<compile_context>
chip_gen: v5e
topology: v5e:2x2
jax: 0.10.0
libtpu: 0.0.40
codegen_flags: <defaults>
</compile_context>

<pallas_src>
import numpy as np
import jax
import jax.numpy as jnp
from jax.experimental import pallas as pl
from jax.experimental.pallas import tpu as pltpu

# ----------------------------- frame geometry ------------------------------
# Input 28x28 is padded by 2 on each side -> 32x32 flat frame (L0).  Each
# 'same' conv shrinks the flat frame by 2*(32+1)=66 (so every tap is an
# in-bounds static slice); each 'valid' conv on the 14-wide frame shrinks it
# by 2*14+2=30; the stride-1 pool frames shrink by (W+1).
W0 = 32
L0 = W0 * W0          # 1024  padded input frame
L1 = L0 - 66          # 958   conv1_1 output frame (covers padded coords 33..990)
L2 = L1 - 66          # 892   conv1_2 output frame (covers padded coords 66..957)
LP1 = L2 - 33         # 859   stride-1 pool-1 frame
W3 = 14
L3 = W3 * W3          # 196   frame after pool-1 (dense 14x14)
L4 = L3 - 30          # 166   conv2_1 output frame (valid)
L5 = L4 - 30          # 136   conv2_2 output frame (valid)
LP2 = L5 - 15         # 121   stride-1 pool-2 frame
NCLS = 11
FC_PAD = 128          # fc2 logits padded to one full lane tile


# ----------------------------- Pallas kernels ------------------------------

def _trunk_kernel(x_ref, w11_ref, b11_ref, w12_ref, b12_ref,
                  w21_ref, b21_ref, w22_ref, b22_ref,
                  s1_ref, s2_ref, mask1_ref, out_ref,
                  scr1, scr2, scr3, scr4, scr5):
    """Per-image fused conv trunk.  Activations: (channels, flat-spatial)."""
    f32 = jnp.float32
    bf16 = jnp.bfloat16

    # conv1_1 (1->16, pad=1).  C_in == 1, so 9 shifted scale-and-adds (VPU).
    acc = jnp.zeros((16, L1), f32)
    for di in range(3):
        for dj in range(3):
            k = di * 3 + dj
            off = di * W0 + dj
            acc = acc + w11_ref[k] * x_ref[:, off:off + L1]
    acc = acc + b11_ref[...]
    # Zero everything outside the true 28x28 region: kills the frame-border
    # garbage and provides conv1_2's zero padding ring.
    scr1[...] = (acc * mask1_ref[...]).astype(bf16)

    # conv1_2 (16->16, pad=1) + ReLU: 9 shifted (16,16)x(16,L2) MXU matmuls.
    acc = jnp.zeros((16, L2), f32)
    for di in range(3):
        for dj in range(3):
            k = di * 3 + dj
            off = di * W0 + dj
            acc = acc + jnp.dot(w12_ref[k], scr1[:, off:off + L2],
                                preferred_element_type=f32)
    scr2[...] = jnp.maximum(acc + b12_ref[...], 0.0).astype(bf16)

    # MaxPool 2x2/2: stride-1 max of 4 shifted views, then a 0/1 selection
    # matmul picking the stride-2 window top-lefts -> dense 14x14 frame.
    p1 = jnp.maximum(
        jnp.maximum(scr2[:, 0:LP1], scr2[:, 1:1 + LP1]),
        jnp.maximum(scr2[:, W0:W0 + LP1], scr2[:, W0 + 1:W0 + 1 + LP1]))
    scr3[...] = jnp.dot(p1, s1_ref[...], preferred_element_type=f32).astype(bf16)

    # conv2_1 (16->32, valid).
    acc = jnp.zeros((32, L4), f32)
    for di in range(3):
        for dj in range(3):
            k = di * 3 + dj
            off = di * W3 + dj
            acc = acc + jnp.dot(w21_ref[k], scr3[:, off:off + L4],
                                preferred_element_type=f32)
    scr4[...] = (acc + b21_ref[...]).astype(bf16)

    # conv2_2 (32->32, valid) + ReLU.
    acc = jnp.zeros((32, L5), f32)
    for di in range(3):
        for dj in range(3):
            k = di * 3 + dj
            off = di * W3 + dj
            acc = acc + jnp.dot(w22_ref[k], scr4[:, off:off + L5],
                                preferred_element_type=f32)
    scr5[...] = jnp.maximum(acc + b22_ref[...], 0.0).astype(bf16)

    # MaxPool 2x2/2 + repack straight into PyTorch flatten order
    # (out[c, y*5+x]), so the host-side reshape(B, 800) is a free view.
    p2 = jnp.maximum(
        jnp.maximum(scr5[:, 0:LP2], scr5[:, 1:1 + LP2]),
        jnp.maximum(scr5[:, W3:W3 + LP2], scr5[:, W3 + 1:W3 + 1 + LP2]))
    out_ref[...] = jnp.dot(p2, s2_ref[...], preferred_element_type=f32)


def _head_kernel(f_ref, w1_ref, b1_ref, w2_ref, b2_ref, o_ref):
    """fc1 + ReLU + fc2 + LogSoftmax, fused; 128-lane padded logits."""
    f32 = jnp.float32
    h = jnp.dot(f_ref[...].astype(jnp.bfloat16), w1_ref[...],
                preferred_element_type=f32) + b1_ref[...]
    h = jnp.maximum(h, 0.0)
    # TODO(synk): Dropout(0.2) is treated as identity (inference semantics).
    z = jnp.dot(h.astype(jnp.bfloat16), w2_ref[...],
                preferred_element_type=f32) + b2_ref[...]
    # Stable LogSoftmax over the last dim; padded columns carry a -1e30 bias
    # so they contribute nothing to the max / logsumexp.
    m = jnp.max(z, axis=-1, keepdims=True)
    s = z - m
    lse = jnp.log(jnp.sum(jnp.exp(s), axis=-1, keepdims=True))
    o_ref[...] = s - lse


# ------------------------------ Pallas calls --------------------------------

def trunk_call(xp, kp):
    """xp: (B, 1, 1024) f32 padded-flattened input.  Returns (B, 32, 25) f32."""
    B = xp.shape[0]
    c3 = lambda b: (0, 0, 0)
    c2 = lambda b: (0, 0)
    flops = int(30e6) * B
    bytes_accessed = int(xp.size * 4 + 900_000 + B * 32 * 25 * 4)
    return pl.pallas_call(
        _trunk_kernel,
        out_shape=jax.ShapeDtypeStruct((B, 32, 25), jnp.float32),
        grid=(B,),
        in_specs=[
            pl.BlockSpec((None, 1, L0), lambda b: (b, 0, 0)),
            pl.BlockSpec((9, 16, 1), c3),
            pl.BlockSpec((16, 1), c2),
            pl.BlockSpec((9, 16, 16), c3),
            pl.BlockSpec((16, 1), c2),
            pl.BlockSpec((9, 32, 16), c3),
            pl.BlockSpec((32, 1), c2),
            pl.BlockSpec((9, 32, 32), c3),
            pl.BlockSpec((32, 1), c2),
            pl.BlockSpec((LP1, L3), c2),
            pl.BlockSpec((LP2, 25), c2),
            pl.BlockSpec((1, L1), c2),
        ],
        out_specs=pl.BlockSpec((None, 32, 25), lambda b: (b, 0, 0)),
        scratch_shapes=[
            pltpu.VMEM((16, L1), jnp.bfloat16),
            pltpu.VMEM((16, L2), jnp.bfloat16),
            pltpu.VMEM((16, L3), jnp.bfloat16),
            pltpu.VMEM((32, L4), jnp.bfloat16),
            pltpu.VMEM((32, L5), jnp.bfloat16),
        ],
        compiler_params=pltpu.CompilerParams(
            dimension_semantics=("parallel",)),
        cost_estimate=pl.CostEstimate(flops=flops, transcendentals=0,
                                      bytes_accessed=bytes_accessed),
    )(xp, kp['w11'], kp['b11'], kp['w12'], kp['b12'],
      kp['w21'], kp['b21'], kp['w22'], kp['b22'],
      kp['s1'], kp['s2'], kp['mask1'])


def head_call(f, kp):
    """f: (Mp, 800) f32 (rows padded to 8).  Returns (Mp, 128) log-probs."""
    Mp = f.shape[0]
    c2 = lambda i: (0, 0)
    return pl.pallas_call(
        _head_kernel,
        out_shape=jax.ShapeDtypeStruct((Mp, FC_PAD), jnp.float32),
        grid=(1,),
        in_specs=[
            pl.BlockSpec((Mp, 800), c2),
            pl.BlockSpec((800, 128), c2),
            pl.BlockSpec((1, 128), c2),
            pl.BlockSpec((128, FC_PAD), c2),
            pl.BlockSpec((1, FC_PAD), c2),
        ],
        out_specs=pl.BlockSpec((Mp, FC_PAD), c2),
    )(f, kp['w1t'], kp['b1'], kp['w2t'], kp['b2'])


# --------------------------- params & packing ------------------------------

def init_params(key):
    """Deterministic params in PyTorch layouts (myNet: 1 input channel)."""
    ks = jax.random.split(key, 12)
    cw = lambda k, o, c: 0.1 * jax.random.normal(k, (o, c, 3, 3), jnp.float32)
    v = lambda k, n: 0.1 * jax.random.normal(k, (n,), jnp.float32)
    return dict(
        w11=cw(ks[0], 16, 1),  b11=v(ks[1], 16),
        w12=cw(ks[2], 16, 16), b12=v(ks[3], 16),
        w21=cw(ks[4], 32, 16), b21=v(ks[5], 32),
        w22=cw(ks[6], 32, 32), b22=v(ks[7], 32),
        wfc1=0.1 * jax.random.normal(ks[8], (128, 32 * 5 * 5), jnp.float32),
        bfc1=v(ks[9], 128),
        wfc2=0.1 * jax.random.normal(ks[10], (NCLS, 128), jnp.float32),
        bfc2=v(ks[11], NCLS),
    )


def _selection_constants():
    """Halo mask + 0/1 pooling-selection matrices (pure layout, built once)."""
    mask1 = np.zeros((1, L1), np.float32)
    for m in range(L1):
        y, x = divmod(m + 33, W0)
        if 2 <= y < 30 and 2 <= x < 30:
            mask1[0, m] = 1.0
    s1 = np.zeros((LP1, L3), np.float32)
    for j in range(L3):
        i2, j2 = divmod(j, 14)
        s1[(2 + 2 * i2) * W0 + (2 + 2 * j2) - 66, j] = 1.0
    s2 = np.zeros((LP2, 25), np.float32)
    for p in range(25):
        i5, j5 = divmod(p, 5)
        s2[(2 * i5) * W3 + 2 * j5, p] = 1.0
    return mask1, s1, s2


def pack_params(p):
    """PyTorch-layout params -> kernel-layout (bf16 MXU operands, f32 bias)."""
    mask1, s1, s2 = _selection_constants()

    def taps(w, dtype):  # (O, C, 3, 3) -> (9, O, C), k = di*3 + dj
        o, c = w.shape[0], w.shape[1]
        return jnp.asarray(w).transpose(2, 3, 0, 1).reshape(9, o, c).astype(dtype)

    col = lambda b: jnp.asarray(b, jnp.float32).reshape(-1, 1)
    w2t = jnp.zeros((128, FC_PAD), jnp.float32).at[:, :NCLS].set(p['wfc2'].T)
    b2 = jnp.full((1, FC_PAD), -1e30, jnp.float32).at[0, :NCLS].set(p['bfc2'])
    return dict(
        w11=taps(p['w11'], jnp.float32), b11=col(p['b11']),
        w12=taps(p['w12'], jnp.bfloat16), b12=col(p['b12']),
        w21=taps(p['w21'], jnp.bfloat16), b21=col(p['b21']),
        w22=taps(p['w22'], jnp.bfloat16), b22=col(p['b22']),
        s1=jnp.asarray(s1, jnp.bfloat16),
        s2=jnp.asarray(s2, jnp.bfloat16),
        mask1=jnp.asarray(mask1, jnp.float32),
        w1t=jnp.asarray(p['wfc1'].T, jnp.bfloat16),
        b1=jnp.asarray(p['bfc1'], jnp.float32).reshape(1, 128),
        w2t=w2t.astype(jnp.bfloat16),
        b2=b2,
    )


# ------------------------------- forward -----------------------------------

def forward(packed, x):
    # NOTE: self.BN (BatchNorm2d) is declared in __init__ but never used in
    # the reference forward(), so it is intentionally omitted here.
    B = x.shape[0]
    xp = jnp.pad(x, ((0, 0), (0, 0), (2, 2), (2, 2))).reshape(B, 1, L0)
    feat = trunk_call(xp, packed)                 # (B, 32, 25), all-VMEM trunk
    f = feat.reshape(B, 32 * 25)                  # free view: PyTorch flatten order
    Mp = ((B + 7) // 8) * 8                       # pad rows to a full sublane tile
    f = jnp.pad(f, ((0, Mp - B), (0, 0)))
    out = head_call(f, packed)                    # (Mp, 128) log-probs (padded)
    return out[:B, :NCLS]


# --------------------------- pure-JAX reference ----------------------------

def reference_forward(p, x):
    dn = ('NCHW', 'OIHW', 'NCHW')

    def conv(x, w, b, pad):
        y = jax.lax.conv_general_dilated(x, w, (1, 1), [(pad, pad), (pad, pad)],
                                         dimension_numbers=dn)
        return y + b.reshape(1, -1, 1, 1)

    def pool(x):
        return jax.lax.reduce_window(x, -jnp.inf, jax.lax.max,
                                     (1, 1, 2, 2), (1, 1, 2, 2), 'VALID')

    x = conv(x, p['w11'], p['b11'], 1)
    x = pool(jax.nn.relu(conv(x, p['w12'], p['b12'], 1)))
    x = conv(x, p['w21'], p['b21'], 0)
    x = pool(jax.nn.relu(conv(x, p['w22'], p['b22'], 0)))
    x = x.reshape(x.shape[0], -1)
    x = jax.nn.relu(x @ p['wfc1'].T + p['bfc1'])
    x = x @ p['wfc2'].T + p['bfc2']
    return jax.nn.log_softmax(x, axis=-1)


if __name__ == "__main__":
    key = jax.random.PRNGKey(0)
    kx, kparams = jax.random.split(key)
    # myNet: 1 input channel; 28x28 spatial is forced by fc1 = 32*5*5.
    x = jax.random.normal(kx, (2, 1, 28, 28), jnp.float32)
    raw = init_params(kparams)
    packed = pack_params(raw)

    out = jax.jit(forward)(packed, x)
    jax.block_until_ready(out)
    assert out.shape == (2, NCLS) and out.dtype == jnp.float32

    ref = reference_forward(raw, x)
    err = float(jnp.max(jnp.abs(out - ref)))
    assert err < 0.25, f"mismatch vs reference: max abs err = {err}"
    print("KERNEL_OK")
</pallas_src>

<mosaic_0001>
module attributes {stable_mosaic.version = 11 : i64} {
  func.func @_trunk_kernel(%arg0: i32, %arg1: memref<1x1x1024xf32, #tpu.memory_space<vmem>>, %arg2: memref<9x16x1xf32, #tpu.memory_space<vmem>>, %arg3: memref<16x1xf32, #tpu.memory_space<vmem>>, %arg4: memref<9x16x16xbf16, #tpu.memory_space<vmem>>, %arg5: memref<16x1xf32, #tpu.memory_space<vmem>>, %arg6: memref<9x32x16xbf16, #tpu.memory_space<vmem>>, %arg7: memref<32x1xf32, #tpu.memory_space<vmem>>, %arg8: memref<9x32x32xbf16, #tpu.memory_space<vmem>>, %arg9: memref<32x1xf32, #tpu.memory_space<vmem>>, %arg10: memref<859x196xbf16, #tpu.memory_space<vmem>>, %arg11: memref<121x25xbf16, #tpu.memory_space<vmem>>, %arg12: memref<1x958xf32, #tpu.memory_space<vmem>>, %arg13: memref<1x32x25xf32, #tpu.memory_space<vmem>>, %arg14: memref<16x958xbf16, #tpu.memory_space<vmem>>, %arg15: memref<16x892xbf16, #tpu.memory_space<vmem>>, %arg16: memref<16x196xbf16, #tpu.memory_space<vmem>>, %arg17: memref<32x166xbf16, #tpu.memory_space<vmem>>, %arg18: memref<32x136xbf16, #tpu.memory_space<vmem>>) attributes {dimension_semantics = [#tpu.dimension_semantics<parallel>], iteration_bounds = array<i64: 2>, scalar_prefetch = 0 : i64, scratch_operands = 5 : i64, tpu.core_type = #tpu.core_type<tc>, window_params = [{transform_indices = @transform_0, window_bounds = array<i64: 1, 1, 1024>}, {pipeline_mode = #tpu.pipeline_mode<synchronous>, transform_indices = @transform_1, window_bounds = array<i64: 9, 16, 1>}, {pipeline_mode = #tpu.pipeline_mode<synchronous>, transform_indices = @transform_2, window_bounds = array<i64: 16, 1>}, {pipeline_mode = #tpu.pipeline_mode<synchronous>, transform_indices = @transform_3, window_bounds = array<i64: 9, 16, 16>}, {pipeline_mode = #tpu.pipeline_mode<synchronous>, transform_indices = @transform_4, window_bounds = array<i64: 16, 1>}, {pipeline_mode = #tpu.pipeline_mode<synchronous>, transform_indices = @transform_5, window_bounds = array<i64: 9, 32, 16>}, {pipeline_mode = #tpu.pipeline_mode<synchronous>, transform_indices = @transform_6, window_bounds = array<i64: 32, 1>}, {pipeline_mode = #tpu.pipeline_mode<synchronous>, transform_indices = @transform_7, window_bounds = array<i64: 9, 32, 32>}, {pipeline_mode = #tpu.pipeline_mode<synchronous>, transform_indices = @transform_8, window_bounds = array<i64: 32, 1>}, {pipeline_mode = #tpu.pipeline_mode<synchronous>, transform_indices = @transform_9, window_bounds = array<i64: 859, 196>}, {pipeline_mode = #tpu.pipeline_mode<synchronous>, transform_indices = @transform_10, window_bounds = array<i64: 121, 25>}, {pipeline_mode = #tpu.pipeline_mode<synchronous>, transform_indices = @transform_11, window_bounds = array<i64: 1, 958>}, {transform_indices = @transform_12, window_bounds = array<i64: 1, 32, 25>}]} {
    %cst = arith.constant 0.000000e+00 : f32
    %0 = vector.broadcast %cst : f32 to vector<16x958xf32>
    %c0 = arith.constant 0 : index
    %c0_0 = arith.constant 0 : index
    %c0_1 = arith.constant 0 : index
    %1 = vector.load %arg2[%c0, %c0_0, %c0_1] : memref<9x16x1xf32, #tpu.memory_space<vmem>>, vector<1x16x1xf32>
    %2 = vector.shape_cast %1 : vector<1x16x1xf32> to vector<16x1xf32>
    %c0_2 = arith.constant 0 : index
    %c0_3 = arith.constant 0 : index
    %c0_4 = arith.constant 0 : index
    %3 = vector.load %arg1[%c0_2, %c0_3, %c0_4] : memref<1x1x1024xf32, #tpu.memory_space<vmem>>, vector<1x1x958xf32>
    %4 = vector.shape_cast %3 : vector<1x1x958xf32> to vector<1x958xf32>
    %5 = vector.broadcast %2 : vector<16x1xf32> to vector<16x958xf32>
    %6 = vector.broadcast %4 : vector<1x958xf32> to vector<16x958xf32>
    %7 = arith.mulf %5, %6 : vector<16x958xf32>
    %8 = arith.addf %0, %7 : vector<16x958xf32>
    %c1 = arith.constant 1 : index
    %c0_5 = arith.constant 0 : index
    %c0_6 = arith.constant 0 : index
    %9 = vector.load %arg2[%c1, %c0_5, %c0_6] : memref<9x16x1xf32, #tpu.memory_space<vmem>>, vector<1x16x1xf32>
    %10 = vector.shape_cast %9 : vector<1x16x1xf32> to vector<16x1xf32>
    %c0_7 = arith.constant 0 : index
    %c0_8 = arith.constant 0 : index
    %c1_9 = arith.constant 1 : index
    %11 = vector.load %arg1[%c0_7, %c0_8, %c1_9] : memref<1x1x1024xf32, #tpu.memory_space<vmem>>, vector<1x1x958xf32>
    %12 = vector.shape_cast %11 : vector<1x1x958xf32> to vector<1x958xf32>
    %13 = vector.broadcast %10 : vector<16x1xf32> to vector<16x958xf32>
    %14 = vector.broadcast %12 : vector<1x958xf32> to vector<16x958xf32>
    %15 = arith.mulf %13, %14 : vector<16x958xf32>
    %16 = arith.addf %8, %15 : vector<16x958xf32>
    %c2 = arith.constant 2 : index
    %c0_10 = arith.constant 0 : index
    %c0_11 = arith.constant 0 : index
    %17 = vector.load %arg2[%c2, %c0_10, %c0_11] : memref<9x16x1xf32, #tpu.memory_space<vmem>>, vector<1x16x1xf32>
    %18 = vector.shape_cast %17 : vector<1x16x1xf32> to vector<16x1xf32>
    %c0_12 = arith.constant 0 : index
    %c0_13 = arith.constant 0 : index
    %c2_14 = arith.constant 2 : index
    %19 = vector.load %arg1[%c0_12, %c0_13, %c2_14] : memref<1x1x1024xf32, #tpu.memory_space<vmem>>, vector<1x1x958xf32>
    %20 = vector.shape_cast %19 : vector<1x1x958xf32> to vector<1x958xf32>
    %21 = vector.broadcast %18 : vector<16x1xf32> to vector<16x958xf32>
    %22 = vector.broadcast %20 : vector<1x958xf32> to vector<16x958xf32>
    %23 = arith.mulf %21, %22 : vector<16x958xf32>
    %24 = arith.addf %16, %23 : vector<16x958xf32>
    %c3 = arith.constant 3 : index
    %c0_15 = arith.constant 0 : index
    %c0_16 = arith.constant 0 : index
    %25 = vector.load %arg2[%c3, %c0_15, %c0_16] : memref<9x16x1xf32, #tpu.memory_space<vmem>>, vector<1x16x1xf32>
    %26 = vector.shape_cast %25 : vector<1x16x1xf32> to vector<16x1xf32>
    %c0_17 = arith.constant 0 : index
    %c0_18 = arith.constant 0 : index
    %c32 = arith.constant 32 : index
    %27 = vector.load %arg1[%c0_17, %c0_18, %c32] : memref<1x1x1024xf32, #tpu.memory_space<vmem>>, vector<1x1x958xf32>
    %28 = vector.shape_cast %27 : vector<1x1x958xf32> to vector<1x958xf32>
    %29 = vector.broadcast %26 : vector<16x1xf32> to vector<16x958xf32>
    %30 = vector.broadcast %28 : vector<1x958xf32> to vector<16x958xf32>
    %31 = arith.mulf %29, %30 : vector<16x958xf32>
    %32 = arith.addf %24, %31 : vector<16x958xf32>
    %c4 = arith.constant 4 : index
    %c0_19 = arith.constant 0 : index
    %c0_20 = arith.constant 0 : index
    %33 = vector.load %arg2[%c4, %c0_19, %c0_20] : memref<9x16x1xf32, #tpu.memory_space<vmem>>, vector<1x16x1xf32>
    %34 = vector.shape_cast %33 : vector<1x16x1xf32> to vector<16x1xf32>
    %c0_21 = arith.constant 0 : index
    %c0_22 = arith.constant 0 : index
    %c33 = arith.constant 33 : index
    %35 = vector.load %arg1[%c0_21, %c0_22, %c33] : memref<1x1x1024xf32, #tpu.memory_space<vmem>>, vector<1x1x958xf32>
    %36 = vector.shape_cast %35 : vector<1x1x958xf32> to vector<1x958xf32>
    %37 = vector.broadcast %34 : vector<16x1xf32> to vector<16x958xf32>
    %38 = vector.broadcast %36 : vector<1x958xf32> to vector<16x958xf32>
    %39 = arith.mulf %37, %38 : vector<16x958xf32>
    %40 = arith.addf %32, %39 : vector<16x958xf32>
    %c5 = arith.constant 5 : index
    %c0_23 = arith.constant 0 : index
    %c0_24 = arith.constant 0 : index
    %41 = vector.load %arg2[%c5, %c0_23, %c0_24] : memref<9x16x1xf32, #tpu.memory_space<vmem>>, vector<1x16x1xf32>
    %42 = vector.shape_cast %41 : vector<1x16x1xf32> to vector<16x1xf32>
    %c0_25 = arith.constant 0 : index
    %c0_26 = arith.constant 0 : index
    %c34 = arith.constant 34 : index
    %43 = vector.load %arg1[%c0_25, %c0_26, %c34] : memref<1x1x1024xf32, #tpu.memory_space<vmem>>, vector<1x1x958xf32>
    %44 = vector.shape_cast %43 : vector<1x1x958xf32> to vector<1x958xf32>
    %45 = vector.broadcast %42 : vector<16x1xf32> to vector<16x958xf32>
    %46 = vector.broadcast %44 : vector<1x958xf32> to vector<16x958xf32>
    %47 = arith.mulf %45, %46 : vector<16x958xf32>
    %48 = arith.addf %40, %47 : vector<16x958xf32>
    %c6 = arith.constant 6 : index
    %c0_27 = arith.constant 0 : index
    %c0_28 = arith.constant 0 : index
    %49 = vector.load %arg2[%c6, %c0_27, %c0_28] : memref<9x16x1xf32, #tpu.memory_space<vmem>>, vector<1x16x1xf32>
    %50 = vector.shape_cast %49 : vector<1x16x1xf32> to vector<16x1xf32>
    %c0_29 = arith.constant 0 : index
    %c0_30 = arith.constant 0 : index
    %c64 = arith.constant 64 : index
    %51 = vector.load %arg1[%c0_29, %c0_30, %c64] : memref<1x1x1024xf32, #tpu.memory_space<vmem>>, vector<1x1x958xf32>
    %52 = vector.shape_cast %51 : vector<1x1x958xf32> to vector<1x958xf32>
    %53 = vector.broadcast %50 : vector<16x1xf32> to vector<16x958xf32>
    %54 = vector.broadcast %52 : vector<1x958xf32> to vector<16x958xf32>
    %55 = arith.mulf %53, %54 : vector<16x958xf32>
    %56 = arith.addf %48, %55 : vector<16x958xf32>
    %c7 = arith.constant 7 : index
    %c0_31 = arith.constant 0 : index
    %c0_32 = arith.constant 0 : index
    %57 = vector.load %arg2[%c7, %c0_31, %c0_32] : memref<9x16x1xf32, #tpu.memory_space<vmem>>, vector<1x16x1xf32>
    %58 = vector.shape_cast %57 : vector<1x16x1xf32> to vector<16x1xf32>
    %c0_33 = arith.constant 0 : index
    %c0_34 = arith.constant 0 : index
    %c65 = arith.constant 65 : index
    %59 = vector.load %arg1[%c0_33, %c0_34, %c65] : memref<1x1x1024xf32, #tpu.memory_space<vmem>>, vector<1x1x958xf32>
    %60 = vector.shape_cast %59 : vector<1x1x958xf32> to vector<1x958xf32>
    %61 = vector.broadcast %58 : vector<16x1xf32> to vector<16x958xf32>
    %62 = vector.broadcast %60 : vector<1x958xf32> to vector<16x958xf32>
    %63 = arith.mulf %61, %62 : vector<16x958xf32>
    %64 = arith.addf %56, %63 : vector<16x958xf32>
    %c8 = arith.constant 8 : index
    %c0_35 = arith.constant 0 : index
    %c0_36 = arith.constant 0 : index
    %65 = vector.load %arg2[%c8, %c0_35, %c0_36] : memref<9x16x1xf32, #tpu.memory_space<vmem>>, vector<1x16x1xf32>
    %66 = vector.shape_cast %65 : vector<1x16x1xf32> to vector<16x1xf32>
    %c0_37 = arith.constant 0 : index
    %c0_38 = arith.constant 0 : index
    %c66 = arith.constant 66 : index
    %67 = vector.load %arg1[%c0_37, %c0_38, %c66] : memref<1x1x1024xf32, #tpu.memory_space<vmem>>, vector<1x1x958xf32>
    %68 = vector.shape_cast %67 : vector<1x1x958xf32> to vector<1x958xf32>
    %69 = vector.broadcast %66 : vector<16x1xf32> to vector<16x958xf32>
    %70 = vector.broadcast %68 : vector<1x958xf32> to vector<16x958xf32>
    %71 = arith.mulf %69, %70 : vector<16x958xf32>
    %72 = arith.addf %64, %71 : vector<16x958xf32>
    %c0_39 = arith.constant 0 : index
    %c0_40 = arith.constant 0 : index
    %73 = vector.load %arg3[%c0_39, %c0_40] : memref<16x1xf32, #tpu.memory_space<vmem>>, vector<16x1xf32>
    %74 = vector.broadcast %73 : vector<16x1xf32> to vector<16x958xf32>
    %75 = arith.addf %72, %74 : vector<16x958xf32>
    %c0_41 = arith.constant 0 : index
    %c0_42 = arith.constant 0 : index
    %76 = vector.load %arg12[%c0_41, %c0_42] : memref<1x958xf32, #tpu.memory_space<vmem>>, vector<1x958xf32>
    %77 = vector.broadcast %76 : vector<1x958xf32> to vector<16x958xf32>
    %78 = arith.mulf %75, %77 : vector<16x958xf32>
    %79 = arith.truncf %78 : vector<16x958xf32> to vector<16x958xbf16>
    %c0_43 = arith.constant 0 : index
    %c0_44 = arith.constant 0 : index
    %80 = vector.load %arg14[%c0_43, %c0_44] : memref<16x958xbf16, #tpu.memory_space<vmem>>, vector<16x958xbf16>
    tpu.vector_store %arg14[%c0_43, %c0_44], %79 {strides = array<i32>} : memref<16x958xbf16, #tpu.memory_space<vmem>>, vector<16x958xbf16>,
    %cst_45 = arith.constant 0.000000e+00 : f32
    %81 = vector.broadcast %cst_45 : f32 to vector<16x892xf32>
    %c0_46 = arith.constant 0 : index
    %c0_47 = arith.constant 0 : index
    %c0_48 = arith.constant 0 : index
    %82 = vector.load %arg4[%c0_46, %c0_47, %c0_48] : memref<9x16x16xbf16, #tpu.memory_space<vmem>>, vector<1x16x16xbf16>
    %83 = vector.shape_cast %82 : vector<1x16x16xbf16> to vector<16x16xbf16>
    %c0_49 = arith.constant 0 : index
    %c0_50 = arith.constant 0 : index
    %84 = vector.load %arg14[%c0_49, %c0_50] : memref<16x958xbf16, #tpu.memory_space<vmem>>, vector<16x892xbf16>
    %cst_51 = arith.constant dense<0.000000e+00> : vector<16x892xf32>
    %85 = tpu.matmul %83, %84, %cst_51 {dimension_numbers = #tpu.dot_dimension_numbers<[1], [0], [0], [1], [0, 0, 1, 1], [], []>} : vector<16x16xbf16>, vector<16x892xbf16>, vector<16x892xf32> -> vector<16x892xf32>
    %86 = arith.addf %81, %85 : vector<16x892xf32>
    %c1_52 = arith.constant 1 : index
    %c0_53 = arith.constant 0 : index
    %c0_54 = arith.constant 0 : index
    %87 = vector.load %arg4[%c1_52, %c0_53, %c0_54] : memref<9x16x16xbf16, #tpu.memory_space<vmem>>, vector<1x16x16xbf16>
    %88 = vector.shape_cast %87 : vector<1x16x16xbf16> to vector<16x16xbf16>
    %c0_55 = arith.constant 0 : index
    %c1_56 = arith.constant 1 : index
    %89 = vector.load %arg14[%c0_55, %c1_56] : memref<16x958xbf16, #tpu.memory_space<vmem>>, vector<16x892xbf16>
    %cst_57 = arith.constant dense<0.000000e+00> : vector<16x892xf32>
    %90 = tpu.matmul %88, %89, %cst_57 {dimension_numbers = #tpu.dot_dimension_numbers<[1], [0], [0], [1], [0, 0, 1, 1], [], []>} : vector<16x16xbf16>, vector<16x892xbf16>, vector<16x892xf32> -> vector<16x892xf32>
    %91 = arith.addf %86, %90 : vector<16x892xf32>
    %c2_58 = arith.constant 2 : index
    %c0_59 = arith.constant 0 : index
    %c0_60 = arith.constant 0 : index
    %92 = vector.load %arg4[%c2_58, %c0_59, %c0_60] : memref<9x16x16xbf16, #tpu.memory_space<vmem>>, vector<1x16x16xbf16>
    %93 = vector.shape_cast %92 : vector<1x16x16xbf16> to vector<16x16xbf16>
    %c0_61 = arith.constant 0 : index
    %c2_62 = arith.constant 2 : index
    %94 = vector.load %arg14[%c0_61, %c2_62] : memref<16x958xbf16, #tpu.memory_space<vmem>>, vector<16x892xbf16>
    %cst_63 = arith.constant dense<0.000000e+00> : vector<16x892xf32>
    %95 = tpu.matmul %93, %94, %cst_63 {dimension_numbers = #tpu.dot_dimension_numbers<[1], [0], [0], [1], [0, 0, 1, 1], [], []>} : vector<16x16xbf16>, vector<16x892xbf16>, vector<16x892xf32> -> vector<16x892xf32>
    %96 = arith.addf %91, %95 : vector<16x892xf32>
    %c3_64 = arith.constant 3 : index
    %c0_65 = arith.constant 0 : index
    %c0_66 = arith.constant 0 : index
    %97 = vector.load %arg4[%c3_64, %c0_65, %c0_66] : memref<9x16x16xbf16, #tpu.memory_space<vmem>>, vector<1x16x16xbf16>
    %98 = vector.shape_cast %97 : vector<1x16x16xbf16> to vector<16x16xbf16>
    %c0_67 = arith.constant 0 : index
    %c32_68 = arith.constant 32 : index
    %99 = vector.load %arg14[%c0_67, %c32_68] : memref<16x958xbf16, #tpu.memory_space<vmem>>, vector<16x892xbf16>
    %cst_69 = arith.constant dense<0.000000e+00> : vector<16x892xf32>
    %100 = tpu.matmul %98, %99, %cst_69 {dimension_numbers = #tpu.dot_dimension_numbers<[1], [0], [0], [1], [0, 0, 1, 1], [], []>} : vector<16x16xbf16>, vector<16x892xbf16>, vector<16x892xf32> -> vector<16x892xf32>
    %101 = arith.addf %96, %100 : vector<16x892xf32>
    %c4_70 = arith.constant 4 : index
    %c0_71 = arith.constant 0 : index
    %c0_72 = arith.constant 0 : index
    %102 = vector.load %arg4[%c4_70, %c0_71, %c0_72] : memref<9x16x16xbf16, #tpu.memory_space<vmem>>, vector<1x16x16xbf16>
    %103 = vector.shape_cast %102 : vector<1x16x16xbf16> to vector<16x16xbf16>
    %c0_73 = arith.constant 0 : index
    %c33_74 = arith.constant 33 : index
    %104 = vector.load %arg14[%c0_73, %c33_74] : memref<16x958xbf16, #tpu.memory_space<vmem>>, vector<16x892xbf16>
    %cst_75 = arith.constant dense<0.000000e+00> : vector<16x892xf32>
    %105 = tpu.matmul %103, %104, %cst_75 {dimension_numbers = #tpu.dot_dimension_numbers<[1], [0], [0], [1], [0, 0, 1, 1], [], []>} : vector<16x16xbf16>, vector<16x892xbf16>, vector<16x892xf32> -> vector<16x892xf32>
    %106 = arith.addf %101, %105 : vector<16x892xf32>
    %c5_76 = arith.constant 5 : index
    %c0_77 = arith.constant 0 : index
    %c0_78 = arith.constant 0 : index
    %107 = vector.load %arg4[%c5_76, %c0_77, %c0_78] : memref<9x16x16xbf16, #tpu.memory_space<vmem>>, vector<1x16x16xbf16>
    %108 = vector.shape_cast %107 : vector<1x16x16xbf16> to vector<16x16xbf16>
    %c0_79 = arith.constant 0 : index
    %c34_80 = arith.constant 34 : index
    %109 = vector.load %arg14[%c0_79, %c34_80] : memref<16x958xbf16, #tpu.memory_space<vmem>>, vector<16x892xbf16>
    %cst_81 = arith.constant dense<0.000000e+00> : vector<16x892xf32>
    %110 = tpu.matmul %108, %109, %cst_81 {dimension_numbers = #tpu.dot_dimension_numbers<[1], [0], [0], [1], [0, 0, 1, 1], [], []>} : vector<16x16xbf16>, vector<16x892xbf16>, vector<16x892xf32> -> vector<16x892xf32>
    %111 = arith.addf %106, %110 : vector<16x892xf32>
    %c6_82 = arith.constant 6 : index
    %c0_83 = arith.constant 0 : index
    %c0_84 = arith.constant 0 : index
    %112 = vector.load %arg4[%c6_82, %c0_83, %c0_84] : memref<9x16x16xbf16, #tpu.memory_space<vmem>>, vector<1x16x16xbf16>
    %113 = vector.shape_cast %112 : vector<1x16x16xbf16> to vector<16x16xbf16>
    %c0_85 = arith.constant 0 : index
    %c64_86 = arith.constant 64 : index
    %114 = vector.load %arg14[%c0_85, %c64_86] : memref<16x958xbf16, #tpu.memory_space<vmem>>, vector<16x892xbf16>
    %cst_87 = arith.constant dense<0.000000e+00> : vector<16x892xf32>
    %115 = tpu.matmul %113, %114, %cst_87 {dimension_numbers = #tpu.dot_dimension_numbers<[1], [0], [0], [1], [0, 0, 1, 1], [], []>} : vector<16x16xbf16>, vector<16x892xbf16>, vector<16x892xf32> -> vector<16x892xf32>
    %116 = arith.addf %111, %115 : vector<16x892xf32>
    %c7_88 = arith.constant 7 : index
    %c0_89 = arith.constant 0 : index
    %c0_90 = arith.constant 0 : index
    %117 = vector.load %arg4[%c7_88, %c0_89, %c0_90] : memref<9x16x16xbf16, #tpu.memory_space<vmem>>, vector<1x16x16xbf16>
    %118 = vector.shape_cast %117 : vector<1x16x16xbf16> to vector<16x16xbf16>
    %c0_91 = arith.constant 0 : index
    %c65_92 = arith.constant 65 : index
    %119 = vector.load %arg14[%c0_91, %c65_92] : memref<16x958xbf16, #tpu.memory_space<vmem>>, vector<16x892xbf16>
    %cst_93 = arith.constant dense<0.000000e+00> : vector<16x892xf32>
    %120 = tpu.matmul %118, %119, %cst_93 {dimension_numbers = #tpu.dot_dimension_numbers<[1], [0], [0], [1], [0, 0, 1, 1], [], []>} : vector<16x16xbf16>, vector<16x892xbf16>, vector<16x892xf32> -> vector<16x892xf32>
    %121 = arith.addf %116, %120 : vector<16x892xf32>
    %c8_94 = arith.constant 8 : index
    %c0_95 = arith.constant 0 : index
    %c0_96 = arith.constant 0 : index
    %122 = vector.load %arg4[%c8_94, %c0_95, %c0_96] : memref<9x16x16xbf16, #tpu.memory_space<vmem>>, vector<1x16x16xbf16>
    %123 = vector.shape_cast %122 : vector<1x16x16xbf16> to vector<16x16xbf16>
    %c0_97 = arith.constant 0 : index
    %c66_98 = arith.constant 66 : index
    %124 = vector.load %arg14[%c0_97, %c66_98] : memref<16x958xbf16, #tpu.memory_space<vmem>>, vector<16x892xbf16>
    %cst_99 = arith.constant dense<0.000000e+00> : vector<16x892xf32>
    %125 = tpu.matmul %123, %124, %cst_99 {dimension_numbers = #tpu.dot_dimension_numbers<[1], [0], [0], [1], [0, 0, 1, 1], [], []>} : vector<16x16xbf16>, vector<16x892xbf16>, vector<16x892xf32> -> vector<16x892xf32>
    %126 = arith.addf %121, %125 : vector<16x892xf32>
    %c0_100 = arith.constant 0 : index
    %c0_101 = arith.constant 0 : index
    %127 = vector.load %arg5[%c0_100, %c0_101] : memref<16x1xf32, #tpu.memory_space<vmem>>, vector<16x1xf32>
    %128 = vector.broadcast %127 : vector<16x1xf32> to vector<16x892xf32>
    %129 = arith.addf %126, %128 : vector<16x892xf32>
    %cst_102 = arith.constant 0.000000e+00 : f32
    %130 = vector.broadcast %cst_102 : f32 to vector<16x892xf32>
    %131 = arith.maximumf %129, %130 : vector<16x892xf32>
    %132 = arith.truncf %131 : vector<16x892xf32> to vector<16x892xbf16>
    %c0_103 = arith.constant 0 : index
    %c0_104 = arith.constant 0 : index
    %133 = vector.load %arg15[%c0_103, %c0_104] : memref<16x892xbf16, #tpu.memory_space<vmem>>, vector<16x892xbf16>
    tpu.vector_store %arg15[%c0_103, %c0_104], %132 {strides = array<i32>} : memref<16x892xbf16, #tpu.memory_space<vmem>>, vector<16x892xbf16>,
    %c0_105 = arith.constant 0 : index
    %c0_106 = arith.constant 0 : index
    %134 = vector.load %arg15[%c0_105, %c0_106] : memref<16x892xbf16, #tpu.memory_space<vmem>>, vector<16x859xbf16>
    %c0_107 = arith.constant 0 : index
    %c1_108 = arith.constant 1 : index
    %135 = vector.load %arg15[%c0_107, %c1_108] : memref<16x892xbf16, #tpu.memory_space<vmem>>, vector<16x859xbf16>
    %136 = arith.maximumf %134, %135 : vector<16x859xbf16>
    %c0_109 = arith.constant 0 : index
    %c32_110 = arith.constant 32 : index
    %137 = vector.load %arg15[%c0_109, %c32_110] : memref<16x892xbf16, #tpu.memory_space<vmem>>, vector<16x859xbf16>
    %c0_111 = arith.constant 0 : index
    %c33_112 = arith.constant 33 : index
    %138 = vector.load %arg15[%c0_111, %c33_112] : memref<16x892xbf16, #tpu.memory_space<vmem>>, vector<16x859xbf16>
    %139 = arith.maximumf %137, %138 : vector<16x859xbf16>
    %140 = arith.maximumf %136, %139 : vector<16x859xbf16>
    %c0_113 = arith.constant 0 : index
    %c0_114 = arith.constant 0 : index
    %141 = vector.load %arg10[%c0_113, %c0_114] : memref<859x196xbf16, #tpu.memory_space<vmem>>, vector<859x196xbf16>
    %cst_115 = arith.constant dense<0.000000e+00> : vector<16x196xf32>
    %142 = tpu.matmul %140, %141, %cst_115 {dimension_numbers = #tpu.dot_dimension_numbers<[1], [0], [0], [1], [0, 0, 1, 1], [], []>} : vector<16x859xbf16>, vector<859x196xbf16>, vector<16x196xf32> -> vector<16x196xf32>
    %143 = arith.truncf %142 : vector<16x196xf32> to vector<16x196xbf16>
    %c0_116 = arith.constant 0 : index
    %c0_117 = arith.constant 0 : index
    %144 = vector.load %arg16[%c0_116, %c0_117] : memref<16x196xbf16, #tpu.memory_space<vmem>>, vector<16x196xbf16>
    tpu.vector_store %arg16[%c0_116, %c0_117], %143 {strides = array<i32>} : memref<16x196xbf16, #tpu.memory_space<vmem>>, vector<16x196xbf16>,
    %cst_118 = arith.constant 0.000000e+00 : f32
    %145 = vector.broadcast %cst_118 : f32 to vector<32x166xf32>
    %c0_119 = arith.constant 0 : index
    %c0_120 = arith.constant 0 : index
    %c0_121 = arith.constant 0 : index
    %146 = vector.load %arg6[%c0_119, %c0_120, %c0_121] : memref<9x32x16xbf16, #tpu.memory_space<vmem>>, vector<1x32x16xbf16>
    %147 = vector.shape_cast %146 : vector<1x32x16xbf16> to vector<32x16xbf16>
    %c0_122 = arith.constant 0 : index
    %c0_123 = arith.constant 0 : index
    %148 = vector.load %arg16[%c0_122, %c0_123] : memref<16x196xbf16, #tpu.memory_space<vmem>>, vector<16x166xbf16>
    %cst_124 = arith.constant dense<0.000000e+00> : vector<32x166xf32>
    %149 = tpu.matmul %147, %148, %cst_124 {dimension_numbers = #tpu.dot_dimension_numbers<[1], [0], [0], [1], [0, 0, 1, 1], [], []>} : vector<32x16xbf16>, vector<16x166xbf16>, vector<32x166xf32> -> vector<32x166xf32>
    %150 = arith.addf %145, %149 : vector<32x166xf32>
    %c1_125 = arith.constant 1 : index
    %c0_126 = arith.constant 0 : index
    %c0_127 = arith.constant 0 : index
    %151 = vector.load %arg6[%c1_125, %c0_126, %c0_127] : memref<9x32x16xbf16, #tpu.memory_space<vmem>>, vector<1x32x16xbf16>
    %152 = vector.shape_cast %151 : vector<1x32x16xbf16> to vector<32x16xbf16>
    %c0_128 = arith.constant 0 : index
    %c1_129 = arith.constant 1 : index
    %153 = vector.load %arg16[%c0_128, %c1_129] : memref<16x196xbf16, #tpu.memory_space<vmem>>, vector<16x166xbf16>
    %cst_130 = arith.constant dense<0.000000e+00> : vector<32x166xf32>
    %154 = tpu.matmul %152, %153, %cst_130 {dimension_numbers = #tpu.dot_dimension_numbers<[1], [0], [0], [1], [0, 0, 1, 1], [], []>} : vector<32x16xbf16>, vector<16x166xbf16>, vector<32x166xf32> -> vector<32x166xf32>
    %155 = arith.addf %150, %154 : vector<32x166xf32>
    %c2_131 = arith.constant 2 : index
    %c0_132 = arith.constant 0 : index
    %c0_133 = arith.constant 0 : index
    %156 = vector.load %arg6[%c2_131, %c0_132, %c0_133] : memref<9x32x16xbf16, #tpu.memory_space<vmem>>, vector<1x32x16xbf16>
    %157 = vector.shape_cast %156 : vector<1x32x16xbf16> to vector<32x16xbf16>
    %c0_134 = arith.constant 0 : index
    %c2_135 = arith.constant 2 : index
    %158 = vector.load %arg16[%c0_134, %c2_135] : memref<16x196xbf16, #tpu.memory_space<vmem>>, vector<16x166xbf16>
    %cst_136 = arith.constant dense<0.000000e+00> : vector<32x166xf32>
    %159 = tpu.matmul %157, %158, %cst_136 {dimension_numbers = #tpu.dot_dimension_numbers<[1], [0], [0], [1], [0, 0, 1, 1], [], []>} : vector<32x16xbf16>, vector<16x166xbf16>, vector<32x166xf32> -> vector<32x166xf32>
    %160 = arith.addf %155, %159 : vector<32x166xf32>
    %c3_137 = arith.constant 3 : index
    %c0_138 = arith.constant 0 : index
    %c0_139 = arith.constant 0 : index
    %161 = vector.load %arg6[%c3_137, %c0_138, %c0_139] : memref<9x32x16xbf16, #tpu.memory_space<vmem>>, vector<1x32x16xbf16>
    %162 = vector.shape_cast %161 : vector<1x32x16xbf16> to vector<32x16xbf16>
    %c0_140 = arith.constant 0 : index
    %c14 = arith.constant 14 : index
    %163 = vector.load %arg16[%c0_140, %c14] : memref<16x196xbf16, #tpu.memory_space<vmem>>, vector<16x166xbf16>
    %cst_141 = arith.constant dense<0.000000e+00> : vector<32x166xf32>
    %164 = tpu.matmul %162, %163, %cst_141 {dimension_numbers = #tpu.dot_dimension_numbers<[1], [0], [0], [1], [0, 0, 1, 1], [], []>} : vector<32x16xbf16>, vector<16x166xbf16>, vector<32x166xf32> -> vector<32x166xf32>
    %165 = arith.addf %160, %164 : vector<32x166xf32>
    %c4_142 = arith.constant 4 : index
    %c0_143 = arith.constant 0 : index
    %c0_144 = arith.constant 0 : index
    %166 = vector.load %arg6[%c4_142, %c0_143, %c0_144] : memref<9x32x16xbf16, #tpu.memory_space<vmem>>, vector<1x32x16xbf16>
    %167 = vector.shape_cast %166 : vector<1x32x16xbf16> to vector<32x16xbf16>
    %c0_145 = arith.constant 0 : index
    %c15 = arith.constant 15 : index
    %168 = vector.load %arg16[%c0_145, %c15] : memref<16x196xbf16, #tpu.memory_space<vmem>>, vector<16x166xbf16>
    %cst_146 = arith.constant dense<0.000000e+00> : vector<32x166xf32>
    %169 = tpu.matmul %167, %168, %cst_146 {dimension_numbers = #tpu.dot_dimension_numbers<[1], [0], [0], [1], [0, 0, 1, 1], [], []>} : vector<32x16xbf16>, vector<16x166xbf16>, vector<32x166xf32> -> vector<32x166xf32>
    %170 = arith.addf %165, %169 : vector<32x166xf32>
    %c5_147 = arith.constant 5 : index
    %c0_148 = arith.constant 0 : index
    %c0_149 = arith.constant 0 : index
    %171 = vector.load %arg6[%c5_147, %c0_148, %c0_149] : memref<9x32x16xbf16, #tpu.memory_space<vmem>>, vector<1x32x16xbf16>
    %172 = vector.shape_cast %171 : vector<1x32x16xbf16> to vector<32x16xbf16>
    %c0_150 = arith.constant 0 : index
    %c16 = arith.constant 16 : index
    %173 = vector.load %arg16[%c0_150, %c16] : memref<16x196xbf16, #tpu.memory_space<vmem>>, vector<16x166xbf16>
    %cst_151 = arith.constant dense<0.000000e+00> : vector<32x166xf32>
    %174 = tpu.matmul %172, %173, %cst_151 {dimension_numbers = #tpu.dot_dimension_numbers<[1], [0], [0], [1], [0, 0, 1, 1], [], []>} : vector<32x16xbf16>, vector<16x166xbf16>, vector<32x166xf32> -> vector<32x166xf32>
    %175 = arith.addf %170, %174 : vector<32x166xf32>
    %c6_152 = arith.constant 6 : index
    %c0_153 = arith.constant 0 : index
    %c0_154 = arith.constant 0 : index
    %176 = vector.load %arg6[%c6_152, %c0_153, %c0_154] : memref<9x32x16xbf16, #tpu.memory_space<vmem>>, vector<1x32x16xbf16>
    %177 = vector.shape_cast %176 : vector<1x32x16xbf16> to vector<32x16xbf16>
    %c0_155 = arith.constant 0 : index
    %c28 = arith.constant 28 : index
    %178 = vector.load %arg16[%c0_155, %c28] : memref<16x196xbf16, #tpu.memory_space<vmem>>, vector<16x166xbf16>
    %cst_156 = arith.constant dense<0.000000e+00> : vector<32x166xf32>
    %179 = tpu.matmul %177, %178, %cst_156 {dimension_numbers = #tpu.dot_dimension_numbers<[1], [0], [0], [1], [0, 0, 1, 1], [], []>} : vector<32x16xbf16>, vector<16x166xbf16>, vector<32x166xf32> -> vector<32x166xf32>
    %180 = arith.addf %175, %179 : vector<32x166xf32>
    %c7_157 = arith.constant 7 : index
    %c0_158 = arith.constant 0 : index
    %c0_159 = arith.constant 0 : index
    %181 = vector.load %arg6[%c7_157, %c0_158, %c0_159] : memref<9x32x16xbf16, #tpu.memory_space<vmem>>, vector<1x32x16xbf16>
    %182 = vector.shape_cast %181 : vector<1x32x16xbf16> to vector<32x16xbf16>
    %c0_160 = arith.constant 0 : index
    %c29 = arith.constant 29 : index
    %183 = vector.load %arg16[%c0_160, %c29] : memref<16x196xbf16, #tpu.memory_space<vmem>>, vector<16x166xbf16>
    %cst_161 = arith.constant dense<0.000000e+00> : vector<32x166xf32>
    %184 = tpu.matmul %182, %183, %cst_161 {dimension_numbers = #tpu.dot_dimension_numbers<[1], [0], [0], [1], [0, 0, 1, 1], [], []>} : vector<32x16xbf16>, vector<16x166xbf16>, vector<32x166xf32> -> vector<32x166xf32>
    %185 = arith.addf %180, %184 : vector<32x166xf32>
    %c8_162 = arith.constant 8 : index
    %c0_163 = arith.constant 0 : index
    %c0_164 = arith.constant 0 : index
    %186 = vector.load %arg6[%c8_162, %c0_163, %c0_164] : memref<9x32x16xbf16, #tpu.memory_space<vmem>>, vector<1x32x16xbf16>
    %187 = vector.shape_cast %186 : vector<1x32x16xbf16> to vector<32x16xbf16>
    %c0_165 = arith.constant 0 : index
    %c30 = arith.constant 30 : index
    %188 = vector.load %arg16[%c0_165, %c30] : memref<16x196xbf16, #tpu.memory_space<vmem>>, vector<16x166xbf16>
    %cst_166 = arith.constant dense<0.000000e+00> : vector<32x166xf32>
    %189 = tpu.matmul %187, %188, %cst_166 {dimension_numbers = #tpu.dot_dimension_numbers<[1], [0], [0], [1], [0, 0, 1, 1], [], []>} : vector<32x16xbf16>, vector<16x166xbf16>, vector<32x166xf32> -> vector<32x166xf32>
    %190 = arith.addf %185, %189 : vector<32x166xf32>
    %c0_167 = arith.constant 0 : index
    %c0_168 = arith.constant 0 : index
    %191 = vector.load %arg7[%c0_167, %c0_168] : memref<32x1xf32, #tpu.memory_space<vmem>>, vector<32x1xf32>
    %192 = vector.broadcast %191 : vector<32x1xf32> to vector<32x166xf32>
    %193 = arith.addf %190, %192 : vector<32x166xf32>
    %194 = arith.truncf %193 : vector<32x166xf32> to vector<32x166xbf16>
    %c0_169 = arith.constant 0 : index
    %c0_170 = arith.constant 0 : index
    %195 = vector.load %arg17[%c0_169, %c0_170] : memref<32x166xbf16, #tpu.memory_space<vmem>>, vector<32x166xbf16>
    tpu.vector_store %arg17[%c0_169, %c0_170], %194 {strides = array<i32>} : memref<32x166xbf16, #tpu.memory_space<vmem>>, vector<32x166xbf16>,
    %cst_171 = arith.constant 0.000000e+00 : f32
    %196 = vector.broadcast %cst_171 : f32 to vector<32x136xf32>
    %c0_172 = arith.constant 0 : index
    %c0_173 = arith.constant 0 : index
    %c0_174 = arith.constant 0 : index
    %197 = vector.load %arg8[%c0_172, %c0_173, %c0_174] : memref<9x32x32xbf16, #tpu.memory_space<vmem>>, vector<1x32x32xbf16>
    %198 = vector.shape_cast %197 : vector<1x32x32xbf16> to vector<32x32xbf16>
    %c0_175 = arith.constant 0 : index
    %c0_176 = arith.constant 0 : index
    %199 = vector.load %arg17[%c0_175, %c0_176] : memref<32x166xbf16, #tpu.memory_space<vmem>>, vector<32x136xbf16>
    %cst_177 = arith.constant dense<0.000000e+00> : vector<32x136xf32>
    %200 = tpu.matmul %198, %199, %cst_177 {dimension_numbers = #tpu.dot_dimension_numbers<[1], [0], [0], [1], [0, 0, 1, 1], [], []>} : vector<32x32xbf16>, vector<32x136xbf16>, vector<32x136xf32> -> vector<32x136xf32>
    %201 = arith.addf %196, %200 : vector<32x136xf32>
    %c1_178 = arith.constant 1 : index
    %c0_179 = arith.constant 0 : index
    %c0_180 = arith.constant 0 : index
    %202 = vector.load %arg8[%c1_178, %c0_179, %c0_180] : memref<9x32x32xbf16, #tpu.memory_space<vmem>>, vector<1x32x32xbf16>
    %203 = vector.shape_cast %202 : vector<1x32x32xbf16> to vector<32x32xbf16>
    %c0_181 = arith.constant 0 : index
    %c1_182 = arith.constant 1 : index
    %204 = vector.load %arg17[%c0_181, %c1_182] : memref<32x166xbf16, #tpu.memory_space<vmem>>, vector<32x136xbf16>
    %cst_183 = arith.constant dense<0.000000e+00> : vector<32x136xf32>
    %205 = tpu.matmul %203, %204, %cst_183 {dimension_numbers = #tpu.dot_dimension_numbers<[1], [0], [0], [1], [0, 0, 1, 1], [], []>} : vector<32x32xbf16>, vector<32x136xbf16>, vector<32x136xf32> -> vector<32x136xf32>
    %206 = arith.addf %201, %205 : vector<32x136xf32>
    %c2_184 = arith.constant 2 : index
    %c0_185 = arith.constant 0 : index
    %c0_186 = arith.constant 0 : index
    %207 = vector.load %arg8[%c2_184, %c0_185, %c0_186] : memref<9x32x32xbf16, #tpu.memory_space<vmem>>, vector<1x32x32xbf16>
    %208 = vector.shape_cast %207 : vector<1x32x32xbf16> to vector<32x32xbf16>
    %c0_187 = arith.constant 0 : index
    %c2_188 = arith.constant 2 : index
    %209 = vector.load %arg17[%c0_187, %c2_188] : memref<32x166xbf16, #tpu.memory_space<vmem>>, vector<32x136xbf16>
    %cst_189 = arith.constant dense<0.000000e+00> : vector<32x136xf32>
    %210 = tpu.matmul %208, %209, %cst_189 {dimension_numbers = #tpu.dot_dimension_numbers<[1], [0], [0], [1], [0, 0, 1, 1], [], []>} : vector<32x32xbf16>, vector<32x136xbf16>, vector<32x136xf32> -> vector<32x136xf32>
    %211 = arith.addf %206, %210 : vector<32x136xf32>
    %c3_190 = arith.constant 3 : index
    %c0_191 = arith.constant 0 : index
    %c0_192 = arith.constant 0 : index
    %212 = vector.load %arg8[%c3_190, %c0_191, %c0_192] : memref<9x32x32xbf16, #tpu.memory_space<vmem>>, vector<1x32x32xbf16>
    %213 = vector.shape_cast %212 : vector<1x32x32xbf16> to vector<32x32xbf16>
    %c0_193 = arith.constant 0 : index
    %c14_194 = arith.constant 14 : index
    %214 = vector.load %arg17[%c0_193, %c14_194] : memref<32x166xbf16, #tpu.memory_space<vmem>>, vector<32x136xbf16>
    %cst_195 = arith.constant dense<0.000000e+00> : vector<32x136xf32>
    %215 = tpu.matmul %213, %214, %cst_195 {dimension_numbers = #tpu.dot_dimension_numbers<[1], [0], [0], [1], [0, 0, 1, 1], [], []>} : vector<32x32xbf16>, vector<32x136xbf16>, vector<32x136xf32> -> vector<32x136xf32>
    %216 = arith.addf %211, %215 : vector<32x136xf32>
    %c4_196 = arith.constant 4 : index
    %c0_197 = arith.constant 0 : index
    %c0_198 = arith.constant 0 : index
    %217 = vector.load %arg8[%c4_196, %c0_197, %c0_198] : memref<9x32x32xbf16, #tpu.memory_space<vmem>>, vector<1x32x32xbf16>
    %218 = vector.shape_cast %217 : vector<1x32x32xbf16> to vector<32x32xbf16>
    %c0_199 = arith.constant 0 : index
    %c15_200 = arith.constant 15 : index
    %219 = vector.load %arg17[%c0_199, %c15_200] : memref<32x166xbf16, #tpu.memory_space<vmem>>, vector<32x136xbf16>
    %cst_201 = arith.constant dense<0.000000e+00> : vector<32x136xf32>
    %220 = tpu.matmul %218, %219, %cst_201 {dimension_numbers = #tpu.dot_dimension_numbers<[1], [0], [0], [1], [0, 0, 1, 1], [], []>} : vector<32x32xbf16>, vector<32x136xbf16>, vector<32x136xf32> -> vector<32x136xf32>
    %221 = arith.addf %216, %220 : vector<32x136xf32>
    %c5_202 = arith.constant 5 : index
    %c0_203 = arith.constant 0 : index
    %c0_204 = arith.constant 0 : index
    %222 = vector.load %arg8[%c5_202, %c0_203, %c0_204] : memref<9x32x32xbf16, #tpu.memory_space<vmem>>, vector<1x32x32xbf16>
    %223 = vector.shape_cast %222 : vector<1x32x32xbf16> to vector<32x32xbf16>
    %c0_205 = arith.constant 0 : index
    %c16_206 = arith.constant 16 : index
    %224 = vector.load %arg17[%c0_205, %c16_206] : memref<32x166xbf16, #tpu.memory_space<vmem>>, vector<32x136xbf16>
    %cst_207 = arith.constant dense<0.000000e+00> : vector<32x136xf32>
    %225 = tpu.matmul %223, %224, %cst_207 {dimension_numbers = #tpu.dot_dimension_numbers<[1], [0], [0], [1], [0, 0, 1, 1], [], []>} : vector<32x32xbf16>, vector<32x136xbf16>, vector<32x136xf32> -> vector<32x136xf32>
    %226 = arith.addf %221, %225 : vector<32x136xf32>
    %c6_208 = arith.constant 6 : index
    %c0_209 = arith.constant 0 : index
    %c0_210 = arith.constant 0 : index
    %227 = vector.load %arg8[%c6_208, %c0_209, %c0_210] : memref<9x32x32xbf16, #tpu.memory_space<vmem>>, vector<1x32x32xbf16>
    %228 = vector.shape_cast %227 : vector<1x32x32xbf16> to vector<32x32xbf16>
    %c0_211 = arith.constant 0 : index
    %c28_212 = arith.constant 28 : index
    %229 = vector.load %arg17[%c0_211, %c28_212] : memref<32x166xbf16, #tpu.memory_space<vmem>>, vector<32x136xbf16>
    %cst_213 = arith.constant dense<0.000000e+00> : vector<32x136xf32>
    %230 = tpu.matmul %228, %229, %cst_213 {dimension_numbers = #tpu.dot_dimension_numbers<[1], [0], [0], [1], [0, 0, 1, 1], [], []>} : vector<32x32xbf16>, vector<32x136xbf16>, vector<32x136xf32> -> vector<32x136xf32>
    %231 = arith.addf %226, %230 : vector<32x136xf32>
    %c7_214 = arith.constant 7 : index
    %c0_215 = arith.constant 0 : index
    %c0_216 = arith.constant 0 : index
    %232 = vector.load %arg8[%c7_214, %c0_215, %c0_216] : memref<9x32x32xbf16, #tpu.memory_space<vmem>>, vector<1x32x32xbf16>
    %233 = vector.shape_cast %232 : vector<1x32x32xbf16> to vector<32x32xbf16>
    %c0_217 = arith.constant 0 : index
    %c29_218 = arith.constant 29 : index
    %234 = vector.load %arg17[%c0_217, %c29_218] : memref<32x166xbf16, #tpu.memory_space<vmem>>, vector<32x136xbf16>
    %cst_219 = arith.constant dense<0.000000e+00> : vector<32x136xf32>
    %235 = tpu.matmul %233, %234, %cst_219 {dimension_numbers = #tpu.dot_dimension_numbers<[1], [0], [0], [1], [0, 0, 1, 1], [], []>} : vector<32x32xbf16>, vector<32x136xbf16>, vector<32x136xf32> -> vector<32x136xf32>
    %236 = arith.addf %231, %235 : vector<32x136xf32>
    %c8_220 = arith.constant 8 : index
    %c0_221 = arith.constant 0 : index
    %c0_222 = arith.constant 0 : index
    %237 = vector.load %arg8[%c8_220, %c0_221, %c0_222] : memref<9x32x32xbf16, #tpu.memory_space<vmem>>, vector<1x32x32xbf16>
    %238 = vector.shape_cast %237 : vector<1x32x32xbf16> to vector<32x32xbf16>
    %c0_223 = arith.constant 0 : index
    %c30_224 = arith.constant 30 : index
    %239 = vector.load %arg17[%c0_223, %c30_224] : memref<32x166xbf16, #tpu.memory_space<vmem>>, vector<32x136xbf16>
    %cst_225 = arith.constant dense<0.000000e+00> : vector<32x136xf32>
    %240 = tpu.matmul %238, %239, %cst_225 {dimension_numbers = #tpu.dot_dimension_numbers<[1], [0], [0], [1], [0, 0, 1, 1], [], []>} : vector<32x32xbf16>, vector<32x136xbf16>, vector<32x136xf32> -> vector<32x136xf32>
    %241 = arith.addf %236, %240 : vector<32x136xf32>
    %c0_226 = arith.constant 0 : index
    %c0_227 = arith.constant 0 : index
    %242 = vector.load %arg9[%c0_226, %c0_227] : memref<32x1xf32, #tpu.memory_space<vmem>>, vector<32x1xf32>
    %243 = vector.broadcast %242 : vector<32x1xf32> to vector<32x136xf32>
    %244 = arith.addf %241, %243 : vector<32x136xf32>
    %cst_228 = arith.constant 0.000000e+00 : f32
    %245 = vector.broadcast %cst_228 : f32 to vector<32x136xf32>
    %246 = arith.maximumf %244, %245 : vector<32x136xf32>
    %247 = arith.truncf %246 : vector<32x136xf32> to vector<32x136xbf16>
    %c0_229 = arith.constant 0 : index
    %c0_230 = arith.constant 0 : index
    %248 = vector.load %arg18[%c0_229, %c0_230] : memref<32x136xbf16, #tpu.memory_space<vmem>>, vector<32x136xbf16>
    tpu.vector_store %arg18[%c0_229, %c0_230], %247 {strides = array<i32>} : memref<32x136xbf16, #tpu.memory_space<vmem>>, vector<32x136xbf16>,
    %c0_231 = arith.constant 0 : index
    %c0_232 = arith.constant 0 : index
    %249 = vector.load %arg18[%c0_231, %c0_232] : memref<32x136xbf16, #tpu.memory_space<vmem>>, vector<32x121xbf16>
    %c0_233 = arith.constant 0 : index
    %c1_234 = arith.constant 1 : index
    %250 = vector.load %arg18[%c0_233, %c1_234] : memref<32x136xbf16, #tpu.memory_space<vmem>>, vector<32x121xbf16>
    %251 = arith.maximumf %249, %250 : vector<32x121xbf16>
    %c0_235 = arith.constant 0 : index
    %c14_236 = arith.constant 14 : index
    %252 = vector.load %arg18[%c0_235, %c14_236] : memref<32x136xbf16, #tpu.memory_space<vmem>>, vector<32x121xbf16>
    %c0_237 = arith.constant 0 : index
    %c15_238 = arith.constant 15 : index
    %253 = vector.load %arg18[%c0_237, %c15_238] : memref<32x136xbf16, #tpu.memory_space<vmem>>, vector<32x121xbf16>
    %254 = arith.maximumf %252, %253 : vector<32x121xbf16>
    %255 = arith.maximumf %251, %254 : vector<32x121xbf16>
    %c0_239 = arith.constant 0 : index
    %c0_240 = arith.constant 0 : index
    %256 = vector.load %arg11[%c0_239, %c0_240] : memref<121x25xbf16, #tpu.memory_space<vmem>>, vector<121x25xbf16>
    %cst_241 = arith.constant dense<0.000000e+00> : vector<32x25xf32>
    %257 = tpu.matmul %255, %256, %cst_241 {dimension_numbers = #tpu.dot_dimension_numbers<[1], [0], [0], [1], [0, 0, 1, 1], [], []>} : vector<32x121xbf16>, vector<121x25xbf16>, vector<32x25xf32> -> vector<32x25xf32>
    %c0_242 = arith.constant 0 : index
    %c0_243 = arith.constant 0 : index
    %c0_244 = arith.constant 0 : index
    %258 = vector.load %arg13[%c0_242, %c0_243, %c0_244] : memref<1x32x25xf32, #tpu.memory_space<vmem>>, vector<1x32x25xf32>
    %259 = vector.shape_cast %258 : vector<1x32x25xf32> to vector<32x25xf32>
    %260 = vector.shape_cast %257 : vector<32x25xf32> to vector<1x32x25xf32>
    tpu.vector_store %arg13[%c0_242, %c0_243, %c0_244], %260 {strides = array<i32>} : memref<1x32x25xf32, #tpu.memory_space<vmem>>, vector<1x32x25xf32>,
    return
  }
  func.func @transform_0(%arg0: i32) -> (i32, i32, i32) {
    %c0_i32 = arith.constant 0 : i32
    %c0_i32_0 = arith.constant 0 : i32
    %c0_i32_1 = arith.constant 0 : i32
    return %arg0, %c0_i32, %c0_i32_0 : i32, i32, i32
  }
  func.func @transform_1(%arg0: i32) -> (i32, i32, i32) {
    %c0_i32 = arith.constant 0 : i32
    %c0_i32_0 = arith.constant 0 : i32
    %c0_i32_1 = arith.constant 0 : i32
    %c0_i32_2 = arith.constant 0 : i32
    return %c0_i32, %c0_i32_0, %c0_i32_1 : i32, i32, i32
  }
  func.func @transform_2(%arg0: i32) -> (i32, i32) {
    %c0_i32 = arith.constant 0 : i32
    %c0_i32_0 = arith.constant 0 : i32
    %c0_i32_1 = arith.constant 0 : i32
    return %c0_i32, %c0_i32_0 : i32, i32
  }
  func.func @transform_3(%arg0: i32) -> (i32, i32, i32) {
    %c0_i32 = arith.constant 0 : i32
    %c0_i32_0 = arith.constant 0 : i32
    %c0_i32_1 = arith.constant 0 : i32
    %c0_i32_2 = arith.constant 0 : i32
    return %c0_i32, %c0_i32_0, %c0_i32_1 : i32, i32, i32
  }
  func.func @transform_4(%arg0: i32) -> (i32, i32) {
    %c0_i32 = arith.constant 0 : i32
    %c0_i32_0 = arith.constant 0 : i32
    %c0_i32_1 = arith.constant 0 : i32
    return %c0_i32, %c0_i32_0 : i32, i32
  }
  func.func @transform_5(%arg0: i32) -> (i32, i32, i32) {
    %c0_i32 = arith.constant 0 : i32
    %c0_i32_0 = arith.constant 0 : i32
    %c0_i32_1 = arith.constant 0 : i32
    %c0_i32_2 = arith.constant 0 : i32
    return %c0_i32, %c0_i32_0, %c0_i32_1 : i32, i32, i32
  }
  func.func @transform_6(%arg0: i32) -> (i32, i32) {
    %c0_i32 = arith.constant 0 : i32
    %c0_i32_0 = arith.constant 0 : i32
    %c0_i32_1 = arith.constant 0 : i32
    return %c0_i32, %c0_i32_0 : i32, i32
  }
  func.func @transform_7(%arg0: i32) -> (i32, i32, i32) {
    %c0_i32 = arith.constant 0 : i32
    %c0_i32_0 = arith.constant 0 : i32
    %c0_i32_1 = arith.constant 0 : i32
    %c0_i32_2 = arith.constant 0 : i32
    return %c0_i32, %c0_i32_0, %c0_i32_1 : i32, i32, i32
  }
  func.func @transform_8(%arg0: i32) -> (i32, i32) {
    %c0_i32 = arith.constant 0 : i32
    %c0_i32_0 = arith.constant 0 : i32
    %c0_i32_1 = arith.constant 0 : i32
    return %c0_i32, %c0_i32_0 : i32, i32
  }
  func.func @transform_9(%arg0: i32) -> (i32, i32) {
    %c0_i32 = arith.constant 0 : i32
    %c0_i32_0 = arith.constant 0 : i32
    %c0_i32_1 = arith.constant 0 : i32
    return %c0_i32, %c0_i32_0 : i32, i32
  }
  func.func @transform_10(%arg0: i32) -> (i32, i32) {
    %c0_i32 = arith.constant 0 : i32
    %c0_i32_0 = arith.constant 0 : i32
    %c0_i32_1 = arith.constant 0 : i32
    return %c0_i32, %c0_i32_0 : i32, i32
  }
  func.func @transform_11(%arg0: i32) -> (i32, i32) {
    %c0_i32 = arith.constant 0 : i32
    %c0_i32_0 = arith.constant 0 : i32
    %c0_i32_1 = arith.constant 0 : i32
    return %c0_i32, %c0_i32_0 : i32, i32
  }
  func.func @transform_12(%arg0: i32) -> (i32, i32, i32) {
    %c0_i32 = arith.constant 0 : i32
    %c0_i32_0 = arith.constant 0 : i32
    %c0_i32_1 = arith.constant 0 : i32
    return %arg0, %c0_i32, %c0_i32_0 : i32, i32, i32
  }
}

module attributes {stable_mosaic.version = 11 : i64} {
  func.func @_head_kernel(%arg0: i32, %arg1: memref<8x800xf32, #tpu.memory_space<vmem>>, %arg2: memref<800x128xbf16, #tpu.memory_space<vmem>>, %arg3: memref<1x128xf32, #tpu.memory_space<vmem>>, %arg4: memref<128x128xbf16, #tpu.memory_space<vmem>>, %arg5: memref<1x128xf32, #tpu.memory_space<vmem>>, %arg6: memref<8x128xf32, #tpu.memory_space<vmem>>) attributes {dimension_semantics = [#tpu.dimension_semantics<arbitrary>], iteration_bounds = array<i64: 1>, scalar_prefetch = 0 : i64, scratch_operands = 0 : i64, tpu.core_type = #tpu.core_type<tc>, window_params = [{pipeline_mode = #tpu.pipeline_mode<synchronous>, transform_indices = @transform_0, window_bounds = array<i64: 8, 800>}, {pipeline_mode = #tpu.pipeline_mode<synchronous>, transform_indices = @transform_1, window_bounds = array<i64: 800, 128>}, {pipeline_mode = #tpu.pipeline_mode<synchronous>, transform_indices = @transform_2, window_bounds = array<i64: 1, 128>}, {pipeline_mode = #tpu.pipeline_mode<synchronous>, transform_indices = @transform_3, window_bounds = array<i64: 128, 128>}, {pipeline_mode = #tpu.pipeline_mode<synchronous>, transform_indices = @transform_4, window_bounds = array<i64: 1, 128>}, {pipeline_mode = #tpu.pipeline_mode<synchronous>, transform_indices = @transform_5, window_bounds = array<i64: 8, 128>}]} {
    %c0 = arith.constant 0 : index
    %c0_0 = arith.constant 0 : index
    %0 = vector.load %arg1[%c0, %c0_0] : memref<8x800xf32, #tpu.memory_space<vmem>>, vector<8x800xf32>
    %1 = arith.truncf %0 : vector<8x800xf32> to vector<8x800xbf16>
    %c0_1 = arith.constant 0 : index
    %c0_2 = arith.constant 0 : index
    %2 = vector.load %arg2[%c0_1, %c0_2] : memref<800x128xbf16, #tpu.memory_space<vmem>>, vector<800x128xbf16>
    %cst = arith.constant dense<0.000000e+00> : vector<8x128xf32>
    %3 = tpu.matmul %1, %2, %cst {dimension_numbers = #tpu.dot_dimension_numbers<[1], [0], [0], [1], [0, 0, 1, 1], [], []>} : vector<8x800xbf16>, vector<800x128xbf16>, vector<8x128xf32> -> vector<8x128xf32>
    %c0_3 = arith.constant 0 : index
    %c0_4 = arith.constant 0 : index
    %4 = vector.load %arg3[%c0_3, %c0_4] : memref<1x128xf32, #tpu.memory_space<vmem>>, vector<1x128xf32>
    %5 = vector.broadcast %4 : vector<1x128xf32> to vector<8x128xf32>
    %6 = arith.addf %3, %5 : vector<8x128xf32>
    %cst_5 = arith.constant 0.000000e+00 : f32
    %7 = vector.broadcast %cst_5 : f32 to vector<8x128xf32>
    %8 = arith.maximumf %6, %7 : vector<8x128xf32>
    %9 = arith.truncf %8 : vector<8x128xf32> to vector<8x128xbf16>
    %c0_6 = arith.constant 0 : index
    %c0_7 = arith.constant 0 : index
    %10 = vector.load %arg4[%c0_6, %c0_7] : memref<128x128xbf16, #tpu.memory_space<vmem>>, vector<128x128xbf16>
    %cst_8 = arith.constant dense<0.000000e+00> : vector<8x128xf32>
    %11 = tpu.matmul %9, %10, %cst_8 {dimension_numbers = #tpu.dot_dimension_numbers<[1], [0], [0], [1], [0, 0, 1, 1], [], []>} : vector<8x128xbf16>, vector<128x128xbf16>, vector<8x128xf32> -> vector<8x128xf32>
    %c0_9 = arith.constant 0 : index
    %c0_10 = arith.constant 0 : index
    %12 = vector.load %arg5[%c0_9, %c0_10] : memref<1x128xf32, #tpu.memory_space<vmem>>, vector<1x128xf32>
    %13 = vector.broadcast %12 : vector<1x128xf32> to vector<8x128xf32>
    %14 = arith.addf %11, %13 : vector<8x128xf32>
    %cst_11 = arith.constant dense<0xFF800000> : vector<8xf32>
    %15 = vector.multi_reduction <maximumf>, %14, %cst_11 [1] : vector<8x128xf32> to vector<8xf32>
    %16 = vector.shape_cast %15 : vector<8xf32> to vector<8x1xf32>
    %17 = vector.broadcast %16 : vector<8x1xf32> to vector<8x128xf32>
    %18 = arith.subf %14, %17 : vector<8x128xf32>
    %19 = math.exp %18 : vector<8x128xf32>
    %cst_12 = arith.constant dense<0.000000e+00> : vector<8xf32>
    %20 = vector.multi_reduction <add>, %19, %cst_12 [1] : vector<8x128xf32> to vector<8xf32>
    %21 = vector.shape_cast %20 : vector<8xf32> to vector<8x1xf32>
    %22 = math.log %21 : vector<8x1xf32>
    %23 = vector.broadcast %22 : vector<8x1xf32> to vector<8x128xf32>
    %24 = arith.subf %18, %23 : vector<8x128xf32>
    %c0_13 = arith.constant 0 : index
    %c0_14 = arith.constant 0 : index
    %25 = vector.load %arg6[%c0_13, %c0_14] : memref<8x128xf32, #tpu.memory_space<vmem>>, vector<8x128xf32>
    tpu.vector_store %arg6[%c0_13, %c0_14], %24 {strides = array<i32>} : memref<8x128xf32, #tpu.memory_space<vmem>>, vector<8x128xf32>,
    return
  }
  func.func @transform_0(%arg0: i32) -> (i32, i32) {
    %c0_i32 = arith.constant 0 : i32
    %c0_i32_0 = arith.constant 0 : i32
    %c0_i32_1 = arith.constant 0 : i32
    return %c0_i32, %c0_i32_0 : i32, i32
  }
  func.func @transform_1(%arg0: i32) -> (i32, i32) {
    %c0_i32 = arith.constant 0 : i32
    %c0_i32_0 = arith.constant 0 : i32
    %c0_i32_1 = arith.constant 0 : i32
    return %c0_i32, %c0_i32_0 : i32, i32
  }
  func.func @transform_2(%arg0: i32) -> (i32, i32) {
    %c0_i32 = arith.constant 0 : i32
    %c0_i32_0 = arith.constant 0 : i32
    %c0_i32_1 = arith.constant 0 : i32
    return %c0_i32, %c0_i32_0 : i32, i32
  }
  func.func @transform_3(%arg0: i32) -> (i32, i32) {
    %c0_i32 = arith.constant 0 : i32
    %c0_i32_0 = arith.constant 0 : i32
    %c0_i32_1 = arith.constant 0 : i32
    return %c0_i32, %c0_i32_0 : i32, i32
  }
  func.func @transform_4(%arg0: i32) -> (i32, i32) {
    %c0_i32 = arith.constant 0 : i32
    %c0_i32_0 = arith.constant 0 : i32
    %c0_i32_1 = arith.constant 0 : i32
    return %c0_i32, %c0_i32_0 : i32, i32
  }
  func.func @transform_5(%arg0: i32) -> (i32, i32) {
    %c0_i32 = arith.constant 0 : i32
    %c0_i32_0 = arith.constant 0 : i32
    %c0_i32_1 = arith.constant 0 : i32
    return %c0_i32, %c0_i32_0 : i32, i32
  }
}

</mosaic_0001>

<llo_original>
// kernel: forward.3
$region0: #{forward.3}
  #allocation0 [shape = 'u32[]', space=smem, size = 0x4, offset = 0x4, fixed_abs, tag = 'smem constant byte address 0x4 - core index']
  #allocation1 [shape = 'u32[72,128]{1,0:T(1,128)}', space=vmem, size = 0x9000, scoped, tag = 'internal scratch']
  %s0 = inlined_call_operand.vmem [shape: f32[8,800], index: 0, kind: input, shape index: {}]
  %s1 = inlined_call_operand.vmem [shape: bf16[800,128], index: 1, kind: input, shape index: {}]
  %s2 = inlined_call_operand.vmem [shape: f32[1,128], index: 2, kind: input, shape index: {}]
  %s3 = inlined_call_operand.vmem [shape: bf16[128,128], index: 3, kind: input, shape index: {}]
  %s4 = inlined_call_operand.vmem [shape: f32[1,128], index: 4, kind: input, shape index: {}]
  %s5 = inlined_call_operand.vmem [shape: f32[8,128], index: 5, kind: output, shape index: {}]
  %s6 = sld [smem:[#allocation0]]
  $region30: #{forward.3} parent=0
    _
  %s8 = ssub.s32 1, %s6
  %s9 = scalar_select 0, %s8, %s6
  // Predicated region
  $region2: #{forward.3} parent=0 // pred_check
    _
  $region3: #{forward.3} parent=0 // pred_check_branch
    %11 = sbr.rel (0) target = $region5
  $region4: #{forward.3} parent=0 // pred_region
    _
  $region5: #{forward.3} parent=0 // pred_fallthru
    _
  // Predicated region
  $region6: #{forward.3} parent=0 // pred_check
    _
  $region7: #{forward.3} parent=0 // pred_check_branch
    %13 = sbr.rel (0) target = $region9
  $region8: #{forward.3} parent=0 // pred_region
    _
  $region9: #{forward.3} parent=0 // pred_fallthru
    _
  // Predicated region
  $region10: #{forward.3} parent=0 // pred_check
    _
  $region11: #{forward.3} parent=0 // pred_check_branch
    %15 = sbr.rel (0) target = $region13
  $region12: #{forward.3} parent=0 // pred_region
    _
  $region13: #{forward.3} parent=0 // pred_fallthru
    _
  // Predicated region
  $region14: #{forward.3} parent=0 // pred_check
    _
  $region15: #{forward.3} parent=0 // pred_check_branch
    %17 = sbr.rel (0) target = $region17
  $region16: #{forward.3} parent=0 // pred_region
    _
  $region17: #{forward.3} parent=0 // pred_fallthru
    _
  // Predicated region
  $region18: #{forward.3} parent=0 // pred_check
    _
  $region19: #{forward.3} parent=0 // pred_check_branch
    %19 = sbr.rel (0) target = $region21
  $region20: #{forward.3} parent=0 // pred_region
    _
  $region21: #{forward.3} parent=0 // pred_fallthru
    _
  %v21 = vld [vmem:[%s0] sm:$0xff]
  %v22 = vld [vmem:[%s0 + $0x8] sm:$0xff]
  %v23 = vld [vmem:[%s0 + $0x10] sm:$0xff]
  %v24 = vld [vmem:[%s0 + $0x18] sm:$0xff]
  %v25 = vld [vmem:[%s0 + $0x20] sm:$0xff]
  %v26 = vld [vmem:[%s0 + $0x28] sm:$0xff]
  %v27 = vld [vmem:[%s0 + $0x30] sm:$0xff]
  %v28 = vpack.c.bf16 %v21, %v21
  %v29 = vpack.c.bf16 %v22, %v22
  %v30 = vpack.c.bf16 %v23, %v23
  %v31 = vpack.c.bf16 %v24, %v24
  %v32 = vpack.c.bf16 %v25, %v25
  %v33 = vpack.c.bf16 %v26, %v26
  %v34 = vpack.c.bf16 %v27, %v27
  %v35 = vld [vmem:[%s1] sm:$0xf]
  %v36 = vld [vmem:[%s1 + $0x4] sm:$0xf]
  %v37 = vld [vmem:[%s1 + $0x8] sm:$0xf]
  %v38 = vld [vmem:[%s1 + $0xc] sm:$0xf]
  %v39 = vld [vmem:[%s1 + $0x10] sm:$0xf]
  %v40 = vld [vmem:[%s1 + $0x14] sm:$0xf]
  %v41 = vld [vmem:[%s1 + $0x18] sm:$0xf]
  %v42 = vld [vmem:[%s1 + $0x1c] sm:$0xf]
  %v43 = vld [vmem:[%s1 + $0x20] sm:$0xf]
  %v44 = vld [vmem:[%s1 + $0x24] sm:$0xf]
  %v45 = vld [vmem:[%s1 + $0x28] sm:$0xf]
  %v46 = vld [vmem:[%s1 + $0x2c] sm:$0xf]
  %v47 = vld [vmem:[%s1 + $0x30] sm:$0xf]
  %v48 = vld [vmem:[%s1 + $0x34] sm:$0xf]
  %v49 = vld [vmem:[%s1 + $0x38] sm:$0xf]
  %v50 = vld [vmem:[%s1 + $0x3c] sm:$0xf]
  %v51 = vld [vmem:[%s1 + $0x40] sm:$0xf]
  %v52 = vld [vmem:[%s1 + $0x44] sm:$0xf]
  %v53 = vld [vmem:[%s1 + $0x48] sm:$0xf]
  %v54 = vld [vmem:[%s1 + $0x4c] sm:$0xf]
  %v55 = vld [vmem:[%s1 + $0x50] sm:$0xf]
  %v56 = vld [vmem:[%s1 + $0x54] sm:$0xf]
  %v57 = vld [vmem:[%s1 + $0x58] sm:$0xf]
  %v58 = vld [vmem:[%s1 + $0x5c] sm:$0xf]
  %v59 = vld [vmem:[%s1 + $0x60] sm:$0xf]
  %v60 = vld [vmem:[%s1 + $0x64] sm:$0xf]
  %v61 = vld [vmem:[%s1 + $0x68] sm:$0xf]
  %v62 = vld [vmem:[%s1 + $0x6c] sm:$0xf]
  %v63 = vld [vmem:[%s1 + $0x70] sm:$0xf]
  %v64 = vld [vmem:[%s1 + $0x74] sm:$0xf]
  %v65 = vld [vmem:[%s1 + $0x78] sm:$0xf]
  %v66 = vld [vmem:[%s1 + $0x7c] sm:$0xf]
  %v67 = vld [vmem:[%s1 + $0x80] sm:$0xf]
  %v68 = vld [vmem:[%s1 + $0x84] sm:$0xf]
  %v69 = vld [vmem:[%s1 + $0x88] sm:$0xf]
  %v70 = vld [vmem:[%s1 + $0x8c] sm:$0xf]
  %v71 = vld [vmem:[%s1 + $0x90] sm:$0xf]
  %v72 = vld [vmem:[%s1 + $0x94] sm:$0xf]
  %v73 = vld [vmem:[%s1 + $0x98] sm:$0xf]
  %v74 = vld [vmem:[%s1 + $0x9c] sm:$0xf]
  %v75 = vld [vmem:[%s1 + $0xa0] sm:$0xf]
  %v76 = vld [vmem:[%s1 + $0xa4] sm:$0xf]
  %v77 = vld [vmem:[%s1 + $0xa8] sm:$0xf]
  %v78 = vld [vmem:[%s1 + $0xac] sm:$0xf]
  %v79 = vld [vmem:[%s1 + $0xb0] sm:$0xf]
  %v80 = vld [vmem:[%s1 + $0xb4] sm:$0xf]
  %v81 = vld [vmem:[%s1 + $0xb8] sm:$0xf]
  %v82 = vld [vmem:[%s1 + $0xbc] sm:$0xf]
  %v83 = vld [vmem:[%s1 + $0xc0] sm:$0xf]
  %v84 = vld [vmem:[%s1 + $0xc4] sm:$0xf]
  %v85 = vld [vmem:[%s1 + $0xc8] sm:$0xf]
  %v86 = vld [vmem:[%s1 + $0xcc] sm:$0xf]
  %v87 = vld [vmem:[%s1 + $0xd0] sm:$0xf]
  %v88 = vld [vmem:[%s1 + $0xd4] sm:$0xf]
  %v89 = vld [vmem:[%s1 + $0xd8] sm:$0xf]
  %v90 = vld [vmem:[%s1 + $0xdc] sm:$0xf]
  %v91 = vld [vmem:[%s1 + $0xe0] sm:$0xf]
  %v92 = vld [vmem:[%s1 + $0xe4] sm:$0xf]
  %v93 = vld [vmem:[%s1 + $0xe8] sm:$0xf]
  %v94 = vld [vmem:[%s1 + $0xec] sm:$0xf]
  %v95 = vld [vmem:[%s1 + $0xf0] sm:$0xf]
  %v96 = vld [vmem:[%s1 + $0xf4] sm:$0xf]
  %v97 = vld [vmem:[%s1 + $0xf8] sm:$0xf]
  %v98 = vld [vmem:[%s1 + $0xfc] sm:$0xf]
  %v99 = vld [vmem:[%s1 + $0x100] sm:$0xf]
  %v100 = vld [vmem:[%s1 + $0x104] sm:$0xf]
  %v101 = vld [vmem:[%s1 + $0x108] sm:$0xf]
  %v102 = vld [vmem:[%s1 + $0x10c] sm:$0xf]
  %v103 = vld [vmem:[%s1 + $0x110] sm:$0xf]
  %v104 = vld [vmem:[%s1 + $0x114] sm:$0xf]
  %v105 = vld [vmem:[%s1 + $0x118] sm:$0xf]
  %v106 = vld [vmem:[%s1 + $0x11c] sm:$0xf]
  %v107 = vld [vmem:[%s1 + $0x120] sm:$0xf]
  %v108 = vld [vmem:[%s1 + $0x124] sm:$0xf]
  %v109 = vld [vmem:[%s1 + $0x128] sm:$0xf]
  %v110 = vld [vmem:[%s1 + $0x12c] sm:$0xf]
  %v111 = vld [vmem:[%s1 + $0x130] sm:$0xf]
  %v112 = vld [vmem:[%s1 + $0x134] sm:$0xf]
  %v113 = vld [vmem:[%s1 + $0x138] sm:$0xf]
  %v114 = vld [vmem:[%s1 + $0x13c] sm:$0xf]
  %v115 = vld [vmem:[%s1 + $0x140] sm:$0xf]
  %v116 = vld [vmem:[%s1 + $0x144] sm:$0xf]
  %v117 = vld [vmem:[%s1 + $0x148] sm:$0xf]
  %v118 = vld [vmem:[%s1 + $0x14c] sm:$0xf]
  %v119 = vld [vmem:[%s1 + $0x150] sm:$0xf]
  %v120 = vld [vmem:[%s1 + $0x154] sm:$0xf]
  %v121 = vld [vmem:[%s1 + $0x158] sm:$0xf]
  %v122 = vld [vmem:[%s1 + $0x15c] sm:$0xf]
  %v123 = vld [vmem:[%s1 + $0x160] sm:$0xf]
  %v124 = vld [vmem:[%s1 + $0x164] sm:$0xf]
  %v125 = vld [vmem:[%s1 + $0x168] sm:$0xf]
  %v126 = vld [vmem:[%s1 + $0x16c] sm:$0xf]
  %v127 = vld [vmem:[%s1 + $0x170] sm:$0xf]
  %v128 = vld [vmem:[%s1 + $0x174] sm:$0xf]
  %v129 = vld [vmem:[%s1 + $0x178] sm:$0xf]
  %v130 = vld [vmem:[%s1 + $0x17c] sm:$0xf]
  %v131 = vld [vmem:[%s1 + $0x180] sm:$0xf]
  %v132 = vld [vmem:[%s1 + $0x184] sm:$0xf]
  %v133 = vld [vmem:[%s1 + $0x188] sm:$0xf]
  %v134 = vld [vmem:[%s1 + $0x18c] sm:$0xf]
  %v135 = vld [vmem:[%s2] sm:$0x1]
  %v137 = vperm.slane %v135, 0
  %v239 = vunpack.c.l.b16 %v35
  %v240 = vunpack.c.l.b16 %v36
  %v241 = vunpack.c.l.b16 %v37
  %v242 = vunpack.c.l.b16 %v38
  %v243 = vunpack.c.l.b16 %v39
  %v244 = vunpack.c.l.b16 %v40
  %v245 = vunpack.c.l.b16 %v41
  %v246 = vunpack.c.l.b16 %v42
  %v247 = vunpack.c.l.b16 %v43
  %v248 = vunpack.c.l.b16 %v44
  %v249 = vunpack.c.l.b16 %v45
  %v250 = vunpack.c.l.b16 %v46
  %v251 = vunpack.c.l.b16 %v47
  %v252 = vunpack.c.l.b16 %v48
  %v253 = vunpack.c.l.b16 %v49
  %v254 = vunpack.c.l.b16 %v50
  %v255 = vunpack.c.l.b16 %v51
  %v256 = vunpack.c.l.b16 %v52
  %v257 = vunpack.c.l.b16 %v53
  %v258 = vunpack.c.l.b16 %v54
  %v259 = vunpack.c.l.b16 %v55
  %v260 = vunpack.c.l.b16 %v56
  %v261 = vunpack.c.l.b16 %v57
  %v262 = vunpack.c.l.b16 %v58
  %v263 = vunpack.c.l.b16 %v59
  %v264 = vunpack.c.l.b16 %v60
  %v265 = vunpack.c.l.b16 %v61
  %v266 = vunpack.c.l.b16 %v62
  %v267 = vunpack.c.l.b16 %v63
  %v268 = vunpack.c.l.b16 %v64
  %v269 = vunpack.c.l.b16 %v65
  %v270 = vunpack.c.l.b16 %v66
  %v271 = vunpack.c.l.b16 %v67
  %v272 = vunpack.c.l.b16 %v68
  %v273 = vunpack.c.l.b16 %v69
  %v274 = vunpack.c.l.b16 %v70
  %v275 = vunpack.c.l.b16 %v71
  %v276 = vunpack.c.l.b16 %v72
  %v277 = vunpack.c.l.b16 %v73
  %v278 = vunpack.c.l.b16 %v74
  %v279 = vunpack.c.l.b16 %v75
  %v280 = vunpack.c.l.b16 %v76
  %v281 = vunpack.c.l.b16 %v77
  %v282 = vunpack.c.l.b16 %v78
  %v283 = vunpack.c.l.b16 %v79
  %v284 = vunpack.c.l.b16 %v80
  %v285 = vunpack.c.l.b16 %v81
  %v286 = vunpack.c.l.b16 %v82
  %v287 = vunpack.c.l.b16 %v83
  %v288 = vunpack.c.l.b16 %v84
  %v289 = vunpack.c.l.b16 %v85
  %v290 = vunpack.c.l.b16 %v86
  %v291 = vunpack.c.l.b16 %v87
  %v292 = vunpack.c.l.b16 %v88
  %v293 = vunpack.c.l.b16 %v89
  %v294 = vunpack.c.l.b16 %v90
  %v295 = vunpack.c.l.b16 %v91
  %v296 = vunpack.c.l.b16 %v92
  %v297 = vunpack.c.l.b16 %v93
  %v298 = vunpack.c.l.b16 %v94
  %v299 = vunpack.c.l.b16 %v95
  %v300 = vunpack.c.l.b16 %v96
  %v301 = vunpack.c.l.b16 %v97
  %v302 = vunpack.c.l.b16 %v98
  %v303 = vunpack.c.l.b16 %v99
  %v304 = vunpack.c.l.b16 %v100
  %v305 = vunpack.c.l.b16 %v101
  %v306 = vunpack.c.l.b16 %v102
  %v307 = vunpack.c.l.b16 %v103
  %v308 = vunpack.c.l.b16 %v104
  %v309 = vunpack.c.l.b16 %v105
  %v310 = vunpack.c.l.b16 %v106
  %v311 = vunpack.c.l.b16 %v107
  %v312 = vunpack.c.l.b16 %v108
  %v313 = vunpack.c.l.b16 %v109
  %v314 = vunpack.c.l.b16 %v110
  %v315 = vunpack.c.l.b16 %v111
  %v316 = vunpack.c.l.b16 %v112
  %v317 = vunpack.c.l.b16 %v113
  %v318 = vunpack.c.l.b16 %v114
  %v319 = vunpack.c.l.b16 %v115
  %v320 = vunpack.c.l.b16 %v116
  %v321 = vunpack.c.l.b16 %v117
  %v322 = vunpack.c.l.b16 %v118
  %v323 = vunpack.c.l.b16 %v119
  %v324 = vunpack.c.l.b16 %v120
  %v325 = vunpack.c.l.b16 %v121
  %v326 = vunpack.c.l.b16 %v122
  %v327 = vunpack.c.l.b16 %v123
  %v328 = vunpack.c.l.b16 %v124
  %v329 = vunpack.c.l.b16 %v125
  %v330 = vunpack.c.l.b16 %v126
  %v331 = vunpack.c.l.b16 %v127
  %v332 = vunpack.c.l.b16 %v128
  %v333 = vunpack.c.l.b16 %v129
  %v334 = vunpack.c.l.b16 %v130
  %v335 = vunpack.c.l.b16 %v131
  %v336 = vunpack.c.l.b16 %v132
  %v337 = vunpack.c.l.b16 %v133
  %v338 = vunpack.c.l.b16 %v134
  %v339 = vpack.c.b16 %v240, %v239
  %v340 = vpack.c.b16 %v242, %v241
  %v341 = vpack.c.b16 %v244, %v243
  %v342 = vpack.c.b16 %v246, %v245
  %v343 = vpack.c.b16 %v248, %v247
  %v344 = vpack.c.b16 %v250, %v249
  %v345 = vpack.c.b16 %v252, %v251
  %v346 = vpack.c.b16 %v254, %v253
  %v347 = vpack.c.b16 %v256, %v255
  %v348 = vpack.c.b16 %v258, %v257
  %v349 = vpack.c.b16 %v260, %v259
  %v350 = vpack.c.b16 %v262, %v261
  %v351 = vpack.c.b16 %v264, %v263
  %v352 = vpack.c.b16 %v266, %v265
  %v353 = vpack.c.b16 %v268, %v267
  %v354 = vpack.c.b16 %v270, %v269
  %v355 = vpack.c.b16 %v272, %v271
  %v356 = vpack.c.b16 %v274, %v273
  %v357 = vpack.c.b16 %v276, %v275
  %v358 = vpack.c.b16 %v278, %v277
  %v359 = vpack.c.b16 %v280, %v279
  %v360 = vpack.c.b16 %v282, %v281
  %v361 = vpack.c.b16 %v284, %v283
  %v362 = vpack.c.b16 %v286, %v285
  %v363 = vpack.c.b16 %v288, %v287
  %v364 = vpack.c.b16 %v290, %v289
  %v365 = vpack.c.b16 %v292, %v291
  %v366 = vpack.c.b16 %v294, %v293
  %v367 = vpack.c.b16 %v296, %v295
  %v368 = vpack.c.b16 %v298, %v297
  %v369 = vpack.c.b16 %v300, %v299
  %v370 = vpack.c.b16 %v302, %v301
  %v371 = vpack.c.b16 %v304, %v303
  %v372 = vpack.c.b16 %v306, %v305
  %v373 = vpack.c.b16 %v308, %v307
  %v374 = vpack.c.b16 %v310, %v309
  %v375 = vpack.c.b16 %v312, %v311
  %v376 = vpack.c.b16 %v314, %v313
  %v377 = vpack.c.b16 %v316, %v315
  %v378 = vpack.c.b16 %v318, %v317
  %v379 = vpack.c.b16 %v320, %v319
  %v380 = vpack.c.b16 %v322, %v321
  %v381 = vpack.c.b16 %v324, %v323
  %v382 = vpack.c.b16 %v326, %v325
  %v383 = vpack.c.b16 %v328, %v327
  %v384 = vpack.c.b16 %v330, %v329
  %v385 = vpack.c.b16 %v332, %v331
  %v386 = vpack.c.b16 %v334, %v333
  %v387 = vpack.c.b16 %v336, %v335
  %v388 = vpack.c.b16 %v338, %v337
  %vm439 = vcmask 261120
  %v441 = vsel %vm439, %v34, 0
  %443 = vmatpush.bf16.msra.mxu0 %v346
  %444 = vmatpush.bf16.msra.mxu0 %v345
  %445 = vmatpush.bf16.msra.mxu0 %v344
  %446 = vmatpush.bf16.msra.mxu0 %v343
  %447 = vmatpush.bf16.msra.mxu0 %v342
  %448 = vmatpush.bf16.msra.mxu0 %v341
  %449 = vmatpush.bf16.msra.mxu0 %v340
  %450 = vmatpush.bf16.msra.mxu0 %v339
  %451 = vmatmul.bf16.gmra.mxu0 %v28
  %v452 = vpop.f32.mrf.mxu0
  %v453 = vadd.f32 %v137, %v452
  %v454 = vpop.f32.mrf.mxu0
  %455 = vdwg.mxu0
  %456 = vmatpush.bf16.msra.mxu0 %v354
  %457 = vmatpush.bf16.msra.mxu0 %v353
  %458 = vmatpush.bf16.msra.mxu0 %v352
  %459 = vmatpush.bf16.msra.mxu0 %v351
  %460 = vmatpush.bf16.msra.mxu0 %v350
  %461 = vmatpush.bf16.msra.mxu0 %v349
  %462 = vmatpush.bf16.msra.mxu0 %v348
  %463 = vmatpush.bf16.msra.mxu0 %v347
  %464 = vmatmul.bf16.gmra.mxu0 %v29
  %v465 = vpop.f32.mrf.mxu0
  %v466 = vadd.f32 %v453, %v465
  %v467 = vpop.f32.mrf.mxu0
  %468 = vdwg.mxu0
  %469 = vmatpush.bf16.msra.mxu0 %v362
  %470 = vmatpush.bf16.msra.mxu0 %v361
  %471 = vmatpush.bf16.msra.mxu0 %v360
  %472 = vmatpush.bf16.msra.mxu0 %v359
  %473 = vmatpush.bf16.msra.mxu0 %v358
  %474 = vmatpush.bf16.msra.mxu0 %v357
  %475 = vmatpush.bf16.msra.mxu0 %v356
  %476 = vmatpush.bf16.msra.mxu0 %v355
  %477 = vmatmul.bf16.gmra.mxu0 %v30
  %v478 = vpop.f32.mrf.mxu0
  %v479 = vadd.f32 %v466, %v478
  %v480 = vpop.f32.mrf.mxu0
  %481 = vdwg.mxu0
  %482 = vmatpush.bf16.msra.mxu0 %v370
  %483 = vmatpush.bf16.msra.mxu0 %v369
  %484 = vmatpush.bf16.msra.mxu0 %v368
  %485 = vmatpush.bf16.msra.mxu0 %v367
  %486 = vmatpush.bf16.msra.mxu0 %v366
  %487 = vmatpush.bf16.msra.mxu0 %v365
  %488 = vmatpush.bf16.msra.mxu0 %v364
  %489 = vmatpush.bf16.msra.mxu0 %v363
  %490 = vmatmul.bf16.gmra.mxu0 %v31
  %v491 = vpop.f32.mrf.mxu0
  %v492 = vadd.f32 %v479, %v491
  %v493 = vpop.f32.mrf.mxu0
  %494 = vdwg.mxu0
  %495 = vmatpush.bf16.msra.mxu0 %v378
  %496 = vmatpush.bf16.msra.mxu0 %v377
  %497 = vmatpush.bf16.msra.mxu0 %v376
  %498 = vmatpush.bf16.msra.mxu0 %v375
  %499 = vmatpush.bf16.msra.mxu0 %v374
  %500 = vmatpush.bf16.msra.mxu0 %v373
  %501 = vmatpush.bf16.msra.mxu0 %v372
  %502 = vmatpush.bf16.msra.mxu0 %v371
  %503 = vmatmul.bf16.gmra.mxu0 %v32
  %v504 = vpop.f32.mrf.mxu0
  %v505 = vadd.f32 %v492, %v504
  %v506 = vpop.f32.mrf.mxu0
  %507 = vdwg.mxu0
  %508 = vmatpush.bf16.msra.mxu0 %v386
  %509 = vmatpush.bf16.msra.mxu0 %v385
  %510 = vmatpush.bf16.msra.mxu0 %v384
  %511 = vmatpush.bf16.msra.mxu0 %v383
  %512 = vmatpush.bf16.msra.mxu0 %v382
  %513 = vmatpush.bf16.msra.mxu0 %v381
  %514 = vmatpush.bf16.msra.mxu0 %v380
  %515 = vmatpush.bf16.msra.mxu0 %v379
  %516 = vmatmul.bf16.gmra.mxu0 %v33
  %v517 = vpop.f32.mrf.mxu0
  %v518 = vadd.f32 %v505, %v517
  %v519 = vpop.f32.mrf.mxu0
  %520 = vdwg.mxu0
  %521 = vmatpush.bf16.msra.mxu0 0
  %522 = vmatpush.bf16.msra.mxu0 0
  %523 = vmatpush.bf16.msra.mxu0 0
  %524 = vmatpush.bf16.msra.mxu0 0
  %525 = vmatpush.bf16.msra.mxu0 0
  %526 = vmatpush.bf16.msra.mxu0 0
  %527 = vmatpush.bf16.msra.mxu0 %v388
  %528 = vmatpush.bf16.msra.mxu0 %v387
  %529 = vmatmul.bf16.gmra.mxu0 %v441
  %v530 = vpop.f32.mrf.mxu0
  %v531 = vadd.f32 %v518, %v530
  %v532 = vpop.f32.mrf.mxu0
  %533 = vdwg.mxu0
  %v534 = vmax.f32 %v531, 0.0
  %v535 = vpack.c.bf16 %v534, %v534
  %v536 = vld [vmem:[%s3] sm:$0xf]
  %v537 = vld [vmem:[%s3 + $0x4] sm:$0xf]
  %v538 = vld [vmem:[%s3 + $0x8] sm:$0xf]
  %v539 = vld [vmem:[%s3 + $0xc] sm:$0xf]
  %v540 = vld [vmem:[%s3 + $0x10] sm:$0xf]
  %v541 = vld [vmem:[%s3 + $0x14] sm:$0xf]
  %v542 = vld [vmem:[%s3 + $0x18] sm:$0xf]
  %v543 = vld [vmem:[%s3 + $0x1c] sm:$0xf]
  %v544 = vld [vmem:[%s3 + $0x20] sm:$0xf]
  %v545 = vld [vmem:[%s3 + $0x24] sm:$0xf]
  %v546 = vld [vmem:[%s3 + $0x28] sm:$0xf]
  %v547 = vld [vmem:[%s3 + $0x2c] sm:$0xf]
  %v548 = vld [vmem:[%s3 + $0x30] sm:$0xf]
  %v549 = vld [vmem:[%s3 + $0x34] sm:$0xf]
  %v550 = vld [vmem:[%s3 + $0x38] sm:$0xf]
  %v551 = vld [vmem:[%s3 + $0x3c] sm:$0xf]
  %v552 = vld [vmem:[%s4] sm:$0x1]
  %v554 = vperm.slane %v552, 0
  %v572 = vunpack.c.l.b16 %v536
  %v573 = vunpack.c.l.b16 %v537
  %v574 = vunpack.c.l.b16 %v538
  %v575 = vunpack.c.l.b16 %v539
  %v576 = vunpack.c.l.b16 %v540
  %v577 = vunpack.c.l.b16 %v541
  %v578 = vunpack.c.l.b16 %v542
  %v579 = vunpack.c.l.b16 %v543
  %v580 = vunpack.c.l.b16 %v544
  %v581 = vunpack.c.l.b16 %v545
  %v582 = vunpack.c.l.b16 %v546
  %v583 = vunpack.c.l.b16 %v547
  %v584 = vunpack.c.l.b16 %v548
  %v585 = vunpack.c.l.b16 %v549
  %v586 = vunpack.c.l.b16 %v550
  %v587 = vunpack.c.l.b16 %v551
  %v588 = vpack.c.b16 %v573, %v572
  %v589 = vpack.c.b16 %v575, %v574
  %v590 = vpack.c.b16 %v577, %v576
  %v591 = vpack.c.b16 %v579, %v578
  %v592 = vpack.c.b16 %v581, %v580
  %v593 = vpack.c.b16 %v583, %v582
  %v594 = vpack.c.b16 %v585, %v584
  %v595 = vpack.c.b16 %v587, %v586
  %604 = vmatpush.bf16.msra.mxu0 %v595
  %605 = vmatpush.bf16.msra.mxu0 %v594
  %606 = vmatpush.bf16.msra.mxu0 %v593
  %607 = vmatpush.bf16.msra.mxu0 %v592
  %608 = vmatpush.bf16.msra.mxu0 %v591
  %609 = vmatpush.bf16.msra.mxu0 %v590
  %610 = vmatpush.bf16.msra.mxu0 %v589
  %611 = vmatpush.bf16.msra.mxu0 %v588
  %612 = vmatmul.bf16.gmra.mxu0 %v535
  %v613 = vpop.f32.mrf.mxu0
  %v614 = vadd.f32 %v554, %v613
  %v615 = vpop.f32.mrf.mxu0
  %616 = vdwg.mxu0
  %617 = vmax.xlane.f32.xlu0 %v614
  %v618 = vpop.xlane.xlu0 %617
  %v619 = vsub.f32 %v614, %v618
  %v620 = vmul.f32 %v619, 1.442695
  %v621 = vpow.pop %v620
  %622 = vadd.xlane.f32.xlu0 %v621
  %v623 = vpop.xlane.xlu0 %622
  %v624 = vlog2.pop %v623
  %v625 = vmul.f32 %v624, 0.6931472
  %v626 = vsub.f32 %v619, %v625
  %627 = vst [vmem:[%s5] sm:$0xff] %v626
  // Predicated region
  $region22: #{forward.3} parent=0 // pred_check
    _
  $region23: #{forward.3} parent=0 // pred_check_branch
    %629 = sbr.rel (0) target = $region25
  $region24: #{forward.3} parent=0 // pred_region
    _
  $region25: #{forward.3} parent=0 // pred_fallthru
    _
  // Predicated region
  $region26: #{forward.3} parent=0 // pred_check
    _
  $region27: #{forward.3} parent=0 // pred_check_branch
    %631 = sbr.rel (0) target = $region29
  $region28: #{forward.3} parent=0 // pred_region
    _
  $region29: #{forward.3} parent=0 // pred_fallthru
    _

// kernel: forward.2
$region0: #{forward.2}
  #allocation0 [shape = 'u32[]', space=smem, size = 0x4, offset = 0x4, fixed_abs, tag = 'smem constant byte address 0x4 - core index']
  #allocation1 [shape = 'u32[72,128]{1,0:T(1,128)}', space=vmem, size = 0x9000, scoped, tag = 'internal scratch']
  #allocation2 [shape = 'bf16[16,958]{1,0:T(8,128)(2,1)}', space=vmem, size = 0x8000, scoped, tag = 'scratch operand']
  #allocation3 [shape = 'bf16[16,892]{1,0:T(8,128)(2,1)}', space=vmem, size = 0x7000, scoped, tag = 'scratch operand']
  #allocation4 [shape = 'bf16[16,196]{1,0:T(8,128)(2,1)}', space=vmem, size = 0x2000, scoped, tag = 'scratch operand']
  #allocation5 [shape = 'bf16[32,166]{1,0:T(8,128)(2,1)}', space=vmem, size = 0x4000, scoped, tag = 'scratch operand']
  #allocation6 [shape = 'bf16[32,136]{1,0:T(8,128)(2,1)}', space=vmem, size = 0x4000, scoped, tag = 'scratch operand']
  %s0 = inlined_call_operand.vmem [shape: f32[2,1,1024], index: 0, kind: input, shape index: {}]
  %s1 = inlined_call_operand.vmem [shape: f32[9,16,1], index: 1, kind: input, shape index: {}]
  %s2 = inlined_call_operand.vmem [shape: f32[16,1], index: 2, kind: input, shape index: {}]
  %s3 = inlined_call_operand.vmem [shape: bf16[9,16,16], index: 3, kind: input, shape index: {}]
  %s4 = inlined_call_operand.vmem [shape: f32[16,1], index: 4, kind: input, shape index: {}]
  %s5 = inlined_call_operand.vmem [shape: bf16[9,32,16], index: 5, kind: input, shape index: {}]
  %s6 = inlined_call_operand.vmem [shape: f32[32,1], index: 6, kind: input, shape index: {}]
  %s7 = inlined_call_operand.vmem [shape: bf16[9,32,32], index: 7, kind: input, shape index: {}]
  %s8 = inlined_call_operand.vmem [shape: f32[32,1], index: 8, kind: input, shape index: {}]
  %s9 = inlined_call_operand.vmem [shape: bf16[859,196], index: 9, kind: input, shape index: {}]
  %s10 = inlined_call_operand.vmem [shape: bf16[121,25], index: 10, kind: input, shape index: {}]
  %s11 = inlined_call_operand.vmem [shape: f32[1,958], index: 11, kind: input, shape index: {}]
  %s12 = inlined_call_operand.vmem [shape: f32[2,32,25], index: 12, kind: output, shape index: {}]
  %s13 = sld [smem:[#allocation0]]
  $region81: #{forward.2} parent=0
    _
  %s15 = ssub.s32 1, %s13
  %s16 = scalar_select 0, %s15, %s13
  loop: start=0, step=1, limit=4
  $region2: #{forward.2} parent=0 // loop_pre_header
    _
  $region3: #{forward.2} parent=0 // loop_header
    %s18 = sphi 0, %s22
    %p19 = scmp.ge.s32.totalorder %s18, 4
    %s28 = sphi 0, %s30
    %s31 = sphi 0, %s28
    %s32 = sphi 0, %s31
    %s48 = sphi 0, %s32
    %s52 = sphi 0, %s52
    %s54 = sphi 0, %s52
    %s55 = sphi 0, %s54
    %s69 = sphi 0, %s55
    %s73 = sphi 0, %s73
    %s75 = sphi 0, %s73
    %s76 = sphi 0, %s75
    %s90 = sphi 0, %s76
    %s94 = sphi 0, %s94
    %s96 = sphi 0, %s94
    %s97 = sphi 0, %s96
    %s111 = sphi 0, %s97
    %s115 = sphi 0, %s115
    %s117 = sphi 0, %s115
    %s118 = sphi 0, %s117
    %s132 = sphi 0, %s118
    %s136 = sphi 0, %s136
    %s138 = sphi 0, %s136
    %s139 = sphi 0, %s138
    %s153 = sphi 0, %s139
    %s157 = sphi 0, %s157
    %s159 = sphi 0, %s157
    %s160 = sphi 0, %s159
    %s174 = sphi 0, %s160
    %s178 = sphi 0, %s178
    %s180 = sphi 0, %s178
    %s181 = sphi 0, %s180
    %s195 = sphi 0, %s181
    %s199 = sphi 0, %s199
    %s201 = sphi 0, %s199
    %s202 = sphi 0, %s201
    %s216 = sphi 0, %s202
    %s220 = sphi 0, %s220
    %s222 = sphi 0, %s220
    %s223 = sphi 0, %s222
    %s237 = sphi 0, %s223
    %s241 = sphi 0, %s241
    %s243 = sphi 0, %s241
    %s244 = sphi 0, %s243
    %s258 = sphi 0, %s244
    %s262 = sphi 0, %s262
    %s264 = sphi 0, %s262
    %s265 = sphi 0, %s264
    %s279 = sphi 0, %s265
    %s285 = sphi 0, %s287
    %s288 = sphi 0, %s285
    %s289 = sphi 0, %s288
    %s305 = sphi 0, %s289
  $region4: #{forward.2} parent=0 // loop_header_branch
    %21 = sbr.rel (%p19) target = $region8
  $region5: #{forward.2} parent=0 // loop_body
    %s23 = ssub.s32 %s18, 1
    %s24 = ssub.s32 %s18, 2
    %s25 = sadd.s32 %s18, 1
    %s26 = ssub.s32 %s18, %s25
    %p27 = scmp.eq.s32.totalorder %s26, 0
    %s29 = sadd.s32 %s28, 1
    %s30 = scalar_select %p27, %s28, %s29
    %p33 = pneg %p27
    %p34 = scmp.eq.s32.totalorder %s18, 1
    %p35 = por %p33, %p34
    %p36 = scmp.ne.s32.totalorder %s28, %s31
    %p37 = scmp.eq.s32.totalorder %s18, 0
    %p38 = por %p36, %p37
    %p39 = scmp.ne.s32.totalorder %s28, %s31
    %p40 = scmp.eq.s32.totalorder %s23, 1
    %p41 = por %p39, %p40
    %p42 = scmp.ne.s32.totalorder %s31, %s32
    %p43 = scmp.eq.s32.totalorder %s23, 0
    %p44 = por %p42, %p43
    %p45 = scmp.ne.s32.totalorder %s31, %s32
    %p46 = scmp.eq.s32.totalorder %s24, 1
    %p47 = por %p45, %p46
    %p49 = scmp.ne.s32.totalorder %s32, %s48
    %p50 = scmp.eq.s32.totalorder %s24, 0
    %p51 = por %p49, %p50
    %s53 = sadd.s32 %s52, 1
    %p56 = scmp.eq.s32.totalorder %s18, 1
    %p57 = scmp.ne.s32.totalorder %s52, %s54
    %p58 = scmp.eq.s32.totalorder %s18, 0
    %p59 = por %p57, %p58
    %p60 = scmp.ne.s32.totalorder %s52, %s54
    %p61 = scmp.eq.s32.totalorder %s23, 1
    %p62 = por %p60, %p61
    %p63 = scmp.ne.s32.totalorder %s54, %s55
    %p64 = scmp.eq.s32.totalorder %s23, 0
    %p65 = por %p63, %p64
    %p66 = scmp.ne.s32.totalorder %s54, %s55
    %p67 = scmp.eq.s32.totalorder %s24, 1
    %p68 = por %p66, %p67
    %p70 = scmp.ne.s32.totalorder %s55, %s69
    %p71 = scmp.eq.s32.totalorder %s24, 0
    %p72 = por %p70, %p71
    %s74 = sadd.s32 %s73, 1
    %p77 = scmp.eq.s32.totalorder %s18, 1
    %p78 = scmp.ne.s32.totalorder %s73, %s75
    %p79 = scmp.eq.s32.totalorder %s18, 0
    %p80 = por %p78, %p79
    %p81 = scmp.ne.s32.totalorder %s73, %s75
    %p82 = scmp.eq.s32.totalorder %s23, 1
    %p83 = por %p81, %p82
    %p84 = scmp.ne.s32.totalorder %s75, %s76
    %p85 = scmp.eq.s32.totalorder %s23, 0
    %p86 = por %p84, %p85
    %p87 = scmp.ne.s32.totalorder %s75, %s76
    %p88 = scmp.eq.s32.totalorder %s24, 1
    %p89 = por %p87, %p88
    %p91 = scmp.ne.s32.totalorder %s76, %s90
    %p92 = scmp.eq.s32.totalorder %s24, 0
    %p93 = por %p91, %p92
    %s95 = sadd.s32 %s94, 1
    %p98 = scmp.eq.s32.totalorder %s18, 1
    %p99 = scmp.ne.s32.totalorder %s94, %s96
    %p100 = scmp.eq.s32.totalorder %s18, 0
    %p101 = por %p99, %p100
    %p102 = scmp.ne.s32.totalorder %s94, %s96
    %p103 = scmp.eq.s32.totalorder %s23, 1
    %p104 = por %p102, %p103
    %p105 = scmp.ne.s32.totalorder %s96, %s97
    %p106 = scmp.eq.s32.totalorder %s23, 0
    %p107 = por %p105, %p106
    %p108 = scmp.ne.s32.totalorder %s96, %s97
    %p109 = scmp.eq.s32.totalorder %s24, 1
    %p110 = por %p108, %p109
    %p112 = scmp.ne.s32.totalorder %s97, %s111
    %p113 = scmp.eq.s32.totalorder %s24, 0
    %p114 = por %p112, %p113
    %s116 = sadd.s32 %s115, 1
    %p119 = scmp.eq.s32.totalorder %s18, 1
    %p120 = scmp.ne.s32.totalorder %s115, %s117
    %p121 = scmp.eq.s32.totalorder %s18, 0
    %p122 = por %p120, %p121
    %p123 = scmp.ne.s32.totalorder %s115, %s117
    %p124 = scmp.eq.s32.totalorder %s23, 1
    %p125 = por %p123, %p124
    %p126 = scmp.ne.s32.totalorder %s117, %s118
    %p127 = scmp.eq.s32.totalorder %s23, 0
    %p128 = por %p126, %p127
    %p129 = scmp.ne.s32.totalorder %s117, %s118
    %p130 = scmp.eq.s32.totalorder %s24, 1
    %p131 = por %p129, %p130
    %p133 = scmp.ne.s32.totalorder %s118, %s132
    %p134 = scmp.eq.s32.totalorder %s24, 0
    %p135 = por %p133, %p134
    %s137 = sadd.s32 %s136, 1
    %p140 = scmp.eq.s32.totalorder %s18, 1
    %p141 = scmp.ne.s32.totalorder %s136, %s138
    %p142 = scmp.eq.s32.totalorder %s18, 0
    %p143 = por %p141, %p142
    %p144 = scmp.ne.s32.totalorder %s136, %s138
    %p145 = scmp.eq.s32.totalorder %s23, 1
    %p146 = por %p144, %p145
    %p147 = scmp.ne.s32.totalorder %s138, %s139
    %p148 = scmp.eq.s32.totalorder %s23, 0
    %p149 = por %p147, %p148
    %p150 = scmp.ne.s32.totalorder %s138, %s139
    %p151 = scmp.eq.s32.totalorder %s24, 1
    %p152 = por %p150, %p151
    %p154 = scmp.ne.s32.totalorder %s139, %s153
    %p155 = scmp.eq.s32.totalorder %s24, 0
    %p156 = por %p154, %p155
    %s158 = sadd.s32 %s157, 1
    %p161 = scmp.eq.s32.totalorder %s18, 1
    %p162 = scmp.ne.s32.totalorder %s157, %s159
    %p163 = scmp.eq.s32.totalorder %s18, 0
    %p164 = por %p162, %p163
    %p165 = scmp.ne.s32.totalorder %s157, %s159
    %p166 = scmp.eq.s32.totalorder %s23, 1
    %p167 = por %p165, %p166
    %p168 = scmp.ne.s32.totalorder %s159, %s160
    %p169 = scmp.eq.s32.totalorder %s23, 0
    %p170 = por %p168, %p169
    %p171 = scmp.ne.s32.totalorder %s159, %s160
    %p172 = scmp.eq.s32.totalorder %s24, 1
    %p173 = por %p171, %p172
    %p175 = scmp.ne.s32.totalorder %s160, %s174
    %p176 = scmp.eq.s32.totalorder %s24, 0
    %p177 = por %p175, %p176
    %s179 = sadd.s32 %s178, 1
    %p182 = scmp.eq.s32.totalorder %s18, 1
    %p183 = scmp.ne.s32.totalorder %s178, %s180
    %p184 = scmp.eq.s32.totalorder %s18, 0
    %p185 = por %p183, %p184
    %p186 = scmp.ne.s32.totalorder %s178, %s180
    %p187 = scmp.eq.s32.totalorder %s23, 1
    %p188 = por %p186, %p187
    %p189 = scmp.ne.s32.totalorder %s180, %s181
    %p190 = scmp.eq.s32.totalorder %s23, 0
    %p191 = por %p189, %p190
    %p192 = scmp.ne.s32.totalorder %s180, %s181
    %p193 = scmp.eq.s32.totalorder %s24, 1
    %p194 = por %p192, %p193
    %p196 = scmp.ne.s32.totalorder %s181, %s195
    %p197 = scmp.eq.s32.totalorder %s24, 0
    %p198 = por %p196, %p197
    %s200 = sadd.s32 %s199, 1
    %p203 = scmp.eq.s32.totalorder %s18, 1
    %p204 = scmp.ne.s32.totalorder %s199, %s201
    %p205 = scmp.eq.s32.totalorder %s18, 0
    %p206 = por %p204, %p205
    %p207 = scmp.ne.s32.totalorder %s199, %s201
    %p208 = scmp.eq.s32.totalorder %s23, 1
    %p209 = por %p207, %p208
    %p210 = scmp.ne.s32.totalorder %s201, %s202
    %p211 = scmp.eq.s32.totalorder %s23, 0
    %p212 = por %p210, %p211
    %p213 = scmp.ne.s32.totalorder %s201, %s202
    %p214 = scmp.eq.s32.totalorder %s24, 1
    %p215 = por %p213, %p214
    %p217 = scmp.ne.s32.totalorder %s202, %s216
    %p218 = scmp.eq.s32.totalorder %s24, 0
    %p219 = por %p217, %p218
    %s221 = sadd.s32 %s220, 1
    %p224 = scmp.eq.s32.totalorder %s18, 1
    %p225 = scmp.ne.s32.totalorder %s220, %s222
    %p226 = scmp.eq.s32.totalorder %s18, 0
    %p227 = por %p225, %p226
    %p228 = scmp.ne.s32.totalorder %s220, %s222
    %p229 = scmp.eq.s32.totalorder %s23, 1
    %p230 = por %p228, %p229
    %p231 = scmp.ne.s32.totalorder %s222, %s223
    %p232 = scmp.eq.s32.totalorder %s23, 0
    %p233 = por %p231, %p232
    %p234 = scmp.ne.s32.totalorder %s222, %s223
    %p235 = scmp.eq.s32.totalorder %s24, 1
    %p236 = por %p234, %p235
    %p238 = scmp.ne.s32.totalorder %s223, %s237
    %p239 = scmp.eq.s32.totalorder %s24, 0
    %p240 = por %p238, %p239
    %s242 = sadd.s32 %s241, 1
    %p245 = scmp.eq.s32.totalorder %s18, 1
    %p246 = scmp.ne.s32.totalorder %s241, %s243
    %p247 = scmp.eq.s32.totalorder %s18, 0
    %p248 = por %p246, %p247
    %p249 = scmp.ne.s32.totalorder %s241, %s243
    %p250 = scmp.eq.s32.totalorder %s23, 1
    %p251 = por %p249, %p250
    %p252 = scmp.ne.s32.totalorder %s243, %s244
    %p253 = scmp.eq.s32.totalorder %s23, 0
    %p254 = por %p252, %p253
    %p255 = scmp.ne.s32.totalorder %s243, %s244
    %p256 = scmp.eq.s32.totalorder %s24, 1
    %p257 = por %p255, %p256
    %p259 = scmp.ne.s32.totalorder %s244, %s258
    %p260 = scmp.eq.s32.totalorder %s24, 0
    %p261 = por %p259, %p260
    %s263 = sadd.s32 %s262, 1
    %p266 = scmp.eq.s32.totalorder %s18, 1
    %p267 = scmp.ne.s32.totalorder %s262, %s264
    %p268 = scmp.eq.s32.totalorder %s18, 0
    %p269 = por %p267, %p268
    %p270 = scmp.ne.s32.totalorder %s262, %s264
    %p271 = scmp.eq.s32.totalorder %s23, 1
    %p272 = por %p270, %p271
    %p273 = scmp.ne.s32.totalorder %s264, %s265
    %p274 = scmp.eq.s32.totalorder %s23, 0
    %p275 = por %p273, %p274
    %p276 = scmp.ne.s32.totalorder %s264, %s265
    %p277 = scmp.eq.s32.totalorder %s24, 1
    %p278 = por %p276, %p277
    %p280 = scmp.ne.s32.totalorder %s265, %s279
    %p281 = scmp.eq.s32.totalorder %s24, 0
    %p282 = por %p280, %p281
    %s283 = ssub.s32 %s18, %s25
    %p284 = scmp.eq.s32.totalorder %s283, 0
    %s286 = sadd.s32 %s285, 1
    %s287 = scalar_select %p284, %s285, %s286
    %p290 = pneg %p284
    %p291 = scmp.eq.s32.totalorder %s18, 1
    %p292 = por %p290, %p291
    %p293 = scmp.ne.s32.totalorder %s285, %s288
    %p294 = scmp.eq.s32.totalorder %s18, 0
    %p295 = por %p293, %p294
    %p296 = scmp.ne.s32.totalorder %s285, %s288
    %p297 = scmp.eq.s32.totalorder %s23, 1
    %p298 = por %p296, %p297
    %p299 = scmp.ne.s32.totalorder %s288, %s289
    %p300 = scmp.eq.s32.totalorder %s23, 0
    %p301 = por %p299, %p300
    %p302 = scmp.ne.s32.totalorder %s288, %s289
    %p303 = scmp.eq.s32.totalorder %s24, 1
    %p304 = por %p302, %p303
    %p306 = scmp.ne.s32.totalorder %s289, %s305
    %p307 = scmp.eq.s32.totalorder %s24, 0
    %p308 = por %p306, %p307
    %p309 = scmp.le.s32.totalorder 1, %s18
    %p310 = scmp.lt.s32.totalorder %s18, 3
    %p311 = pnand %p309, %p310
    %p312 = pneg %p311
    // Predicated region
    $region9: #{forward.2} parent=5 // pred_check
      _
    $region10: #{forward.2} parent=5 // pred_check_branch
      %314 = sbr.rel (%p311) target = $region12
    $region11: #{forward.2} parent=5 // pred_region
      %s315 = ssub.s32 %s18, 1
      // Predicated region
      $region13: #{forward.2} parent=11 // pred_check
        %p316 = pneg %p65
      $region14: #{forward.2} parent=11 // pred_check_branch
        %318 = sbr.rel (%p316) target = $region16
      $region15: #{forward.2} parent=11 // pred_region
        _
      $region16: #{forward.2} parent=11 // pred_fallthru
        _
      // Predicated region
      $region17: #{forward.2} parent=11 // pred_check
        %p319 = pneg %p86
      $region18: #{forward.2} parent=11 // pred_check_branch
        %321 = sbr.rel (%p319) target = $region20
      $region19: #{forward.2} parent=11 // pred_region
        _
      $region20: #{forward.2} parent=11 // pred_fallthru
        _
      // Predicated region
      $region21: #{forward.2} parent=11 // pred_check
        %p322 = pneg %p107
      $region22: #{forward.2} parent=11 // pred_check_branch
        %324 = sbr.rel (%p322) target = $region24
      $region23: #{forward.2} parent=11 // pred_region
        _
      $region24: #{forward.2} parent=11 // pred_fallthru
        _
      // Predicated region
      $region25: #{forward.2} parent=11 // pred_check
        %p325 = pneg %p128
      $region26: #{forward.2} parent=11 // pred_check_branch
        %327 = sbr.rel (%p325) target = $region28
      $region27: #{forward.2} parent=11 // pred_region
        _
      $region28: #{forward.2} parent=11 // pred_fallthru
        _
      // Predicated region
      $region29: #{forward.2} parent=11 // pred_check
        %p328 = pneg %p149
      $region30: #{forward.2} parent=11 // pred_check_branch
        %330 = sbr.rel (%p328) target = $region32
      $region31: #{forward.2} parent=11 // pred_region
        _
      $region32: #{forward.2} parent=11 // pred_fallthru
        _
      // Predicated region
      $region33: #{forward.2} parent=11 // pred_check
        %p331 = pneg %p170
      $region34: #{forward.2} parent=11 // pred_check_branch
        %333 = sbr.rel (%p331) target = $region36
      $region35: #{forward.2} parent=11 // pred_region
        _
      $region36: #{forward.2} parent=11 // pred_fallthru
        _
      // Predicated region
      $region37: #{forward.2} parent=11 // pred_check
        %p334 = pneg %p191
      $region38: #{forward.2} parent=11 // pred_check_branch
        %336 = sbr.rel (%p334) target = $region40
      $region39: #{forward.2} parent=11 // pred_region
        _
      $region40: #{forward.2} parent=11 // pred_fallthru
        _
      // Predicated region
      $region41: #{forward.2} parent=11 // pred_check
        %p337 = pneg %p212
      $region42: #{forward.2} parent=11 // pred_check_branch
        %339 = sbr.rel (%p337) target = $region44
      $region43: #{forward.2} parent=11 // pred_region
        _
      $region44: #{forward.2} parent=11 // pred_fallthru
        _
      // Predicated region
      $region45: #{forward.2} parent=11 // pred_check
        %p340 = pneg %p233
      $region46: #{forward.2} parent=11 // pred_check_branch
        %342 = sbr.rel (%p340) target = $region48
      $region47: #{forward.2} parent=11 // pred_region
        _
      $region48: #{forward.2} parent=11 // pred_fallthru
        _
      // Predicated region
      $region49: #{forward.2} parent=11 // pred_check
        %p343 = pneg %p254
      $region50: #{forward.2} parent=11 // pred_check_branch
        %345 = sbr.rel (%p343) target = $region52
      $region51: #{forward.2} parent=11 // pred_region
        _
      $region52: #{forward.2} parent=11 // pred_fallthru
        _
      // Predicated region
      $region53: #{forward.2} parent=11 // pred_check
        %p346 = pneg %p275
      $region54: #{forward.2} parent=11 // pred_check_branch
        %348 = sbr.rel (%p346) target = $region56
      $region55: #{forward.2} parent=11 // pred_region
        _
      $region56: #{forward.2} parent=11 // pred_fallthru
        _
    $region12: #{forward.2} parent=5 // pred_fallthru
      _
    %p349 = scmp.lt.s32.totalorder %s18, 2
    // Predicated region
    $region57: #{forward.2} parent=5 // pred_check
      %p350 = pneg %p349
    $region58: #{forward.2} parent=5 // pred_check_branch
      %352 = sbr.rel (%p350) target = $region60
    $region59: #{forward.2} parent=5 // pred_region
      // Predicated region
      $region61: #{forward.2} parent=59 // pred_check
        %p353 = pneg %p38
      $region62: #{forward.2} parent=59 // pred_check_branch
        %355 = sbr.rel (%p353) target = $region64
      $region63: #{forward.2} parent=59 // pred_region
        %p356 = scmp.lt.s32.totalorder %s18, 1
        %s357 = scalar_select %p356, %s18, 1
        %s358 = smul.addr %s357, 8
        %s359 = scalar_lea.vmem %s0, %s358
      $region64: #{forward.2} parent=59 // pred_fallthru
        _
    $region60: #{forward.2} parent=5 // pred_fallthru
      _
    %p360 = scmp.le.s32.totalorder 1, %s18
    %p361 = scmp.lt.s32.totalorder %s18, 3
    %p362 = pnand %p360, %p361
    %p363 = pneg %p362
    // Predicated region
    $region65: #{forward.2} parent=5 // pred_check
      _
    $region66: #{forward.2} parent=5 // pred_check_branch
      %365 = sbr.rel (%p362) target = $region68
    $region67: #{forward.2} parent=5 // pred_region
      %s366 = ssub.s32 %s18, 1
      %p367 = scmp.lt.s32.totalorder %s23, 1
      %s368 = scalar_select %p367, %s23, 1
      %s369 = smul.addr %s368, 8
      %s370 = scalar_lea.vmem %s0, %s369
      %p371 = pneg %p44
      %p372 = pneg %p41
      %p373 = pneg %p65
      %p374 = pneg %p62
      %p375 = pneg %p86
      %p376 = pneg %p83
      %p377 = pneg %p107
      %p378 = pneg %p104
      %p379 = pneg %p128
      %p380 = pneg %p125
      %p381 = pneg %p149
      %p382 = pneg %p146
      %p383 = pneg %p170
      %p384 = pneg %p167
      %p385 = pneg %p191
      %p386 = pneg %p188
      %p387 = pneg %p212
      %p388 = pneg %p209
      %p389 = pneg %p233
      %p390 = pneg %p230
      %p391 = pneg %p254
      %p392 = pneg %p251
      %p393 = pneg %p275
      %p394 = pneg %p272
      %p395 = pneg %p301
      %p396 = pneg %p298
      %p397 = scmp.lt.s32.totalorder %s23, 1
      %s398 = scalar_select %p397, %s23, 1
      %s399 = smul.addr %s398, 4
      %s400 = smul.addr %s399, 8
      %s401 = scalar_lea.vmem %s12, %s400
      %p402 = scmp.lt.s32.totalorder %s23, 1
      %s403 = scalar_select %p402, %s23, 1
      %s404 = smul.addr %s403, 8
      %s405 = scalar_lea.vmem %s0, %s404
      %p406 = scmp.lt.s32.totalorder %s23, 1
      %s407 = scalar_select %p406, %s23, 1
      %s408 = smul.addr %s407, 4
      %s409 = smul.addr %s408, 8
      %s410 = scalar_lea.vmem %s12, %s409
      %v412 = vld [vmem:[%s1] sm:$0xff]
      %v413 = vld [vmem:[%s1 + $0x8] sm:$0xff]
      %v414 = vld [vmem:[%s405] sm:$0xff]
      %416 = vset.pattern.permute.xlu0 0
      %417 = vperm.xlu0 %416, %v412
      %v418 = vpop.permute.xlu0 %417
      %421 = vset.pattern.permute.xlu0 0
      %422 = vperm.xlu0 %421, %v413
      %v423 = vpop.permute.xlu0 %422
      %v426 = vperm.slane %v414, 0
      %v427 = vperm.slane %v414, 1
      %v428 = vperm.slane %v414, 2
      %v429 = vperm.slane %v414, 3
      %v430 = vperm.slane %v414, 4
      %v431 = vperm.slane %v414, 5
      %v432 = vperm.slane %v414, 6
      %v433 = vperm.slane %v414, 7
      %v442 = vmul.f32 %v418, %v426
      %v443 = vmul.f32 %v418, %v427
      %v444 = vmul.f32 %v418, %v428
      %v445 = vmul.f32 %v418, %v429
      %v446 = vmul.f32 %v418, %v430
      %v447 = vmul.f32 %v418, %v431
      %v448 = vmul.f32 %v418, %v432
      %v449 = vmul.f32 %v418, %v433
      %v450 = vmul.f32 %v423, %v426
      %v451 = vmul.f32 %v423, %v427
      %v452 = vmul.f32 %v423, %v428
      %v453 = vmul.f32 %v423, %v429
      %v454 = vmul.f32 %v423, %v430
      %v455 = vmul.f32 %v423, %v431
      %v456 = vmul.f32 %v423, %v432
      %v457 = vmul.f32 %v423, %v433
      %v458 = vadd.f32 %v442, 0.0
      %v459 = vadd.f32 %v443, 0.0
      %v460 = vadd.f32 %v444, 0.0
      %v461 = vadd.f32 %v445, 0.0
      %v462 = vadd.f32 %v446, 0.0
      %v463 = vadd.f32 %v447, 0.0
      %v464 = vadd.f32 %v448, 0.0
      %v465 = vadd.f32 %v449, 0.0
      %v466 = vadd.f32 %v450, 0.0
      %v467 = vadd.f32 %v451, 0.0
      %v468 = vadd.f32 %v452, 0.0
      %v469 = vadd.f32 %v453, 0.0
      %v470 = vadd.f32 %v454, 0.0
      %v471 = vadd.f32 %v455, 0.0
      %v472 = vadd.f32 %v456, 0.0
      %v473 = vadd.f32 %v457, 0.0
      %s474 = scalar_lea.vmem %s1, 16
      %v475 = vld [vmem:[%s474] sm:$0xff]
      %v476 = vld [vmem:[%s474 + $0x8] sm:$0xff]
      %478 = vset.pattern.permute.xlu0 0
      %479 = vperm.xlu0 %478, %v475
      %v480 = vpop.permute.xlu0 %479
      %483 = vset.pattern.permute.xlu0 0
      %484 = vperm.xlu0 %483, %v476
      %v485 = vpop.permute.xlu0 %484
      %v487 = vmul.f32 %v480, %v426
      %v488 = vmul.f32 %v480, %v427
      %v489 = vmul.f32 %v480, %v428
      %v490 = vmul.f32 %v480, %v429
      %v491 = vmul.f32 %v480, %v430
      %v492 = vmul.f32 %v480, %v431
      %v493 = vmul.f32 %v480, %v432
      %v494 = vmul.f32 %v480, %v433
      %v495 = vmul.f32 %v485, %v426
      %v496 = vmul.f32 %v485, %v427
      %v497 = vmul.f32 %v485, %v428
      %v498 = vmul.f32 %v485, %v429
      %v499 = vmul.f32 %v485, %v430
      %v500 = vmul.f32 %v485, %v431
      %v501 = vmul.f32 %v485, %v432
      %v502 = vmul.f32 %v485, %v433
      %519 = vrot.lane.b32.xlu0 %v487, 127
      %v520 = vpop.permute.xlu0 %519
      %521 = vrot.lane.b32.xlu0 %v488, 127
      %v522 = vpop.permute.xlu0 %521
      %523 = vrot.lane.b32.xlu0 %v489, 127
      %v524 = vpop.permute.xlu0 %523
      %525 = vrot.lane.b32.xlu0 %v490, 127
      %v526 = vpop.permute.xlu0 %525
      %527 = vrot.lane.b32.xlu0 %v491, 127
      %v528 = vpop.permute.xlu0 %527
      %529 = vrot.lane.b32.xlu0 %v492, 127
      %v530 = vpop.permute.xlu0 %529
      %531 = vrot.lane.b32.xlu0 %v493, 127
      %v532 = vpop.permute.xlu0 %531
      %533 = vrot.lane.b32.xlu0 %v494, 127
      %v534 = vpop.permute.xlu0 %533
      %535 = vrot.lane.b32.xlu0 %v495, 127
      %v536 = vpop.permute.xlu0 %535
      %537 = vrot.lane.b32.xlu0 %v496, 127
      %v538 = vpop.permute.xlu0 %537
      %539 = vrot.lane.b32.xlu0 %v497, 127
      %v540 = vpop.permute.xlu0 %539
      %541 = vrot.lane.b32.xlu0 %v498, 127
      %v542 = vpop.permute.xlu0 %541
      %543 = vrot.lane.b32.xlu0 %v499, 127
      %v544 = vpop.permute.xlu0 %543
      %545 = vrot.lane.b32.xlu0 %v500, 127
      %v546 = vpop.permute.xlu0 %545
      %547 = vrot.lane.b32.xlu0 %v501, 127
      %v548 = vpop.permute.xlu0 %547
      %549 = vrot.lane.b32.xlu0 %v502, 127
      %v550 = vpop.permute.xlu0 %549
      %vm551 = vcmask 1039360
      %v552 = vsel %vm551, %v520, %v522
      %v553 = vsel %vm551, %v522, %v524
      %v554 = vsel %vm551, %v524, %v526
      %v555 = vsel %vm551, %v526, %v528
      %v556 = vsel %vm551, %v528, %v530
      %v557 = vsel %vm551, %v530, %v532
      %v558 = vsel %vm551, %v532, %v534
      %v559 = vsel %vm551, %v536, %v538
      %v560 = vsel %vm551, %v538, %v540
      %v561 = vsel %vm551, %v540, %v542
      %v562 = vsel %vm551, %v542, %v544
      %v563 = vsel %vm551, %v544, %v546
      %v564 = vsel %vm551, %v546, %v548
      %v565 = vsel %vm551, %v548, %v550
      %v582 = vadd.f32 %v458, %v552
      %v583 = vadd.f32 %v459, %v553
      %v584 = vadd.f32 %v460, %v554
      %v585 = vadd.f32 %v461, %v555
      %v586 = vadd.f32 %v462, %v556
      %v587 = vadd.f32 %v463, %v557
      %v588 = vadd.f32 %v464, %v558
      %v589 = vadd.f32 %v465, %v534
      %v590 = vadd.f32 %v466, %v559
      %v591 = vadd.f32 %v467, %v560
      %v592 = vadd.f32 %v468, %v561
      %v593 = vadd.f32 %v469, %v562
      %v594 = vadd.f32 %v470, %v563
      %v595 = vadd.f32 %v471, %v564
      %v596 = vadd.f32 %v472, %v565
      %v597 = vadd.f32 %v473, %v550
      %s598 = scalar_lea.vmem %s1, 32
      %v599 = vld [vmem:[%s598] sm:$0xff]
      %v600 = vld [vmem:[%s598 + $0x8] sm:$0xff]
      %602 = vset.pattern.permute.xlu0 0
      %603 = vperm.xlu0 %602, %v599
      %v604 = vpop.permute.xlu0 %603
      %607 = vset.pattern.permute.xlu0 0
      %608 = vperm.xlu0 %607, %v600
      %v609 = vpop.permute.xlu0 %608
      %v611 = vmul.f32 %v604, %v426
      %v612 = vmul.f32 %v604, %v427
      %v613 = vmul.f32 %v604, %v428
      %v614 = vmul.f32 %v604, %v429
      %v615 = vmul.f32 %v604, %v430
      %v616 = vmul.f32 %v604, %v431
      %v617 = vmul.f32 %v604, %v432
      %v618 = vmul.f32 %v604, %v433
      %v619 = vmul.f32 %v609, %v426
      %v620 = vmul.f32 %v609, %v427
      %v621 = vmul.f32 %v609, %v428
      %v622 = vmul.f32 %v609, %v429
      %v623 = vmul.f32 %v609, %v430
      %v624 = vmul.f32 %v609, %v431
      %v625 = vmul.f32 %v609, %v432
      %v626 = vmul.f32 %v609, %v433
      %643 = vrot.lane.b32.xlu0 %v611, 126
      %v644 = vpop.permute.xlu0 %643
      %645 = vrot.lane.b32.xlu0 %v612, 126
      %v646 = vpop.permute.xlu0 %645
      %647 = vrot.lane.b32.xlu0 %v613, 126
      %v648 = vpop.permute.xlu0 %647
      %649 = vrot.lane.b32.xlu0 %v614, 126
      %v650 = vpop.permute.xlu0 %649
      %651 = vrot.lane.b32.xlu0 %v615, 126
      %v652 = vpop.permute.xlu0 %651
      %653 = vrot.lane.b32.xlu0 %v616, 126
      %v654 = vpop.permute.xlu0 %653
      %655 = vrot.lane.b32.xlu0 %v617, 126
      %v656 = vpop.permute.xlu0 %655
      %657 = vrot.lane.b32.xlu0 %v618, 126
      %v658 = vpop.permute.xlu0 %657
      %659 = vrot.lane.b32.xlu0 %v619, 126
      %v660 = vpop.permute.xlu0 %659
      %661 = vrot.lane.b32.xlu0 %v620, 126
      %v662 = vpop.permute.xlu0 %661
      %663 = vrot.lane.b32.xlu0 %v621, 126
      %v664 = vpop.permute.xlu0 %663
      %665 = vrot.lane.b32.xlu0 %v622, 126
      %v666 = vpop.permute.xlu0 %665
      %667 = vrot.lane.b32.xlu0 %v623, 126
      %v668 = vpop.permute.xlu0 %667
      %669 = vrot.lane.b32.xlu0 %v624, 126
      %v670 = vpop.permute.xlu0 %669
      %671 = vrot.lane.b32.xlu0 %v625, 126
      %v672 = vpop.permute.xlu0 %671
      %673 = vrot.lane.b32.xlu0 %v626, 126
      %v674 = vpop.permute.xlu0 %673
      %vm675 = vcmask 1031168
      %v676 = vsel %vm675, %v644, %v646
      %v677 = vsel %vm675, %v646, %v648
      %v678 = vsel %vm675, %v648, %v650
      %v679 = vsel %vm675, %v650, %v652
      %v680 = vsel %vm675, %v652, %v654
      %v681 = vsel %vm675, %v654, %v656
      %v682 = vsel %vm675, %v656, %v658
      %v683 = vsel %vm675, %v660, %v662
      %v684 = vsel %vm675, %v662, %v664
      %v685 = vsel %vm675, %v664, %v666
      %v686 = vsel %vm675, %v666, %v668
      %v687 = vsel %vm675, %v668, %v670
      %v688 = vsel %vm675, %v670, %v672
      %v689 = vsel %vm675, %v672, %v674
      %v706 = vadd.f32 %v582, %v676
      %v707 = vadd.f32 %v583, %v677
      %v708 = vadd.f32 %v584, %v678
      %v709 = vadd.f32 %v585, %v679
      %v710 = vadd.f32 %v586, %v680
      %v711 = vadd.f32 %v587, %v681
      %v712 = vadd.f32 %v588, %v682
      %v713 = vadd.f32 %v589, %v658
      %v714 = vadd.f32 %v590, %v683
      %v715 = vadd.f32 %v591, %v684
      %v716 = vadd.f32 %v592, %v685
      %v717 = vadd.f32 %v593, %v686
      %v718 = vadd.f32 %v594, %v687
      %v719 = vadd.f32 %v595, %v688
      %v720 = vadd.f32 %v596, %v689
      %v721 = vadd.f32 %v597, %v674
      %s722 = scalar_lea.vmem %s1, 48
      %v723 = vld [vmem:[%s722] sm:$0xff]
      %v724 = vld [vmem:[%s722 + $0x8] sm:$0xff]
      %726 = vset.pattern.permute.xlu0 0
      %727 = vperm.xlu0 %726, %v723
      %v728 = vpop.permute.xlu0 %727
      %731 = vset.pattern.permute.xlu0 0
      %732 = vperm.xlu0 %731, %v724
      %v733 = vpop.permute.xlu0 %732
      %v735 = vmul.f32 %v728, %v426
      %v736 = vmul.f32 %v728, %v427
      %v737 = vmul.f32 %v728, %v428
      %v738 = vmul.f32 %v728, %v429
      %v739 = vmul.f32 %v728, %v430
      %v740 = vmul.f32 %v728, %v431
      %v741 = vmul.f32 %v728, %v432
      %v742 = vmul.f32 %v728, %v433
      %v743 = vmul.f32 %v733, %v426
      %v744 = vmul.f32 %v733, %v427
      %v745 = vmul.f32 %v733, %v428
      %v746 = vmul.f32 %v733, %v429
      %v747 = vmul.f32 %v733, %v430
      %v748 = vmul.f32 %v733, %v431
      %v749 = vmul.f32 %v733, %v432
      %v750 = vmul.f32 %v733, %v433
      %767 = vrot.lane.b32.xlu0 %v735, 96
      %v768 = vpop.permute.xlu0 %767
      %769 = vrot.lane.b32.xlu0 %v736, 96
      %v770 = vpop.permute.xlu0 %769
      %771 = vrot.lane.b32.xlu0 %v737, 96
      %v772 = vpop.permute.xlu0 %771
      %773 = vrot.lane.b32.xlu0 %v738, 96
      %v774 = vpop.permute.xlu0 %773
      %775 = vrot.lane.b32.xlu0 %v739, 96
      %v776 = vpop.permute.xlu0 %775
      %777 = vrot.lane.b32.xlu0 %v740, 96
      %v778 = vpop.permute.xlu0 %777
      %779 = vrot.lane.b32.xlu0 %v741, 96
      %v780 = vpop.permute.xlu0 %779
      %781 = vrot.lane.b32.xlu0 %v742, 96
      %v782 = vpop.permute.xlu0 %781
      %783 = vrot.lane.b32.xlu0 %v743, 96
      %v784 = vpop.permute.xlu0 %783
      %785 = vrot.lane.b32.xlu0 %v744, 96
      %v786 = vpop.permute.xlu0 %785
      %787 = vrot.lane.b32.xlu0 %v745, 96
      %v788 = vpop.permute.xlu0 %787
      %789 = vrot.lane.b32.xlu0 %v746, 96
      %v790 = vpop.permute.xlu0 %789
      %791 = vrot.lane.b32.xlu0 %v747, 96
      %v792 = vpop.permute.xlu0 %791
      %793 = vrot.lane.b32.xlu0 %v748, 96
      %v794 = vpop.permute.xlu0 %793
      %795 = vrot.lane.b32.xlu0 %v749, 96
      %v796 = vpop.permute.xlu0 %795
      %797 = vrot.lane.b32.xlu0 %v750, 96
      %v798 = vpop.permute.xlu0 %797
      %vm799 = vcmask 785408
      %v800 = vsel %vm799, %v768, %v770
      %v801 = vsel %vm799, %v770, %v772
      %v802 = vsel %vm799, %v772, %v774
      %v803 = vsel %vm799, %v774, %v776
      %v804 = vsel %vm799, %v776, %v778
      %v805 = vsel %vm799, %v778, %v780
      %v806 = vsel %vm799, %v780, %v782
      %v807 = vsel %vm799, %v784, %v786
      %v808 = vsel %vm799, %v786, %v788
      %v809 = vsel %vm799, %v788, %v790
      %v810 = vsel %vm799, %v790, %v792
      %v811 = vsel %vm799, %v792, %v794
      %v812 = vsel %vm799, %v794, %v796
      %v813 = vsel %vm799, %v796, %v798
      %v830 = vadd.f32 %v706, %v800
      %v831 = vadd.f32 %v707, %v801
      %v832 = vadd.f32 %v708, %v802
      %v833 = vadd.f32 %v709, %v803
      %v834 = vadd.f32 %v710, %v804
      %v835 = vadd.f32 %v711, %v805
      %v836 = vadd.f32 %v712, %v806
      %v837 = vadd.f32 %v713, %v782
      %v838 = vadd.f32 %v714, %v807
      %v839 = vadd.f32 %v715, %v808
      %v840 = vadd.f32 %v716, %v809
      %v841 = vadd.f32 %v717, %v810
      %v842 = vadd.f32 %v718, %v811
      %v843 = vadd.f32 %v719, %v812
      %v844 = vadd.f32 %v720, %v813
      %v845 = vadd.f32 %v721, %v798
      %s846 = scalar_lea.vmem %s1, 64
      %v847 = vld [vmem:[%s846] sm:$0xff]
      %v848 = vld [vmem:[%s846 + $0x8] sm:$0xff]
      %850 = vset.pattern.permute.xlu0 0
      %851 = vperm.xlu0 %850, %v847
      %v852 = vpop.permute.xlu0 %851
      %855 = vset.pattern.permute.xlu0 0
      %856 = vperm.xlu0 %855, %v848
      %v857 = vpop.permute.xlu0 %856
      %v859 = vmul.f32 %v852, %v426
      %v860 = vmul.f32 %v852, %v427
      %v861 = vmul.f32 %v852, %v428
      %v862 = vmul.f32 %v852, %v429
      %v863 = vmul.f32 %v852, %v430
      %v864 = vmul.f32 %v852, %v431
      %v865 = vmul.f32 %v852, %v432
      %v866 = vmul.f32 %v852, %v433
      %v867 = vmul.f32 %v857, %v426
      %v868 = vmul.f32 %v857, %v427
      %v869 = vmul.f32 %v857, %v428
      %v870 = vmul.f32 %v857, %v429
      %v871 = vmul.f32 %v857, %v430
      %v872 = vmul.f32 %v857, %v431
      %v873 = vmul.f32 %v857, %v432
      %v874 = vmul.f32 %v857, %v433
      %891 = vrot.lane.b32.xlu0 %v859, 95
      %v892 = vpop.permute.xlu0 %891
      %893 = vrot.lane.b32.xlu0 %v860, 95
      %v894 = vpop.permute.xlu0 %893
      %895 = vrot.lane.b32.xlu0 %v861, 95
      %v896 = vpop.permute.xlu0 %895
      %897 = vrot.lane.b32.xlu0 %v862, 95
      %v898 = vpop.permute.xlu0 %897
      %899 = vrot.lane.b32.xlu0 %v863, 95
      %v900 = vpop.permute.xlu0 %899
      %901 = vrot.lane.b32.xlu0 %v864, 95
      %v902 = vpop.permute.xlu0 %901
      %903 = vrot.lane.b32.xlu0 %v865, 95
      %v904 = vpop.permute.xlu0 %903
      %905 = vrot.lane.b32.xlu0 %v866, 95
      %v906 = vpop.permute.xlu0 %905
      %907 = vrot.lane.b32.xlu0 %v867, 95
      %v908 = vpop.permute.xlu0 %907
      %909 = vrot.lane.b32.xlu0 %v868, 95
      %v910 = vpop.permute.xlu0 %909
      %911 = vrot.lane.b32.xlu0 %v869, 95
      %v912 = vpop.permute.xlu0 %911
      %913 = vrot.lane.b32.xlu0 %v870, 95
      %v914 = vpop.permute.xlu0 %913
      %915 = vrot.lane.b32.xlu0 %v871, 95
      %v916 = vpop.permute.xlu0 %915
      %917 = vrot.lane.b32.xlu0 %v872, 95
      %v918 = vpop.permute.xlu0 %917
      %919 = vrot.lane.b32.xlu0 %v873, 95
      %v920 = vpop.permute.xlu0 %919
      %921 = vrot.lane.b32.xlu0 %v874, 95
      %v922 = vpop.permute.xlu0 %921
      %vm923 = vcmask 777216
      %v924 = vsel %vm923, %v892, %v894
      %v925 = vsel %vm923, %v894, %v896
      %v926 = vsel %vm923, %v896, %v898
      %v927 = vsel %vm923, %v898, %v900
      %v928 = vsel %vm923, %v900, %v902
      %v929 = vsel %vm923, %v902, %v904
      %v930 = vsel %vm923, %v904, %v906
      %v931 = vsel %vm923, %v908, %v910
      %v932 = vsel %vm923, %v910, %v912
      %v933 = vsel %vm923, %v912, %v914
      %v934 = vsel %vm923, %v914, %v916
      %v935 = vsel %vm923, %v916, %v918
      %v936 = vsel %vm923, %v918, %v920
      %v937 = vsel %vm923, %v920, %v922
      %v954 = vadd.f32 %v830, %v924
      %v955 = vadd.f32 %v831, %v925
      %v956 = vadd.f32 %v832, %v926
      %v957 = vadd.f32 %v833, %v927
      %v958 = vadd.f32 %v834, %v928
      %v959 = vadd.f32 %v835, %v929
      %v960 = vadd.f32 %v836, %v930
      %v961 = vadd.f32 %v837, %v906
      %v962 = vadd.f32 %v838, %v931
      %v963 = vadd.f32 %v839, %v932
      %v964 = vadd.f32 %v840, %v933
      %v965 = vadd.f32 %v841, %v934
      %v966 = vadd.f32 %v842, %v935
      %v967 = vadd.f32 %v843, %v936
      %v968 = vadd.f32 %v844, %v937
      %v969 = vadd.f32 %v845, %v922
      %s970 = scalar_lea.vmem %s1, 80
      %v971 = vld [vmem:[%s970] sm:$0xff]
      %v972 = vld [vmem:[%s970 + $0x8] sm:$0xff]
      %974 = vset.pattern.permute.xlu0 0
      %975 = vperm.xlu0 %974, %v971
      %v976 = vpop.permute.xlu0 %975
      %979 = vset.pattern.permute.xlu0 0
      %980 = vperm.xlu0 %979, %v972
      %v981 = vpop.permute.xlu0 %980
      %v983 = vmul.f32 %v976, %v426
      %v984 = vmul.f32 %v976, %v427
      %v985 = vmul.f32 %v976, %v428
      %v986 = vmul.f32 %v976, %v429
      %v987 = vmul.f32 %v976, %v430
      %v988 = vmul.f32 %v976, %v431
      %v989 = vmul.f32 %v976, %v432
      %v990 = vmul.f32 %v976, %v433
      %v991 = vmul.f32 %v981, %v426
      %v992 = vmul.f32 %v981, %v427
      %v993 = vmul.f32 %v981, %v428
      %v994 = vmul.f32 %v981, %v429
      %v995 = vmul.f32 %v981, %v430
      %v996 = vmul.f32 %v981, %v431
      %v997 = vmul.f32 %v981, %v432
      %v998 = vmul.f32 %v981, %v433
      %1015 = vrot.lane.b32.xlu0 %v983, 94
      %v1016 = vpop.permute.xlu0 %1015
      %1017 = vrot.lane.b32.xlu0 %v984, 94
      %v1018 = vpop.permute.xlu0 %1017
      %1019 = vrot.lane.b32.xlu0 %v985, 94
      %v1020 = vpop.permute.xlu0 %1019
      %1021 = vrot.lane.b32.xlu0 %v986, 94
      %v1022 = vpop.permute.xlu0 %1021
      %1023 = vrot.lane.b32.xlu0 %v987, 94
      %v1024 = vpop.permute.xlu0 %1023
      %1025 = vrot.lane.b32.xlu0 %v988, 94
      %v1026 = vpop.permute.xlu0 %1025
      %1027 = vrot.lane.b32.xlu0 %v989, 94
      %v1028 = vpop.permute.xlu0 %1027
      %1029 = vrot.lane.b32.xlu0 %v990, 94
      %v1030 = vpop.permute.xlu0 %1029
      %1031 = vrot.lane.b32.xlu0 %v991, 94
      %v1032 = vpop.permute.xlu0 %1031
      %1033 = vrot.lane.b32.xlu0 %v992, 94
      %v1034 = vpop.permute.xlu0 %1033
      %1035 = vrot.lane.b32.xlu0 %v993, 94
      %v1036 = vpop.permute.xlu0 %1035
      %1037 = vrot.lane.b32.xlu0 %v994, 94
      %v1038 = vpop.permute.xlu0 %1037
      %1039 = vrot.lane.b32.xlu0 %v995, 94
      %v1040 = vpop.permute.xlu0 %1039
      %1041 = vrot.lane.b32.xlu0 %v996, 94
      %v1042 = vpop.permute.xlu0 %1041
      %1043 = vrot.lane.b32.xlu0 %v997, 94
      %v1044 = vpop.permute.xlu0 %1043
      %1045 = vrot.lane.b32.xlu0 %v998, 94
      %v1046 = vpop.permute.xlu0 %1045
      %vm1047 = vcmask 769024
      %v1048 = vsel %vm1047, %v1016, %v1018
      %v1049 = vsel %vm1047, %v1018, %v1020
      %v1050 = vsel %vm1047, %v1020, %v1022
      %v1051 = vsel %vm1047, %v1022, %v1024
      %v1052 = vsel %vm1047, %v1024, %v1026
      %v1053 = vsel %vm1047, %v1026, %v1028
      %v1054 = vsel %vm1047, %v1028, %v1030
      %v1055 = vsel %vm1047, %v1032, %v1034
      %v1056 = vsel %vm1047, %v1034, %v1036
      %v1057 = vsel %vm1047, %v1036, %v1038
      %v1058 = vsel %vm1047, %v1038, %v1040
      %v1059 = vsel %vm1047, %v1040, %v1042
      %v1060 = vsel %vm1047, %v1042, %v1044
      %v1061 = vsel %vm1047, %v1044, %v1046
      %v1078 = vadd.f32 %v954, %v1048
      %v1079 = vadd.f32 %v955, %v1049
      %v1080 = vadd.f32 %v956, %v1050
      %v1081 = vadd.f32 %v957, %v1051
      %v1082 = vadd.f32 %v958, %v1052
      %v1083 = vadd.f32 %v959, %v1053
      %v1084 = vadd.f32 %v960, %v1054
      %v1085 = vadd.f32 %v961, %v1030
      %v1086 = vadd.f32 %v962, %v1055
      %v1087 = vadd.f32 %v963, %v1056
      %v1088 = vadd.f32 %v964, %v1057
      %v1089 = vadd.f32 %v965, %v1058
      %v1090 = vadd.f32 %v966, %v1059
      %v1091 = vadd.f32 %v967, %v1060
      %v1092 = vadd.f32 %v968, %v1061
      %v1093 = vadd.f32 %v969, %v1046
      %s1094 = scalar_lea.vmem %s1, 96
      %v1095 = vld [vmem:[%s1094] sm:$0xff]
      %v1096 = vld [vmem:[%s1094 + $0x8] sm:$0xff]
      %1098 = vset.pattern.permute.xlu0 0
      %1099 = vperm.xlu0 %1098, %v1095
      %v1100 = vpop.permute.xlu0 %1099
      %1103 = vset.pattern.permute.xlu0 0
      %1104 = vperm.xlu0 %1103, %v1096
      %v1105 = vpop.permute.xlu0 %1104
      %v1107 = vmul.f32 %v1100, %v426
      %v1108 = vmul.f32 %v1100, %v427
      %v1109 = vmul.f32 %v1100, %v428
      %v1110 = vmul.f32 %v1100, %v429
      %v1111 = vmul.f32 %v1100, %v430
      %v1112 = vmul.f32 %v1100, %v431
      %v1113 = vmul.f32 %v1100, %v432
      %v1114 = vmul.f32 %v1100, %v433
      %v1115 = vmul.f32 %v1105, %v426
      %v1116 = vmul.f32 %v1105, %v427
      %v1117 = vmul.f32 %v1105, %v428
      %v1118 = vmul.f32 %v1105, %v429
      %v1119 = vmul.f32 %v1105, %v430
      %v1120 = vmul.f32 %v1105, %v431
      %v1121 = vmul.f32 %v1105, %v432
      %v1122 = vmul.f32 %v1105, %v433
      %1139 = vrot.lane.b32.xlu0 %v1107, 64
      %v1140 = vpop.permute.xlu0 %1139
      %1141 = vrot.lane.b32.xlu0 %v1108, 64
      %v1142 = vpop.permute.xlu0 %1141
      %1143 = vrot.lane.b32.xlu0 %v1109, 64
      %v1144 = vpop.permute.xlu0 %1143
      %1145 = vrot.lane.b32.xlu0 %v1110, 64
      %v1146 = vpop.permute.xlu0 %1145
      %1147 = vrot.lane.b32.xlu0 %v1111, 64
      %v1148 = vpop.permute.xlu0 %1147
      %1149 = vrot.lane.b32.xlu0 %v1112, 64
      %v1150 = vpop.permute.xlu0 %1149
      %1151 = vrot.lane.b32.xlu0 %v1113, 64
      %v1152 = vpop.permute.xlu0 %1151
      %1153 = vrot.lane.b32.xlu0 %v1114, 64
      %v1154 = vpop.permute.xlu0 %1153
      %1155 = vrot.lane.b32.xlu0 %v1115, 64
      %v1156 = vpop.permute.xlu0 %1155
      %1157 = vrot.lane.b32.xlu0 %v1116, 64
      %v1158 = vpop.permute.xlu0 %1157
      %1159 = vrot.lane.b32.xlu0 %v1117, 64
      %v1160 = vpop.permute.xlu0 %1159
      %1161 = vrot.lane.b32.xlu0 %v1118, 64
      %v1162 = vpop.permute.xlu0 %1161
      %1163 = vrot.lane.b32.xlu0 %v1119, 64
      %v1164 = vpop.permute.xlu0 %1163
      %1165 = vrot.lane.b32.xlu0 %v1120, 64
      %v1166 = vpop.permute.xlu0 %1165
      %1167 = vrot.lane.b32.xlu0 %v1121, 64
      %v1168 = vpop.permute.xlu0 %1167
      %1169 = vrot.lane.b32.xlu0 %v1122, 64
      %v1170 = vpop.permute.xlu0 %1169
      %vm1171 = vcmask 523264
      %v1172 = vsel %vm1171, %v1140, %v1142
      %v1173 = vsel %vm1171, %v1142, %v1144
      %v1174 = vsel %vm1171, %v1144, %v1146
      %v1175 = vsel %vm1171, %v1146, %v1148
      %v1176 = vsel %vm1171, %v1148, %v1150
      %v1177 = vsel %vm1171, %v1150, %v1152
      %v1178 = vsel %vm1171, %v1152, %v1154
      %v1179 = vsel %vm1171, %v1156, %v1158
      %v1180 = vsel %vm1171, %v1158, %v1160
      %v1181 = vsel %vm1171, %v1160, %v1162
      %v1182 = vsel %vm1171, %v1162, %v1164
      %v1183 = vsel %vm1171, %v1164, %v1166
      %v1184 = vsel %vm1171, %v1166, %v1168
      %v1185 = vsel %vm1171, %v1168, %v1170
      %v1202 = vadd.f32 %v1078, %v1172
      %v1203 = vadd.f32 %v1079, %v1173
      %v1204 = vadd.f32 %v1080, %v1174
      %v1205 = vadd.f32 %v1081, %v1175
      %v1206 = vadd.f32 %v1082, %v1176
      %v1207 = vadd.f32 %v1083, %v1177
      %v1208 = vadd.f32 %v1084, %v1178
      %v1209 = vadd.f32 %v1085, %v1154
      %v1210 = vadd.f32 %v1086, %v1179
      %v1211 = vadd.f32 %v1087, %v1180
      %v1212 = vadd.f32 %v1088, %v1181
      %v1213 = vadd.f32 %v1089, %v1182
      %v1214 = vadd.f32 %v1090, %v1183
      %v1215 = vadd.f32 %v1091, %v1184
      %v1216 = vadd.f32 %v1092, %v1185
      %v1217 = vadd.f32 %v1093, %v1170
      %s1218 = scalar_lea.vmem %s1, 112
      %v1219 = vld [vmem:[%s1218] sm:$0xff]
      %v1220 = vld [vmem:[%s1218 + $0x8] sm:$0xff]
      %1222 = vset.pattern.permute.xlu0 0
      %1223 = vperm.xlu0 %1222, %v1219
      %v1224 = vpop.permute.xlu0 %1223
      %1227 = vset.pattern.permute.xlu0 0
      %1228 = vperm.xlu0 %1227, %v1220
      %v1229 = vpop.permute.xlu0 %1228
      %v1231 = vmul.f32 %v1224, %v426
      %v1232 = vmul.f32 %v1224, %v427
      %v1233 = vmul.f32 %v1224, %v428
      %v1234 = vmul.f32 %v1224, %v429
      %v1235 = vmul.f32 %v1224, %v430
      %v1236 = vmul.f32 %v1224, %v431
      %v1237 = vmul.f32 %v1224, %v432
      %v1238 = vmul.f32 %v1224, %v433
      %v1239 = vmul.f32 %v1229, %v426
      %v1240 = vmul.f32 %v1229, %v427
      %v1241 = vmul.f32 %v1229, %v428
      %v1242 = vmul.f32 %v1229, %v429
      %v1243 = vmul.f32 %v1229, %v430
      %v1244 = vmul.f32 %v1229, %v431
      %v1245 = vmul.f32 %v1229, %v432
      %v1246 = vmul.f32 %v1229, %v433
      %1263 = vrot.lane.b32.xlu0 %v1231, 63
      %v1264 = vpop.permute.xlu0 %1263
      %1265 = vrot.lane.b32.xlu0 %v1232, 63
      %v1266 = vpop.permute.xlu0 %1265
      %1267 = vrot.lane.b32.xlu0 %v1233, 63
      %v1268 = vpop.permute.xlu0 %1267
      %1269 = vrot.lane.b32.xlu0 %v1234, 63
      %v1270 = vpop.permute.xlu0 %1269
      %1271 = vrot.lane.b32.xlu0 %v1235, 63
      %v1272 = vpop.permute.xlu0 %1271
      %1273 = vrot.lane.b32.xlu0 %v1236, 63
      %v1274 = vpop.permute.xlu0 %1273
      %1275 = vrot.lane.b32.xlu0 %v1237, 63
      %v1276 = vpop.permute.xlu0 %1275
      %1277 = vrot.lane.b32.xlu0 %v1238, 63
      %v1278 = vpop.permute.xlu0 %1277
      %1279 = vrot.lane.b32.xlu0 %v1239, 63
      %v1280 = vpop.permute.xlu0 %1279
      %1281 = vrot.lane.b32.xlu0 %v1240, 63
      %v1282 = vpop.permute.xlu0 %1281
      %1283 = vrot.lane.b32.xlu0 %v1241, 63
      %v1284 = vpop.permute.xlu0 %1283
      %1285 = vrot.lane.b32.xlu0 %v1242, 63
      %v1286 = vpop.permute.xlu0 %1285
      %1287 = vrot.lane.b32.xlu0 %v1243, 63
      %v1288 = vpop.permute.xlu0 %1287
      %1289 = vrot.lane.b32.xlu0 %v1244, 63
      %v1290 = vpop.permute.xlu0 %1289
      %1291 = vrot.lane.b32.xlu0 %v1245, 63
      %v1292 = vpop.permute.xlu0 %1291
      %1293 = vrot.lane.b32.xlu0 %v1246, 63
      %v1294 = vpop.permute.xlu0 %1293
      %vm1295 = vcmask 515072
      %v1296 = vsel %vm1295, %v1264, %v1266
      %v1297 = vsel %vm1295, %v1266, %v1268
      %v1298 = vsel %vm1295, %v1268, %v1270
      %v1299 = vsel %vm1295, %v1270, %v1272
      %v1300 = vsel %vm1295, %v1272, %v1274
      %v1301 = vsel %vm1295, %v1274, %v1276
      %v1302 = vsel %vm1295, %v1276, %v1278
      %v1303 = vsel %vm1295, %v1280, %v1282
      %v1304 = vsel %vm1295, %v1282, %v1284
      %v1305 = vsel %vm1295, %v1284, %v1286
      %v1306 = vsel %vm1295, %v1286, %v1288
      %v1307 = vsel %vm1295, %v1288, %v1290
      %v1308 = vsel %vm1295, %v1290, %v1292
      %v1309 = vsel %vm1295, %v1292, %v1294
      %v1326 = vadd.f32 %v1202, %v1296
      %v1327 = vadd.f32 %v1203, %v1297
      %v1328 = vadd.f32 %v1204, %v1298
      %v1329 = vadd.f32 %v1205, %v1299
      %v1330 = vadd.f32 %v1206, %v1300
      %v1331 = vadd.f32 %v1207, %v1301
      %v1332 = vadd.f32 %v1208, %v1302
      %v1333 = vadd.f32 %v1209, %v1278
      %v1334 = vadd.f32 %v1210, %v1303
      %v1335 = vadd.f32 %v1211, %v1304
      %v1336 = vadd.f32 %v1212, %v1305
      %v1337 = vadd.f32 %v1213, %v1306
      %v1338 = vadd.f32 %v1214, %v1307
      %v1339 = vadd.f32 %v1215, %v1308
      %v1340 = vadd.f32 %v1216, %v1309
      %v1341 = vadd.f32 %v1217, %v1294
      %s1342 = scalar_lea.vmem %s1, 128
      %v1343 = vld [vmem:[%s1342] sm:$0xff]
      %v1344 = vld [vmem:[%s1342 + $0x8] sm:$0xff]
      %1346 = vset.pattern.permute.xlu0 0
      %1347 = vperm.xlu0 %1346, %v1343
      %v1348 = vpop.permute.xlu0 %1347
      %1351 = vset.pattern.permute.xlu0 0
      %1352 = vperm.xlu0 %1351, %v1344
      %v1353 = vpop.permute.xlu0 %1352
      %v1355 = vmul.f32 %v1348, %v426
      %v1356 = vmul.f32 %v1348, %v427
      %v1357 = vmul.f32 %v1348, %v428
      %v1358 = vmul.f32 %v1348, %v429
      %v1359 = vmul.f32 %v1348, %v430
      %v1360 = vmul.f32 %v1348, %v431
      %v1361 = vmul.f32 %v1348, %v432
      %v1362 = vmul.f32 %v1348, %v433
      %v1363 = vmul.f32 %v1353, %v426
      %v1364 = vmul.f32 %v1353, %v427
      %v1365 = vmul.f32 %v1353, %v428
      %v1366 = vmul.f32 %v1353, %v429
      %v1367 = vmul.f32 %v1353, %v430
      %v1368 = vmul.f32 %v1353, %v431
      %v1369 = vmul.f32 %v1353, %v432
      %v1370 = vmul.f32 %v1353, %v433
      %1387 = vrot.lane.b32.xlu0 %v1355, 62
      %v1388 = vpop.permute.xlu0 %1387
      %1389 = vrot.lane.b32.xlu0 %v1356, 62
      %v1390 = vpop.permute.xlu0 %1389
      %1391 = vrot.lane.b32.xlu0 %v1357, 62
      %v1392 = vpop.permute.xlu0 %1391
      %1393 = vrot.lane.b32.xlu0 %v1358, 62
      %v1394 = vpop.permute.xlu0 %1393
      %1395 = vrot.lane.b32.xlu0 %v1359, 62
      %v1396 = vpop.permute.xlu0 %1395
      %1397 = vrot.lane.b32.xlu0 %v1360, 62
      %v1398 = vpop.permute.xlu0 %1397
      %1399 = vrot.lane.b32.xlu0 %v1361, 62
      %v1400 = vpop.permute.xlu0 %1399
      %1401 = vrot.lane.b32.xlu0 %v1362, 62
      %v1402 = vpop.permute.xlu0 %1401
      %1403 = vrot.lane.b32.xlu0 %v1363, 62
      %v1404 = vpop.permute.xlu0 %1403
      %1405 = vrot.lane.b32.xlu0 %v1364, 62
      %v1406 = vpop.permute.xlu0 %1405
      %1407 = vrot.lane.b32.xlu0 %v1365, 62
      %v1408 = vpop.permute.xlu0 %1407
      %1409 = vrot.lane.b32.xlu0 %v1366, 62
      %v1410 = vpop.permute.xlu0 %1409
      %1411 = vrot.lane.b32.xlu0 %v1367, 62
      %v1412 = vpop.permute.xlu0 %1411
      %1413 = vrot.lane.b32.xlu0 %v1368, 62
      %v1414 = vpop.permute.xlu0 %1413
      %1415 = vrot.lane.b32.xlu0 %v1369, 62
      %v1416 = vpop.permute.xlu0 %1415
      %1417 = vrot.lane.b32.xlu0 %v1370, 62
      %v1418 = vpop.permute.xlu0 %1417
      %vm1419 = vcmask 506880
      %v1420 = vsel %vm1419, %v1388, %v1390
      %v1421 = vsel %vm1419, %v1390, %v1392
      %v1422 = vsel %vm1419, %v1392, %v1394
      %v1423 = vsel %vm1419, %v1394, %v1396
      %v1424 = vsel %vm1419, %v1396, %v1398
      %v1425 = vsel %vm1419, %v1398, %v1400
      %v1426 = vsel %vm1419, %v1400, %v1402
      %v1427 = vsel %vm1419, %v1404, %v1406
      %v1428 = vsel %vm1419, %v1406, %v1408
      %v1429 = vsel %vm1419, %v1408, %v1410
      %v1430 = vsel %vm1419, %v1410, %v1412
      %v1431 = vsel %vm1419, %v1412, %v1414
      %v1432 = vsel %vm1419, %v1414, %v1416
      %v1433 = vsel %vm1419, %v1416, %v1418
      %v1450 = vadd.f32 %v1326, %v1420
      %v1451 = vadd.f32 %v1327, %v1421
      %v1452 = vadd.f32 %v1328, %v1422
      %v1453 = vadd.f32 %v1329, %v1423
      %v1454 = vadd.f32 %v1330, %v1424
      %v1455 = vadd.f32 %v1331, %v1425
      %v1456 = vadd.f32 %v1332, %v1426
      %v1457 = vadd.f32 %v1333, %v1402
      %v1458 = vadd.f32 %v1334, %v1427
      %v1459 = vadd.f32 %v1335, %v1428
      %v1460 = vadd.f32 %v1336, %v1429
      %v1461 = vadd.f32 %v1337, %v1430
      %v1462 = vadd.f32 %v1338, %v1431
      %v1463 = vadd.f32 %v1339, %v1432
      %v1464 = vadd.f32 %v1340, %v1433
      %v1465 = vadd.f32 %v1341, %v1418
      %v1466 = vld [vmem:[%s2] sm:$0xff]
      %v1467 = vld [vmem:[%s2 + $0x8] sm:$0xff]
      %1469 = vset.pattern.permute.xlu0 0
      %1470 = vperm.xlu0 %1469, %v1466
      %v1471 = vpop.permute.xlu0 %1470
      %1474 = vset.pattern.permute.xlu0 0
      %1475 = vperm.xlu0 %1474, %v1467
      %v1476 = vpop.permute.xlu0 %1475
      %v1478 = vadd.f32 %v1450, %v1471
      %v1479 = vadd.f32 %v1451, %v1471
      %v1480 = vadd.f32 %v1452, %v1471
      %v1481 = vadd.f32 %v1453, %v1471
      %v1482 = vadd.f32 %v1454, %v1471
      %v1483 = vadd.f32 %v1455, %v1471
      %v1484 = vadd.f32 %v1456, %v1471
      %v1485 = vadd.f32 %v1457, %v1471
      %v1486 = vadd.f32 %v1458, %v1476
      %v1487 = vadd.f32 %v1459, %v1476
      %v1488 = vadd.f32 %v1460, %v1476
      %v1489 = vadd.f32 %v1461, %v1476
      %v1490 = vadd.f32 %v1462, %v1476
      %v1491 = vadd.f32 %v1463, %v1476
      %v1492 = vadd.f32 %v1464, %v1476
      %v1493 = vadd.f32 %v1465, %v1476
      %v1494 = vld [vmem:[%s11] sm:$0xff]
      %v1496 = vperm.slane %v1494, 0
      %v1497 = vperm.slane %v1494, 1
      %v1498 = vperm.slane %v1494, 2
      %v1499 = vperm.slane %v1494, 3
      %v1500 = vperm.slane %v1494, 4
      %v1501 = vperm.slane %v1494, 5
      %v1502 = vperm.slane %v1494, 6
      %v1503 = vperm.slane %v1494, 7
      %v1512 = vmul.f32 %v1478, %v1496
      %v1513 = vmul.f32 %v1479, %v1497
      %v1514 = vmul.f32 %v1480, %v1498
      %v1515 = vmul.f32 %v1481, %v1499
      %v1516 = vmul.f32 %v1482, %v1500
      %v1517 = vmul.f32 %v1483, %v1501
      %v1518 = vmul.f32 %v1484, %v1502
      %v1519 = vmul.f32 %v1485, %v1503
      %v1520 = vmul.f32 %v1486, %v1496
      %v1521 = vmul.f32 %v1487, %v1497
      %v1522 = vmul.f32 %v1488, %v1498
      %v1523 = vmul.f32 %v1489, %v1499
      %v1524 = vmul.f32 %v1490, %v1500
      %v1525 = vmul.f32 %v1491, %v1501
      %v1526 = vmul.f32 %v1492, %v1502
      %v1527 = vmul.f32 %v1493, %v1503
      %v1528 = vpack.c.bf16 %v1513, %v1512
      %v1529 = vpack.c.bf16 %v1515, %v1514
      %v1530 = vpack.c.bf16 %v1517, %v1516
      %v1531 = vpack.c.bf16 %v1519, %v1518
      %v1532 = vpack.c.bf16 %v1521, %v1520
      %v1533 = vpack.c.bf16 %v1523, %v1522
      %v1534 = vpack.c.bf16 %v1525, %v1524
      %v1535 = vpack.c.bf16 %v1527, %v1526
      %1536 = vst [vmem:[#allocation2] sm:$0xff] %v1528
      %1537 = vst [vmem:[#allocation2 + $0x8] sm:$0xff] %v1529
      %1538 = vst [vmem:[#allocation2 + $0x10] sm:$0xff] %v1530
      %vm1539 = vcmask 1043456
      %vm1540 = vcmask 506884
      %vm1541 = vmor %vm1540, %vm1539
      %1542 = vst.msk [vmem:[#allocation2 + $0x18] sm:$0xff] %vm1541, %v1531
      %1543 = vst [vmem:[#allocation2 + $0x20] sm:$0xff] %v1532
      %1544 = vst [vmem:[#allocation2 + $0x28] sm:$0xff] %v1533
      %1545 = vst [vmem:[#allocation2 + $0x30] sm:$0xff] %v1534
      %1546 = vst.msk [vmem:[#allocation2 + $0x38] sm:$0xff] %vm1541, %v1535
      %v1547 = vld [vmem:[%s3] sm:$0xf]
      %v1548 = vld [vmem:[%s3 + $0x4] sm:$0xf]
      %v1549 = vld [vmem:[#allocation2] sm:$0xff]
      %v1550 = vld [vmem:[#allocation2 + $0x8] sm:$0xff]
      %v1551 = vld [vmem:[#allocation2 + $0x10] sm:$0xff]
      %v1552 = vld [vmem:[#allocation2 + $0x18] sm:$0xf]
      %v1553 = vld [vmem:[#allocation2 + $0x20] sm:$0xff]
      %v1554 = vld [vmem:[#allocation2 + $0x28] sm:$0xff]
      %v1555 = vld [vmem:[#allocation2 + $0x30] sm:$0xff]
      %v1556 = vld [vmem:[#allocation2 + $0x38] sm:$0xf]
      %s1557 = scalar_lea.vmem %s3, 8
      %v1558 = vld [vmem:[%s1557] sm:$0xf]
      %v1559 = vld [vmem:[%s1557 + $0x4] sm:$0xf]
      %v1562 = vunpack.c.l.b16 %v1558
      %v1563 = vunpack.c.l.b16 %v1559
      %v1564 = vpack.c.b16 %v1563, %v1562
      %v1573 = vunpack.c.l.b16 %v1549
      %v1574 = vunpack.c.h.b16 %v1549
      %v1575 = vunpack.c.l.b16 %v1550
      %v1576 = vunpack.c.h.b16 %v1550
      %v1577 = vunpack.c.l.b16 %v1551
      %v1578 = vunpack.c.h.b16 %v1551
      %v1579 = vunpack.c.l.b16 %v1552
      %v1580 = vunpack.c.l.b16 %v1553
      %v1581 = vunpack.c.h.b16 %v1553
      %v1582 = vunpack.c.l.b16 %v1554
      %v1583 = vunpack.c.h.b16 %v1554
      %v1584 = vunpack.c.l.b16 %v1555
      %v1585 = vunpack.c.h.b16 %v1555
      %v1586 = vunpack.c.l.b16 %v1556
      %v1587 = vpack.c.b16 %v1580, %v1573
      %v1588 = vpack.c.b16 %v1581, %v1574
      %v1589 = vpack.c.b16 %v1582, %v1575
      %v1590 = vpack.c.b16 %v1583, %v1576
      %v1591 = vpack.c.b16 %v1584, %v1577
      %v1592 = vpack.c.b16 %v1585, %v1578
      %v1593 = vpack.c.b16 %v1586, %v1579
      %1594 = vrot.lane.b32.xlu0 %v1587, 127
      %v1595 = vpop.permute.xlu0 %1594
      %1596 = vrot.lane.b32.xlu0 %v1588, 127
      %v1597 = vpop.permute.xlu0 %1596
      %1598 = vrot.lane.b32.xlu0 %v1589, 127
      %v1599 = vpop.permute.xlu0 %1598
      %1600 = vrot.lane.b32.xlu0 %v1590, 127
      %v1601 = vpop.permute.xlu0 %1600
      %1602 = vrot.lane.b32.xlu0 %v1591, 127
      %v1603 = vpop.permute.xlu0 %1602
      %1604 = vrot.lane.b32.xlu0 %v1592, 127
      %v1605 = vpop.permute.xlu0 %1604
      %1606 = vrot.lane.b32.xlu0 %v1593, 127
      %v1607 = vpop.permute.xlu0 %1606
      %vm1608 = vcmask 1039360
      %v1609 = vsel %vm1608, %v1595, %v1597
      %v1610 = vsel %vm1608, %v1597, %v1599
      %v1611 = vsel %vm1608, %v1599, %v1601
      %v1612 = vsel %vm1608, %v1601, %v1603
      %v1613 = vsel %vm1608, %v1603, %v1605
      %v1614 = vsel %vm1608, %v1605, %v1607
      %vm1622 = vcmask 130048
      %v1624 = vsel %vm1622, %v1564, 0
      %1626 = vmatpush.bf16.msra.mxu0 0
      %1627 = vmatpush.bf16.msra.mxu0 0
      %1628 = vmatpush.bf16.msra.mxu0 0
      %1629 = vmatpush.bf16.msra.mxu0 0
      %1630 = vmatpush.bf16.msra.mxu0 0
      %1631 = vmatpush.bf16.msra.mxu0 0
      %1632 = vmatpush.bf16.msra.mxu0 0
      %1633 = vmatpush.bf16.msra.mxu0 %v1609
      %1634 = vmatmul.bf16.gmra.mxu0 %v1624
      %v1635 = vpop.f32.mrf.mxu0
      %v1636 = vadd.f32 0.0, %v1635
      %v1637 = vpop.f32.mrf.mxu0
      %v1638 = vadd.f32 0.0, %v1637
      %1639 = vdwg.mxu0
      %1640 = vmatpush.bf16.msra.mxu0 0
      %1641 = vmatpush.bf16.msra.mxu0 0
      %1642 = vmatpush.bf16.msra.mxu0 0
      %1643 = vmatpush.bf16.msra.mxu0 0
      %1644 = vmatpush.bf16.msra.mxu0 0
      %1645 = vmatpush.bf16.msra.mxu0 0
      %1646 = vmatpush.bf16.msra.mxu0 0
      %1647 = vmatpush.bf16.msra.mxu0 %v1610
      %1648 = vmatmul.bf16.gmra.mxu0 %v1624
      %v1649 = vpop.f32.mrf.mxu0
      %v1650 = vadd.f32 0.0, %v1649
      %v1651 = vpop.f32.mrf.mxu0
      %v1652 = vadd.f32 0.0, %v1651
      %1653 = vdwg.mxu0
      %1654 = vmatpush.bf16.msra.mxu0 0
      %1655 = vmatpush.bf16.msra.mxu0 0
      %1656 = vmatpush.bf16.msra.mxu0 0
      %1657 = vmatpush.bf16.msra.mxu0 0
      %1658 = vmatpush.bf16.msra.mxu0 0
      %1659 = vmatpush.bf16.msra.mxu0 0
      %1660 = vmatpush.bf16.msra.mxu0 0
      %1661 = vmatpush.bf16.msra.mxu0 %v1611
      %1662 = vmatmul.bf16.gmra.mxu0 %v1624
      %v1663 = vpop.f32.mrf.mxu0
      %v1664 = vadd.f32 0.0, %v1663
      %v1665 = vpop.f32.mrf.mxu0
      %v1666 = vadd.f32 0.0, %v1665
      %1667 = vdwg.mxu0
      %1668 = vmatpush.bf16.msra.mxu0 0
      %1669 = vmatpush.bf16.msra.mxu0 0
      %1670 = vmatpush.bf16.msra.mxu0 0
      %1671 = vmatpush.bf16.msra.mxu0 0
      %1672 = vmatpush.bf16.msra.mxu0 0
      %1673 = vmatpush.bf16.msra.mxu0 0
      %1674 = vmatpush.bf16.msra.mxu0 0
      %1675 = vmatpush.bf16.msra.mxu0 %v1612
      %1676 = vmatmul.bf16.gmra.mxu0 %v1624
      %v1677 = vpop.f32.mrf.mxu0
      %v1678 = vadd.f32 0.0, %v1677
      %v1679 = vpop.f32.mrf.mxu0
      %v1680 = vadd.f32 0.0, %v1679
      %1681 = vdwg.mxu0
      %1682 = vmatpush.bf16.msra.mxu0 0
      %1683 = vmatpush.bf16.msra.mxu0 0
      %1684 = vmatpush.bf16.msra.mxu0 0
      %1685 = vmatpush.bf16.msra.mxu0 0
      %1686 = vmatpush.bf16.msra.mxu0 0
      %1687 = vmatpush.bf16.msra.mxu0 0
      %1688 = vmatpush.bf16.msra.mxu0 0
      %1689 = vmatpush.bf16.msra.mxu0 %v1613
      %1690 = vmatmul.bf16.gmra.mxu0 %v1624
      %v1691 = vpop.f32.mrf.mxu0
      %v1692 = vadd.f32 0.0, %v1691
      %v1693 = vpop.f32.mrf.mxu0
      %v1694 = vadd.f32 0.0, %v1693
      %1695 = vdwg.mxu0
      %1696 = vmatpush.bf16.msra.mxu0 0
      %1697 = vmatpush.bf16.msra.mxu0 0
      %1698 = vmatpush.bf16.msra.mxu0 0
      %1699 = vmatpush.bf16.msra.mxu0 0
      %1700 = vmatpush.bf16.msra.mxu0 0
      %1701 = vmatpush.bf16.msra.mxu0 0
      %1702 = vmatpush.bf16.msra.mxu0 0
      %1703 = vmatpush.bf16.msra.mxu0 %v1614
      %1704 = vmatmul.bf16.gmra.mxu0 %v1624
      %v1705 = vpop.f32.mrf.mxu0
      %v1706 = vadd.f32 0.0, %v1705
      %v1707 = vpop.f32.mrf.mxu0
      %v1708 = vadd.f32 0.0, %v1707
      %1709 = vdwg.mxu0
      %1710 = vmatpush.bf16.msra.mxu0 0
      %1711 = vmatpush.bf16.msra.mxu0 0
      %1712 = vmatpush.bf16.msra.mxu0 0
      %1713 = vmatpush.bf16.msra.mxu0 0
      %1714 = vmatpush.bf16.msra.mxu0 0
      %1715 = vmatpush.bf16.msra.mxu0 0
      %1716 = vmatpush.bf16.msra.mxu0 0
      %1717 = vmatpush.bf16.msra.mxu0 %v1607
      %1718 = vmatmul.bf16.gmra.mxu0 %v1624
      %v1719 = vpop.f32.mrf.mxu0
      %v1720 = vadd.f32 0.0, %v1719
      %v1721 = vpop.f32.mrf.mxu0
      %v1722 = vadd.f32 0.0, %v1721
      %1723 = vdwg.mxu0
      %v1726 = vunpack.c.l.b16 %v1547
      %v1727 = vunpack.c.l.b16 %v1548
      %v1728 = vpack.c.b16 %v1727, %v1726
      %v1737 = vsel %vm1622, %v1728, 0
      %1739 = vmatpush.bf16.msra.mxu0 0
      %1740 = vmatpush.bf16.msra.mxu0 0
      %1741 = vmatpush.bf16.msra.mxu0 0
      %1742 = vmatpush.bf16.msra.mxu0 0
      %1743 = vmatpush.bf16.msra.mxu0 0
      %1744 = vmatpush.bf16.msra.mxu0 0
      %1745 = vmatpush.bf16.msra.mxu0 0
      %1746 = vmatpush.bf16.msra.mxu0 %v1587
      %1747 = vmatmul.bf16.gmra.mxu0 %v1737
      %v1748 = vpop.f32.mrf.mxu0
      %v1749 = vadd.f32 %v1636, %v1748
      %v1750 = vpop.f32.mrf.mxu0
      %v1751 = vadd.f32 %v1638, %v1750
      %1752 = vdwg.mxu0
      %1753 = vmatpush.bf16.msra.mxu0 0
      %1754 = vmatpush.bf16.msra.mxu0 0
      %1755 = vmatpush.bf16.msra.mxu0 0
      %1756 = vmatpush.bf16.msra.mxu0 0
      %1757 = vmatpush.bf16.msra.mxu0 0
      %1758 = vmatpush.bf16.msra.mxu0 0
      %1759 = vmatpush.bf16.msra.mxu0 0
      %1760 = vmatpush.bf16.msra.mxu0 %v1588
      %1761 = vmatmul.bf16.gmra.mxu0 %v1737
      %v1762 = vpop.f32.mrf.mxu0
      %v1763 = vadd.f32 %v1650, %v1762
      %v1764 = vpop.f32.mrf.mxu0
      %v1765 = vadd.f32 %v1652, %v1764
      %1766 = vdwg.mxu0
      %1767 = vmatpush.bf16.msra.mxu0 0
      %1768 = vmatpush.bf16.msra.mxu0 0
      %1769 = vmatpush.bf16.msra.mxu0 0
      %1770 = vmatpush.bf16.msra.mxu0 0
      %1771 = vmatpush.bf16.msra.mxu0 0
      %1772 = vmatpush.bf16.msra.mxu0 0
      %1773 = vmatpush.bf16.msra.mxu0 0
      %1774 = vmatpush.bf16.msra.mxu0 %v1589
      %1775 = vmatmul.bf16.gmra.mxu0 %v1737
      %v1776 = vpop.f32.mrf.mxu0
      %v1777 = vadd.f32 %v1664, %v1776
      %v1778 = vpop.f32.mrf.mxu0
      %v1779 = vadd.f32 %v1666, %v1778
      %1780 = vdwg.mxu0
      %1781 = vmatpush.bf16.msra.mxu0 0
      %1782 = vmatpush.bf16.msra.mxu0 0
      %1783 = vmatpush.bf16.msra.mxu0 0
      %1784 = vmatpush.bf16.msra.mxu0 0
      %1785 = vmatpush.bf16.msra.mxu0 0
      %1786 = vmatpush.bf16.msra.mxu0 0
      %1787 = vmatpush.bf16.msra.mxu0 0
      %1788 = vmatpush.bf16.msra.mxu0 %v1590
      %1789 = vmatmul.bf16.gmra.mxu0 %v1737
      %v1790 = vpop.f32.mrf.mxu0
      %v1791 = vadd.f32 %v1678, %v1790
      %v1792 = vpop.f32.mrf.mxu0
      %v1793 = vadd.f32 %v1680, %v1792
      %1794 = vdwg.mxu0
      %1795 = vmatpush.bf16.msra.mxu0 0
      %1796 = vmatpush.bf16.msra.mxu0 0
      %1797 = vmatpush.bf16.msra.mxu0 0
      %1798 = vmatpush.bf16.msra.mxu0 0
      %1799 = vmatpush.bf16.msra.mxu0 0
      %1800 = vmatpush.bf16.msra.mxu0 0
      %1801 = vmatpush.bf16.msra.mxu0 0
      %1802 = vmatpush.bf16.msra.mxu0 %v1591
      %1803 = vmatmul.bf16.gmra.mxu0 %v1737
      %v1804 = vpop.f32.mrf.mxu0
      %v1805 = vadd.f32 %v1692, %v1804
      %v1806 = vpop.f32.mrf.mxu0
      %v1807 = vadd.f32 %v1694, %v1806
      %1808 = vdwg.mxu0
      %1809 = vmatpush.bf16.msra.mxu0 0
      %1810 = vmatpush.bf16.msra.mxu0 0
      %1811 = vmatpush.bf16.msra.mxu0 0
      %1812 = vmatpush.bf16.msra.mxu0 0
      %1813 = vmatpush.bf16.msra.mxu0 0
      %1814 = vmatpush.bf16.msra.mxu0 0
      %1815 = vmatpush.bf16.msra.mxu0 0
      %1816 = vmatpush.bf16.msra.mxu0 %v1592
      %1817 = vmatmul.bf16.gmra.mxu0 %v1737
      %v1818 = vpop.f32.mrf.mxu0
      %v1819 = vadd.f32 %v1706, %v1818
      %v1820 = vpop.f32.mrf.mxu0
      %v1821 = vadd.f32 %v1708, %v1820
      %1822 = vdwg.mxu0
      %1823 = vmatpush.bf16.msra.mxu0 0
      %1824 = vmatpush.bf16.msra.mxu0 0
      %1825 = vmatpush.bf16.msra.mxu0 0
      %1826 = vmatpush.bf16.msra.mxu0 0
      %1827 = vmatpush.bf16.msra.mxu0 0
      %1828 = vmatpush.bf16.msra.mxu0 0
      %1829 = vmatpush.bf16.msra.mxu0 0
      %1830 = vmatpush.bf16.msra.mxu0 %v1593
      %1831 = vmatmul.bf16.gmra.mxu0 %v1737
      %v1832 = vpop.f32.mrf.mxu0
      %v1833 = vadd.f32 %v1720, %v1832
      %v1834 = vpop.f32.mrf.mxu0
      %v1835 = vadd.f32 %v1722, %v1834
      %1836 = vdwg.mxu0
      %s1837 = scalar_lea.vmem %s3, 16
      %v1838 = vld [vmem:[%s1837] sm:$0xf]
      %v1839 = vld [vmem:[%s1837 + $0x4] sm:$0xf]
      %v1842 = vunpack.c.l.b16 %v1838
      %v1843 = vunpack.c.l.b16 %v1839
      %v1844 = vpack.c.b16 %v1843, %v1842
      %1845 = vrot.lane.b32.xlu0 %v1587, 126
      %v1846 = vpop.permute.xlu0 %1845
      %1847 = vrot.lane.b32.xlu0 %v1588, 126
      %v1848 = vpop.permute.xlu0 %1847
      %1849 = vrot.lane.b32.xlu0 %v1589, 126
      %v1850 = vpop.permute.xlu0 %1849
      %1851 = vrot.lane.b32.xlu0 %v1590, 126
      %v1852 = vpop.permute.xlu0 %1851
      %1853 = vrot.lane.b32.xlu0 %v1591, 126
      %v1854 = vpop.permute.xlu0 %1853
      %1855 = vrot.lane.b32.xlu0 %v1592, 126
      %v1856 = vpop.permute.xlu0 %1855
      %1857 = vrot.lane.b32.xlu0 %v1593, 126
      %v1858 = vpop.permute.xlu0 %1857
      %vm1859 = vcmask 1031168
      %v1860 = vsel %vm1859, %v1846, %v1848
      %v1861 = vsel %vm1859, %v1848, %v1850
      %v1862 = vsel %vm1859, %v1850, %v1852
      %v1863 = vsel %vm1859, %v1852, %v1854
      %v1864 = vsel %vm1859, %v1854, %v1856
      %v1865 = vsel %vm1859, %v1856, %v1858
      %v1874 = vsel %vm1622, %v1844, 0
      %1876 = vmatpush.bf16.msra.mxu0 0
      %1877 = vmatpush.bf16.msra.mxu0 0
      %1878 = vmatpush.bf16.msra.mxu0 0
      %1879 = vmatpush.bf16.msra.mxu0 0
      %1880 = vmatpush.bf16.msra.mxu0 0
      %1881 = vmatpush.bf16.msra.mxu0 0
      %1882 = vmatpush.bf16.msra.mxu0 0
      %1883 = vmatpush.bf16.msra.mxu0 %v1860
      %1884 = vmatmul.bf16.gmra.mxu0 %v1874
      %v1885 = vpop.f32.mrf.mxu0
      %v1886 = vadd.f32 0.0, %v1885
      %v1887 = vpop.f32.mrf.mxu0
      %v1888 = vadd.f32 0.0, %v1887
      %1889 = vdwg.mxu0
      %1890 = vmatpush.bf16.msra.mxu0 0
      %1891 = vmatpush.bf16.msra.mxu0 0
      %1892 = vmatpush.bf16.msra.mxu0 0
      %1893 = vmatpush.bf16.msra.mxu0 0
      %1894 = vmatpush.bf16.msra.mxu0 0
      %1895 = vmatpush.bf16.msra.mxu0 0
      %1896 = vmatpush.bf16.msra.mxu0 0
      %1897 = vmatpush.bf16.msra.mxu0 %v1861
      %1898 = vmatmul.bf16.gmra.mxu0 %v1874
      %v1899 = vpop.f32.mrf.mxu0
      %v1900 = vadd.f32 0.0, %v1899
      %v1901 = vpop.f32.mrf.mxu0
      %v1902 = vadd.f32 0.0, %v1901
      %1903 = vdwg.mxu0
      %1904 = vmatpush.bf16.msra.mxu0 0
      %1905 = vmatpush.bf16.msra.mxu0 0
      %1906 = vmatpush.bf16.msra.mxu0 0
      %1907 = vmatpush.bf16.msra.mxu0 0
      %1908 = vmatpush.bf16.msra.mxu0 0
      %1909 = vmatpush.bf16.msra.mxu0 0
      %1910 = vmatpush.bf16.msra.mxu0 0
      %1911 = vmatpush.bf16.msra.mxu0 %v1862
      %1912 = vmatmul.bf16.gmra.mxu0 %v1874
      %v1913 = vpop.f32.mrf.mxu0
      %v1914 = vadd.f32 0.0, %v1913
      %v1915 = vpop.f32.mrf.mxu0
      %v1916 = vadd.f32 0.0, %v1915
      %1917 = vdwg.mxu0
      %1918 = vmatpush.bf16.msra.mxu0 0
      %1919 = vmatpush.bf16.msra.mxu0 0
      %1920 = vmatpush.bf16.msra.mxu0 0
      %1921 = vmatpush.bf16.msra.mxu0 0
      %1922 = vmatpush.bf16.msra.mxu0 0
      %1923 = vmatpush.bf16.msra.mxu0 0
      %1924 = vmatpush.bf16.msra.mxu0 0
      %1925 = vmatpush.bf16.msra.mxu0 %v1863
      %1926 = vmatmul.bf16.gmra.mxu0 %v1874
      %v1927 = vpop.f32.mrf.mxu0
      %v1928 = vadd.f32 0.0, %v1927
      %v1929 = vpop.f32.mrf.mxu0
      %v1930 = vadd.f32 0.0, %v1929
      %1931 = vdwg.mxu0
      %1932 = vmatpush.bf16.msra.mxu0 0
      %1933 = vmatpush.bf16.msra.mxu0 0
      %1934 = vmatpush.bf16.msra.mxu0 0
      %1935 = vmatpush.bf16.msra.mxu0 0
      %1936 = vmatpush.bf16.msra.mxu0 0
      %1937 = vmatpush.bf16.msra.mxu0 0
      %1938 = vmatpush.bf16.msra.mxu0 0
      %1939 = vmatpush.bf16.msra.mxu0 %v1864
      %1940 = vmatmul.bf16.gmra.mxu0 %v1874
      %v1941 = vpop.f32.mrf.mxu0
      %v1942 = vadd.f32 0.0, %v1941
      %v1943 = vpop.f32.mrf.mxu0
      %v1944 = vadd.f32 0.0, %v1943
      %1945 = vdwg.mxu0
      %1946 = vmatpush.bf16.msra.mxu0 0
      %1947 = vmatpush.bf16.msra.mxu0 0
      %1948 = vmatpush.bf16.msra.mxu0 0
      %1949 = vmatpush.bf16.msra.mxu0 0
      %1950 = vmatpush.bf16.msra.mxu0 0
      %1951 = vmatpush.bf16.msra.mxu0 0
      %1952 = vmatpush.bf16.msra.mxu0 0
      %1953 = vmatpush.bf16.msra.mxu0 %v1865
      %1954 = vmatmul.bf16.gmra.mxu0 %v1874
      %v1955 = vpop.f32.mrf.mxu0
      %v1956 = vadd.f32 0.0, %v1955
      %v1957 = vpop.f32.mrf.mxu0
      %v1958 = vadd.f32 0.0, %v1957
      %1959 = vdwg.mxu0
      %1960 = vmatpush.bf16.msra.mxu0 0
      %1961 = vmatpush.bf16.msra.mxu0 0
      %1962 = vmatpush.bf16.msra.mxu0 0
      %1963 = vmatpush.bf16.msra.mxu0 0
      %1964 = vmatpush.bf16.msra.mxu0 0
      %1965 = vmatpush.bf16.msra.mxu0 0
      %1966 = vmatpush.bf16.msra.mxu0 0
      %1967 = vmatpush.bf16.msra.mxu0 %v1858
      %1968 = vmatmul.bf16.gmra.mxu0 %v1874
      %v1969 = vpop.f32.mrf.mxu0
      %v1970 = vadd.f32 0.0, %v1969
      %v1971 = vpop.f32.mrf.mxu0
      %v1972 = vadd.f32 0.0, %v1971
      %1973 = vdwg.mxu0
      %v1974 = vadd.f32 %v1749, %v1886
      %v1975 = vadd.f32 %v1763, %v1900
      %v1976 = vadd.f32 %v1777, %v1914
      %v1977 = vadd.f32 %v1791, %v1928
      %v1978 = vadd.f32 %v1805, %v1942
      %v1979 = vadd.f32 %v1819, %v1956
      %v1980 = vadd.f32 %v1833, %v1970
      %v1981 = vadd.f32 %v1751, %v1888
      %v1982 = vadd.f32 %v1765, %v1902
      %v1983 = vadd.f32 %v1779, %v1916
      %v1984 = vadd.f32 %v1793, %v1930
      %v1985 = vadd.f32 %v1807, %v1944
      %v1986 = vadd.f32 %v1821, %v1958
      %v1987 = vadd.f32 %v1835, %v1972
      %s1988 = scalar_lea.vmem %s3, 24
      %v1989 = vld [vmem:[%s1988] sm:$0xf]
      %v1990 = vld [vmem:[%s1988 + $0x4] sm:$0xf]
      %v1991 = vld [vmem:[#allocation2] sm:$0xff]
      %v1992 = vld [vmem:[#allocation2 + $0x8] sm:$0xff]
      %v1993 = vld [vmem:[#allocation2 + $0x10] sm:$0xff]
      %v1994 = vld [vmem:[#allocation2 + $0x18] sm:$0xff]
      %v1995 = vld [vmem:[#allocation2 + $0x20] sm:$0xff]
      %v1996 = vld [vmem:[#allocation2 + $0x28] sm:$0xff]
      %v1997 = vld [vmem:[#allocation2 + $0x30] sm:$0xff]
      %v1998 = vld [vmem:[#allocation2 + $0x38] sm:$0xff]
      %v2001 = vunpack.c.l.b16 %v1989
      %v2002 = vunpack.c.l.b16 %v1990
      %v2003 = vpack.c.b16 %v2002, %v2001
      %v2012 = vunpack.c.l.b16 %v1991
      %v2013 = vunpack.c.h.b16 %v1991
      %v2014 = vunpack.c.l.b16 %v1992
      %v2015 = vunpack.c.h.b16 %v1992
      %v2016 = vunpack.c.l.b16 %v1993
      %v2017 = vunpack.c.h.b16 %v1993
      %v2018 = vunpack.c.l.b16 %v1994
      %v2019 = vunpack.c.h.b16 %v1994
      %v2020 = vunpack.c.l.b16 %v1995
      %v2021 = vunpack.c.h.b16 %v1995
      %v2022 = vunpack.c.l.b16 %v1996
      %v2023 = vunpack.c.h.b16 %v1996
      %v2024 = vunpack.c.l.b16 %v1997
      %v2025 = vunpack.c.h.b16 %v1997
      %v2026 = vunpack.c.l.b16 %v1998
      %v2027 = vunpack.c.h.b16 %v1998
      %v2028 = vpack.c.b16 %v2020, %v2012
      %v2029 = vpack.c.b16 %v2021, %v2013
      %v2030 = vpack.c.b16 %v2022, %v2014
      %v2031 = vpack.c.b16 %v2023, %v2015
      %v2032 = vpack.c.b16 %v2024, %v2016
      %v2033 = vpack.c.b16 %v2025, %v2017
      %v2034 = vpack.c.b16 %v2026, %v2018
      %v2035 = vpack.c.b16 %v2027, %v2019
      %2036 = vrot.lane.b32.xlu0 %v2028, 96
      %v2037 = vpop.permute.xlu0 %2036
      %2038 = vrot.lane.b32.xlu0 %v2029, 96
      %v2039 = vpop.permute.xlu0 %2038
      %2040 = vrot.lane.b32.xlu0 %v2030, 96
      %v2041 = vpop.permute.xlu0 %2040
      %2042 = vrot.lane.b32.xlu0 %v2031, 96
      %v2043 = vpop.permute.xlu0 %2042
      %2044 = vrot.lane.b32.xlu0 %v2032, 96
      %v2045 = vpop.permute.xlu0 %2044
      %2046 = vrot.lane.b32.xlu0 %v2033, 96
      %v2047 = vpop.permute.xlu0 %2046
      %2048 = vrot.lane.b32.xlu0 %v2034, 96
      %v2049 = vpop.permute.xlu0 %2048
      %2050 = vrot.lane.b32.xlu0 %v2035, 96
      %v2051 = vpop.permute.xlu0 %2050
      %vm2052 = vcmask 785408
      %v2053 = vsel %vm2052, %v2037, %v2039
      %v2054 = vsel %vm2052, %v2039, %v2041
      %v2055 = vsel %vm2052, %v2041, %v2043
      %v2056 = vsel %vm2052, %v2043, %v2045
      %v2057 = vsel %vm2052, %v2045, %v2047
      %v2058 = vsel %vm2052, %v2047, %v2049
      %v2059 = vsel %vm2052, %v2049, %v2051
      %v2068 = vsel %vm1622, %v2003, 0
      %2070 = vmatpush.bf16.msra.mxu0 0
      %2071 = vmatpush.bf16.msra.mxu0 0
      %2072 = vmatpush.bf16.msra.mxu0 0
      %2073 = vmatpush.bf16.msra.mxu0 0
      %2074 = vmatpush.bf16.msra.mxu0 0
      %2075 = vmatpush.bf16.msra.mxu0 0
      %2076 = vmatpush.bf16.msra.mxu0 0
      %2077 = vmatpush.bf16.msra.mxu0 %v2053
      %2078 = vmatmul.bf16.gmra.mxu0 %v2068
      %v2079 = vpop.f32.mrf.mxu0
      %v2080 = vadd.f32 0.0, %v2079
      %v2081 = vpop.f32.mrf.mxu0
      %v2082 = vadd.f32 0.0, %v2081
      %2083 = vdwg.mxu0
      %2084 = vmatpush.bf16.msra.mxu0 0
      %2085 = vmatpush.bf16.msra.mxu0 0
      %2086 = vmatpush.bf16.msra.mxu0 0
      %2087 = vmatpush.bf16.msra.mxu0 0
      %2088 = vmatpush.bf16.msra.mxu0 0
      %2089 = vmatpush.bf16.msra.mxu0 0
      %2090 = vmatpush.bf16.msra.mxu0 0
      %2091 = vmatpush.bf16.msra.mxu0 %v2054
      %2092 = vmatmul.bf16.gmra.mxu0 %v2068
      %v2093 = vpop.f32.mrf.mxu0
      %v2094 = vadd.f32 0.0, %v2093
      %v2095 = vpop.f32.mrf.mxu0
      %v2096 = vadd.f32 0.0, %v2095
      %2097 = vdwg.mxu0
      %2098 = vmatpush.bf16.msra.mxu0 0
      %2099 = vmatpush.bf16.msra.mxu0 0
      %2100 = vmatpush.bf16.msra.mxu0 0
      %2101 = vmatpush.bf16.msra.mxu0 0
      %2102 = vmatpush.bf16.msra.mxu0 0
      %2103 = vmatpush.bf16.msra.mxu0 0
      %2104 = vmatpush.bf16.msra.mxu0 0
      %2105 = vmatpush.bf16.msra.mxu0 %v2055
      %2106 = vmatmul.bf16.gmra.mxu0 %v2068
      %v2107 = vpop.f32.mrf.mxu0
      %v2108 = vadd.f32 0.0, %v2107
      %v2109 = vpop.f32.mrf.mxu0
      %v2110 = vadd.f32 0.0, %v2109
      %2111 = vdwg.mxu0
      %2112 = vmatpush.bf16.msra.mxu0 0
      %2113 = vmatpush.bf16.msra.mxu0 0
      %2114 = vmatpush.bf16.msra.mxu0 0
      %2115 = vmatpush.bf16.msra.mxu0 0
      %2116 = vmatpush.bf16.msra.mxu0 0
      %2117 = vmatpush.bf16.msra.mxu0 0
      %2118 = vmatpush.bf16.msra.mxu0 0
      %2119 = vmatpush.bf16.msra.mxu0 %v2056
      %2120 = vmatmul.bf16.gmra.mxu0 %v2068
      %v2121 = vpop.f32.mrf.mxu0
      %v2122 = vadd.f32 0.0, %v2121
      %v2123 = vpop.f32.mrf.mxu0
      %v2124 = vadd.f32 0.0, %v2123
      %2125 = vdwg.mxu0
      %2126 = vmatpush.bf16.msra.mxu0 0
      %2127 = vmatpush.bf16.msra.mxu0 0
      %2128 = vmatpush.bf16.msra.mxu0 0
      %2129 = vmatpush.bf16.msra.mxu0 0
      %2130 = vmatpush.bf16.msra.mxu0 0
      %2131 = vmatpush.bf16.msra.mxu0 0
      %2132 = vmatpush.bf16.msra.mxu0 0
      %2133 = vmatpush.bf16.msra.mxu0 %v2057
      %2134 = vmatmul.bf16.gmra.mxu0 %v2068
      %v2135 = vpop.f32.mrf.mxu0
      %v2136 = vadd.f32 0.0, %v2135
      %v2137 = vpop.f32.mrf.mxu0
      %v2138 = vadd.f32 0.0, %v2137
      %2139 = vdwg.mxu0
      %2140 = vmatpush.bf16.msra.mxu0 0
      %2141 = vmatpush.bf16.msra.mxu0 0
      %2142 = vmatpush.bf16.msra.mxu0 0
      %2143 = vmatpush.bf16.msra.mxu0 0
      %2144 = vmatpush.bf16.msra.mxu0 0
      %2145 = vmatpush.bf16.msra.mxu0 0
      %2146 = vmatpush.bf16.msra.mxu0 0
      %2147 = vmatpush.bf16.msra.mxu0 %v2058
      %2148 = vmatmul.bf16.gmra.mxu0 %v2068
      %v2149 = vpop.f32.mrf.mxu0
      %v2150 = vadd.f32 0.0, %v2149
      %v2151 = vpop.f32.mrf.mxu0
      %v2152 = vadd.f32 0.0, %v2151
      %2153 = vdwg.mxu0
      %2154 = vmatpush.bf16.msra.mxu0 0
      %2155 = vmatpush.bf16.msra.mxu0 0
      %2156 = vmatpush.bf16.msra.mxu0 0
      %2157 = vmatpush.bf16.msra.mxu0 0
      %2158 = vmatpush.bf16.msra.mxu0 0
      %2159 = vmatpush.bf16.msra.mxu0 0
      %2160 = vmatpush.bf16.msra.mxu0 0
      %2161 = vmatpush.bf16.msra.mxu0 %v2059
      %2162 = vmatmul.bf16.gmra.mxu0 %v2068
      %v2163 = vpop.f32.mrf.mxu0
      %v2164 = vadd.f32 0.0, %v2163
      %v2165 = vpop.f32.mrf.mxu0
      %v2166 = vadd.f32 0.0, %v2165
      %2167 = vdwg.mxu0
      %v2168 = vadd.f32 %v1974, %v2080
      %v2169 = vadd.f32 %v1975, %v2094
      %v2170 = vadd.f32 %v1976, %v2108
      %v2171 = vadd.f32 %v1977, %v2122
      %v2172 = vadd.f32 %v1978, %v2136
      %v2173 = vadd.f32 %v1979, %v2150
      %v2174 = vadd.f32 %v1980, %v2164
      %v2175 = vadd.f32 %v1981, %v2082
      %v2176 = vadd.f32 %v1982, %v2096
      %v2177 = vadd.f32 %v1983, %v2110
      %v2178 = vadd.f32 %v1984, %v2124
      %v2179 = vadd.f32 %v1985, %v2138
      %v2180 = vadd.f32 %v1986, %v2152
      %v2181 = vadd.f32 %v1987, %v2166
      %s2182 = scalar_lea.vmem %s3, 32
      %v2183 = vld [vmem:[%s2182] sm:$0xf]
      %v2184 = vld [vmem:[%s2182 + $0x4] sm:$0xf]
      %v2187 = vunpack.c.l.b16 %v2183
      %v2188 = vunpack.c.l.b16 %v2184
      %v2189 = vpack.c.b16 %v2188, %v2187
      %2190 = vrot.lane.b32.xlu0 %v2028, 95
      %v2191 = vpop.permute.xlu0 %2190
      %2192 = vrot.lane.b32.xlu0 %v2029, 95
      %v2193 = vpop.permute.xlu0 %2192
      %2194 = vrot.lane.b32.xlu0 %v2030, 95
      %v2195 = vpop.permute.xlu0 %2194
      %2196 = vrot.lane.b32.xlu0 %v2031, 95
      %v2197 = vpop.permute.xlu0 %2196
      %2198 = vrot.lane.b32.xlu0 %v2032, 95
      %v2199 = vpop.permute.xlu0 %2198
      %2200 = vrot.lane.b32.xlu0 %v2033, 95
      %v2201 = vpop.permute.xlu0 %2200
      %2202 = vrot.lane.b32.xlu0 %v2034, 95
      %v2203 = vpop.permute.xlu0 %2202
      %2204 = vrot.lane.b32.xlu0 %v2035, 95
      %v2205 = vpop.permute.xlu0 %2204
      %vm2206 = vcmask 777216
      %v2207 = vsel %vm2206, %v2191, %v2193
      %v2208 = vsel %vm2206, %v2193, %v2195
      %v2209 = vsel %vm2206, %v2195, %v2197
      %v2210 = vsel %vm2206, %v2197, %v2199
      %v2211 = vsel %vm2206, %v2199, %v2201
      %v2212 = vsel %vm2206, %v2201, %v2203
      %v2213 = vsel %vm2206, %v2203, %v2205
      %v2222 = vsel %vm1622, %v2189, 0
      %2224 = vmatpush.bf16.msra.mxu0 0
      %2225 = vmatpush.bf16.msra.mxu0 0
      %2226 = vmatpush.bf16.msra.mxu0 0
      %2227 = vmatpush.bf16.msra.mxu0 0
      %2228 = vmatpush.bf16.msra.mxu0 0
      %2229 = vmatpush.bf16.msra.mxu0 0
      %2230 = vmatpush.bf16.msra.mxu0 0
      %2231 = vmatpush.bf16.msra.mxu0 %v2207
      %2232 = vmatmul.bf16.gmra.mxu0 %v2222
      %v2233 = vpop.f32.mrf.mxu0
      %v2234 = vadd.f32 0.0, %v2233
      %v2235 = vpop.f32.mrf.mxu0
      %v2236 = vadd.f32 0.0, %v2235
      %2237 = vdwg.mxu0
      %2238 = vmatpush.bf16.msra.mxu0 0
      %2239 = vmatpush.bf16.msra.mxu0 0
      %2240 = vmatpush.bf16.msra.mxu0 0
      %2241 = vmatpush.bf16.msra.mxu0 0
      %2242 = vmatpush.bf16.msra.mxu0 0
      %2243 = vmatpush.bf16.msra.mxu0 0
      %2244 = vmatpush.bf16.msra.mxu0 0
      %2245 = vmatpush.bf16.msra.mxu0 %v2208
      %2246 = vmatmul.bf16.gmra.mxu0 %v2222
      %v2247 = vpop.f32.mrf.mxu0
      %v2248 = vadd.f32 0.0, %v2247
      %v2249 = vpop.f32.mrf.mxu0
      %v2250 = vadd.f32 0.0, %v2249
      %2251 = vdwg.mxu0
      %2252 = vmatpush.bf16.msra.mxu0 0
      %2253 = vmatpush.bf16.msra.mxu0 0
      %2254 = vmatpush.bf16.msra.mxu0 0
      %2255 = vmatpush.bf16.msra.mxu0 0
      %2256 = vmatpush.bf16.msra.mxu0 0
      %2257 = vmatpush.bf16.msra.mxu0 0
      %2258 = vmatpush.bf16.msra.mxu0 0
      %2259 = vmatpush.bf16.msra.mxu0 %v2209
      %2260 = vmatmul.bf16.gmra.mxu0 %v2222
      %v2261 = vpop.f32.mrf.mxu0
      %v2262 = vadd.f32 0.0, %v2261
      %v2263 = vpop.f32.mrf.mxu0
      %v2264 = vadd.f32 0.0, %v2263
      %2265 = vdwg.mxu0
      %2266 = vmatpush.bf16.msra.mxu0 0
      %2267 = vmatpush.bf16.msra.mxu0 0
      %2268 = vmatpush.bf16.msra.mxu0 0
      %2269 = vmatpush.bf16.msra.mxu0 0
      %2270 = vmatpush.bf16.msra.mxu0 0
      %2271 = vmatpush.bf16.msra.mxu0 0
      %2272 = vmatpush.bf16.msra.mxu0 0
      %2273 = vmatpush.bf16.msra.mxu0 %v2210
      %2274 = vmatmul.bf16.gmra.mxu0 %v2222
      %v2275 = vpop.f32.mrf.mxu0
      %v2276 = vadd.f32 0.0, %v2275
      %v2277 = vpop.f32.mrf.mxu0
      %v2278 = vadd.f32 0.0, %v2277
      %2279 = vdwg.mxu0
      %2280 = vmatpush.bf16.msra.mxu0 0
      %2281 = vmatpush.bf16.msra.mxu0 0
      %2282 = vmatpush.bf16.msra.mxu0 0
      %2283 = vmatpush.bf16.msra.mxu0 0
      %2284 = vmatpush.bf16.msra.mxu0 0
      %2285 = vmatpush.bf16.msra.mxu0 0
      %2286 = vmatpush.bf16.msra.mxu0 0
      %2287 = vmatpush.bf16.msra.mxu0 %v2211
      %2288 = vmatmul.bf16.gmra.mxu0 %v2222
      %v2289 = vpop.f32.mrf.mxu0
      %v2290 = vadd.f32 0.0, %v2289
      %v2291 = vpop.f32.mrf.mxu0
      %v2292 = vadd.f32 0.0, %v2291
      %2293 = vdwg.mxu0
      %2294 = vmatpush.bf16.msra.mxu0 0
      %2295 = vmatpush.bf16.msra.mxu0 0
      %2296 = vmatpush.bf16.msra.mxu0 0
      %2297 = vmatpush.bf16.msra.mxu0 0
      %2298 = vmatpush.bf16.msra.mxu0 0
      %2299 = vmatpush.bf16.msra.mxu0 0
      %2300 = vmatpush.bf16.msra.mxu0 0
      %2301 = vmatpush.bf16.msra.mxu0 %v2212
      %2302 = vmatmul.bf16.gmra.mxu0 %v2222
      %v2303 = vpop.f32.mrf.mxu0
      %v2304 = vadd.f32 0.0, %v2303
      %v2305 = vpop.f32.mrf.mxu0
      %v2306 = vadd.f32 0.0, %v2305
      %2307 = vdwg.mxu0
      %2308 = vmatpush.bf16.msra.mxu0 0
      %2309 = vmatpush.bf16.msra.mxu0 0
      %2310 = vmatpush.bf16.msra.mxu0 0
      %2311 = vmatpush.bf16.msra.mxu0 0
      %2312 = vmatpush.bf16.msra.mxu0 0
      %2313 = vmatpush.bf16.msra.mxu0 0
      %2314 = vmatpush.bf16.msra.mxu0 0
      %2315 = vmatpush.bf16.msra.mxu0 %v2213
      %2316 = vmatmul.bf16.gmra.mxu0 %v2222
      %v2317 = vpop.f32.mrf.mxu0
      %v2318 = vadd.f32 0.0, %v2317
      %v2319 = vpop.f32.mrf.mxu0
      %v2320 = vadd.f32 0.0, %v2319
      %2321 = vdwg.mxu0
      %v2322 = vadd.f32 %v2168, %v2234
      %v2323 = vadd.f32 %v2169, %v2248
      %v2324 = vadd.f32 %v2170, %v2262
      %v2325 = vadd.f32 %v2171, %v2276
      %v2326 = vadd.f32 %v2172, %v2290
      %v2327 = vadd.f32 %v2173, %v2304
      %v2328 = vadd.f32 %v2174, %v2318
      %v2329 = vadd.f32 %v2175, %v2236
      %v2330 = vadd.f32 %v2176, %v2250
      %v2331 = vadd.f32 %v2177, %v2264
      %v2332 = vadd.f32 %v2178, %v2278
      %v2333 = vadd.f32 %v2179, %v2292
      %v2334 = vadd.f32 %v2180, %v2306
      %v2335 = vadd.f32 %v2181, %v2320
      %s2336 = scalar_lea.vmem %s3, 40
      %v2337 = vld [vmem:[%s2336] sm:$0xf]
      %v2338 = vld [vmem:[%s2336 + $0x4] sm:$0xf]
      %v2341 = vunpack.c.l.b16 %v2337
      %v2342 = vunpack.c.l.b16 %v2338
      %v2343 = vpack.c.b16 %v2342, %v2341
      %2344 = vrot.lane.b32.xlu0 %v2028, 94
      %v2345 = vpop.permute.xlu0 %2344
      %2346 = vrot.lane.b32.xlu0 %v2029, 94
      %v2347 = vpop.permute.xlu0 %2346
      %2348 = vrot.lane.b32.xlu0 %v2030, 94
      %v2349 = vpop.permute.xlu0 %2348
      %2350 = vrot.lane.b32.xlu0 %v2031, 94
      %v2351 = vpop.permute.xlu0 %2350
      %2352 = vrot.lane.b32.xlu0 %v2032, 94
      %v2353 = vpop.permute.xlu0 %2352
      %2354 = vrot.lane.b32.xlu0 %v2033, 94
      %v2355 = vpop.permute.xlu0 %2354
      %2356 = vrot.lane.b32.xlu0 %v2034, 94
      %v2357 = vpop.permute.xlu0 %2356
      %2358 = vrot.lane.b32.xlu0 %v2035, 94
      %v2359 = vpop.permute.xlu0 %2358
      %vm2360 = vcmask 769024
      %v2361 = vsel %vm2360, %v2345, %v2347
      %v2362 = vsel %vm2360, %v2347, %v2349
      %v2363 = vsel %vm2360, %v2349, %v2351
      %v2364 = vsel %vm2360, %v2351, %v2353
      %v2365 = vsel %vm2360, %v2353, %v2355
      %v2366 = vsel %vm2360, %v2355, %v2357
      %v2367 = vsel %vm2360, %v2357, %v2359
      %v2376 = vsel %vm1622, %v2343, 0
      %2378 = vmatpush.bf16.msra.mxu0 0
      %2379 = vmatpush.bf16.msra.mxu0 0
      %2380 = vmatpush.bf16.msra.mxu0 0
      %2381 = vmatpush.bf16.msra.mxu0 0
      %2382 = vmatpush.bf16.msra.mxu0 0
      %2383 = vmatpush.bf16.msra.mxu0 0
      %2384 = vmatpush.bf16.msra.mxu0 0
      %2385 = vmatpush.bf16.msra.mxu0 %v2361
      %2386 = vmatmul.bf16.gmra.mxu0 %v2376
      %v2387 = vpop.f32.mrf.mxu0
      %v2388 = vadd.f32 0.0, %v2387
      %v2389 = vpop.f32.mrf.mxu0
      %v2390 = vadd.f32 0.0, %v2389
      %2391 = vdwg.mxu0
      %2392 = vmatpush.bf16.msra.mxu0 0
      %2393 = vmatpush.bf16.msra.mxu0 0
      %2394 = vmatpush.bf16.msra.mxu0 0
      %2395 = vmatpush.bf16.msra.mxu0 0
      %2396 = vmatpush.bf16.msra.mxu0 0
      %2397 = vmatpush.bf16.msra.mxu0 0
      %2398 = vmatpush.bf16.msra.mxu0 0
      %2399 = vmatpush.bf16.msra.mxu0 %v2362
      %2400 = vmatmul.bf16.gmra.mxu0 %v2376
      %v2401 = vpop.f32.mrf.mxu0
      %v2402 = vadd.f32 0.0, %v2401
      %v2403 = vpop.f32.mrf.mxu0
      %v2404 = vadd.f32 0.0, %v2403
      %2405 = vdwg.mxu0
      %2406 = vmatpush.bf16.msra.mxu0 0
      %2407 = vmatpush.bf16.msra.mxu0 0
      %2408 = vmatpush.bf16.msra.mxu0 0
      %2409 = vmatpush.bf16.msra.mxu0 0
      %2410 = vmatpush.bf16.msra.mxu0 0
      %2411 = vmatpush.bf16.msra.mxu0 0
      %2412 = vmatpush.bf16.msra.mxu0 0
      %2413 = vmatpush.bf16.msra.mxu0 %v2363
      %2414 = vmatmul.bf16.gmra.mxu0 %v2376
      %v2415 = vpop.f32.mrf.mxu0
      %v2416 = vadd.f32 0.0, %v2415
      %v2417 = vpop.f32.mrf.mxu0
      %v2418 = vadd.f32 0.0, %v2417
      %2419 = vdwg.mxu0
      %2420 = vmatpush.bf16.msra.mxu0 0
      %2421 = vmatpush.bf16.msra.mxu0 0
      %2422 = vmatpush.bf16.msra.mxu0 0
      %2423 = vmatpush.bf16.msra.mxu0 0
      %2424 = vmatpush.bf16.msra.mxu0 0
      %2425 = vmatpush.bf16.msra.mxu0 0
      %2426 = vmatpush.bf16.msra.mxu0 0
      %2427 = vmatpush.bf16.msra.mxu0 %v2364
      %2428 = vmatmul.bf16.gmra.mxu0 %v2376
      %v2429 = vpop.f32.mrf.mxu0
      %v2430 = vadd.f32 0.0, %v2429
      %v2431 = vpop.f32.mrf.mxu0
      %v2432 = vadd.f32 0.0, %v2431
      %2433 = vdwg.mxu0
      %2434 = vmatpush.bf16.msra.mxu0 0
      %2435 = vmatpush.bf16.msra.mxu0 0
      %2436 = vmatpush.bf16.msra.mxu0 0
      %2437 = vmatpush.bf16.msra.mxu0 0
      %2438 = vmatpush.bf16.msra.mxu0 0
      %2439 = vmatpush.bf16.msra.mxu0 0
      %2440 = vmatpush.bf16.msra.mxu0 0
      %2441 = vmatpush.bf16.msra.mxu0 %v2365
      %2442 = vmatmul.bf16.gmra.mxu0 %v2376
      %v2443 = vpop.f32.mrf.mxu0
      %v2444 = vadd.f32 0.0, %v2443
      %v2445 = vpop.f32.mrf.mxu0
      %v2446 = vadd.f32 0.0, %v2445
      %2447 = vdwg.mxu0
      %2448 = vmatpush.bf16.msra.mxu0 0
      %2449 = vmatpush.bf16.msra.mxu0 0
      %2450 = vmatpush.bf16.msra.mxu0 0
      %2451 = vmatpush.bf16.msra.mxu0 0
      %2452 = vmatpush.bf16.msra.mxu0 0
      %2453 = vmatpush.bf16.msra.mxu0 0
      %2454 = vmatpush.bf16.msra.mxu0 0
      %2455 = vmatpush.bf16.msra.mxu0 %v2366
      %2456 = vmatmul.bf16.gmra.mxu0 %v2376
      %v2457 = vpop.f32.mrf.mxu0
      %v2458 = vadd.f32 0.0, %v2457
      %v2459 = vpop.f32.mrf.mxu0
      %v2460 = vadd.f32 0.0, %v2459
      %2461 = vdwg.mxu0
      %2462 = vmatpush.bf16.msra.mxu0 0
      %2463 = vmatpush.bf16.msra.mxu0 0
      %2464 = vmatpush.bf16.msra.mxu0 0
      %2465 = vmatpush.bf16.msra.mxu0 0
      %2466 = vmatpush.bf16.msra.mxu0 0
      %2467 = vmatpush.bf16.msra.mxu0 0
      %2468 = vmatpush.bf16.msra.mxu0 0
      %2469 = vmatpush.bf16.msra.mxu0 %v2367
      %2470 = vmatmul.bf16.gmra.mxu0 %v2376
      %v2471 = vpop.f32.mrf.mxu0
      %v2472 = vadd.f32 0.0, %v2471
      %v2473 = vpop.f32.mrf.mxu0
      %v2474 = vadd.f32 0.0, %v2473
      %2475 = vdwg.mxu0
      %v2476 = vadd.f32 %v2322, %v2388
      %v2477 = vadd.f32 %v2323, %v2402
      %v2478 = vadd.f32 %v2324, %v2416
      %v2479 = vadd.f32 %v2325, %v2430
      %v2480 = vadd.f32 %v2326, %v2444
      %v2481 = vadd.f32 %v2327, %v2458
      %v2482 = vadd.f32 %v2328, %v2472
      %v2483 = vadd.f32 %v2329, %v2390
      %v2484 = vadd.f32 %v2330, %v2404
      %v2485 = vadd.f32 %v2331, %v2418
      %v2486 = vadd.f32 %v2332, %v2432
      %v2487 = vadd.f32 %v2333, %v2446
      %v2488 = vadd.f32 %v2334, %v2460
      %v2489 = vadd.f32 %v2335, %v2474
      %s2490 = scalar_lea.vmem %s3, 48
      %v2491 = vld [vmem:[%s2490] sm:$0xf]
      %v2492 = vld [vmem:[%s2490 + $0x4] sm:$0xf]
      %v2495 = vunpack.c.l.b16 %v2491
      %v2496 = vunpack.c.l.b16 %v2492
      %v2497 = vpack.c.b16 %v2496, %v2495
      %2498 = vrot.lane.b32.xlu0 %v2028, 64
      %v2499 = vpop.permute.xlu0 %2498
      %2500 = vrot.lane.b32.xlu0 %v2029, 64
      %v2501 = vpop.permute.xlu0 %2500
      %2502 = vrot.lane.b32.xlu0 %v2030, 64
      %v2503 = vpop.permute.xlu0 %2502
      %2504 = vrot.lane.b32.xlu0 %v2031, 64
      %v2505 = vpop.permute.xlu0 %2504
      %2506 = vrot.lane.b32.xlu0 %v2032, 64
      %v2507 = vpop.permute.xlu0 %2506
      %2508 = vrot.lane.b32.xlu0 %v2033, 64
      %v2509 = vpop.permute.xlu0 %2508
      %2510 = vrot.lane.b32.xlu0 %v2034, 64
      %v2511 = vpop.permute.xlu0 %2510
      %2512 = vrot.lane.b32.xlu0 %v2035, 64
      %v2513 = vpop.permute.xlu0 %2512
      %vm2514 = vcmask 523264
      %v2515 = vsel %vm2514, %v2499, %v2501
      %v2516 = vsel %vm2514, %v2501, %v2503
      %v2517 = vsel %vm2514, %v2503, %v2505
      %v2518 = vsel %vm2514, %v2505, %v2507
      %v2519 = vsel %vm2514, %v2507, %v2509
      %v2520 = vsel %vm2514, %v2509, %v2511
      %v2521 = vsel %vm2514, %v2511, %v2513
      %v2530 = vsel %vm1622, %v2497, 0
      %2532 = vmatpush.bf16.msra.mxu0 0
      %2533 = vmatpush.bf16.msra.mxu0 0
      %2534 = vmatpush.bf16.msra.mxu0 0
      %2535 = vmatpush.bf16.msra.mxu0 0
      %2536 = vmatpush.bf16.msra.mxu0 0
      %2537 = vmatpush.bf16.msra.mxu0 0
      %2538 = vmatpush.bf16.msra.mxu0 0
      %2539 = vmatpush.bf16.msra.mxu0 %v2515
      %2540 = vmatmul.bf16.gmra.mxu0 %v2530
      %v2541 = vpop.f32.mrf.mxu0
      %v2542 = vadd.f32 0.0, %v2541
      %v2543 = vpop.f32.mrf.mxu0
      %v2544 = vadd.f32 0.0, %v2543
      %2545 = vdwg.mxu0
      %2546 = vmatpush.bf16.msra.mxu0 0
      %2547 = vmatpush.bf16.msra.mxu0 0
      %2548 = vmatpush.bf16.msra.mxu0 0
      %2549 = vmatpush.bf16.msra.mxu0 0
      %2550 = vmatpush.bf16.msra.mxu0 0
      %2551 = vmatpush.bf16.msra.mxu0 0
      %2552 = vmatpush.bf16.msra.mxu0 0
      %2553 = vmatpush.bf16.msra.mxu0 %v2516
      %2554 = vmatmul.bf16.gmra.mxu0 %v2530
      %v2555 = vpop.f32.mrf.mxu0
      %v2556 = vadd.f32 0.0, %v2555
      %v2557 = vpop.f32.mrf.mxu0
      %v2558 = vadd.f32 0.0, %v2557
      %2559 = vdwg.mxu0
      %2560 = vmatpush.bf16.msra.mxu0 0
      %2561 = vmatpush.bf16.msra.mxu0 0
      %2562 = vmatpush.bf16.msra.mxu0 0
      %2563 = vmatpush.bf16.msra.mxu0 0
      %2564 = vmatpush.bf16.msra.mxu0 0
      %2565 = vmatpush.bf16.msra.mxu0 0
      %2566 = vmatpush.bf16.msra.mxu0 0
      %2567 = vmatpush.bf16.msra.mxu0 %v2517
      %2568 = vmatmul.bf16.gmra.mxu0 %v2530
      %v2569 = vpop.f32.mrf.mxu0
      %v2570 = vadd.f32 0.0, %v2569
      %v2571 = vpop.f32.mrf.mxu0
      %v2572 = vadd.f32 0.0, %v2571
      %2573 = vdwg.mxu0
      %2574 = vmatpush.bf16.msra.mxu0 0
      %2575 = vmatpush.bf16.msra.mxu0 0
      %2576 = vmatpush.bf16.msra.mxu0 0
      %2577 = vmatpush.bf16.msra.mxu0 0
      %2578 = vmatpush.bf16.msra.mxu0 0
      %2579 = vmatpush.bf16.msra.mxu0 0
      %2580 = vmatpush.bf16.msra.mxu0 0
      %2581 = vmatpush.bf16.msra.mxu0 %v2518
      %2582 = vmatmul.bf16.gmra.mxu0 %v2530
      %v2583 = vpop.f32.mrf.mxu0
      %v2584 = vadd.f32 0.0, %v2583
      %v2585 = vpop.f32.mrf.mxu0
      %v2586 = vadd.f32 0.0, %v2585
      %2587 = vdwg.mxu0
      %2588 = vmatpush.bf16.msra.mxu0 0
      %2589 = vmatpush.bf16.msra.mxu0 0
      %2590 = vmatpush.bf16.msra.mxu0 0
      %2591 = vmatpush.bf16.msra.mxu0 0
      %2592 = vmatpush.bf16.msra.mxu0 0
      %2593 = vmatpush.bf16.msra.mxu0 0
      %2594 = vmatpush.bf16.msra.mxu0 0
      %2595 = vmatpush.bf16.msra.mxu0 %v2519
      %2596 = vmatmul.bf16.gmra.mxu0 %v2530
      %v2597 = vpop.f32.mrf.mxu0
      %v2598 = vadd.f32 0.0, %v2597
      %v2599 = vpop.f32.mrf.mxu0
      %v2600 = vadd.f32 0.0, %v2599
      %2601 = vdwg.mxu0
      %2602 = vmatpush.bf16.msra.mxu0 0
      %2603 = vmatpush.bf16.msra.mxu0 0
      %2604 = vmatpush.bf16.msra.mxu0 0
      %2605 = vmatpush.bf16.msra.mxu0 0
      %2606 = vmatpush.bf16.msra.mxu0 0
      %2607 = vmatpush.bf16.msra.mxu0 0
      %2608 = vmatpush.bf16.msra.mxu0 0
      %2609 = vmatpush.bf16.msra.mxu0 %v2520
      %2610 = vmatmul.bf16.gmra.mxu0 %v2530
      %v2611 = vpop.f32.mrf.mxu0
      %v2612 = vadd.f32 0.0, %v2611
      %v2613 = vpop.f32.mrf.mxu0
      %v2614 = vadd.f32 0.0, %v2613
      %2615 = vdwg.mxu0
      %2616 = vmatpush.bf16.msra.mxu0 0
      %2617 = vmatpush.bf16.msra.mxu0 0
      %2618 = vmatpush.bf16.msra.mxu0 0
      %2619 = vmatpush.bf16.msra.mxu0 0
      %2620 = vmatpush.bf16.msra.mxu0 0
      %2621 = vmatpush.bf16.msra.mxu0 0
      %2622 = vmatpush.bf16.msra.mxu0 0
      %2623 = vmatpush.bf16.msra.mxu0 %v2521
      %2624 = vmatmul.bf16.gmra.mxu0 %v2530
      %v2625 = vpop.f32.mrf.mxu0
      %v2626 = vadd.f32 0.0, %v2625
      %v2627 = vpop.f32.mrf.mxu0
      %v2628 = vadd.f32 0.0, %v2627
      %2629 = vdwg.mxu0
      %v2630 = vadd.f32 %v2476, %v2542
      %v2631 = vadd.f32 %v2477, %v2556
      %v2632 = vadd.f32 %v2478, %v2570
      %v2633 = vadd.f32 %v2479, %v2584
      %v2634 = vadd.f32 %v2480, %v2598
      %v2635 = vadd.f32 %v2481, %v2612
      %v2636 = vadd.f32 %v2482, %v2626
      %v2637 = vadd.f32 %v2483, %v2544
      %v2638 = vadd.f32 %v2484, %v2558
      %v2639 = vadd.f32 %v2485, %v2572
      %v2640 = vadd.f32 %v2486, %v2586
      %v2641 = vadd.f32 %v2487, %v2600
      %v2642 = vadd.f32 %v2488, %v2614
      %v2643 = vadd.f32 %v2489, %v2628
      %s2644 = scalar_lea.vmem %s3, 56
      %v2645 = vld [vmem:[%s2644] sm:$0xf]
      %v2646 = vld [vmem:[%s2644 + $0x4] sm:$0xf]
      %v2649 = vunpack.c.l.b16 %v2645
      %v2650 = vunpack.c.l.b16 %v2646
      %v2651 = vpack.c.b16 %v2650, %v2649
      %2652 = vrot.lane.b32.xlu0 %v2028, 63
      %v2653 = vpop.permute.xlu0 %2652
      %2654 = vrot.lane.b32.xlu0 %v2029, 63
      %v2655 = vpop.permute.xlu0 %2654
      %2656 = vrot.lane.b32.xlu0 %v2030, 63
      %v2657 = vpop.permute.xlu0 %2656
      %2658 = vrot.lane.b32.xlu0 %v2031, 63
      %v2659 = vpop.permute.xlu0 %2658
      %2660 = vrot.lane.b32.xlu0 %v2032, 63
      %v2661 = vpop.permute.xlu0 %2660
      %2662 = vrot.lane.b32.xlu0 %v2033, 63
      %v2663 = vpop.permute.xlu0 %2662
      %2664 = vrot.lane.b32.xlu0 %v2034, 63
      %v2665 = vpop.permute.xlu0 %2664
      %2666 = vrot.lane.b32.xlu0 %v2035, 63
      %v2667 = vpop.permute.xlu0 %2666
      %vm2668 = vcmask 515072
      %v2669 = vsel %vm2668, %v2653, %v2655
      %v2670 = vsel %vm2668, %v2655, %v2657
      %v2671 = vsel %vm2668, %v2657, %v2659
      %v2672 = vsel %vm2668, %v2659, %v2661
      %v2673 = vsel %vm2668, %v2661, %v2663
      %v2674 = vsel %vm2668, %v2663, %v2665
      %v2675 = vsel %vm2668, %v2665, %v2667
      %v2684 = vsel %vm1622, %v2651, 0
      %2686 = vmatpush.bf16.msra.mxu0 0
      %2687 = vmatpush.bf16.msra.mxu0 0
      %2688 = vmatpush.bf16.msra.mxu0 0
      %2689 = vmatpush.bf16.msra.mxu0 0
      %2690 = vmatpush.bf16.msra.mxu0 0
      %2691 = vmatpush.bf16.msra.mxu0 0
      %2692 = vmatpush.bf16.msra.mxu0 0
      %2693 = vmatpush.bf16.msra.mxu0 %v2669
      %2694 = vmatmul.bf16.gmra.mxu0 %v2684
      %v2695 = vpop.f32.mrf.mxu0
      %v2696 = vadd.f32 0.0, %v2695
      %v2697 = vpop.f32.mrf.mxu0
      %v2698 = vadd.f32 0.0, %v2697
      %2699 = vdwg.mxu0
      %2700 = vmatpush.bf16.msra.mxu0 0
      %2701 = vmatpush.bf16.msra.mxu0 0
      %2702 = vmatpush.bf16.msra.mxu0 0
      %2703 = vmatpush.bf16.msra.mxu0 0
      %2704 = vmatpush.bf16.msra.mxu0 0
      %2705 = vmatpush.bf16.msra.mxu0 0
      %2706 = vmatpush.bf16.msra.mxu0 0
      %2707 = vmatpush.bf16.msra.mxu0 %v2670
      %2708 = vmatmul.bf16.gmra.mxu0 %v2684
      %v2709 = vpop.f32.mrf.mxu0
      %v2710 = vadd.f32 0.0, %v2709
      %v2711 = vpop.f32.mrf.mxu0
      %v2712 = vadd.f32 0.0, %v2711
      %2713 = vdwg.mxu0
      %2714 = vmatpush.bf16.msra.mxu0 0
      %2715 = vmatpush.bf16.msra.mxu0 0
      %2716 = vmatpush.bf16.msra.mxu0 0
      %2717 = vmatpush.bf16.msra.mxu0 0
      %2718 = vmatpush.bf16.msra.mxu0 0
      %2719 = vmatpush.bf16.msra.mxu0 0
      %2720 = vmatpush.bf16.msra.mxu0 0
      %2721 = vmatpush.bf16.msra.mxu0 %v2671
      %2722 = vmatmul.bf16.gmra.mxu0 %v2684
      %v2723 = vpop.f32.mrf.mxu0
      %v2724 = vadd.f32 0.0, %v2723
      %v2725 = vpop.f32.mrf.mxu0
      %v2726 = vadd.f32 0.0, %v2725
      %2727 = vdwg.mxu0
      %2728 = vmatpush.bf16.msra.mxu0 0
      %2729 = vmatpush.bf16.msra.mxu0 0
      %2730 = vmatpush.bf16.msra.mxu0 0
      %2731 = vmatpush.bf16.msra.mxu0 0
      %2732 = vmatpush.bf16.msra.mxu0 0
      %2733 = vmatpush.bf16.msra.mxu0 0
      %2734 = vmatpush.bf16.msra.mxu0 0
      %2735 = vmatpush.bf16.msra.mxu0 %v2672
      %2736 = vmatmul.bf16.gmra.mxu0 %v2684
      %v2737 = vpop.f32.mrf.mxu0
      %v2738 = vadd.f32 0.0, %v2737
      %v2739 = vpop.f32.mrf.mxu0
      %v2740 = vadd.f32 0.0, %v2739
      %2741 = vdwg.mxu0
      %2742 = vmatpush.bf16.msra.mxu0 0
      %2743 = vmatpush.bf16.msra.mxu0 0
      %2744 = vmatpush.bf16.msra.mxu0 0
      %2745 = vmatpush.bf16.msra.mxu0 0
      %2746 = vmatpush.bf16.msra.mxu0 0
      %2747 = vmatpush.bf16.msra.mxu0 0
      %2748 = vmatpush.bf16.msra.mxu0 0
      %2749 = vmatpush.bf16.msra.mxu0 %v2673
      %2750 = vmatmul.bf16.gmra.mxu0 %v2684
      %v2751 = vpop.f32.mrf.mxu0
      %v2752 = vadd.f32 0.0, %v2751
      %v2753 = vpop.f32.mrf.mxu0
      %v2754 = vadd.f32 0.0, %v2753
      %2755 = vdwg.mxu0
      %2756 = vmatpush.bf16.msra.mxu0 0
      %2757 = vmatpush.bf16.msra.mxu0 0
      %2758 = vmatpush.bf16.msra.mxu0 0
      %2759 = vmatpush.bf16.msra.mxu0 0
      %2760 = vmatpush.bf16.msra.mxu0 0
      %2761 = vmatpush.bf16.msra.mxu0 0
      %2762 = vmatpush.bf16.msra.mxu0 0
      %2763 = vmatpush.bf16.msra.mxu0 %v2674
      %2764 = vmatmul.bf16.gmra.mxu0 %v2684
      %v2765 = vpop.f32.mrf.mxu0
      %v2766 = vadd.f32 0.0, %v2765
      %v2767 = vpop.f32.mrf.mxu0
      %v2768 = vadd.f32 0.0, %v2767
      %2769 = vdwg.mxu0
      %2770 = vmatpush.bf16.msra.mxu0 0
      %2771 = vmatpush.bf16.msra.mxu0 0
      %2772 = vmatpush.bf16.msra.mxu0 0
      %2773 = vmatpush.bf16.msra.mxu0 0
      %2774 = vmatpush.bf16.msra.mxu0 0
      %2775 = vmatpush.bf16.msra.mxu0 0
      %2776 = vmatpush.bf16.msra.mxu0 0
      %2777 = vmatpush.bf16.msra.mxu0 %v2675
      %2778 = vmatmul.bf16.gmra.mxu0 %v2684
      %v2779 = vpop.f32.mrf.mxu0
      %v2780 = vadd.f32 0.0, %v2779
      %v2781 = vpop.f32.mrf.mxu0
      %v2782 = vadd.f32 0.0, %v2781
      %2783 = vdwg.mxu0
      %v2784 = vadd.f32 %v2630, %v2696
      %v2785 = vadd.f32 %v2631, %v2710
      %v2786 = vadd.f32 %v2632, %v2724
      %v2787 = vadd.f32 %v2633, %v2738
      %v2788 = vadd.f32 %v2634, %v2752
      %v2789 = vadd.f32 %v2635, %v2766
      %v2790 = vadd.f32 %v2636, %v2780
      %v2791 = vadd.f32 %v2637, %v2698
      %v2792 = vadd.f32 %v2638, %v2712
      %v2793 = vadd.f32 %v2639, %v2726
      %v2794 = vadd.f32 %v2640, %v2740
      %v2795 = vadd.f32 %v2641, %v2754
      %v2796 = vadd.f32 %v2642, %v2768
      %v2797 = vadd.f32 %v2643, %v2782
      %s2798 = scalar_lea.vmem %s3, 64
      %v2799 = vld [vmem:[%s2798] sm:$0xf]
      %v2800 = vld [vmem:[%s2798 + $0x4] sm:$0xf]
      %v2803 = vunpack.c.l.b16 %v2799
      %v2804 = vunpack.c.l.b16 %v2800
      %v2805 = vpack.c.b16 %v2804, %v2803
      %2806 = vrot.lane.b32.xlu0 %v2028, 62
      %v2807 = vpop.permute.xlu0 %2806
      %2808 = vrot.lane.b32.xlu0 %v2029, 62
      %v2809 = vpop.permute.xlu0 %2808
      %2810 = vrot.lane.b32.xlu0 %v2030, 62
      %v2811 = vpop.permute.xlu0 %2810
      %2812 = vrot.lane.b32.xlu0 %v2031, 62
      %v2813 = vpop.permute.xlu0 %2812
      %2814 = vrot.lane.b32.xlu0 %v2032, 62
      %v2815 = vpop.permute.xlu0 %2814
      %2816 = vrot.lane.b32.xlu0 %v2033, 62
      %v2817 = vpop.permute.xlu0 %2816
      %2818 = vrot.lane.b32.xlu0 %v2034, 62
      %v2819 = vpop.permute.xlu0 %2818
      %2820 = vrot.lane.b32.xlu0 %v2035, 62
      %v2821 = vpop.permute.xlu0 %2820
      %vm2822 = vcmask 506880
      %v2823 = vsel %vm2822, %v2807, %v2809
      %v2824 = vsel %vm2822, %v2809, %v2811
      %v2825 = vsel %vm2822, %v2811, %v2813
      %v2826 = vsel %vm2822, %v2813, %v2815
      %v2827 = vsel %vm2822, %v2815, %v2817
      %v2828 = vsel %vm2822, %v2817, %v2819
      %v2829 = vsel %vm2822, %v2819, %v2821
      %v2838 = vsel %vm1622, %v2805, 0
      %2840 = vmatpush.bf16.msra.mxu0 0
      %2841 = vmatpush.bf16.msra.mxu0 0
      %2842 = vmatpush.bf16.msra.mxu0 0
      %2843 = vmatpush.bf16.msra.mxu0 0
      %2844 = vmatpush.bf16.msra.mxu0 0
      %2845 = vmatpush.bf16.msra.mxu0 0
      %2846 = vmatpush.bf16.msra.mxu0 0
      %2847 = vmatpush.bf16.msra.mxu0 %v2823
      %2848 = vmatmul.bf16.gmra.mxu0 %v2838
      %v2849 = vpop.f32.mrf.mxu0
      %v2850 = vadd.f32 0.0, %v2849
      %v2851 = vpop.f32.mrf.mxu0
      %v2852 = vadd.f32 0.0, %v2851
      %2853 = vdwg.mxu0
      %2854 = vmatpush.bf16.msra.mxu0 0
      %2855 = vmatpush.bf16.msra.mxu0 0
      %2856 = vmatpush.bf16.msra.mxu0 0
      %2857 = vmatpush.bf16.msra.mxu0 0
      %2858 = vmatpush.bf16.msra.mxu0 0
      %2859 = vmatpush.bf16.msra.mxu0 0
      %2860 = vmatpush.bf16.msra.mxu0 0
      %2861 = vmatpush.bf16.msra.mxu0 %v2824
      %2862 = vmatmul.bf16.gmra.mxu0 %v2838
      %v2863 = vpop.f32.mrf.mxu0
      %v2864 = vadd.f32 0.0, %v2863
      %v2865 = vpop.f32.mrf.mxu0
      %v2866 = vadd.f32 0.0, %v2865
      %2867 = vdwg.mxu0
      %2868 = vmatpush.bf16.msra.mxu0 0
      %2869 = vmatpush.bf16.msra.mxu0 0
      %2870 = vmatpush.bf16.msra.mxu0 0
      %2871 = vmatpush.bf16.msra.mxu0 0
      %2872 = vmatpush.bf16.msra.mxu0 0
      %2873 = vmatpush.bf16.msra.mxu0 0
      %2874 = vmatpush.bf16.msra.mxu0 0
      %2875 = vmatpush.bf16.msra.mxu0 %v2825
      %2876 = vmatmul.bf16.gmra.mxu0 %v2838
      %v2877 = vpop.f32.mrf.mxu0
      %v2878 = vadd.f32 0.0, %v2877
      %v2879 = vpop.f32.mrf.mxu0
      %v2880 = vadd.f32 0.0, %v2879
      %2881 = vdwg.mxu0
      %2882 = vmatpush.bf16.msra.mxu0 0
      %2883 = vmatpush.bf16.msra.mxu0 0
      %2884 = vmatpush.bf16.msra.mxu0 0
      %2885 = vmatpush.bf16.msra.mxu0 0
      %2886 = vmatpush.bf16.msra.mxu0 0
      %2887 = vmatpush.bf16.msra.mxu0 0
      %2888 = vmatpush.bf16.msra.mxu0 0
      %2889 = vmatpush.bf16.msra.mxu0 %v2826
      %2890 = vmatmul.bf16.gmra.mxu0 %v2838
      %v2891 = vpop.f32.mrf.mxu0
      %v2892 = vadd.f32 0.0, %v2891
      %v2893 = vpop.f32.mrf.mxu0
      %v2894 = vadd.f32 0.0, %v2893
      %2895 = vdwg.mxu0
      %2896 = vmatpush.bf16.msra.mxu0 0
      %2897 = vmatpush.bf16.msra.mxu0 0
      %2898 = vmatpush.bf16.msra.mxu0 0
      %2899 = vmatpush.bf16.msra.mxu0 0
      %2900 = vmatpush.bf16.msra.mxu0 0
      %2901 = vmatpush.bf16.msra.mxu0 0
      %2902 = vmatpush.bf16.msra.mxu0 0
      %2903 = vmatpush.bf16.msra.mxu0 %v2827
      %2904 = vmatmul.bf16.gmra.mxu0 %v2838
      %v2905 = vpop.f32.mrf.mxu0
      %v2906 = vadd.f32 0.0, %v2905
      %v2907 = vpop.f32.mrf.mxu0
      %v2908 = vadd.f32 0.0, %v2907
      %2909 = vdwg.mxu0
      %2910 = vmatpush.bf16.msra.mxu0 0
      %2911 = vmatpush.bf16.msra.mxu0 0
      %2912 = vmatpush.bf16.msra.mxu0 0
      %2913 = vmatpush.bf16.msra.mxu0 0
      %2914 = vmatpush.bf16.msra.mxu0 0
      %2915 = vmatpush.bf16.msra.mxu0 0
      %2916 = vmatpush.bf16.msra.mxu0 0
      %2917 = vmatpush.bf16.msra.mxu0 %v2828
      %2918 = vmatmul.bf16.gmra.mxu0 %v2838
      %v2919 = vpop.f32.mrf.mxu0
      %v2920 = vadd.f32 0.0, %v2919
      %v2921 = vpop.f32.mrf.mxu0
      %v2922 = vadd.f32 0.0, %v2921
      %2923 = vdwg.mxu0
      %2924 = vmatpush.bf16.msra.mxu0 0
      %2925 = vmatpush.bf16.msra.mxu0 0
      %2926 = vmatpush.bf16.msra.mxu0 0
      %2927 = vmatpush.bf16.msra.mxu0 0
      %2928 = vmatpush.bf16.msra.mxu0 0
      %2929 = vmatpush.bf16.msra.mxu0 0
      %2930 = vmatpush.bf16.msra.mxu0 0
      %2931 = vmatpush.bf16.msra.mxu0 %v2829
      %2932 = vmatmul.bf16.gmra.mxu0 %v2838
      %v2933 = vpop.f32.mrf.mxu0
      %v2934 = vadd.f32 0.0, %v2933
      %v2935 = vpop.f32.mrf.mxu0
      %v2936 = vadd.f32 0.0, %v2935
      %2937 = vdwg.mxu0
      %v2938 = vadd.f32 %v2784, %v2850
      %v2939 = vadd.f32 %v2785, %v2864
      %v2940 = vadd.f32 %v2786, %v2878
      %v2941 = vadd.f32 %v2787, %v2892
      %v2942 = vadd.f32 %v2788, %v2906
      %v2943 = vadd.f32 %v2789, %v2920
      %v2944 = vadd.f32 %v2790, %v2934
      %v2945 = vadd.f32 %v2791, %v2852
      %v2946 = vadd.f32 %v2792, %v2866
      %v2947 = vadd.f32 %v2793, %v2880
      %v2948 = vadd.f32 %v2794, %v2894
      %v2949 = vadd.f32 %v2795, %v2908
      %v2950 = vadd.f32 %v2796, %v2922
      %v2951 = vadd.f32 %v2797, %v2936
      %v2952 = vld [vmem:[%s4] sm:$0xff]
      %v2953 = vld [vmem:[%s4 + $0x8] sm:$0xff]
      %2955 = vset.pattern.permute.xlu0 0
      %2956 = vperm.xlu0 %2955, %v2952
      %v2957 = vpop.permute.xlu0 %2956
      %2960 = vset.pattern.permute.xlu0 0
      %2961 = vperm.xlu0 %2960, %v2953
      %v2962 = vpop.permute.xlu0 %2961
      %v2964 = vadd.f32 %v2938, %v2957
      %v2965 = vadd.f32 %v2939, %v2957
      %v2966 = vadd.f32 %v2940, %v2957
      %v2967 = vadd.f32 %v2941, %v2957
      %v2968 = vadd.f32 %v2942, %v2957
      %v2969 = vadd.f32 %v2943, %v2957
      %v2970 = vadd.f32 %v2944, %v2957
      %v2971 = vadd.f32 %v2945, %v2962
      %v2972 = vadd.f32 %v2946, %v2962
      %v2973 = vadd.f32 %v2947, %v2962
      %v2974 = vadd.f32 %v2948, %v2962
      %v2975 = vadd.f32 %v2949, %v2962
      %v2976 = vadd.f32 %v2950, %v2962
      %v2977 = vadd.f32 %v2951, %v2962
      %v2978 = vmax.f32 %v2964, 0.0
      %v2979 = vmax.f32 %v2965, 0.0
      %v2980 = vmax.f32 %v2966, 0.0
      %v2981 = vmax.f32 %v2967, 0.0
      %v2982 = vmax.f32 %v2968, 0.0
      %v2983 = vmax.f32 %v2969, 0.0
      %v2984 = vmax.f32 %v2970, 0.0
      %v2985 = vmax.f32 %v2971, 0.0
      %v2986 = vmax.f32 %v2972, 0.0
      %v2987 = vmax.f32 %v2973, 0.0
      %v2988 = vmax.f32 %v2974, 0.0
      %v2989 = vmax.f32 %v2975, 0.0
      %v2990 = vmax.f32 %v2976, 0.0
      %v2991 = vmax.f32 %v2977, 0.0
      %v2992 = vpack.c.bf16 %v2979, %v2978
      %v2993 = vpack.c.bf16 %v2981, %v2980
      %v2994 = vpack.c.bf16 %v2983, %v2982
      %v2995 = vpack.c.bf16 %v2984, %v2984
      %v2996 = vpack.c.bf16 %v2986, %v2985
      %v2997 = vpack.c.bf16 %v2988, %v2987
      %v2998 = vpack.c.bf16 %v2990, %v2989
      %v2999 = vpack.c.bf16 %v2991, %v2991
      %3000 = vst [vmem:[#allocation3] sm:$0xff] %v2992
      %3001 = vst [vmem:[#allocation3 + $0x8] sm:$0xff] %v2993
      %3002 = vst [vmem:[#allocation3 + $0x10] sm:$0xff] %v2994
      %vm3003 = vcmask 1010688
      %3004 = vst.msk [vmem:[#allocation3 + $0x18] sm:$0xf] %vm3003, %v2995
      %3005 = vst [vmem:[#allocation3 + $0x1c] sm:$0xff] %v2996
      %3006 = vst [vmem:[#allocation3 + $0x24] sm:$0xff] %v2997
      %3007 = vst [vmem:[#allocation3 + $0x2c] sm:$0xff] %v2998
      %3008 = vst.msk [vmem:[#allocation3 + $0x34] sm:$0xf] %vm3003, %v2999
      %v3009 = vld [vmem:[#allocation3] sm:$0xff]
      %v3010 = vld [vmem:[#allocation3 + $0x8] sm:$0xff]
      %v3011 = vld [vmem:[#allocation3 + $0x10] sm:$0xff]
      %v3012 = vld [vmem:[#allocation3 + $0x18] sm:$0xf]
      %v3013 = vld [vmem:[#allocation3 + $0x1c] sm:$0xff]
      %v3014 = vld [vmem:[#allocation3 + $0x24] sm:$0xff]
      %v3015 = vld [vmem:[#allocation3 + $0x2c] sm:$0xff]
      %v3016 = vld [vmem:[#allocation3 + $0x34] sm:$0xf]
      %v3017 = vunpack.c.l.bf16 %v3009
      %v3018 = vunpack.c.h.bf16 %v3009
      %v3019 = vunpack.c.l.bf16 %v3010
      %v3020 = vunpack.c.h.bf16 %v3010
      %v3021 = vunpack.c.l.bf16 %v3011
      %v3022 = vunpack.c.h.bf16 %v3011
      %v3023 = vunpack.c.l.bf16 %v3012
      %v3024 = vunpack.c.l.bf16 %v3013
      %v3025 = vunpack.c.h.bf16 %v3013
      %v3026 = vunpack.c.l.bf16 %v3014
      %v3027 = vunpack.c.h.bf16 %v3014
      %v3028 = vunpack.c.l.bf16 %v3015
      %v3029 = vunpack.c.h.bf16 %v3015
      %v3030 = vunpack.c.l.bf16 %v3016
      %3045 = vrot.lane.b32.xlu0 %v3017, 127
      %v3046 = vpop.permute.xlu0 %3045
      %3047 = vrot.lane.b32.xlu0 %v3018, 127
      %v3048 = vpop.permute.xlu0 %3047
      %3049 = vrot.lane.b32.xlu0 %v3019, 127
      %v3050 = vpop.permute.xlu0 %3049
      %3051 = vrot.lane.b32.xlu0 %v3020, 127
      %v3052 = vpop.permute.xlu0 %3051
      %3053 = vrot.lane.b32.xlu0 %v3021, 127
      %v3054 = vpop.permute.xlu0 %3053
      %3055 = vrot.lane.b32.xlu0 %v3022, 127
      %v3056 = vpop.permute.xlu0 %3055
      %3057 = vrot.lane.b32.xlu0 %v3023, 127
      %v3058 = vpop.permute.xlu0 %3057
      %3059 = vrot.lane.b32.xlu0 %v3024, 127
      %v3060 = vpop.permute.xlu0 %3059
      %3061 = vrot.lane.b32.xlu0 %v3025, 127
      %v3062 = vpop.permute.xlu0 %3061
      %3063 = vrot.lane.b32.xlu0 %v3026, 127
      %v3064 = vpop.permute.xlu0 %3063
      %3065 = vrot.lane.b32.xlu0 %v3027, 127
      %v3066 = vpop.permute.xlu0 %3065
      %3067 = vrot.lane.b32.xlu0 %v3028, 127
      %v3068 = vpop.permute.xlu0 %3067
      %3069 = vrot.lane.b32.xlu0 %v3029, 127
      %v3070 = vpop.permute.xlu0 %3069
      %3071 = vrot.lane.b32.xlu0 %v3030, 127
      %v3072 = vpop.permute.xlu0 %3071
      %v3073 = vsel %vm551, %v3046, %v3048
      %v3074 = vsel %vm551, %v3048, %v3050
      %v3075 = vsel %vm551, %v3050, %v3052
      %v3076 = vsel %vm551, %v3052, %v3054
      %v3077 = vsel %vm551, %v3054, %v3056
      %v3078 = vsel %vm551, %v3056, %v3058
      %v3079 = vsel %vm551, %v3060, %v3062
      %v3080 = vsel %vm551, %v3062, %v3064
      %v3081 = vsel %vm551, %v3064, %v3066
      %v3082 = vsel %vm551, %v3066, %v3068
      %v3083 = vsel %vm551, %v3068, %v3070
      %v3084 = vsel %vm551, %v3070, %v3072
      %v3099 = vmax.f32 %v3017, %v3073
      %v3100 = vmax.f32 %v3018, %v3074
      %v3101 = vmax.f32 %v3019, %v3075
      %v3102 = vmax.f32 %v3020, %v3076
      %v3103 = vmax.f32 %v3021, %v3077
      %v3104 = vmax.f32 %v3022, %v3078
      %v3105 = vmax.f32 %v3023, %v3058
      %v3106 = vmax.f32 %v3024, %v3079
      %v3107 = vmax.f32 %v3025, %v3080
      %v3108 = vmax.f32 %v3026, %v3081
      %v3109 = vmax.f32 %v3027, %v3082
      %v3110 = vmax.f32 %v3028, %v3083
      %v3111 = vmax.f32 %v3029, %v3084
      %v3112 = vmax.f32 %v3030, %v3072
      %v3113 = vpack.c.bf16 %v3100, %v3099
      %v3114 = vpack.c.bf16 %v3102, %v3101
      %v3115 = vpack.c.bf16 %v3104, %v3103
      %v3116 = vpack.c.bf16 %v3105, %v3105
      %v3117 = vpack.c.bf16 %v3107, %v3106
      %v3118 = vpack.c.bf16 %v3109, %v3108
      %v3119 = vpack.c.bf16 %v3111, %v3110
      %v3120 = vpack.c.bf16 %v3112, %v3112
      %v3121 = vunpack.c.l.bf16 %v3113
      %v3122 = vunpack.c.h.bf16 %v3113
      %v3123 = vunpack.c.l.bf16 %v3114
      %v3124 = vunpack.c.h.bf16 %v3114
      %v3125 = vunpack.c.l.bf16 %v3115
      %v3126 = vunpack.c.h.bf16 %v3115
      %v3127 = vunpack.c.l.bf16 %v3116
      %v3128 = vunpack.c.l.bf16 %v3117
      %v3129 = vunpack.c.h.bf16 %v3117
      %v3130 = vunpack.c.l.bf16 %v3118
      %v3131 = vunpack.c.h.bf16 %v3118
      %v3132 = vunpack.c.l.bf16 %v3119
      %v3133 = vunpack.c.h.bf16 %v3119
      %v3134 = vunpack.c.l.bf16 %v3120
      %3149 = vrot.lane.b32.xlu0 %v3121, 96
      %v3150 = vpop.permute.xlu0 %3149
      %3151 = vrot.lane.b32.xlu0 %v3122, 96
      %v3152 = vpop.permute.xlu0 %3151
      %3153 = vrot.lane.b32.xlu0 %v3123, 96
      %v3154 = vpop.permute.xlu0 %3153
      %3155 = vrot.lane.b32.xlu0 %v3124, 96
      %v3156 = vpop.permute.xlu0 %3155
      %3157 = vrot.lane.b32.xlu0 %v3125, 96
      %v3158 = vpop.permute.xlu0 %3157
      %3159 = vrot.lane.b32.xlu0 %v3126, 96
      %v3160 = vpop.permute.xlu0 %3159
      %3161 = vrot.lane.b32.xlu0 %v3127, 96
      %v3162 = vpop.permute.xlu0 %3161
      %3163 = vrot.lane.b32.xlu0 %v3128, 96
      %v3164 = vpop.permute.xlu0 %3163
      %3165 = vrot.lane.b32.xlu0 %v3129, 96
      %v3166 = vpop.permute.xlu0 %3165
      %3167 = vrot.lane.b32.xlu0 %v3130, 96
      %v3168 = vpop.permute.xlu0 %3167
      %3169 = vrot.lane.b32.xlu0 %v3131, 96
      %v3170 = vpop.permute.xlu0 %3169
      %3171 = vrot.lane.b32.xlu0 %v3132, 96
      %v3172 = vpop.permute.xlu0 %3171
      %3173 = vrot.lane.b32.xlu0 %v3133, 96
      %v3174 = vpop.permute.xlu0 %3173
      %3175 = vrot.lane.b32.xlu0 %v3134, 96
      %v3176 = vpop.permute.xlu0 %3175
      %v3177 = vsel %vm799, %v3150, %v3152
      %v3178 = vsel %vm799, %v3152, %v3154
      %v3179 = vsel %vm799, %v3154, %v3156
      %v3180 = vsel %vm799, %v3156, %v3158
      %v3181 = vsel %vm799, %v3158, %v3160
      %v3182 = vsel %vm799, %v3160, %v3162
      %v3183 = vsel %vm799, %v3164, %v3166
      %v3184 = vsel %vm799, %v3166, %v3168
      %v3185 = vsel %vm799, %v3168, %v3170
      %v3186 = vsel %vm799, %v3170, %v3172
      %v3187 = vsel %vm799, %v3172, %v3174
      %v3188 = vsel %vm799, %v3174, %v3176
      %v3203 = vmax.f32 %v3121, %v3177
      %v3204 = vmax.f32 %v3122, %v3178
      %v3205 = vmax.f32 %v3123, %v3179
      %v3206 = vmax.f32 %v3124, %v3180
      %v3207 = vmax.f32 %v3125, %v3181
      %v3208 = vmax.f32 %v3126, %v3182
      %v3209 = vmax.f32 %v3127, %v3162
      %v3210 = vmax.f32 %v3128, %v3183
      %v3211 = vmax.f32 %v3129, %v3184
      %v3212 = vmax.f32 %v3130, %v3185
      %v3213 = vmax.f32 %v3131, %v3186
      %v3214 = vmax.f32 %v3132, %v3187
      %v3215 = vmax.f32 %v3133, %v3188
      %v3216 = vmax.f32 %v3134, %v3176
      %v3217 = vpack.c.bf16 %v3210, %v3203
      %v3218 = vpack.c.bf16 %v3211, %v3204
      %v3219 = vpack.c.bf16 %v3212, %v3205
      %v3220 = vpack.c.bf16 %v3213, %v3206
      %v3221 = vpack.c.bf16 %v3214, %v3207
      %v3222 = vpack.c.bf16 %v3215, %v3208
      %v3223 = vpack.c.bf16 %v3216, %v3209
      %v3224 = vld [vmem:[%s9] sm:$0xff]
      %v3225 = vld [vmem:[%s9 + $0x8] sm:$0xff]
      %v3226 = vld [vmem:[%s9 + $0x10] sm:$0xff]
      %v3227 = vld [vmem:[%s9 + $0x18] sm:$0xff]
      %v3228 = vld [vmem:[%s9 + $0x20] sm:$0xff]
      %v3229 = vld [vmem:[%s9 + $0x28] sm:$0xff]
      %v3230 = vld [vmem:[%s9 + $0x30] sm:$0xff]
      %v3231 = vld [vmem:[%s9 + $0x38] sm:$0xff]
      %v3232 = vld [vmem:[%s9 + $0x40] sm:$0xff]
      %v3233 = vld [vmem:[%s9 + $0x48] sm:$0xff]
      %v3234 = vld [vmem:[%s9 + $0x50] sm:$0xff]
      %v3235 = vld [vmem:[%s9 + $0x58] sm:$0xff]
      %v3236 = vld [vmem:[%s9 + $0x60] sm:$0xff]
      %v3237 = vld [vmem:[%s9 + $0x68] sm:$0xff]
      %v3238 = vld [vmem:[%s9 + $0x70] sm:$0xff]
      %v3239 = vld [vmem:[%s9 + $0x78] sm:$0xff]
      %v3240 = vld [vmem:[%s9 + $0x80] sm:$0xff]
      %v3241 = vld [vmem:[%s9 + $0x88] sm:$0xff]
      %v3242 = vld [vmem:[%s9 + $0x90] sm:$0xff]
      %v3243 = vld [vmem:[%s9 + $0x98] sm:$0xff]
      %v3244 = vld [vmem:[%s9 + $0xa0] sm:$0xff]
      %v3245 = vld [vmem:[%s9 + $0xa8] sm:$0xff]
      %v3246 = vld [vmem:[%s9 + $0xb0] sm:$0xff]
      %v3247 = vld [vmem:[%s9 + $0xb8] sm:$0xff]
      %v3248 = vld [vmem:[%s9 + $0xc0] sm:$0xff]
      %v3249 = vld [vmem:[%s9 + $0xc8] sm:$0xff]
      %v3250 = vld [vmem:[%s9 + $0xd0] sm:$0xff]
      %v3251 = vld [vmem:[%s9 + $0xd8] sm:$0xff]
      %v3252 = vld [vmem:[%s9 + $0xe0] sm:$0xff]
      %v3253 = vld [vmem:[%s9 + $0xe8] sm:$0xff]
      %v3254 = vld [vmem:[%s9 + $0xf0] sm:$0xff]
      %v3255 = vld [vmem:[%s9 + $0xf8] sm:$0xff]
      %v3256 = vld [vmem:[%s9 + $0x100] sm:$0xff]
      %v3257 = vld [vmem:[%s9 + $0x108] sm:$0xff]
      %v3258 = vld [vmem:[%s9 + $0x110] sm:$0xff]
      %v3259 = vld [vmem:[%s9 + $0x118] sm:$0xff]
      %v3260 = vld [vmem:[%s9 + $0x120] sm:$0xff]
      %v3261 = vld [vmem:[%s9 + $0x128] sm:$0xff]
      %v3262 = vld [vmem:[%s9 + $0x130] sm:$0xff]
      %v3263 = vld [vmem:[%s9 + $0x138] sm:$0xff]
      %v3264 = vld [vmem:[%s9 + $0x140] sm:$0xff]
      %v3265 = vld [vmem:[%s9 + $0x148] sm:$0xff]
      %v3266 = vld [vmem:[%s9 + $0x150] sm:$0xff]
      %v3267 = vld [vmem:[%s9 + $0x158] sm:$0xff]
      %v3268 = vld [vmem:[%s9 + $0x160] sm:$0xff]
      %v3269 = vld [vmem:[%s9 + $0x168] sm:$0xff]
      %v3270 = vld [vmem:[%s9 + $0x170] sm:$0xff]
      %v3271 = vld [vmem:[%s9 + $0x178] sm:$0xff]
      %v3272 = vld [vmem:[%s9 + $0x180] sm:$0xff]
      %v3273 = vld [vmem:[%s9 + $0x188] sm:$0xff]
      %v3274 = vld [vmem:[%s9 + $0x190] sm:$0xff]
      %v3275 = vld [vmem:[%s9 + $0x198] sm:$0xff]
      %v3276 = vld [vmem:[%s9 + $0x1a0] sm:$0xff]
      %v3277 = vld [vmem:[%s9 + $0x1a8] sm:$0xff]
      %v3278 = vld [vmem:[%s9 + $0x1b0] sm:$0xff]
      %v3279 = vld [vmem:[%s9 + $0x1b8] sm:$0xff]
      %v3280 = vld [vmem:[%s9 + $0x1c0] sm:$0xff]
      %v3281 = vld [vmem:[%s9 + $0x1c8] sm:$0xff]
      %v3282 = vld [vmem:[%s9 + $0x1d0] sm:$0xff]
      %v3283 = vld [vmem:[%s9 + $0x1d8] sm:$0xff]
      %v3284 = vld [vmem:[%s9 + $0x1e0] sm:$0xff]
      %v3285 = vld [vmem:[%s9 + $0x1e8] sm:$0xff]
      %v3286 = vld [vmem:[%s9 + $0x1f0] sm:$0xff]
      %v3287 = vld [vmem:[%s9 + $0x1f8] sm:$0xff]
      %v3288 = vld [vmem:[%s9 + $0x200] sm:$0xff]
      %v3289 = vld [vmem:[%s9 + $0x208] sm:$0xff]
      %v3290 = vld [vmem:[%s9 + $0x210] sm:$0xff]
      %v3291 = vld [vmem:[%s9 + $0x218] sm:$0xff]
      %v3292 = vld [vmem:[%s9 + $0x220] sm:$0xff]
      %v3293 = vld [vmem:[%s9 + $0x228] sm:$0xff]
      %v3294 = vld [vmem:[%s9 + $0x230] sm:$0xff]
      %v3295 = vld [vmem:[%s9 + $0x238] sm:$0xff]
      %v3296 = vld [vmem:[%s9 + $0x240] sm:$0xff]
      %v3297 = vld [vmem:[%s9 + $0x248] sm:$0xff]
      %v3298 = vld [vmem:[%s9 + $0x250] sm:$0xff]
      %v3299 = vld [vmem:[%s9 + $0x258] sm:$0xff]
      %v3300 = vld [vmem:[%s9 + $0x260] sm:$0xff]
      %v3301 = vld [vmem:[%s9 + $0x268] sm:$0xff]
      %v3302 = vld [vmem:[%s9 + $0x270] sm:$0xff]
      %v3303 = vld [vmem:[%s9 + $0x278] sm:$0xff]
      %v3304 = vld [vmem:[%s9 + $0x280] sm:$0xff]
      %v3305 = vld [vmem:[%s9 + $0x288] sm:$0xff]
      %v3306 = vld [vmem:[%s9 + $0x290] sm:$0xff]
      %v3307 = vld [vmem:[%s9 + $0x298] sm:$0xff]
      %v3308 = vld [vmem:[%s9 + $0x2a0] sm:$0xff]
      %v3309 = vld [vmem:[%s9 + $0x2a8] sm:$0xff]
      %v3310 = vld [vmem:[%s9 + $0x2b0] sm:$0xff]
      %v3311 = vld [vmem:[%s9 + $0x2b8] sm:$0xff]
      %v3312 = vld [vmem:[%s9 + $0x2c0] sm:$0xff]
      %v3313 = vld [vmem:[%s9 + $0x2c8] sm:$0xff]
      %v3314 = vld [vmem:[%s9 + $0x2d0] sm:$0xff]
      %v3315 = vld [vmem:[%s9 + $0x2d8] sm:$0xff]
      %v3316 = vld [vmem:[%s9 + $0x2e0] sm:$0xff]
      %v3317 = vld [vmem:[%s9 + $0x2e8] sm:$0xff]
      %v3318 = vld [vmem:[%s9 + $0x2f0] sm:$0xff]
      %v3319 = vld [vmem:[%s9 + $0x2f8] sm:$0xff]
      %v3320 = vld [vmem:[%s9 + $0x300] sm:$0xff]
      %v3321 = vld [vmem:[%s9 + $0x308] sm:$0xff]
      %v3322 = vld [vmem:[%s9 + $0x310] sm:$0xff]
      %v3323 = vld [vmem:[%s9 + $0x318] sm:$0xff]
      %v3324 = vld [vmem:[%s9 + $0x320] sm:$0xff]
      %v3325 = vld [vmem:[%s9 + $0x328] sm:$0xff]
      %v3326 = vld [vmem:[%s9 + $0x330] sm:$0xff]
      %v3327 = vld [vmem:[%s9 + $0x338] sm:$0xff]
      %v3328 = vld [vmem:[%s9 + $0x340] sm:$0xff]
      %v3329 = vld [vmem:[%s9 + $0x348] sm:$0xff]
      %v3330 = vld [vmem:[%s9 + $0x350] sm:$0xff]
      %v3331 = vld [vmem:[%s9 + $0x358] sm:$0x33]
      %v3440 = vunpack.c.l.b16 %v3224
      %v3441 = vunpack.c.h.b16 %v3224
      %v3442 = vunpack.c.l.b16 %v3225
      %v3443 = vunpack.c.h.b16 %v3225
      %v3444 = vunpack.c.l.b16 %v3226
      %v3445 = vunpack.c.h.b16 %v3226
      %v3446 = vunpack.c.l.b16 %v3227
      %v3447 = vunpack.c.h.b16 %v3227
      %v3448 = vunpack.c.l.b16 %v3228
      %v3449 = vunpack.c.h.b16 %v3228
      %v3450 = vunpack.c.l.b16 %v3229
      %v3451 = vunpack.c.h.b16 %v3229
      %v3452 = vunpack.c.l.b16 %v3230
      %v3453 = vunpack.c.h.b16 %v3230
      %v3454 = vunpack.c.l.b16 %v3231
      %v3455 = vunpack.c.h.b16 %v3231
      %v3456 = vunpack.c.l.b16 %v3232
      %v3457 = vunpack.c.h.b16 %v3232
      %v3458 = vunpack.c.l.b16 %v3233
      %v3459 = vunpack.c.h.b16 %v3233
      %v3460 = vunpack.c.l.b16 %v3234
      %v3461 = vunpack.c.h.b16 %v3234
      %v3462 = vunpack.c.l.b16 %v3235
      %v3463 = vunpack.c.h.b16 %v3235
      %v3464 = vunpack.c.l.b16 %v3236
      %v3465 = vunpack.c.h.b16 %v3236
      %v3466 = vunpack.c.l.b16 %v3237
      %v3467 = vunpack.c.h.b16 %v3237
      %v3468 = vunpack.c.l.b16 %v3238
      %v3469 = vunpack.c.h.b16 %v3238
      %v3470 = vunpack.c.l.b16 %v3239
      %v3471 = vunpack.c.h.b16 %v3239
      %v3472 = vunpack.c.l.b16 %v3240
      %v3473 = vunpack.c.h.b16 %v3240
      %v3474 = vunpack.c.l.b16 %v3241
      %v3475 = vunpack.c.h.b16 %v3241
      %v3476 = vunpack.c.l.b16 %v3242
      %v3477 = vunpack.c.h.b16 %v3242
      %v3478 = vunpack.c.l.b16 %v3243
      %v3479 = vunpack.c.h.b16 %v3243
      %v3480 = vunpack.c.l.b16 %v3244
      %v3481 = vunpack.c.h.b16 %v3244
      %v3482 = vunpack.c.l.b16 %v3245
      %v3483 = vunpack.c.h.b16 %v3245
      %v3484 = vunpack.c.l.b16 %v3246
      %v3485 = vunpack.c.h.b16 %v3246
      %v3486 = vunpack.c.l.b16 %v3247
      %v3487 = vunpack.c.h.b16 %v3247
      %v3488 = vunpack.c.l.b16 %v3248
      %v3489 = vunpack.c.h.b16 %v3248
      %v3490 = vunpack.c.l.b16 %v3249
      %v3491 = vunpack.c.h.b16 %v3249
      %v3492 = vunpack.c.l.b16 %v3250
      %v3493 = vunpack.c.h.b16 %v3250
      %v3494 = vunpack.c.l.b16 %v3251
      %v3495 = vunpack.c.h.b16 %v3251
      %v3496 = vunpack.c.l.b16 %v3252
      %v3497 = vunpack.c.h.b16 %v3252
      %v3498 = vunpack.c.l.b16 %v3253
      %v3499 = vunpack.c.h.b16 %v3253
      %v3500 = vunpack.c.l.b16 %v3254
      %v3501 = vunpack.c.h.b16 %v3254
      %v3502 = vunpack.c.l.b16 %v3255
      %v3503 = vunpack.c.h.b16 %v3255
      %v3504 = vunpack.c.l.b16 %v3256
      %v3505 = vunpack.c.h.b16 %v3256
      %v3506 = vunpack.c.l.b16 %v3257
      %v3507 = vunpack.c.h.b16 %v3257
      %v3508 = vunpack.c.l.b16 %v3258
      %v3509 = vunpack.c.h.b16 %v3258
      %v3510 = vunpack.c.l.b16 %v3259
      %v3511 = vunpack.c.h.b16 %v3259
      %v3512 = vunpack.c.l.b16 %v3260
      %v3513 = vunpack.c.h.b16 %v3260
      %v3514 = vunpack.c.l.b16 %v3261
      %v3515 = vunpack.c.h.b16 %v3261
      %v3516 = vunpack.c.l.b16 %v3262
      %v3517 = vunpack.c.h.b16 %v3262
      %v3518 = vunpack.c.l.b16 %v3263
      %v3519 = vunpack.c.h.b16 %v3263
      %v3520 = vunpack.c.l.b16 %v3264
      %v3521 = vunpack.c.h.b16 %v3264
      %v3522 = vunpack.c.l.b16 %v3265
      %v3523 = vunpack.c.h.b16 %v3265
      %v3524 = vunpack.c.l.b16 %v3266
      %v3525 = vunpack.c.h.b16 %v3266
      %v3526 = vunpack.c.l.b16 %v3267
      %v3527 = vunpack.c.h.b16 %v3267
      %v3528 = vunpack.c.l.b16 %v3268
      %v3529 = vunpack.c.h.b16 %v3268
      %v3530 = vunpack.c.l.b16 %v3269
      %v3531 = vunpack.c.h.b16 %v3269
      %v3532 = vunpack.c.l.b16 %v3270
      %v3533 = vunpack.c.h.b16 %v3270
      %v3534 = vunpack.c.l.b16 %v3271
      %v3535 = vunpack.c.h.b16 %v3271
      %v3536 = vunpack.c.l.b16 %v3272
      %v3537 = vunpack.c.h.b16 %v3272
      %v3538 = vunpack.c.l.b16 %v3273
      %v3539 = vunpack.c.h.b16 %v3273
      %v3540 = vunpack.c.l.b16 %v3274
      %v3541 = vunpack.c.h.b16 %v3274
      %v3542 = vunpack.c.l.b16 %v3275
      %v3543 = vunpack.c.h.b16 %v3275
      %v3544 = vunpack.c.l.b16 %v3276
      %v3545 = vunpack.c.h.b16 %v3276
      %v3546 = vunpack.c.l.b16 %v3277
      %v3547 = vunpack.c.h.b16 %v3277
      %v3548 = vunpack.c.l.b16 %v3278
      %v3549 = vunpack.c.h.b16 %v3278
      %v3550 = vunpack.c.l.b16 %v3279
      %v3551 = vunpack.c.h.b16 %v3279
      %v3552 = vunpack.c.l.b16 %v3280
      %v3553 = vunpack.c.h.b16 %v3280
      %v3554 = vunpack.c.l.b16 %v3281
      %v3555 = vunpack.c.h.b16 %v3281
      %v3556 = vunpack.c.l.b16 %v3282
      %v3557 = vunpack.c.h.b16 %v3282
      %v3558 = vunpack.c.l.b16 %v3283
      %v3559 = vunpack.c.h.b16 %v3283
      %v3560 = vunpack.c.l.b16 %v3284
      %v3561 = vunpack.c.h.b16 %v3284
      %v3562 = vunpack.c.l.b16 %v3285
      %v3563 = vunpack.c.h.b16 %v3285
      %v3564 = vunpack.c.l.b16 %v3286
      %v3565 = vunpack.c.h.b16 %v3286
      %v3566 = vunpack.c.l.b16 %v3287
      %v3567 = vunpack.c.h.b16 %v3287
      %v3568 = vunpack.c.l.b16 %v3288
      %v3569 = vunpack.c.h.b16 %v3288
      %v3570 = vunpack.c.l.b16 %v3289
      %v3571 = vunpack.c.h.b16 %v3289
      %v3572 = vunpack.c.l.b16 %v3290
      %v3573 = vunpack.c.h.b16 %v3290
      %v3574 = vunpack.c.l.b16 %v3291
      %v3575 = vunpack.c.h.b16 %v3291
      %v3576 = vunpack.c.l.b16 %v3292
      %v3577 = vunpack.c.h.b16 %v3292
      %v3578 = vunpack.c.l.b16 %v3293
      %v3579 = vunpack.c.h.b16 %v3293
      %v3580 = vunpack.c.l.b16 %v3294
      %v3581 = vunpack.c.h.b16 %v3294
      %v3582 = vunpack.c.l.b16 %v3295
      %v3583 = vunpack.c.h.b16 %v3295
      %v3584 = vunpack.c.l.b16 %v3296
      %v3585 = vunpack.c.h.b16 %v3296
      %v3586 = vunpack.c.l.b16 %v3297
      %v3587 = vunpack.c.h.b16 %v3297
      %v3588 = vunpack.c.l.b16 %v3298
      %v3589 = vunpack.c.h.b16 %v3298
      %v3590 = vunpack.c.l.b16 %v3299
      %v3591 = vunpack.c.h.b16 %v3299
      %v3592 = vunpack.c.l.b16 %v3300
      %v3593 = vunpack.c.h.b16 %v3300
      %v3594 = vunpack.c.l.b16 %v3301
      %v3595 = vunpack.c.h.b16 %v3301
      %v3596 = vunpack.c.l.b16 %v3302
      %v3597 = vunpack.c.h.b16 %v3302
      %v3598 = vunpack.c.l.b16 %v3303
      %v3599 = vunpack.c.h.b16 %v3303
      %v3600 = vunpack.c.l.b16 %v3304
      %v3601 = vunpack.c.h.b16 %v3304
      %v3602 = vunpack.c.l.b16 %v3305
      %v3603 = vunpack.c.h.b16 %v3305
      %v3604 = vunpack.c.l.b16 %v3306
      %v3605 = vunpack.c.h.b16 %v3306
      %v3606 = vunpack.c.l.b16 %v3307
      %v3607 = vunpack.c.h.b16 %v3307
      %v3608 = vunpack.c.l.b16 %v3308
      %v3609 = vunpack.c.h.b16 %v3308
      %v3610 = vunpack.c.l.b16 %v3309
      %v3611 = vunpack.c.h.b16 %v3309
      %v3612 = vunpack.c.l.b16 %v3310
      %v3613 = vunpack.c.h.b16 %v3310
      %v3614 = vunpack.c.l.b16 %v3311
      %v3615 = vunpack.c.h.b16 %v3311
      %v3616 = vunpack.c.l.b16 %v3312
      %v3617 = vunpack.c.h.b16 %v3312
      %v3618 = vunpack.c.l.b16 %v3313
      %v3619 = vunpack.c.h.b16 %v3313
      %v3620 = vunpack.c.l.b16 %v3314
      %v3621 = vunpack.c.h.b16 %v3314
      %v3622 = vunpack.c.l.b16 %v3315
      %v3623 = vunpack.c.h.b16 %v3315
      %v3624 = vunpack.c.l.b16 %v3316
      %v3625 = vunpack.c.h.b16 %v3316
      %v3626 = vunpack.c.l.b16 %v3317
      %v3627 = vunpack.c.h.b16 %v3317
      %v3628 = vunpack.c.l.b16 %v3318
      %v3629 = vunpack.c.h.b16 %v3318
      %v3630 = vunpack.c.l.b16 %v3319
      %v3631 = vunpack.c.h.b16 %v3319
      %v3632 = vunpack.c.l.b16 %v3320
      %v3633 = vunpack.c.h.b16 %v3320
      %v3634 = vunpack.c.l.b16 %v3321
      %v3635 = vunpack.c.h.b16 %v3321
      %v3636 = vunpack.c.l.b16 %v3322
      %v3637 = vunpack.c.h.b16 %v3322
      %v3638 = vunpack.c.l.b16 %v3323
      %v3639 = vunpack.c.h.b16 %v3323
      %v3640 = vunpack.c.l.b16 %v3324
      %v3641 = vunpack.c.h.b16 %v3324
      %v3642 = vunpack.c.l.b16 %v3325
      %v3643 = vunpack.c.h.b16 %v3325
      %v3644 = vunpack.c.l.b16 %v3326
      %v3645 = vunpack.c.h.b16 %v3326
      %v3646 = vunpack.c.l.b16 %v3327
      %v3647 = vunpack.c.h.b16 %v3327
      %v3648 = vunpack.c.l.b16 %v3328
      %v3649 = vunpack.c.h.b16 %v3328
      %v3650 = vunpack.c.l.b16 %v3329
      %v3651 = vunpack.c.h.b16 %v3329
      %v3652 = vunpack.c.l.b16 %v3330
      %v3653 = vunpack.c.h.b16 %v3330
      %v3654 = vunpack.c.l.b16 %v3331
      %v3655 = vunpack.c.h.b16 %v3331
      %v3656 = vpack.c.b16 %v3442, %v3440
      %v3657 = vpack.c.b16 %v3443, %v3441
      %v3658 = vpack.c.b16 %v3446, %v3444
      %v3659 = vpack.c.b16 %v3447, %v3445
      %v3660 = vpack.c.b16 %v3450, %v3448
      %v3661 = vpack.c.b16 %v3451, %v3449
      %v3662 = vpack.c.b16 %v3454, %v3452
      %v3663 = vpack.c.b16 %v3455, %v3453
      %v3664 = vpack.c.b16 %v3458, %v3456
      %v3665 = vpack.c.b16 %v3459, %v3457
      %v3666 = vpack.c.b16 %v3462, %v3460
      %v3667 = vpack.c.b16 %v3463, %v3461
      %v3668 = vpack.c.b16 %v3466, %v3464
      %v3669 = vpack.c.b16 %v3467, %v3465
      %v3670 = vpack.c.b16 %v3470, %v3468
      %v3671 = vpack.c.b16 %v3471, %v3469
      %v3672 = vpack.c.b16 %v3474, %v3472
      %v3673 = vpack.c.b16 %v3475, %v3473
      %v3674 = vpack.c.b16 %v3478, %v3476
      %v3675 = vpack.c.b16 %v3479, %v3477
      %v3676 = vpack.c.b16 %v3482, %v3480
      %v3677 = vpack.c.b16 %v3483, %v3481
      %v3678 = vpack.c.b16 %v3486, %v3484
      %v3679 = vpack.c.b16 %v3487, %v3485
      %v3680 = vpack.c.b16 %v3490, %v3488
      %v3681 = vpack.c.b16 %v3491, %v3489
      %v3682 = vpack.c.b16 %v3494, %v3492
      %v3683 = vpack.c.b16 %v3495, %v3493
      %v3684 = vpack.c.b16 %v3498, %v3496
      %v3685 = vpack.c.b16 %v3499, %v3497
      %v3686 = vpack.c.b16 %v3502, %v3500
      %v3687 = vpack.c.b16 %v3503, %v3501
      %v3688 = vpack.c.b16 %v3506, %v3504
      %v3689 = vpack.c.b16 %v3507, %v3505
      %v3690 = vpack.c.b16 %v3510, %v3508
      %v3691 = vpack.c.b16 %v3511, %v3509
      %v3692 = vpack.c.b16 %v3514, %v3512
      %v3693 = vpack.c.b16 %v3515, %v3513
      %v3694 = vpack.c.b16 %v3518, %v3516
      %v3695 = vpack.c.b16 %v3519, %v3517
      %v3696 = vpack.c.b16 %v3522, %v3520
      %v3697 = vpack.c.b16 %v3523, %v3521
      %v3698 = vpack.c.b16 %v3526, %v3524
      %v3699 = vpack.c.b16 %v3527, %v3525
      %v3700 = vpack.c.b16 %v3530, %v3528
      %v3701 = vpack.c.b16 %v3531, %v3529
      %v3702 = vpack.c.b16 %v3534, %v3532
      %v3703 = vpack.c.b16 %v3535, %v3533
      %v3704 = vpack.c.b16 %v3538, %v3536
      %v3705 = vpack.c.b16 %v3539, %v3537
      %v3706 = vpack.c.b16 %v3542, %v3540
      %v3707 = vpack.c.b16 %v3543, %v3541
      %v3708 = vpack.c.b16 %v3546, %v3544
      %v3709 = vpack.c.b16 %v3547, %v3545
      %v3710 = vpack.c.b16 %v3550, %v3548
      %v3711 = vpack.c.b16 %v3551, %v3549
      %v3712 = vpack.c.b16 %v3554, %v3552
      %v3713 = vpack.c.b16 %v3555, %v3553
      %v3714 = vpack.c.b16 %v3558, %v3556
      %v3715 = vpack.c.b16 %v3559, %v3557
      %v3716 = vpack.c.b16 %v3562, %v3560
      %v3717 = vpack.c.b16 %v3563, %v3561
      %v3718 = vpack.c.b16 %v3566, %v3564
      %v3719 = vpack.c.b16 %v3567, %v3565
      %v3720 = vpack.c.b16 %v3570, %v3568
      %v3721 = vpack.c.b16 %v3571, %v3569
      %v3722 = vpack.c.b16 %v3574, %v3572
      %v3723 = vpack.c.b16 %v3575, %v3573
      %v3724 = vpack.c.b16 %v3578, %v3576
      %v3725 = vpack.c.b16 %v3579, %v3577
      %v3726 = vpack.c.b16 %v3582, %v3580
      %v3727 = vpack.c.b16 %v3583, %v3581
      %v3728 = vpack.c.b16 %v3586, %v3584
      %v3729 = vpack.c.b16 %v3587, %v3585
      %v3730 = vpack.c.b16 %v3590, %v3588
      %v3731 = vpack.c.b16 %v3591, %v3589
      %v3732 = vpack.c.b16 %v3594, %v3592
      %v3733 = vpack.c.b16 %v3595, %v3593
      %v3734 = vpack.c.b16 %v3598, %v3596
      %v3735 = vpack.c.b16 %v3599, %v3597
      %v3736 = vpack.c.b16 %v3602, %v3600
      %v3737 = vpack.c.b16 %v3603, %v3601
      %v3738 = vpack.c.b16 %v3606, %v3604
      %v3739 = vpack.c.b16 %v3607, %v3605
      %v3740 = vpack.c.b16 %v3610, %v3608
      %v3741 = vpack.c.b16 %v3611, %v3609
      %v3742 = vpack.c.b16 %v3614, %v3612
      %v3743 = vpack.c.b16 %v3615, %v3613
      %v3744 = vpack.c.b16 %v3618, %v3616
      %v3745 = vpack.c.b16 %v3619, %v3617
      %v3746 = vpack.c.b16 %v3622, %v3620
      %v3747 = vpack.c.b16 %v3623, %v3621
      %v3748 = vpack.c.b16 %v3626, %v3624
      %v3749 = vpack.c.b16 %v3627, %v3625
      %v3750 = vpack.c.b16 %v3630, %v3628
      %v3751 = vpack.c.b16 %v3631, %v3629
      %v3752 = vpack.c.b16 %v3634, %v3632
      %v3753 = vpack.c.b16 %v3635, %v3633
      %v3754 = vpack.c.b16 %v3638, %v3636
      %v3755 = vpack.c.b16 %v3639, %v3637
      %v3756 = vpack.c.b16 %v3642, %v3640
      %v3757 = vpack.c.b16 %v3643, %v3641
      %v3758 = vpack.c.b16 %v3646, %v3644
      %v3759 = vpack.c.b16 %v3647, %v3645
      %v3760 = vpack.c.b16 %v3650, %v3648
      %v3761 = vpack.c.b16 %v3651, %v3649
      %v3762 = vpack.c.b16 %v3654, %v3652
      %v3763 = vpack.c.b16 %v3655, %v3653
      %vm3870 = vcmask 744448
      %v3872 = vsel %vm3870, %v3223, 0
      %vm3874 = vcmask 1044480
      %vm3875 = vcmask 1045504
      %v3876 = vsel %vm3874, 4294967295, 65535
      %v3877 = vsel %vm3875, %v3876, 0
      %v3879 = vand.u32 %v3762, %v3877
      %v3882 = vand.u32 %v3763, %v3877
      %3884 = vmatpush.bf16.msra.mxu0 %v3670
      %3885 = vmatpush.bf16.msra.mxu0 %v3668
      %3886 = vmatpush.bf16.msra.mxu0 %v3666
      %3887 = vmatpush.bf16.msra.mxu0 %v3664
      %3888 = vmatpush.bf16.msra.mxu0 %v3662
      %3889 = vmatpush.bf16.msra.mxu0 %v3660
      %3890 = vmatpush.bf16.msra.mxu0 %v3658
      %3891 = vmatpush.bf16.msra.mxu0 %v3656
      %3892 = vmatmul.bf16.gmra.mxu0 %v3217
      %v3893 = vpop.f32.mrf.mxu0
      %v3894 = vadd.f32 0.0, %v3893
      %v3895 = vpop.f32.mrf.mxu0
      %v3896 = vadd.f32 0.0, %v3895
      %3897 = vdwg.mxu0
      %3898 = vmatpush.bf16.msra.mxu0 %v3686
      %3899 = vmatpush.bf16.msra.mxu0 %v3684
      %3900 = vmatpush.bf16.msra.mxu0 %v3682
      %3901 = vmatpush.bf16.msra.mxu0 %v3680
      %3902 = vmatpush.bf16.msra.mxu0 %v3678
      %3903 = vmatpush.bf16.msra.mxu0 %v3676
      %3904 = vmatpush.bf16.msra.mxu0 %v3674
      %3905 = vmatpush.bf16.msra.mxu0 %v3672
      %3906 = vmatmul.bf16.gmra.mxu0 %v3218
      %v3907 = vpop.f32.mrf.mxu0
      %v3908 = vadd.f32 %v3894, %v3907
      %v3909 = vpop.f32.mrf.mxu0
      %v3910 = vadd.f32 %v3896, %v3909
      %3911 = vdwg.mxu0
      %3912 = vmatpush.bf16.msra.mxu0 %v3702
      %3913 = vmatpush.bf16.msra.mxu0 %v3700
      %3914 = vmatpush.bf16.msra.mxu0 %v3698
      %3915 = vmatpush.bf16.msra.mxu0 %v3696
      %3916 = vmatpush.bf16.msra.mxu0 %v3694
      %3917 = vmatpush.bf16.msra.mxu0 %v3692
      %3918 = vmatpush.bf16.msra.mxu0 %v3690
      %3919 = vmatpush.bf16.msra.mxu0 %v3688
      %3920 = vmatmul.bf16.gmra.mxu0 %v3219
      %v3921 = vpop.f32.mrf.mxu0
      %v3922 = vadd.f32 %v3908, %v3921
      %v3923 = vpop.f32.mrf.mxu0
      %v3924 = vadd.f32 %v3910, %v3923
      %3925 = vdwg.mxu0
      %3926 = vmatpush.bf16.msra.mxu0 %v3718
      %3927 = vmatpush.bf16.msra.mxu0 %v3716
      %3928 = vmatpush.bf16.msra.mxu0 %v3714
      %3929 = vmatpush.bf16.msra.mxu0 %v3712
      %3930 = vmatpush.bf16.msra.mxu0 %v3710
      %3931 = vmatpush.bf16.msra.mxu0 %v3708
      %3932 = vmatpush.bf16.msra.mxu0 %v3706
      %3933 = vmatpush.bf16.msra.mxu0 %v3704
      %3934 = vmatmul.bf16.gmra.mxu0 %v3220
      %v3935 = vpop.f32.mrf.mxu0
      %v3936 = vadd.f32 %v3922, %v3935
      %v3937 = vpop.f32.mrf.mxu0
      %v3938 = vadd.f32 %v3924, %v3937
      %3939 = vdwg.mxu0
      %3940 = vmatpush.bf16.msra.mxu0 %v3734
      %3941 = vmatpush.bf16.msra.mxu0 %v3732
      %3942 = vmatpush.bf16.msra.mxu0 %v3730
      %3943 = vmatpush.bf16.msra.mxu0 %v3728
      %3944 = vmatpush.bf16.msra.mxu0 %v3726
      %3945 = vmatpush.bf16.msra.mxu0 %v3724
      %3946 = vmatpush.bf16.msra.mxu0 %v3722
      %3947 = vmatpush.bf16.msra.mxu0 %v3720
      %3948 = vmatmul.bf16.gmra.mxu0 %v3221
      %v3949 = vpop.f32.mrf.mxu0
      %v3950 = vadd.f32 %v3936, %v3949
      %v3951 = vpop.f32.mrf.mxu0
      %v3952 = vadd.f32 %v3938, %v3951
      %3953 = vdwg.mxu0
      %3954 = vmatpush.bf16.msra.mxu0 %v3750
      %3955 = vmatpush.bf16.msra.mxu0 %v3748
      %3956 = vmatpush.bf16.msra.mxu0 %v3746
      %3957 = vmatpush.bf16.msra.mxu0 %v3744
      %3958 = vmatpush.bf16.msra.mxu0 %v3742
      %3959 = vmatpush.bf16.msra.mxu0 %v3740
      %3960 = vmatpush.bf16.msra.mxu0 %v3738
      %3961 = vmatpush.bf16.msra.mxu0 %v3736
      %3962 = vmatmul.bf16.gmra.mxu0 %v3222
      %v3963 = vpop.f32.mrf.mxu0
      %v3964 = vadd.f32 %v3950, %v3963
      %v3965 = vpop.f32.mrf.mxu0
      %v3966 = vadd.f32 %v3952, %v3965
      %3967 = vdwg.mxu0
      %3968 = vmatpush.bf16.msra.mxu0 0
      %3969 = vmatpush.bf16.msra.mxu0 0
      %3970 = vmatpush.bf16.msra.mxu0 %v3879
      %3971 = vmatpush.bf16.msra.mxu0 %v3760
      %3972 = vmatpush.bf16.msra.mxu0 %v3758
      %3973 = vmatpush.bf16.msra.mxu0 %v3756
      %3974 = vmatpush.bf16.msra.mxu0 %v3754
      %3975 = vmatpush.bf16.msra.mxu0 %v3752
      %3976 = vmatmul.bf16.gmra.mxu0 %v3872
      %v3977 = vpop.f32.mrf.mxu0
      %v3978 = vadd.f32 %v3964, %v3977
      %v3979 = vpop.f32.mrf.mxu0
      %v3980 = vadd.f32 %v3966, %v3979
      %3981 = vdwg.mxu0
      %3982 = vmatpush.bf16.msra.mxu0 %v3671
      %3983 = vmatpush.bf16.msra.mxu0 %v3669
      %3984 = vmatpush.bf16.msra.mxu0 %v3667
      %3985 = vmatpush.bf16.msra.mxu0 %v3665
      %3986 = vmatpush.bf16.msra.mxu0 %v3663
      %3987 = vmatpush.bf16.msra.mxu0 %v3661
      %3988 = vmatpush.bf16.msra.mxu0 %v3659
      %3989 = vmatpush.bf16.msra.mxu0 %v3657
      %3990 = vmatmul.bf16.gmra.mxu0 %v3217
      %v3991 = vpop.f32.mrf.mxu0
      %v3992 = vadd.f32 0.0, %v3991
      %v3993 = vpop.f32.mrf.mxu0
      %v3994 = vadd.f32 0.0, %v3993
      %3995 = vdwg.mxu0
      %3996 = vmatpush.bf16.msra.mxu0 %v3687
      %3997 = vmatpush.bf16.msra.mxu0 %v3685
      %3998 = vmatpush.bf16.msra.mxu0 %v3683
      %3999 = vmatpush.bf16.msra.mxu0 %v3681
      %4000 = vmatpush.bf16.msra.mxu0 %v3679
      %4001 = vmatpush.bf16.msra.mxu0 %v3677
      %4002 = vmatpush.bf16.msra.mxu0 %v3675
      %4003 = vmatpush.bf16.msra.mxu0 %v3673
      %4004 = vmatmul.bf16.gmra.mxu0 %v3218
      %v4005 = vpop.f32.mrf.mxu0
      %v4006 = vadd.f32 %v3992, %v4005
      %v4007 = vpop.f32.mrf.mxu0
      %v4008 = vadd.f32 %v3994, %v4007
      %4009 = vdwg.mxu0
      %4010 = vmatpush.bf16.msra.mxu0 %v3703
      %4011 = vmatpush.bf16.msra.mxu0 %v3701
      %4012 = vmatpush.bf16.msra.mxu0 %v3699
      %4013 = vmatpush.bf16.msra.mxu0 %v3697
      %4014 = vmatpush.bf16.msra.mxu0 %v3695
      %4015 = vmatpush.bf16.msra.mxu0 %v3693
      %4016 = vmatpush.bf16.msra.mxu0 %v3691
      %4017 = vmatpush.bf16.msra.mxu0 %v3689
      %4018 = vmatmul.bf16.gmra.mxu0 %v3219
      %v4019 = vpop.f32.mrf.mxu0
      %v4020 = vadd.f32 %v4006, %v4019
      %v4021 = vpop.f32.mrf.mxu0
      %v4022 = vadd.f32 %v4008, %v4021
      %4023 = vdwg.mxu0
      %4024 = vmatpush.bf16.msra.mxu0 %v3719
      %4025 = vmatpush.bf16.msra.mxu0 %v3717
      %4026 = vmatpush.bf16.msra.mxu0 %v3715
      %4027 = vmatpush.bf16.msra.mxu0 %v3713
      %4028 = vmatpush.bf16.msra.mxu0 %v3711
      %4029 = vmatpush.bf16.msra.mxu0 %v3709
      %4030 = vmatpush.bf16.msra.mxu0 %v3707
      %4031 = vmatpush.bf16.msra.mxu0 %v3705
      %4032 = vmatmul.bf16.gmra.mxu0 %v3220
      %v4033 = vpop.f32.mrf.mxu0
      %v4034 = vadd.f32 %v4020, %v4033
      %v4035 = vpop.f32.mrf.mxu0
      %v4036 = vadd.f32 %v4022, %v4035
      %4037 = vdwg.mxu0
      %4038 = vmatpush.bf16.msra.mxu0 %v3735
      %4039 = vmatpush.bf16.msra.mxu0 %v3733
      %4040 = vmatpush.bf16.msra.mxu0 %v3731
      %4041 = vmatpush.bf16.msra.mxu0 %v3729
      %4042 = vmatpush.bf16.msra.mxu0 %v3727
      %4043 = vmatpush.bf16.msra.mxu0 %v3725
      %4044 = vmatpush.bf16.msra.mxu0 %v3723
      %4045 = vmatpush.bf16.msra.mxu0 %v3721
      %4046 = vmatmul.bf16.gmra.mxu0 %v3221
      %v4047 = vpop.f32.mrf.mxu0
      %v4048 = vadd.f32 %v4034, %v4047
      %v4049 = vpop.f32.mrf.mxu0
      %v4050 = vadd.f32 %v4036, %v4049
      %4051 = vdwg.mxu0
      %4052 = vmatpush.bf16.msra.mxu0 %v3751
      %4053 = vmatpush.bf16.msra.mxu0 %v3749
      %4054 = vmatpush.bf16.msra.mxu0 %v3747
      %4055 = vmatpush.bf16.msra.mxu0 %v3745
      %4056 = vmatpush.bf16.msra.mxu0 %v3743
      %4057 = vmatpush.bf16.msra.mxu0 %v3741
      %4058 = vmatpush.bf16.msra.mxu0 %v3739
      %4059 = vmatpush.bf16.msra.mxu0 %v3737
      %4060 = vmatmul.bf16.gmra.mxu0 %v3222
      %v4061 = vpop.f32.mrf.mxu0
      %v4062 = vadd.f32 %v4048, %v4061
      %v4063 = vpop.f32.mrf.mxu0
      %v4064 = vadd.f32 %v4050, %v4063
      %4065 = vdwg.mxu0
      %4066 = vmatpush.bf16.msra.mxu0 0
      %4067 = vmatpush.bf16.msra.mxu0 0
      %4068 = vmatpush.bf16.msra.mxu0 %v3882
      %4069 = vmatpush.bf16.msra.mxu0 %v3761
      %4070 = vmatpush.bf16.msra.mxu0 %v3759
      %4071 = vmatpush.bf16.msra.mxu0 %v3757
      %4072 = vmatpush.bf16.msra.mxu0 %v3755
      %4073 = vmatpush.bf16.msra.mxu0 %v3753
      %4074 = vmatmul.bf16.gmra.mxu0 %v3872
      %v4075 = vpop.f32.mrf.mxu0
      %v4076 = vadd.f32 %v4062, %v4075
      %v4077 = vpop.f32.mrf.mxu0
      %v4078 = vadd.f32 %v4064, %v4077
      %4079 = vdwg.mxu0
      %v4080 = vpack.c.bf16 %v4076, %v3978
      %v4081 = vpack.c.bf16 %v4078, %v3980
      %vm4082 = vcmask 556036
      %vm4083 = vmor %vm4082, %vm1539
      %4084 = vst.msk [vmem:[#allocation4] sm:$0xff] %vm4083, %v4080
      %4085 = vst.msk [vmem:[#allocation4 + $0x8] sm:$0xff] %vm4083, %v4081
      %v4086 = vld [vmem:[%s5] sm:$0xf]
      %v4087 = vld [vmem:[%s5 + $0x4] sm:$0xf]
      %v4088 = vld [vmem:[%s5 + $0x8] sm:$0xf]
      %v4089 = vld [vmem:[%s5 + $0xc] sm:$0xf]
      %v4090 = vld [vmem:[#allocation4] sm:$0xff]
      %v4091 = vld [vmem:[#allocation4 + $0x8] sm:$0xff]
      %s4092 = scalar_lea.vmem %s5, 16
      %v4093 = vld [vmem:[%s4092] sm:$0xf]
      %v4094 = vld [vmem:[%s4092 + $0x4] sm:$0xf]
      %v4095 = vld [vmem:[%s4092 + $0x8] sm:$0xf]
      %v4096 = vld [vmem:[%s4092 + $0xc] sm:$0xf]
      %v4101 = vunpack.c.l.b16 %v4093
      %v4102 = vunpack.c.l.b16 %v4094
      %v4103 = vunpack.c.l.b16 %v4095
      %v4104 = vunpack.c.l.b16 %v4096
      %v4105 = vpack.c.b16 %v4102, %v4101
      %v4106 = vpack.c.b16 %v4104, %v4103
      %v4109 = vunpack.c.l.b16 %v4090
      %v4110 = vunpack.c.h.b16 %v4090
      %v4111 = vunpack.c.l.b16 %v4091
      %v4112 = vunpack.c.h.b16 %v4091
      %v4113 = vpack.c.b16 %v4111, %v4109
      %v4114 = vpack.c.b16 %v4112, %v4110
      %4115 = vrot.lane.b32.xlu0 %v4113, 127
      %v4116 = vpop.permute.xlu0 %4115
      %4117 = vrot.lane.b32.xlu0 %v4114, 127
      %v4118 = vpop.permute.xlu0 %4117
      %v4119 = vsel %vm1608, %v4116, %v4118
      %v4123 = vsel %vm1622, %v4105, 0
      %v4126 = vsel %vm1622, %v4106, 0
      %4128 = vmatpush.bf16.msra.mxu0 0
      %4129 = vmatpush.bf16.msra.mxu0 0
      %4130 = vmatpush.bf16.msra.mxu0 0
      %4131 = vmatpush.bf16.msra.mxu0 0
      %4132 = vmatpush.bf16.msra.mxu0 0
      %4133 = vmatpush.bf16.msra.mxu0 0
      %4134 = vmatpush.bf16.msra.mxu0 0
      %4135 = vmatpush.bf16.msra.mxu0 %v4119
      %4136 = vmatmul.bf16.gmra.mxu0 %v4123
      %v4137 = vpop.f32.mrf.mxu0
      %v4138 = vadd.f32 0.0, %v4137
      %v4139 = vpop.f32.mrf.mxu0
      %v4140 = vadd.f32 0.0, %v4139
      %4141 = vmatmul.bf16.gmra.mxu0 %v4126
      %v4142 = vpop.f32.mrf.mxu0
      %v4143 = vadd.f32 0.0, %v4142
      %v4144 = vpop.f32.mrf.mxu0
      %v4145 = vadd.f32 0.0, %v4144
      %4146 = vdwg.mxu0
      %4147 = vmatpush.bf16.msra.mxu0 0
      %4148 = vmatpush.bf16.msra.mxu0 0
      %4149 = vmatpush.bf16.msra.mxu0 0
      %4150 = vmatpush.bf16.msra.mxu0 0
      %4151 = vmatpush.bf16.msra.mxu0 0
      %4152 = vmatpush.bf16.msra.mxu0 0
      %4153 = vmatpush.bf16.msra.mxu0 0
      %4154 = vmatpush.bf16.msra.mxu0 %v4118
      %4155 = vmatmul.bf16.gmra.mxu0 %v4123
      %v4156 = vpop.f32.mrf.mxu0
      %v4157 = vadd.f32 0.0, %v4156
      %v4158 = vpop.f32.mrf.mxu0
      %v4159 = vadd.f32 0.0, %v4158
      %4160 = vmatmul.bf16.gmra.mxu0 %v4126
      %v4161 = vpop.f32.mrf.mxu0
      %v4162 = vadd.f32 0.0, %v4161
      %v4163 = vpop.f32.mrf.mxu0
      %v4164 = vadd.f32 0.0, %v4163
      %4165 = vdwg.mxu0
      %v4170 = vunpack.c.l.b16 %v4086
      %v4171 = vunpack.c.l.b16 %v4087
      %v4172 = vunpack.c.l.b16 %v4088
      %v4173 = vunpack.c.l.b16 %v4089
      %v4174 = vpack.c.b16 %v4171, %v4170
      %v4175 = vpack.c.b16 %v4173, %v4172
      %v4179 = vsel %vm1622, %v4174, 0
      %v4182 = vsel %vm1622, %v4175, 0
      %4184 = vmatpush.bf16.msra.mxu0 0
      %4185 = vmatpush.bf16.msra.mxu0 0
      %4186 = vmatpush.bf16.msra.mxu0 0
      %4187 = vmatpush.bf16.msra.mxu0 0
      %4188 = vmatpush.bf16.msra.mxu0 0
      %4189 = vmatpush.bf16.msra.mxu0 0
      %4190 = vmatpush.bf16.msra.mxu0 0
      %4191 = vmatpush.bf16.msra.mxu0 %v4113
      %4192 = vmatmul.bf16.gmra.mxu0 %v4179
      %v4193 = vpop.f32.mrf.mxu0
      %v4194 = vadd.f32 %v4138, %v4193
      %v4195 = vpop.f32.mrf.mxu0
      %v4196 = vadd.f32 %v4140, %v4195
      %4197 = vmatmul.bf16.gmra.mxu0 %v4182
      %v4198 = vpop.f32.mrf.mxu0
      %v4199 = vadd.f32 %v4143, %v4198
      %v4200 = vpop.f32.mrf.mxu0
      %v4201 = vadd.f32 %v4145, %v4200
      %4202 = vdwg.mxu0
      %4203 = vmatpush.bf16.msra.mxu0 0
      %4204 = vmatpush.bf16.msra.mxu0 0
      %4205 = vmatpush.bf16.msra.mxu0 0
      %4206 = vmatpush.bf16.msra.mxu0 0
      %4207 = vmatpush.bf16.msra.mxu0 0
      %4208 = vmatpush.bf16.msra.mxu0 0
      %4209 = vmatpush.bf16.msra.mxu0 0
      %4210 = vmatpush.bf16.msra.mxu0 %v4114
      %4211 = vmatmul.bf16.gmra.mxu0 %v4179
      %v4212 = vpop.f32.mrf.mxu0
      %v4213 = vadd.f32 %v4157, %v4212
      %v4214 = vpop.f32.mrf.mxu0
      %v4215 = vadd.f32 %v4159, %v4214
      %4216 = vmatmul.bf16.gmra.mxu0 %v4182
      %v4217 = vpop.f32.mrf.mxu0
      %v4218 = vadd.f32 %v4162, %v4217
      %v4219 = vpop.f32.mrf.mxu0
      %v4220 = vadd.f32 %v4164, %v4219
      %4221 = vdwg.mxu0
      %s4222 = scalar_lea.vmem %s5, 32
      %v4223 = vld [vmem:[%s4222] sm:$0xf]
      %v4224 = vld [vmem:[%s4222 + $0x4] sm:$0xf]
      %v4225 = vld [vmem:[%s4222 + $0x8] sm:$0xf]
      %v4226 = vld [vmem:[%s4222 + $0xc] sm:$0xf]
      %v4231 = vunpack.c.l.b16 %v4223
      %v4232 = vunpack.c.l.b16 %v4224
      %v4233 = vunpack.c.l.b16 %v4225
      %v4234 = vunpack.c.l.b16 %v4226
      %v4235 = vpack.c.b16 %v4232, %v4231
      %v4236 = vpack.c.b16 %v4234, %v4233
      %4237 = vrot.lane.b32.xlu0 %v4113, 126
      %v4238 = vpop.permute.xlu0 %4237
      %4239 = vrot.lane.b32.xlu0 %v4114, 126
      %v4240 = vpop.permute.xlu0 %4239
      %v4241 = vsel %vm1859, %v4238, %v4240
      %v4245 = vsel %vm1622, %v4235, 0
      %v4248 = vsel %vm1622, %v4236, 0
      %4250 = vmatpush.bf16.msra.mxu0 0
      %4251 = vmatpush.bf16.msra.mxu0 0
      %4252 = vmatpush.bf16.msra.mxu0 0
      %4253 = vmatpush.bf16.msra.mxu0 0
      %4254 = vmatpush.bf16.msra.mxu0 0
      %4255 = vmatpush.bf16.msra.mxu0 0
      %4256 = vmatpush.bf16.msra.mxu0 0
      %4257 = vmatpush.bf16.msra.mxu0 %v4241
      %4258 = vmatmul.bf16.gmra.mxu0 %v4245
      %v4259 = vpop.f32.mrf.mxu0
      %v4260 = vadd.f32 0.0, %v4259
      %v4261 = vpop.f32.mrf.mxu0
      %v4262 = vadd.f32 0.0, %v4261
      %4263 = vmatmul.bf16.gmra.mxu0 %v4248
      %v4264 = vpop.f32.mrf.mxu0
      %v4265 = vadd.f32 0.0, %v4264
      %v4266 = vpop.f32.mrf.mxu0
      %v4267 = vadd.f32 0.0, %v4266
      %4268 = vdwg.mxu0
      %4269 = vmatpush.bf16.msra.mxu0 0
      %4270 = vmatpush.bf16.msra.mxu0 0
      %4271 = vmatpush.bf16.msra.mxu0 0
      %4272 = vmatpush.bf16.msra.mxu0 0
      %4273 = vmatpush.bf16.msra.mxu0 0
      %4274 = vmatpush.bf16.msra.mxu0 0
      %4275 = vmatpush.bf16.msra.mxu0 0
      %4276 = vmatpush.bf16.msra.mxu0 %v4240
      %4277 = vmatmul.bf16.gmra.mxu0 %v4245
      %v4278 = vpop.f32.mrf.mxu0
      %v4279 = vadd.f32 0.0, %v4278
      %v4280 = vpop.f32.mrf.mxu0
      %v4281 = vadd.f32 0.0, %v4280
      %4282 = vmatmul.bf16.gmra.mxu0 %v4248
      %v4283 = vpop.f32.mrf.mxu0
      %v4284 = vadd.f32 0.0, %v4283
      %v4285 = vpop.f32.mrf.mxu0
      %v4286 = vadd.f32 0.0, %v4285
      %4287 = vdwg.mxu0
      %v4288 = vadd.f32 %v4194, %v4260
      %v4289 = vadd.f32 %v4213, %v4279
      %v4290 = vadd.f32 %v4196, %v4262
      %v4291 = vadd.f32 %v4215, %v4281
      %v4292 = vadd.f32 %v4199, %v4265
      %v4293 = vadd.f32 %v4218, %v4284
      %v4294 = vadd.f32 %v4201, %v4267
      %v4295 = vadd.f32 %v4220, %v4286
      %s4296 = scalar_lea.vmem %s5, 48
      %v4297 = vld [vmem:[%s4296] sm:$0xf]
      %v4298 = vld [vmem:[%s4296 + $0x4] sm:$0xf]
      %v4299 = vld [vmem:[%s4296 + $0x8] sm:$0xf]
      %v4300 = vld [vmem:[%s4296 + $0xc] sm:$0xf]
      %v4305 = vunpack.c.l.b16 %v4297
      %v4306 = vunpack.c.l.b16 %v4298
      %v4307 = vunpack.c.l.b16 %v4299
      %v4308 = vunpack.c.l.b16 %v4300
      %v4309 = vpack.c.b16 %v4306, %v4305
      %v4310 = vpack.c.b16 %v4308, %v4307
      %4311 = vrot.lane.b32.xlu0 %v4113, 114
      %v4312 = vpop.permute.xlu0 %4311
      %4313 = vrot.lane.b32.xlu0 %v4114, 114
      %v4314 = vpop.permute.xlu0 %4313
      %vm4315 = vcmask 932864
      %v4316 = vsel %vm4315, %v4312, %v4314
      %v4320 = vsel %vm1622, %v4309, 0
      %v4323 = vsel %vm1622, %v4310, 0
      %4325 = vmatpush.bf16.msra.mxu0 0
      %4326 = vmatpush.bf16.msra.mxu0 0
      %4327 = vmatpush.bf16.msra.mxu0 0
      %4328 = vmatpush.bf16.msra.mxu0 0
      %4329 = vmatpush.bf16.msra.mxu0 0
      %4330 = vmatpush.bf16.msra.mxu0 0
      %4331 = vmatpush.bf16.msra.mxu0 0
      %4332 = vmatpush.bf16.msra.mxu0 %v4316
      %4333 = vmatmul.bf16.gmra.mxu0 %v4320
      %v4334 = vpop.f32.mrf.mxu0
      %v4335 = vadd.f32 0.0, %v4334
      %v4336 = vpop.f32.mrf.mxu0
      %v4337 = vadd.f32 0.0, %v4336
      %4338 = vmatmul.bf16.gmra.mxu0 %v4323
      %v4339 = vpop.f32.mrf.mxu0
      %v4340 = vadd.f32 0.0, %v4339
      %v4341 = vpop.f32.mrf.mxu0
      %v4342 = vadd.f32 0.0, %v4341
      %4343 = vdwg.mxu0
      %4344 = vmatpush.bf16.msra.mxu0 0
      %4345 = vmatpush.bf16.msra.mxu0 0
      %4346 = vmatpush.bf16.msra.mxu0 0
      %4347 = vmatpush.bf16.msra.mxu0 0
      %4348 = vmatpush.bf16.msra.mxu0 0
      %4349 = vmatpush.bf16.msra.mxu0 0
      %4350 = vmatpush.bf16.msra.mxu0 0
      %4351 = vmatpush.bf16.msra.mxu0 %v4314
      %4352 = vmatmul.bf16.gmra.mxu0 %v4320
      %v4353 = vpop.f32.mrf.mxu0
      %v4354 = vadd.f32 0.0, %v4353
      %v4355 = vpop.f32.mrf.mxu0
      %v4356 = vadd.f32 0.0, %v4355
      %4357 = vmatmul.bf16.gmra.mxu0 %v4323
      %v4358 = vpop.f32.mrf.mxu0
      %v4359 = vadd.f32 0.0, %v4358
      %v4360 = vpop.f32.mrf.mxu0
      %v4361 = vadd.f32 0.0, %v4360
      %4362 = vdwg.mxu0
      %v4363 = vadd.f32 %v4288, %v4335
      %v4364 = vadd.f32 %v4289, %v4354
      %v4365 = vadd.f32 %v4290, %v4337
      %v4366 = vadd.f32 %v4291, %v4356
      %v4367 = vadd.f32 %v4292, %v4340
      %v4368 = vadd.f32 %v4293, %v4359
      %v4369 = vadd.f32 %v4294, %v4342
      %v4370 = vadd.f32 %v4295, %v4361
      %s4371 = scalar_lea.vmem %s5, 64
      %v4372 = vld [vmem:[%s4371] sm:$0xf]
      %v4373 = vld [vmem:[%s4371 + $0x4] sm:$0xf]
      %v4374 = vld [vmem:[%s4371 + $0x8] sm:$0xf]
      %v4375 = vld [vmem:[%s4371 + $0xc] sm:$0xf]
      %v4380 = vunpack.c.l.b16 %v4372
      %v4381 = vunpack.c.l.b16 %v4373
      %v4382 = vunpack.c.l.b16 %v4374
      %v4383 = vunpack.c.l.b16 %v4375
      %v4384 = vpack.c.b16 %v4381, %v4380
      %v4385 = vpack.c.b16 %v4383, %v4382
      %4386 = vrot.lane.b32.xlu0 %v4113, 113
      %v4387 = vpop.permute.xlu0 %4386
      %4388 = vrot.lane.b32.xlu0 %v4114, 113
      %v4389 = vpop.permute.xlu0 %4388
      %vm4390 = vcmask 924672
      %v4391 = vsel %vm4390, %v4387, %v4389
      %v4395 = vsel %vm1622, %v4384, 0
      %v4398 = vsel %vm1622, %v4385, 0
      %4400 = vmatpush.bf16.msra.mxu0 0
      %4401 = vmatpush.bf16.msra.mxu0 0
      %4402 = vmatpush.bf16.msra.mxu0 0
      %4403 = vmatpush.bf16.msra.mxu0 0
      %4404 = vmatpush.bf16.msra.mxu0 0
      %4405 = vmatpush.bf16.msra.mxu0 0
      %4406 = vmatpush.bf16.msra.mxu0 0
      %4407 = vmatpush.bf16.msra.mxu0 %v4391
      %4408 = vmatmul.bf16.gmra.mxu0 %v4395
      %v4409 = vpop.f32.mrf.mxu0
      %v4410 = vadd.f32 0.0, %v4409
      %v4411 = vpop.f32.mrf.mxu0
      %v4412 = vadd.f32 0.0, %v4411
      %4413 = vmatmul.bf16.gmra.mxu0 %v4398
      %v4414 = vpop.f32.mrf.mxu0
      %v4415 = vadd.f32 0.0, %v4414
      %v4416 = vpop.f32.mrf.mxu0
      %v4417 = vadd.f32 0.0, %v4416
      %4418 = vdwg.mxu0
      %4419 = vmatpush.bf16.msra.mxu0 0
      %4420 = vmatpush.bf16.msra.mxu0 0
      %4421 = vmatpush.bf16.msra.mxu0 0
      %4422 = vmatpush.bf16.msra.mxu0 0
      %4423 = vmatpush.bf16.msra.mxu0 0
      %4424 = vmatpush.bf16.msra.mxu0 0
      %4425 = vmatpush.bf16.msra.mxu0 0
      %4426 = vmatpush.bf16.msra.mxu0 %v4389
      %4427 = vmatmul.bf16.gmra.mxu0 %v4395
      %v4428 = vpop.f32.mrf.mxu0
      %v4429 = vadd.f32 0.0, %v4428
      %v4430 = vpop.f32.mrf.mxu0
      %v4431 = vadd.f32 0.0, %v4430
      %4432 = vmatmul.bf16.gmra.mxu0 %v4398
      %v4433 = vpop.f32.mrf.mxu0
      %v4434 = vadd.f32 0.0, %v4433
      %v4435 = vpop.f32.mrf.mxu0
      %v4436 = vadd.f32 0.0, %v4435
      %4437 = vdwg.mxu0
      %v4438 = vadd.f32 %v4363, %v4410
      %v4439 = vadd.f32 %v4364, %v4429
      %v4440 = vadd.f32 %v4365, %v4412
      %v4441 = vadd.f32 %v4366, %v4431
      %v4442 = vadd.f32 %v4367, %v4415
      %v4443 = vadd.f32 %v4368, %v4434
      %v4444 = vadd.f32 %v4369, %v4417
      %v4445 = vadd.f32 %v4370, %v4436
      %s4446 = scalar_lea.vmem %s5, 80
      %v4447 = vld [vmem:[%s4446] sm:$0xf]
      %v4448 = vld [vmem:[%s4446 + $0x4] sm:$0xf]
      %v4449 = vld [vmem:[%s4446 + $0x8] sm:$0xf]
      %v4450 = vld [vmem:[%s4446 + $0xc] sm:$0xf]
      %v4455 = vunpack.c.l.b16 %v4447
      %v4456 = vunpack.c.l.b16 %v4448
      %v4457 = vunpack.c.l.b16 %v4449
      %v4458 = vunpack.c.l.b16 %v4450
      %v4459 = vpack.c.b16 %v4456, %v4455
      %v4460 = vpack.c.b16 %v4458, %v4457
      %4461 = vrot.lane.b32.xlu0 %v4113, 112
      %v4462 = vpop.permute.xlu0 %4461
      %4463 = vrot.lane.b32.xlu0 %v4114, 112
      %v4464 = vpop.permute.xlu0 %4463
      %vm4465 = vcmask 916480
      %v4466 = vsel %vm4465, %v4462, %v4464
      %v4470 = vsel %vm1622, %v4459, 0
      %v4473 = vsel %vm1622, %v4460, 0
      %4475 = vmatpush.bf16.msra.mxu0 0
      %4476 = vmatpush.bf16.msra.mxu0 0
      %4477 = vmatpush.bf16.msra.mxu0 0
      %4478 = vmatpush.bf16.msra.mxu0 0
      %4479 = vmatpush.bf16.msra.mxu0 0
      %4480 = vmatpush.bf16.msra.mxu0 0
      %4481 = vmatpush.bf16.msra.mxu0 0
      %4482 = vmatpush.bf16.msra.mxu0 %v4466
      %4483 = vmatmul.bf16.gmra.mxu0 %v4470
      %v4484 = vpop.f32.mrf.mxu0
      %v4485 = vadd.f32 0.0, %v4484
      %v4486 = vpop.f32.mrf.mxu0
      %v4487 = vadd.f32 0.0, %v4486
      %4488 = vmatmul.bf16.gmra.mxu0 %v4473
      %v4489 = vpop.f32.mrf.mxu0
      %v4490 = vadd.f32 0.0, %v4489
      %v4491 = vpop.f32.mrf.mxu0
      %v4492 = vadd.f32 0.0, %v4491
      %4493 = vdwg.mxu0
      %4494 = vmatpush.bf16.msra.mxu0 0
      %4495 = vmatpush.bf16.msra.mxu0 0
      %4496 = vmatpush.bf16.msra.mxu0 0
      %4497 = vmatpush.bf16.msra.mxu0 0
      %4498 = vmatpush.bf16.msra.mxu0 0
      %4499 = vmatpush.bf16.msra.mxu0 0
      %4500 = vmatpush.bf16.msra.mxu0 0
      %4501 = vmatpush.bf16.msra.mxu0 %v4464
      %4502 = vmatmul.bf16.gmra.mxu0 %v4470
      %v4503 = vpop.f32.mrf.mxu0
      %v4504 = vadd.f32 0.0, %v4503
      %v4505 = vpop.f32.mrf.mxu0
      %v4506 = vadd.f32 0.0, %v4505
      %4507 = vmatmul.bf16.gmra.mxu0 %v4473
      %v4508 = vpop.f32.mrf.mxu0
      %v4509 = vadd.f32 0.0, %v4508
      %v4510 = vpop.f32.mrf.mxu0
      %v4511 = vadd.f32 0.0, %v4510
      %4512 = vdwg.mxu0
      %v4513 = vadd.f32 %v4438, %v4485
      %v4514 = vadd.f32 %v4439, %v4504
      %v4515 = vadd.f32 %v4440, %v4487
      %v4516 = vadd.f32 %v4441, %v4506
      %v4517 = vadd.f32 %v4442, %v4490
      %v4518 = vadd.f32 %v4443, %v4509
      %v4519 = vadd.f32 %v4444, %v4492
      %v4520 = vadd.f32 %v4445, %v4511
      %s4521 = scalar_lea.vmem %s5, 96
      %v4522 = vld [vmem:[%s4521] sm:$0xf]
      %v4523 = vld [vmem:[%s4521 + $0x4] sm:$0xf]
      %v4524 = vld [vmem:[%s4521 + $0x8] sm:$0xf]
      %v4525 = vld [vmem:[%s4521 + $0xc] sm:$0xf]
      %v4530 = vunpack.c.l.b16 %v4522
      %v4531 = vunpack.c.l.b16 %v4523
      %v4532 = vunpack.c.l.b16 %v4524
      %v4533 = vunpack.c.l.b16 %v4525
      %v4534 = vpack.c.b16 %v4531, %v4530
      %v4535 = vpack.c.b16 %v4533, %v4532
      %4536 = vrot.lane.b32.xlu0 %v4113, 100
      %v4537 = vpop.permute.xlu0 %4536
      %4538 = vrot.lane.b32.xlu0 %v4114, 100
      %v4539 = vpop.permute.xlu0 %4538
      %vm4540 = vcmask 818176
      %v4541 = vsel %vm4540, %v4537, %v4539
      %v4545 = vsel %vm1622, %v4534, 0
      %v4548 = vsel %vm1622, %v4535, 0
      %4550 = vmatpush.bf16.msra.mxu0 0
      %4551 = vmatpush.bf16.msra.mxu0 0
      %4552 = vmatpush.bf16.msra.mxu0 0
      %4553 = vmatpush.bf16.msra.mxu0 0
      %4554 = vmatpush.bf16.msra.mxu0 0
      %4555 = vmatpush.bf16.msra.mxu0 0
      %4556 = vmatpush.bf16.msra.mxu0 0
      %4557 = vmatpush.bf16.msra.mxu0 %v4541
      %4558 = vmatmul.bf16.gmra.mxu0 %v4545
      %v4559 = vpop.f32.mrf.mxu0
      %v4560 = vadd.f32 0.0, %v4559
      %v4561 = vpop.f32.mrf.mxu0
      %v4562 = vadd.f32 0.0, %v4561
      %4563 = vmatmul.bf16.gmra.mxu0 %v4548
      %v4564 = vpop.f32.mrf.mxu0
      %v4565 = vadd.f32 0.0, %v4564
      %v4566 = vpop.f32.mrf.mxu0
      %v4567 = vadd.f32 0.0, %v4566
      %4568 = vdwg.mxu0
      %4569 = vmatpush.bf16.msra.mxu0 0
      %4570 = vmatpush.bf16.msra.mxu0 0
      %4571 = vmatpush.bf16.msra.mxu0 0
      %4572 = vmatpush.bf16.msra.mxu0 0
      %4573 = vmatpush.bf16.msra.mxu0 0
      %4574 = vmatpush.bf16.msra.mxu0 0
      %4575 = vmatpush.bf16.msra.mxu0 0
      %4576 = vmatpush.bf16.msra.mxu0 %v4539
      %4577 = vmatmul.bf16.gmra.mxu0 %v4545
      %v4578 = vpop.f32.mrf.mxu0
      %v4579 = vadd.f32 0.0, %v4578
      %v4580 = vpop.f32.mrf.mxu0
      %v4581 = vadd.f32 0.0, %v4580
      %4582 = vmatmul.bf16.gmra.mxu0 %v4548
      %v4583 = vpop.f32.mrf.mxu0
      %v4584 = vadd.f32 0.0, %v4583
      %v4585 = vpop.f32.mrf.mxu0
      %v4586 = vadd.f32 0.0, %v4585
      %4587 = vdwg.mxu0
      %v4588 = vadd.f32 %v4513, %v4560
      %v4589 = vadd.f32 %v4514, %v4579
      %v4590 = vadd.f32 %v4515, %v4562
      %v4591 = vadd.f32 %v4516, %v4581
      %v4592 = vadd.f32 %v4517, %v4565
      %v4593 = vadd.f32 %v4518, %v4584
      %v4594 = vadd.f32 %v4519, %v4567
      %v4595 = vadd.f32 %v4520, %v4586
      %s4596 = scalar_lea.vmem %s5, 112
      %v4597 = vld [vmem:[%s4596] sm:$0xf]
      %v4598 = vld [vmem:[%s4596 + $0x4] sm:$0xf]
      %v4599 = vld [vmem:[%s4596 + $0x8] sm:$0xf]
      %v4600 = vld [vmem:[%s4596 + $0xc] sm:$0xf]
      %v4605 = vunpack.c.l.b16 %v4597
      %v4606 = vunpack.c.l.b16 %v4598
      %v4607 = vunpack.c.l.b16 %v4599
      %v4608 = vunpack.c.l.b16 %v4600
      %v4609 = vpack.c.b16 %v4606, %v4605
      %v4610 = vpack.c.b16 %v4608, %v4607
      %4611 = vrot.lane.b32.xlu0 %v4113, 99
      %v4612 = vpop.permute.xlu0 %4611
      %4613 = vrot.lane.b32.xlu0 %v4114, 99
      %v4614 = vpop.permute.xlu0 %4613
      %vm4615 = vcmask 809984
      %v4616 = vsel %vm4615, %v4612, %v4614
      %v4620 = vsel %vm1622, %v4609, 0
      %v4623 = vsel %vm1622, %v4610, 0
      %4625 = vmatpush.bf16.msra.mxu0 0
      %4626 = vmatpush.bf16.msra.mxu0 0
      %4627 = vmatpush.bf16.msra.mxu0 0
      %4628 = vmatpush.bf16.msra.mxu0 0
      %4629 = vmatpush.bf16.msra.mxu0 0
      %4630 = vmatpush.bf16.msra.mxu0 0
      %4631 = vmatpush.bf16.msra.mxu0 0
      %4632 = vmatpush.bf16.msra.mxu0 %v4616
      %4633 = vmatmul.bf16.gmra.mxu0 %v4620
      %v4634 = vpop.f32.mrf.mxu0
      %v4635 = vadd.f32 0.0, %v4634
      %v4636 = vpop.f32.mrf.mxu0
      %v4637 = vadd.f32 0.0, %v4636
      %4638 = vmatmul.bf16.gmra.mxu0 %v4623
      %v4639 = vpop.f32.mrf.mxu0
      %v4640 = vadd.f32 0.0, %v4639
      %v4641 = vpop.f32.mrf.mxu0
      %v4642 = vadd.f32 0.0, %v4641
      %4643 = vdwg.mxu0
      %4644 = vmatpush.bf16.msra.mxu0 0
      %4645 = vmatpush.bf16.msra.mxu0 0
      %4646 = vmatpush.bf16.msra.mxu0 0
      %4647 = vmatpush.bf16.msra.mxu0 0
      %4648 = vmatpush.bf16.msra.mxu0 0
      %4649 = vmatpush.bf16.msra.mxu0 0
      %4650 = vmatpush.bf16.msra.mxu0 0
      %4651 = vmatpush.bf16.msra.mxu0 %v4614
      %4652 = vmatmul.bf16.gmra.mxu0 %v4620
      %v4653 = vpop.f32.mrf.mxu0
      %v4654 = vadd.f32 0.0, %v4653
      %v4655 = vpop.f32.mrf.mxu0
      %v4656 = vadd.f32 0.0, %v4655
      %4657 = vmatmul.bf16.gmra.mxu0 %v4623
      %v4658 = vpop.f32.mrf.mxu0
      %v4659 = vadd.f32 0.0, %v4658
      %v4660 = vpop.f32.mrf.mxu0
      %v4661 = vadd.f32 0.0, %v4660
      %4662 = vdwg.mxu0
      %v4663 = vadd.f32 %v4588, %v4635
      %v4664 = vadd.f32 %v4589, %v4654
      %v4665 = vadd.f32 %v4590, %v4637
      %v4666 = vadd.f32 %v4591, %v4656
      %v4667 = vadd.f32 %v4592, %v4640
      %v4668 = vadd.f32 %v4593, %v4659
      %v4669 = vadd.f32 %v4594, %v4642
      %v4670 = vadd.f32 %v4595, %v4661
      %s4671 = scalar_lea.vmem %s5, 128
      %v4672 = vld [vmem:[%s4671] sm:$0xf]
      %v4673 = vld [vmem:[%s4671 + $0x4] sm:$0xf]
      %v4674 = vld [vmem:[%s4671 + $0x8] sm:$0xf]
      %v4675 = vld [vmem:[%s4671 + $0xc] sm:$0xf]
      %v4680 = vunpack.c.l.b16 %v4672
      %v4681 = vunpack.c.l.b16 %v4673
      %v4682 = vunpack.c.l.b16 %v4674
      %v4683 = vunpack.c.l.b16 %v4675
      %v4684 = vpack.c.b16 %v4681, %v4680
      %v4685 = vpack.c.b16 %v4683, %v4682
      %4686 = vrot.lane.b32.xlu0 %v4113, 98
      %v4687 = vpop.permute.xlu0 %4686
      %4688 = vrot.lane.b32.xlu0 %v4114, 98
      %v4689 = vpop.permute.xlu0 %4688
      %vm4690 = vcmask 801792
      %v4691 = vsel %vm4690, %v4687, %v4689
      %v4695 = vsel %vm1622, %v4684, 0
      %v4698 = vsel %vm1622, %v4685, 0
      %4700 = vmatpush.bf16.msra.mxu0 0
      %4701 = vmatpush.bf16.msra.mxu0 0
      %4702 = vmatpush.bf16.msra.mxu0 0
      %4703 = vmatpush.bf16.msra.mxu0 0
      %4704 = vmatpush.bf16.msra.mxu0 0
      %4705 = vmatpush.bf16.msra.mxu0 0
      %4706 = vmatpush.bf16.msra.mxu0 0
      %4707 = vmatpush.bf16.msra.mxu0 %v4691
      %4708 = vmatmul.bf16.gmra.mxu0 %v4695
      %v4709 = vpop.f32.mrf.mxu0
      %v4710 = vadd.f32 0.0, %v4709
      %v4711 = vpop.f32.mrf.mxu0
      %v4712 = vadd.f32 0.0, %v4711
      %4713 = vmatmul.bf16.gmra.mxu0 %v4698
      %v4714 = vpop.f32.mrf.mxu0
      %v4715 = vadd.f32 0.0, %v4714
      %v4716 = vpop.f32.mrf.mxu0
      %v4717 = vadd.f32 0.0, %v4716
      %4718 = vdwg.mxu0
      %4719 = vmatpush.bf16.msra.mxu0 0
      %4720 = vmatpush.bf16.msra.mxu0 0
      %4721 = vmatpush.bf16.msra.mxu0 0
      %4722 = vmatpush.bf16.msra.mxu0 0
      %4723 = vmatpush.bf16.msra.mxu0 0
      %4724 = vmatpush.bf16.msra.mxu0 0
      %4725 = vmatpush.bf16.msra.mxu0 0
      %4726 = vmatpush.bf16.msra.mxu0 %v4689
      %4727 = vmatmul.bf16.gmra.mxu0 %v4695
      %v4728 = vpop.f32.mrf.mxu0
      %v4729 = vadd.f32 0.0, %v4728
      %v4730 = vpop.f32.mrf.mxu0
      %v4731 = vadd.f32 0.0, %v4730
      %4732 = vmatmul.bf16.gmra.mxu0 %v4698
      %v4733 = vpop.f32.mrf.mxu0
      %v4734 = vadd.f32 0.0, %v4733
      %v4735 = vpop.f32.mrf.mxu0
      %v4736 = vadd.f32 0.0, %v4735
      %4737 = vdwg.mxu0
      %v4738 = vadd.f32 %v4663, %v4710
      %v4739 = vadd.f32 %v4664, %v4729
      %v4740 = vadd.f32 %v4665, %v4712
      %v4741 = vadd.f32 %v4666, %v4731
      %v4742 = vadd.f32 %v4667, %v4715
      %v4743 = vadd.f32 %v4668, %v4734
      %v4744 = vadd.f32 %v4669, %v4717
      %v4745 = vadd.f32 %v4670, %v4736
      %v4746 = vld [vmem:[%s6] sm:$0xff]
      %v4747 = vld [vmem:[%s6 + $0x8] sm:$0xff]
      %v4748 = vld [vmem:[%s6 + $0x10] sm:$0xff]
      %v4749 = vld [vmem:[%s6 + $0x18] sm:$0xff]
      %4751 = vset.pattern.permute.xlu0 0
      %4752 = vperm.xlu0 %4751, %v4746
      %v4753 = vpop.permute.xlu0 %4752
      %4756 = vset.pattern.permute.xlu0 0
      %4757 = vperm.xlu0 %4756, %v4747
      %v4758 = vpop.permute.xlu0 %4757
      %4761 = vset.pattern.permute.xlu0 0
      %4762 = vperm.xlu0 %4761, %v4748
      %v4763 = vpop.permute.xlu0 %4762
      %4766 = vset.pattern.permute.xlu0 0
      %4767 = vperm.xlu0 %4766, %v4749
      %v4768 = vpop.permute.xlu0 %4767
      %v4770 = vadd.f32 %v4738, %v4753
      %v4771 = vadd.f32 %v4739, %v4753
      %v4772 = vadd.f32 %v4740, %v4758
      %v4773 = vadd.f32 %v4741, %v4758
      %v4774 = vadd.f32 %v4742, %v4763
      %v4775 = vadd.f32 %v4743, %v4763
      %v4776 = vadd.f32 %v4744, %v4768
      %v4777 = vadd.f32 %v4745, %v4768
      %v4778 = vpack.c.bf16 %v4771, %v4770
      %v4779 = vpack.c.bf16 %v4773, %v4772
      %v4780 = vpack.c.bf16 %v4775, %v4774
      %v4781 = vpack.c.bf16 %v4777, %v4776
      %vm4782 = vcmask 310276
      %vm4783 = vmor %vm4782, %vm1539
      %4784 = vst.msk [vmem:[#allocation5] sm:$0xff] %vm4783, %v4778
      %4785 = vst.msk [vmem:[#allocation5 + $0x8] sm:$0xff] %vm4783, %v4779
      %4786 = vst.msk [vmem:[#allocation5 + $0x10] sm:$0xff] %vm4783, %v4780
      %4787 = vst.msk [vmem:[#allocation5 + $0x18] sm:$0xff] %vm4783, %v4781
      %v4788 = vld [vmem:[%s7] sm:$0xf]
      %v4789 = vld [vmem:[%s7 + $0x4] sm:$0xf]
      %v4790 = vld [vmem:[%s7 + $0x8] sm:$0xf]
      %v4791 = vld [vmem:[%s7 + $0xc] sm:$0xf]
      %v4792 = vld [vmem:[#allocation5] sm:$0xff]
      %v4793 = vld [vmem:[#allocation5 + $0x8] sm:$0xff]
      %v4794 = vld [vmem:[#allocation5 + $0x10] sm:$0xff]
      %v4795 = vld [vmem:[#allocation5 + $0x18] sm:$0xff]
      %s4796 = scalar_lea.vmem %s7, 16
      %v4797 = vld [vmem:[%s4796] sm:$0xf]
      %v4798 = vld [vmem:[%s4796 + $0x4] sm:$0xf]
      %v4799 = vld [vmem:[%s4796 + $0x8] sm:$0xf]
      %v4800 = vld [vmem:[%s4796 + $0xc] sm:$0xf]
      %v4805 = vunpack.c.l.b16 %v4797
      %v4806 = vunpack.c.l.b16 %v4798
      %v4807 = vunpack.c.l.b16 %v4799
      %v4808 = vunpack.c.l.b16 %v4800
      %v4809 = vpack.c.b16 %v4806, %v4805
      %v4810 = vpack.c.b16 %v4808, %v4807
      %v4815 = vunpack.c.l.b16 %v4792
      %v4816 = vunpack.c.h.b16 %v4792
      %v4817 = vunpack.c.l.b16 %v4793
      %v4818 = vunpack.c.h.b16 %v4793
      %v4819 = vunpack.c.l.b16 %v4794
      %v4820 = vunpack.c.h.b16 %v4794
      %v4821 = vunpack.c.l.b16 %v4795
      %v4822 = vunpack.c.h.b16 %v4795
      %v4823 = vpack.c.b16 %v4817, %v4815
      %v4824 = vpack.c.b16 %v4818, %v4816
      %v4825 = vpack.c.b16 %v4821, %v4819
      %v4826 = vpack.c.b16 %v4822, %v4820
      %4827 = vrot.lane.b32.xlu0 %v4823, 127
      %v4828 = vpop.permute.xlu0 %4827
      %4829 = vrot.lane.b32.xlu0 %v4824, 127
      %v4830 = vpop.permute.xlu0 %4829
      %4831 = vrot.lane.b32.xlu0 %v4825, 127
      %v4832 = vpop.permute.xlu0 %4831
      %4833 = vrot.lane.b32.xlu0 %v4826, 127
      %v4834 = vpop.permute.xlu0 %4833
      %v4835 = vsel %vm1608, %v4828, %v4830
      %v4836 = vsel %vm1608, %v4832, %v4834
      %vm4841 = vcmask 261120
      %v4843 = vsel %vm4841, %v4809, 0
      %v4846 = vsel %vm4841, %v4810, 0
      %4848 = vmatpush.bf16.msra.mxu0 0
      %4849 = vmatpush.bf16.msra.mxu0 0
      %4850 = vmatpush.bf16.msra.mxu0 0
      %4851 = vmatpush.bf16.msra.mxu0 0
      %4852 = vmatpush.bf16.msra.mxu0 0
      %4853 = vmatpush.bf16.msra.mxu0 0
      %4854 = vmatpush.bf16.msra.mxu0 %v4836
      %4855 = vmatpush.bf16.msra.mxu0 %v4835
      %4856 = vmatmul.bf16.gmra.mxu0 %v4843
      %v4857 = vpop.f32.mrf.mxu0
      %v4858 = vadd.f32 0.0, %v4857
      %v4859 = vpop.f32.mrf.mxu0
      %v4860 = vadd.f32 0.0, %v4859
      %4861 = vmatmul.bf16.gmra.mxu0 %v4846
      %v4862 = vpop.f32.mrf.mxu0
      %v4863 = vadd.f32 0.0, %v4862
      %v4864 = vpop.f32.mrf.mxu0
      %v4865 = vadd.f32 0.0, %v4864
      %4866 = vdwg.mxu0
      %4867 = vmatpush.bf16.msra.mxu0 0
      %4868 = vmatpush.bf16.msra.mxu0 0
      %4869 = vmatpush.bf16.msra.mxu0 0
      %4870 = vmatpush.bf16.msra.mxu0 0
      %4871 = vmatpush.bf16.msra.mxu0 0
      %4872 = vmatpush.bf16.msra.mxu0 0
      %4873 = vmatpush.bf16.msra.mxu0 %v4834
      %4874 = vmatpush.bf16.msra.mxu0 %v4830
      %4875 = vmatmul.bf16.gmra.mxu0 %v4843
      %v4876 = vpop.f32.mrf.mxu0
      %v4877 = vadd.f32 0.0, %v4876
      %v4878 = vpop.f32.mrf.mxu0
      %v4879 = vadd.f32 0.0, %v4878
      %4880 = vmatmul.bf16.gmra.mxu0 %v4846
      %v4881 = vpop.f32.mrf.mxu0
      %v4882 = vadd.f32 0.0, %v4881
      %v4883 = vpop.f32.mrf.mxu0
      %v4884 = vadd.f32 0.0, %v4883
      %4885 = vdwg.mxu0
      %v4890 = vunpack.c.l.b16 %v4788
      %v4891 = vunpack.c.l.b16 %v4789
      %v4892 = vunpack.c.l.b16 %v4790
      %v4893 = vunpack.c.l.b16 %v4791
      %v4894 = vpack.c.b16 %v4891, %v4890
      %v4895 = vpack.c.b16 %v4893, %v4892
      %v4901 = vsel %vm4841, %v4894, 0
      %v4904 = vsel %vm4841, %v4895, 0
      %4906 = vmatpush.bf16.msra.mxu0 0
      %4907 = vmatpush.bf16.msra.mxu0 0
      %4908 = vmatpush.bf16.msra.mxu0 0
      %4909 = vmatpush.bf16.msra.mxu0 0
      %4910 = vmatpush.bf16.msra.mxu0 0
      %4911 = vmatpush.bf16.msra.mxu0 0
      %4912 = vmatpush.bf16.msra.mxu0 %v4825
      %4913 = vmatpush.bf16.msra.mxu0 %v4823
      %4914 = vmatmul.bf16.gmra.mxu0 %v4901
      %v4915 = vpop.f32.mrf.mxu0
      %v4916 = vadd.f32 %v4858, %v4915
      %v4917 = vpop.f32.mrf.mxu0
      %v4918 = vadd.f32 %v4860, %v4917
      %4919 = vmatmul.bf16.gmra.mxu0 %v4904
      %v4920 = vpop.f32.mrf.mxu0
      %v4921 = vadd.f32 %v4863, %v4920
      %v4922 = vpop.f32.mrf.mxu0
      %v4923 = vadd.f32 %v4865, %v4922
      %4924 = vdwg.mxu0
      %4925 = vmatpush.bf16.msra.mxu0 0
      %4926 = vmatpush.bf16.msra.mxu0 0
      %4927 = vmatpush.bf16.msra.mxu0 0
      %4928 = vmatpush.bf16.msra.mxu0 0
      %4929 = vmatpush.bf16.msra.mxu0 0
      %4930 = vmatpush.bf16.msra.mxu0 0
      %4931 = vmatpush.bf16.msra.mxu0 %v4826
      %4932 = vmatpush.bf16.msra.mxu0 %v4824
      %4933 = vmatmul.bf16.gmra.mxu0 %v4901
      %v4934 = vpop.f32.mrf.mxu0
      %v4935 = vadd.f32 %v4877, %v4934
      %v4936 = vpop.f32.mrf.mxu0
      %v4937 = vadd.f32 %v4879, %v4936
      %4938 = vmatmul.bf16.gmra.mxu0 %v4904
      %v4939 = vpop.f32.mrf.mxu0
      %v4940 = vadd.f32 %v4882, %v4939
      %v4941 = vpop.f32.mrf.mxu0
      %v4942 = vadd.f32 %v4884, %v4941
      %4943 = vdwg.mxu0
      %s4944 = scalar_lea.vmem %s7, 32
      %v4945 = vld [vmem:[%s4944] sm:$0xf]
      %v4946 = vld [vmem:[%s4944 + $0x4] sm:$0xf]
      %v4947 = vld [vmem:[%s4944 + $0x8] sm:$0xf]
      %v4948 = vld [vmem:[%s4944 + $0xc] sm:$0xf]
      %v4953 = vunpack.c.l.b16 %v4945
      %v4954 = vunpack.c.l.b16 %v4946
      %v4955 = vunpack.c.l.b16 %v4947
      %v4956 = vunpack.c.l.b16 %v4948
      %v4957 = vpack.c.b16 %v4954, %v4953
      %v4958 = vpack.c.b16 %v4956, %v4955
      %4959 = vrot.lane.b32.xlu0 %v4823, 126
      %v4960 = vpop.permute.xlu0 %4959
      %4961 = vrot.lane.b32.xlu0 %v4824, 126
      %v4962 = vpop.permute.xlu0 %4961
      %4963 = vrot.lane.b32.xlu0 %v4825, 126
      %v4964 = vpop.permute.xlu0 %4963
      %4965 = vrot.lane.b32.xlu0 %v4826, 126
      %v4966 = vpop.permute.xlu0 %4965
      %v4967 = vsel %vm1859, %v4960, %v4962
      %v4968 = vsel %vm1859, %v4964, %v4966
      %v4974 = vsel %vm4841, %v4957, 0
      %v4977 = vsel %vm4841, %v4958, 0
      %4979 = vmatpush.bf16.msra.mxu0 0
      %4980 = vmatpush.bf16.msra.mxu0 0
      %4981 = vmatpush.bf16.msra.mxu0 0
      %4982 = vmatpush.bf16.msra.mxu0 0
      %4983 = vmatpush.bf16.msra.mxu0 0
      %4984 = vmatpush.bf16.msra.mxu0 0
      %4985 = vmatpush.bf16.msra.mxu0 %v4968
      %4986 = vmatpush.bf16.msra.mxu0 %v4967
      %4987 = vmatmul.bf16.gmra.mxu0 %v4974
      %v4988 = vpop.f32.mrf.mxu0
      %v4989 = vadd.f32 0.0, %v4988
      %v4990 = vpop.f32.mrf.mxu0
      %v4991 = vadd.f32 0.0, %v4990
      %4992 = vmatmul.bf16.gmra.mxu0 %v4977
      %v4993 = vpop.f32.mrf.mxu0
      %v4994 = vadd.f32 0.0, %v4993
      %v4995 = vpop.f32.mrf.mxu0
      %v4996 = vadd.f32 0.0, %v4995
      %4997 = vdwg.mxu0
      %4998 = vmatpush.bf16.msra.mxu0 0
      %4999 = vmatpush.bf16.msra.mxu0 0
      %5000 = vmatpush.bf16.msra.mxu0 0
      %5001 = vmatpush.bf16.msra.mxu0 0
      %5002 = vmatpush.bf16.msra.mxu0 0
      %5003 = vmatpush.bf16.msra.mxu0 0
      %5004 = vmatpush.bf16.msra.mxu0 %v4966
      %5005 = vmatpush.bf16.msra.mxu0 %v4962
      %5006 = vmatmul.bf16.gmra.mxu0 %v4974
      %v5007 = vpop.f32.mrf.mxu0
      %v5008 = vadd.f32 0.0, %v5007
      %v5009 = vpop.f32.mrf.mxu0
      %v5010 = vadd.f32 0.0, %v5009
      %5011 = vmatmul.bf16.gmra.mxu0 %v4977
      %v5012 = vpop.f32.mrf.mxu0
      %v5013 = vadd.f32 0.0, %v5012
      %v5014 = vpop.f32.mrf.mxu0
      %v5015 = vadd.f32 0.0, %v5014
      %5016 = vdwg.mxu0
      %v5017 = vadd.f32 %v4916, %v4989
      %v5018 = vadd.f32 %v4935, %v5008
      %v5019 = vadd.f32 %v4918, %v4991
      %v5020 = vadd.f32 %v4937, %v5010
      %v5021 = vadd.f32 %v4921, %v4994
      %v5022 = vadd.f32 %v4940, %v5013
      %v5023 = vadd.f32 %v4923, %v4996
      %v5024 = vadd.f32 %v4942, %v5015
      %s5025 = scalar_lea.vmem %s7, 48
      %v5026 = vld [vmem:[%s5025] sm:$0xf]
      %v5027 = vld [vmem:[%s5025 + $0x4] sm:$0xf]
      %v5028 = vld [vmem:[%s5025 + $0x8] sm:$0xf]
      %v5029 = vld [vmem:[%s5025 + $0xc] sm:$0xf]
      %v5034 = vunpack.c.l.b16 %v5026
      %v5035 = vunpack.c.l.b16 %v5027
      %v5036 = vunpack.c.l.b16 %v5028
      %v5037 = vunpack.c.l.b16 %v5029
      %v5038 = vpack.c.b16 %v5035, %v5034
      %v5039 = vpack.c.b16 %v5037, %v5036
      %5040 = vrot.lane.b32.xlu0 %v4823, 114
      %v5041 = vpop.permute.xlu0 %5040
      %5042 = vrot.lane.b32.xlu0 %v4824, 114
      %v5043 = vpop.permute.xlu0 %5042
      %5044 = vrot.lane.b32.xlu0 %v4825, 114
      %v5045 = vpop.permute.xlu0 %5044
      %5046 = vrot.lane.b32.xlu0 %v4826, 114
      %v5047 = vpop.permute.xlu0 %5046
      %v5048 = vsel %vm4315, %v5041, %v5043
      %v5049 = vsel %vm4315, %v5045, %v5047
      %v5055 = vsel %vm4841, %v5038, 0
      %v5058 = vsel %vm4841, %v5039, 0
      %5060 = vmatpush.bf16.msra.mxu0 0
      %5061 = vmatpush.bf16.msra.mxu0 0
      %5062 = vmatpush.bf16.msra.mxu0 0
      %5063 = vmatpush.bf16.msra.mxu0 0
      %5064 = vmatpush.bf16.msra.mxu0 0
      %5065 = vmatpush.bf16.msra.mxu0 0
      %5066 = vmatpush.bf16.msra.mxu0 %v5049
      %5067 = vmatpush.bf16.msra.mxu0 %v5048
      %5068 = vmatmul.bf16.gmra.mxu0 %v5055
      %v5069 = vpop.f32.mrf.mxu0
      %v5070 = vadd.f32 0.0, %v5069
      %v5071 = vpop.f32.mrf.mxu0
      %v5072 = vadd.f32 0.0, %v5071
      %5073 = vmatmul.bf16.gmra.mxu0 %v5058
      %v5074 = vpop.f32.mrf.mxu0
      %v5075 = vadd.f32 0.0, %v5074
      %v5076 = vpop.f32.mrf.mxu0
      %v5077 = vadd.f32 0.0, %v5076
      %5078 = vdwg.mxu0
      %5079 = vmatpush.bf16.msra.mxu0 0
      %5080 = vmatpush.bf16.msra.mxu0 0
      %5081 = vmatpush.bf16.msra.mxu0 0
      %5082 = vmatpush.bf16.msra.mxu0 0
      %5083 = vmatpush.bf16.msra.mxu0 0
      %5084 = vmatpush.bf16.msra.mxu0 0
      %5085 = vmatpush.bf16.msra.mxu0 %v5047
      %5086 = vmatpush.bf16.msra.mxu0 %v5043
      %5087 = vmatmul.bf16.gmra.mxu0 %v5055
      %v5088 = vpop.f32.mrf.mxu0
      %v5089 = vadd.f32 0.0, %v5088
      %v5090 = vpop.f32.mrf.mxu0
      %v5091 = vadd.f32 0.0, %v5090
      %5092 = vmatmul.bf16.gmra.mxu0 %v5058
      %v5093 = vpop.f32.mrf.mxu0
      %v5094 = vadd.f32 0.0, %v5093
      %v5095 = vpop.f32.mrf.mxu0
      %v5096 = vadd.f32 0.0, %v5095
      %5097 = vdwg.mxu0
      %v5098 = vadd.f32 %v5017, %v5070
      %v5099 = vadd.f32 %v5018, %v5089
      %v5100 = vadd.f32 %v5019, %v5072
      %v5101 = vadd.f32 %v5020, %v5091
      %v5102 = vadd.f32 %v5021, %v5075
      %v5103 = vadd.f32 %v5022, %v5094
      %v5104 = vadd.f32 %v5023, %v5077
      %v5105 = vadd.f32 %v5024, %v5096
      %s5106 = scalar_lea.vmem %s7, 64
      %v5107 = vld [vmem:[%s5106] sm:$0xf]
      %v5108 = vld [vmem:[%s5106 + $0x4] sm:$0xf]
      %v5109 = vld [vmem:[%s5106 + $0x8] sm:$0xf]
      %v5110 = vld [vmem:[%s5106 + $0xc] sm:$0xf]
      %v5115 = vunpack.c.l.b16 %v5107
      %v5116 = vunpack.c.l.b16 %v5108
      %v5117 = vunpack.c.l.b16 %v5109
      %v5118 = vunpack.c.l.b16 %v5110
      %v5119 = vpack.c.b16 %v5116, %v5115
      %v5120 = vpack.c.b16 %v5118, %v5117
      %5121 = vrot.lane.b32.xlu0 %v4823, 113
      %v5122 = vpop.permute.xlu0 %5121
      %5123 = vrot.lane.b32.xlu0 %v4824, 113
      %v5124 = vpop.permute.xlu0 %5123
      %5125 = vrot.lane.b32.xlu0 %v4825, 113
      %v5126 = vpop.permute.xlu0 %5125
      %5127 = vrot.lane.b32.xlu0 %v4826, 113
      %v5128 = vpop.permute.xlu0 %5127
      %v5129 = vsel %vm4390, %v5122, %v5124
      %v5130 = vsel %vm4390, %v5126, %v5128
      %v5136 = vsel %vm4841, %v5119, 0
      %v5139 = vsel %vm4841, %v5120, 0
      %5141 = vmatpush.bf16.msra.mxu0 0
      %5142 = vmatpush.bf16.msra.mxu0 0
      %5143 = vmatpush.bf16.msra.mxu0 0
      %5144 = vmatpush.bf16.msra.mxu0 0
      %5145 = vmatpush.bf16.msra.mxu0 0
      %5146 = vmatpush.bf16.msra.mxu0 0
      %5147 = vmatpush.bf16.msra.mxu0 %v5130
      %5148 = vmatpush.bf16.msra.mxu0 %v5129
      %5149 = vmatmul.bf16.gmra.mxu0 %v5136
      %v5150 = vpop.f32.mrf.mxu0
      %v5151 = vadd.f32 0.0, %v5150
      %v5152 = vpop.f32.mrf.mxu0
      %v5153 = vadd.f32 0.0, %v5152
      %5154 = vmatmul.bf16.gmra.mxu0 %v5139
      %v5155 = vpop.f32.mrf.mxu0
      %v5156 = vadd.f32 0.0, %v5155
      %v5157 = vpop.f32.mrf.mxu0
      %v5158 = vadd.f32 0.0, %v5157
      %5159 = vdwg.mxu0
      %5160 = vmatpush.bf16.msra.mxu0 0
      %5161 = vmatpush.bf16.msra.mxu0 0
      %5162 = vmatpush.bf16.msra.mxu0 0
      %5163 = vmatpush.bf16.msra.mxu0 0
      %5164 = vmatpush.bf16.msra.mxu0 0
      %5165 = vmatpush.bf16.msra.mxu0 0
      %5166 = vmatpush.bf16.msra.mxu0 %v5128
      %5167 = vmatpush.bf16.msra.mxu0 %v5124
      %5168 = vmatmul.bf16.gmra.mxu0 %v5136
      %v5169 = vpop.f32.mrf.mxu0
      %v5170 = vadd.f32 0.0, %v5169
      %v5171 = vpop.f32.mrf.mxu0
      %v5172 = vadd.f32 0.0, %v5171
      %5173 = vmatmul.bf16.gmra.mxu0 %v5139
      %v5174 = vpop.f32.mrf.mxu0
      %v5175 = vadd.f32 0.0, %v5174
      %v5176 = vpop.f32.mrf.mxu0
      %v5177 = vadd.f32 0.0, %v5176
      %5178 = vdwg.mxu0
      %v5179 = vadd.f32 %v5098, %v5151
      %v5180 = vadd.f32 %v5099, %v5170
      %v5181 = vadd.f32 %v5100, %v5153
      %v5182 = vadd.f32 %v5101, %v5172
      %v5183 = vadd.f32 %v5102, %v5156
      %v5184 = vadd.f32 %v5103, %v5175
      %v5185 = vadd.f32 %v5104, %v5158
      %v5186 = vadd.f32 %v5105, %v5177
      %s5187 = scalar_lea.vmem %s7, 80
      %v5188 = vld [vmem:[%s5187] sm:$0xf]
      %v5189 = vld [vmem:[%s5187 + $0x4] sm:$0xf]
      %v5190 = vld [vmem:[%s5187 + $0x8] sm:$0xf]
      %v5191 = vld [vmem:[%s5187 + $0xc] sm:$0xf]
      %v5196 = vunpack.c.l.b16 %v5188
      %v5197 = vunpack.c.l.b16 %v5189
      %v5198 = vunpack.c.l.b16 %v5190
      %v5199 = vunpack.c.l.b16 %v5191
      %v5200 = vpack.c.b16 %v5197, %v5196
      %v5201 = vpack.c.b16 %v5199, %v5198
      %5202 = vrot.lane.b32.xlu0 %v4823, 112
      %v5203 = vpop.permute.xlu0 %5202
      %5204 = vrot.lane.b32.xlu0 %v4824, 112
      %v5205 = vpop.permute.xlu0 %5204
      %5206 = vrot.lane.b32.xlu0 %v4825, 112
      %v5207 = vpop.permute.xlu0 %5206
      %5208 = vrot.lane.b32.xlu0 %v4826, 112
      %v5209 = vpop.permute.xlu0 %5208
      %v5210 = vsel %vm4465, %v5203, %v5205
      %v5211 = vsel %vm4465, %v5207, %v5209
      %v5217 = vsel %vm4841, %v5200, 0
      %v5220 = vsel %vm4841, %v5201, 0
      %5222 = vmatpush.bf16.msra.mxu0 0
      %5223 = vmatpush.bf16.msra.mxu0 0
      %5224 = vmatpush.bf16.msra.mxu0 0
      %5225 = vmatpush.bf16.msra.mxu0 0
      %5226 = vmatpush.bf16.msra.mxu0 0
      %5227 = vmatpush.bf16.msra.mxu0 0
      %5228 = vmatpush.bf16.msra.mxu0 %v5211
      %5229 = vmatpush.bf16.msra.mxu0 %v5210
      %5230 = vmatmul.bf16.gmra.mxu0 %v5217
      %v5231 = vpop.f32.mrf.mxu0
      %v5232 = vadd.f32 0.0, %v5231
      %v5233 = vpop.f32.mrf.mxu0
      %v5234 = vadd.f32 0.0, %v5233
      %5235 = vmatmul.bf16.gmra.mxu0 %v5220
      %v5236 = vpop.f32.mrf.mxu0
      %v5237 = vadd.f32 0.0, %v5236
      %v5238 = vpop.f32.mrf.mxu0
      %v5239 = vadd.f32 0.0, %v5238
      %5240 = vdwg.mxu0
      %5241 = vmatpush.bf16.msra.mxu0 0
      %5242 = vmatpush.bf16.msra.mxu0 0
      %5243 = vmatpush.bf16.msra.mxu0 0
      %5244 = vmatpush.bf16.msra.mxu0 0
      %5245 = vmatpush.bf16.msra.mxu0 0
      %5246 = vmatpush.bf16.msra.mxu0 0
      %5247 = vmatpush.bf16.msra.mxu0 %v5209
      %5248 = vmatpush.bf16.msra.mxu0 %v5205
      %5249 = vmatmul.bf16.gmra.mxu0 %v5217
      %v5250 = vpop.f32.mrf.mxu0
      %v5251 = vadd.f32 0.0, %v5250
      %v5252 = vpop.f32.mrf.mxu0
      %v5253 = vadd.f32 0.0, %v5252
      %5254 = vmatmul.bf16.gmra.mxu0 %v5220
      %v5255 = vpop.f32.mrf.mxu0
      %v5256 = vadd.f32 0.0, %v5255
      %v5257 = vpop.f32.mrf.mxu0
      %v5258 = vadd.f32 0.0, %v5257
      %5259 = vdwg.mxu0
      %v5260 = vadd.f32 %v5179, %v5232
      %v5261 = vadd.f32 %v5180, %v5251
      %v5262 = vadd.f32 %v5181, %v5234
      %v5263 = vadd.f32 %v5182, %v5253
      %v5264 = vadd.f32 %v5183, %v5237
      %v5265 = vadd.f32 %v5184, %v5256
      %v5266 = vadd.f32 %v5185, %v5239
      %v5267 = vadd.f32 %v5186, %v5258
      %s5268 = scalar_lea.vmem %s7, 96
      %v5269 = vld [vmem:[%s5268] sm:$0xf]
      %v5270 = vld [vmem:[%s5268 + $0x4] sm:$0xf]
      %v5271 = vld [vmem:[%s5268 + $0x8] sm:$0xf]
      %v5272 = vld [vmem:[%s5268 + $0xc] sm:$0xf]
      %v5277 = vunpack.c.l.b16 %v5269
      %v5278 = vunpack.c.l.b16 %v5270
      %v5279 = vunpack.c.l.b16 %v5271
      %v5280 = vunpack.c.l.b16 %v5272
      %v5281 = vpack.c.b16 %v5278, %v5277
      %v5282 = vpack.c.b16 %v5280, %v5279
      %5283 = vrot.lane.b32.xlu0 %v4823, 100
      %v5284 = vpop.permute.xlu0 %5283
      %5285 = vrot.lane.b32.xlu0 %v4824, 100
      %v5286 = vpop.permute.xlu0 %5285
      %5287 = vrot.lane.b32.xlu0 %v4825, 100
      %v5288 = vpop.permute.xlu0 %5287
      %5289 = vrot.lane.b32.xlu0 %v4826, 100
      %v5290 = vpop.permute.xlu0 %5289
      %v5291 = vsel %vm4540, %v5284, %v5286
      %v5292 = vsel %vm4540, %v5288, %v5290
      %v5298 = vsel %vm4841, %v5281, 0
      %v5301 = vsel %vm4841, %v5282, 0
      %5303 = vmatpush.bf16.msra.mxu0 0
      %5304 = vmatpush.bf16.msra.mxu0 0
      %5305 = vmatpush.bf16.msra.mxu0 0
      %5306 = vmatpush.bf16.msra.mxu0 0
      %5307 = vmatpush.bf16.msra.mxu0 0
      %5308 = vmatpush.bf16.msra.mxu0 0
      %5309 = vmatpush.bf16.msra.mxu0 %v5292
      %5310 = vmatpush.bf16.msra.mxu0 %v5291
      %5311 = vmatmul.bf16.gmra.mxu0 %v5298
      %v5312 = vpop.f32.mrf.mxu0
      %v5313 = vadd.f32 0.0, %v5312
      %v5314 = vpop.f32.mrf.mxu0
      %v5315 = vadd.f32 0.0, %v5314
      %5316 = vmatmul.bf16.gmra.mxu0 %v5301
      %v5317 = vpop.f32.mrf.mxu0
      %v5318 = vadd.f32 0.0, %v5317
      %v5319 = vpop.f32.mrf.mxu0
      %v5320 = vadd.f32 0.0, %v5319
      %5321 = vdwg.mxu0
      %5322 = vmatpush.bf16.msra.mxu0 0
      %5323 = vmatpush.bf16.msra.mxu0 0
      %5324 = vmatpush.bf16.msra.mxu0 0
      %5325 = vmatpush.bf16.msra.mxu0 0
      %5326 = vmatpush.bf16.msra.mxu0 0
      %5327 = vmatpush.bf16.msra.mxu0 0
      %5328 = vmatpush.bf16.msra.mxu0 %v5290
      %5329 = vmatpush.bf16.msra.mxu0 %v5286
      %5330 = vmatmul.bf16.gmra.mxu0 %v5298
      %v5331 = vpop.f32.mrf.mxu0
      %v5332 = vadd.f32 0.0, %v5331
      %v5333 = vpop.f32.mrf.mxu0
      %v5334 = vadd.f32 0.0, %v5333
      %5335 = vmatmul.bf16.gmra.mxu0 %v5301
      %v5336 = vpop.f32.mrf.mxu0
      %v5337 = vadd.f32 0.0, %v5336
      %v5338 = vpop.f32.mrf.mxu0
      %v5339 = vadd.f32 0.0, %v5338
      %5340 = vdwg.mxu0
      %v5341 = vadd.f32 %v5260, %v5313
      %v5342 = vadd.f32 %v5261, %v5332
      %v5343 = vadd.f32 %v5262, %v5315
      %v5344 = vadd.f32 %v5263, %v5334
      %v5345 = vadd.f32 %v5264, %v5318
      %v5346 = vadd.f32 %v5265, %v5337
      %v5347 = vadd.f32 %v5266, %v5320
      %v5348 = vadd.f32 %v5267, %v5339
      %s5349 = scalar_lea.vmem %s7, 112
      %v5350 = vld [vmem:[%s5349] sm:$0xf]
      %v5351 = vld [vmem:[%s5349 + $0x4] sm:$0xf]
      %v5352 = vld [vmem:[%s5349 + $0x8] sm:$0xf]
      %v5353 = vld [vmem:[%s5349 + $0xc] sm:$0xf]
      %v5358 = vunpack.c.l.b16 %v5350
      %v5359 = vunpack.c.l.b16 %v5351
      %v5360 = vunpack.c.l.b16 %v5352
      %v5361 = vunpack.c.l.b16 %v5353
      %v5362 = vpack.c.b16 %v5359, %v5358
      %v5363 = vpack.c.b16 %v5361, %v5360
      %5364 = vrot.lane.b32.xlu0 %v4823, 99
      %v5365 = vpop.permute.xlu0 %5364
      %5366 = vrot.lane.b32.xlu0 %v4824, 99
      %v5367 = vpop.permute.xlu0 %5366
      %5368 = vrot.lane.b32.xlu0 %v4825, 99
      %v5369 = vpop.permute.xlu0 %5368
      %5370 = vrot.lane.b32.xlu0 %v4826, 99
      %v5371 = vpop.permute.xlu0 %5370
      %v5372 = vsel %vm4615, %v5365, %v5367
      %v5373 = vsel %vm4615, %v5369, %v5371
      %v5379 = vsel %vm4841, %v5362, 0
      %v5382 = vsel %vm4841, %v5363, 0
      %5384 = vmatpush.bf16.msra.mxu0 0
      %5385 = vmatpush.bf16.msra.mxu0 0
      %5386 = vmatpush.bf16.msra.mxu0 0
      %5387 = vmatpush.bf16.msra.mxu0 0
      %5388 = vmatpush.bf16.msra.mxu0 0
      %5389 = vmatpush.bf16.msra.mxu0 0
      %5390 = vmatpush.bf16.msra.mxu0 %v5373
      %5391 = vmatpush.bf16.msra.mxu0 %v5372
      %5392 = vmatmul.bf16.gmra.mxu0 %v5379
      %v5393 = vpop.f32.mrf.mxu0
      %v5394 = vadd.f32 0.0, %v5393
      %v5395 = vpop.f32.mrf.mxu0
      %v5396 = vadd.f32 0.0, %v5395
      %5397 = vmatmul.bf16.gmra.mxu0 %v5382
      %v5398 = vpop.f32.mrf.mxu0
      %v5399 = vadd.f32 0.0, %v5398
      %v5400 = vpop.f32.mrf.mxu0
      %v5401 = vadd.f32 0.0, %v5400
      %5402 = vdwg.mxu0
      %5403 = vmatpush.bf16.msra.mxu0 0
      %5404 = vmatpush.bf16.msra.mxu0 0
      %5405 = vmatpush.bf16.msra.mxu0 0
      %5406 = vmatpush.bf16.msra.mxu0 0
      %5407 = vmatpush.bf16.msra.mxu0 0
      %5408 = vmatpush.bf16.msra.mxu0 0
      %5409 = vmatpush.bf16.msra.mxu0 %v5371
      %5410 = vmatpush.bf16.msra.mxu0 %v5367
      %5411 = vmatmul.bf16.gmra.mxu0 %v5379
      %v5412 = vpop.f32.mrf.mxu0
      %v5413 = vadd.f32 0.0, %v5412
      %v5414 = vpop.f32.mrf.mxu0
      %v5415 = vadd.f32 0.0, %v5414
      %5416 = vmatmul.bf16.gmra.mxu0 %v5382
      %v5417 = vpop.f32.mrf.mxu0
      %v5418 = vadd.f32 0.0, %v5417
      %v5419 = vpop.f32.mrf.mxu0
      %v5420 = vadd.f32 0.0, %v5419
      %5421 = vdwg.mxu0
      %v5422 = vadd.f32 %v5341, %v5394
      %v5423 = vadd.f32 %v5342, %v5413
      %v5424 = vadd.f32 %v5343, %v5396
      %v5425 = vadd.f32 %v5344, %v5415
      %v5426 = vadd.f32 %v5345, %v5399
      %v5427 = vadd.f32 %v5346, %v5418
      %v5428 = vadd.f32 %v5347, %v5401
      %v5429 = vadd.f32 %v5348, %v5420
      %s5430 = scalar_lea.vmem %s7, 128
      %v5431 = vld [vmem:[%s5430] sm:$0xf]
      %v5432 = vld [vmem:[%s5430 + $0x4] sm:$0xf]
      %v5433 = vld [vmem:[%s5430 + $0x8] sm:$0xf]
      %v5434 = vld [vmem:[%s5430 + $0xc] sm:$0xf]
      %v5439 = vunpack.c.l.b16 %v5431
      %v5440 = vunpack.c.l.b16 %v5432
      %v5441 = vunpack.c.l.b16 %v5433
      %v5442 = vunpack.c.l.b16 %v5434
      %v5443 = vpack.c.b16 %v5440, %v5439
      %v5444 = vpack.c.b16 %v5442, %v5441
      %5445 = vrot.lane.b32.xlu0 %v4823, 98
      %v5446 = vpop.permute.xlu0 %5445
      %5447 = vrot.lane.b32.xlu0 %v4824, 98
      %v5448 = vpop.permute.xlu0 %5447
      %5449 = vrot.lane.b32.xlu0 %v4825, 98
      %v5450 = vpop.permute.xlu0 %5449
      %5451 = vrot.lane.b32.xlu0 %v4826, 98
      %v5452 = vpop.permute.xlu0 %5451
      %v5453 = vsel %vm4690, %v5446, %v5448
      %v5454 = vsel %vm4690, %v5450, %v5452
      %v5460 = vsel %vm4841, %v5443, 0
      %v5463 = vsel %vm4841, %v5444, 0
      %5465 = vmatpush.bf16.msra.mxu0 0
      %5466 = vmatpush.bf16.msra.mxu0 0
      %5467 = vmatpush.bf16.msra.mxu0 0
      %5468 = vmatpush.bf16.msra.mxu0 0
      %5469 = vmatpush.bf16.msra.mxu0 0
      %5470 = vmatpush.bf16.msra.mxu0 0
      %5471 = vmatpush.bf16.msra.mxu0 %v5454
      %5472 = vmatpush.bf16.msra.mxu0 %v5453
      %5473 = vmatmul.bf16.gmra.mxu0 %v5460
      %v5474 = vpop.f32.mrf.mxu0
      %v5475 = vadd.f32 0.0, %v5474
      %v5476 = vpop.f32.mrf.mxu0
      %v5477 = vadd.f32 0.0, %v5476
      %5478 = vmatmul.bf16.gmra.mxu0 %v5463
      %v5479 = vpop.f32.mrf.mxu0
      %v5480 = vadd.f32 0.0, %v5479
      %v5481 = vpop.f32.mrf.mxu0
      %v5482 = vadd.f32 0.0, %v5481
      %5483 = vdwg.mxu0
      %5484 = vmatpush.bf16.msra.mxu0 0
      %5485 = vmatpush.bf16.msra.mxu0 0
      %5486 = vmatpush.bf16.msra.mxu0 0
      %5487 = vmatpush.bf16.msra.mxu0 0
      %5488 = vmatpush.bf16.msra.mxu0 0
      %5489 = vmatpush.bf16.msra.mxu0 0
      %5490 = vmatpush.bf16.msra.mxu0 %v5452
      %5491 = vmatpush.bf16.msra.mxu0 %v5448
      %5492 = vmatmul.bf16.gmra.mxu0 %v5460
      %v5493 = vpop.f32.mrf.mxu0
      %v5494 = vadd.f32 0.0, %v5493
      %v5495 = vpop.f32.mrf.mxu0
      %v5496 = vadd.f32 0.0, %v5495
      %5497 = vmatmul.bf16.gmra.mxu0 %v5463
      %v5498 = vpop.f32.mrf.mxu0
      %v5499 = vadd.f32 0.0, %v5498
      %v5500 = vpop.f32.mrf.mxu0
      %v5501 = vadd.f32 0.0, %v5500
      %5502 = vdwg.mxu0
      %v5503 = vadd.f32 %v5422, %v5475
      %v5504 = vadd.f32 %v5423, %v5494
      %v5505 = vadd.f32 %v5424, %v5477
      %v5506 = vadd.f32 %v5425, %v5496
      %v5507 = vadd.f32 %v5426, %v5480
      %v5508 = vadd.f32 %v5427, %v5499
      %v5509 = vadd.f32 %v5428, %v5482
      %v5510 = vadd.f32 %v5429, %v5501
      %v5511 = vld [vmem:[%s8] sm:$0xff]
      %v5512 = vld [vmem:[%s8 + $0x8] sm:$0xff]
      %v5513 = vld [vmem:[%s8 + $0x10] sm:$0xff]
      %v5514 = vld [vmem:[%s8 + $0x18] sm:$0xff]
      %5516 = vset.pattern.permute.xlu0 0
      %5517 = vperm.xlu0 %5516, %v5511
      %v5518 = vpop.permute.xlu0 %5517
      %5521 = vset.pattern.permute.xlu0 0
      %5522 = vperm.xlu0 %5521, %v5512
      %v5523 = vpop.permute.xlu0 %5522
      %5526 = vset.pattern.permute.xlu0 0
      %5527 = vperm.xlu0 %5526, %v5513
      %v5528 = vpop.permute.xlu0 %5527
      %5531 = vset.pattern.permute.xlu0 0
      %5532 = vperm.xlu0 %5531, %v5514
      %v5533 = vpop.permute.xlu0 %5532
      %v5535 = vadd.f32 %v5503, %v5518
      %v5536 = vadd.f32 %v5504, %v5518
      %v5537 = vadd.f32 %v5505, %v5523
      %v5538 = vadd.f32 %v5506, %v5523
      %v5539 = vadd.f32 %v5507, %v5528
      %v5540 = vadd.f32 %v5508, %v5528
      %v5541 = vadd.f32 %v5509, %v5533
      %v5542 = vadd.f32 %v5510, %v5533
      %v5543 = vmax.f32 %v5535, 0.0
      %v5544 = vmax.f32 %v5536, 0.0
      %v5545 = vmax.f32 %v5537, 0.0
      %v5546 = vmax.f32 %v5538, 0.0
      %v5547 = vmax.f32 %v5539, 0.0
      %v5548 = vmax.f32 %v5540, 0.0
      %v5549 = vmax.f32 %v5541, 0.0
      %v5550 = vmax.f32 %v5542, 0.0
      %v5551 = vpack.c.bf16 %v5544, %v5543
      %v5552 = vpack.c.bf16 %v5546, %v5545
      %v5553 = vpack.c.bf16 %v5548, %v5547
      %v5554 = vpack.c.bf16 %v5550, %v5549
      %vm5555 = vcmask 64516
      %vm5556 = vmor %vm5555, %vm1539
      %5557 = vst.msk [vmem:[#allocation6] sm:$0xff] %vm5556, %v5551
      %5558 = vst.msk [vmem:[#allocation6 + $0x8] sm:$0xff] %vm5556, %v5552
      %5559 = vst.msk [vmem:[#allocation6 + $0x10] sm:$0xff] %vm5556, %v5553
      %5560 = vst.msk [vmem:[#allocation6 + $0x18] sm:$0xff] %vm5556, %v5554
      %v5561 = vld [vmem:[#allocation6] sm:$0xf]
      %v5562 = vld [vmem:[#allocation6 + $0x8] sm:$0xf]
      %v5563 = vld [vmem:[#allocation6 + $0x10] sm:$0xf]
      %v5564 = vld [vmem:[#allocation6 + $0x18] sm:$0xf]
      %v5565 = vunpack.c.l.bf16 %v5561
      %v5566 = vunpack.c.l.bf16 %v5562
      %v5567 = vunpack.c.l.bf16 %v5563
      %v5568 = vunpack.c.l.bf16 %v5564
      %5573 = vrot.lane.b32.xlu0 %v5565, 127
      %v5574 = vpop.permute.xlu0 %5573
      %5575 = vrot.lane.b32.xlu0 %v5566, 127
      %v5576 = vpop.permute.xlu0 %5575
      %5577 = vrot.lane.b32.xlu0 %v5567, 127
      %v5578 = vpop.permute.xlu0 %5577
      %5579 = vrot.lane.b32.xlu0 %v5568, 127
      %v5580 = vpop.permute.xlu0 %5579
      %v5585 = vmax.f32 %v5565, %v5574
      %v5586 = vmax.f32 %v5566, %v5576
      %v5587 = vmax.f32 %v5567, %v5578
      %v5588 = vmax.f32 %v5568, %v5580
      %v5589 = vpack.c.bf16 %v5585, %v5585
      %v5590 = vpack.c.bf16 %v5586, %v5586
      %v5591 = vpack.c.bf16 %v5587, %v5587
      %v5592 = vpack.c.bf16 %v5588, %v5588
      %v5593 = vld [vmem:[#allocation6] sm:$0xff]
      %v5594 = vld [vmem:[#allocation6 + $0x8] sm:$0xff]
      %v5595 = vld [vmem:[#allocation6 + $0x10] sm:$0xff]
      %v5596 = vld [vmem:[#allocation6 + $0x18] sm:$0xff]
      %v5597 = vunpack.c.l.bf16 %v5593
      %v5598 = vunpack.c.h.bf16 %v5593
      %v5599 = vunpack.c.l.bf16 %v5594
      %v5600 = vunpack.c.h.bf16 %v5594
      %v5601 = vunpack.c.l.bf16 %v5595
      %v5602 = vunpack.c.h.bf16 %v5595
      %v5603 = vunpack.c.l.bf16 %v5596
      %v5604 = vunpack.c.h.bf16 %v5596
      %5613 = vrot.lane.b32.xlu0 %v5597, 127
      %v5614 = vpop.permute.xlu0 %5613
      %5615 = vrot.lane.b32.xlu0 %v5598, 127
      %v5616 = vpop.permute.xlu0 %5615
      %5617 = vrot.lane.b32.xlu0 %v5599, 127
      %v5618 = vpop.permute.xlu0 %5617
      %5619 = vrot.lane.b32.xlu0 %v5600, 127
      %v5620 = vpop.permute.xlu0 %5619
      %5621 = vrot.lane.b32.xlu0 %v5601, 127
      %v5622 = vpop.permute.xlu0 %5621
      %5623 = vrot.lane.b32.xlu0 %v5602, 127
      %v5624 = vpop.permute.xlu0 %5623
      %5625 = vrot.lane.b32.xlu0 %v5603, 127
      %v5626 = vpop.permute.xlu0 %5625
      %5627 = vrot.lane.b32.xlu0 %v5604, 127
      %v5628 = vpop.permute.xlu0 %5627
      %v5629 = vsel %vm551, %v5614, %v5616
      %v5630 = vsel %vm551, %v5618, %v5620
      %v5631 = vsel %vm551, %v5622, %v5624
      %v5632 = vsel %vm551, %v5626, %v5628
      %v5641 = vmax.f32 %v5597, %v5629
      %v5642 = vmax.f32 %v5598, %v5616
      %v5643 = vmax.f32 %v5599, %v5630
      %v5644 = vmax.f32 %v5600, %v5620
      %v5645 = vmax.f32 %v5601, %v5631
      %v5646 = vmax.f32 %v5602, %v5624
      %v5647 = vmax.f32 %v5603, %v5632
      %v5648 = vmax.f32 %v5604, %v5628
      %v5649 = vpack.c.bf16 %v5642, %v5641
      %v5650 = vpack.c.bf16 %v5644, %v5643
      %v5651 = vpack.c.bf16 %v5646, %v5645
      %v5652 = vpack.c.bf16 %v5648, %v5647
      %v5653 = vunpack.c.l.bf16 %v5589
      %v5654 = vunpack.c.l.bf16 %v5590
      %v5655 = vunpack.c.l.bf16 %v5591
      %v5656 = vunpack.c.l.bf16 %v5592
      %v5657 = vunpack.c.l.bf16 %v5649
      %v5658 = vunpack.c.h.bf16 %v5649
      %v5659 = vunpack.c.l.bf16 %v5650
      %v5660 = vunpack.c.h.bf16 %v5650
      %v5661 = vunpack.c.l.bf16 %v5651
      %v5662 = vunpack.c.h.bf16 %v5651
      %v5663 = vunpack.c.l.bf16 %v5652
      %v5664 = vunpack.c.h.bf16 %v5652
      %5673 = vrot.lane.b32.xlu0 %v5657, 114
      %v5674 = vpop.permute.xlu0 %5673
      %5675 = vrot.lane.b32.xlu0 %v5658, 114
      %v5676 = vpop.permute.xlu0 %5675
      %5677 = vrot.lane.b32.xlu0 %v5659, 114
      %v5678 = vpop.permute.xlu0 %5677
      %5679 = vrot.lane.b32.xlu0 %v5660, 114
      %v5680 = vpop.permute.xlu0 %5679
      %5681 = vrot.lane.b32.xlu0 %v5661, 114
      %v5682 = vpop.permute.xlu0 %5681
      %5683 = vrot.lane.b32.xlu0 %v5662, 114
      %v5684 = vpop.permute.xlu0 %5683
      %5685 = vrot.lane.b32.xlu0 %v5663, 114
      %v5686 = vpop.permute.xlu0 %5685
      %5687 = vrot.lane.b32.xlu0 %v5664, 114
      %v5688 = vpop.permute.xlu0 %5687
      %vm5689 = vcmask 932864
      %v5690 = vsel %vm5689, %v5674, %v5676
      %v5691 = vsel %vm5689, %v5678, %v5680
      %v5692 = vsel %vm5689, %v5682, %v5684
      %v5693 = vsel %vm5689, %v5686, %v5688
      %v5698 = vmax.f32 %v5653, %v5690
      %v5699 = vmax.f32 %v5654, %v5691
      %v5700 = vmax.f32 %v5655, %v5692
      %v5701 = vmax.f32 %v5656, %v5693
      %v5702 = vpack.c.bf16 %v5699, %v5698
      %v5703 = vpack.c.bf16 %v5701, %v5700
      %v5704 = vld [vmem:[%s10] sm:$0xf]
      %v5705 = vld [vmem:[%s10 + $0x4] sm:$0xf]
      %v5706 = vld [vmem:[%s10 + $0x8] sm:$0xf]
      %v5707 = vld [vmem:[%s10 + $0xc] sm:$0xf]
      %v5708 = vld [vmem:[%s10 + $0x10] sm:$0xf]
      %v5709 = vld [vmem:[%s10 + $0x14] sm:$0xf]
      %v5710 = vld [vmem:[%s10 + $0x18] sm:$0xf]
      %v5711 = vld [vmem:[%s10 + $0x1c] sm:$0xf]
      %v5712 = vld [vmem:[%s10 + $0x20] sm:$0xf]
      %v5713 = vld [vmem:[%s10 + $0x24] sm:$0xf]
      %v5714 = vld [vmem:[%s10 + $0x28] sm:$0xf]
      %v5715 = vld [vmem:[%s10 + $0x2c] sm:$0xf]
      %v5716 = vld [vmem:[%s10 + $0x30] sm:$0xf]
      %v5717 = vld [vmem:[%s10 + $0x34] sm:$0xf]
      %v5718 = vld [vmem:[%s10 + $0x38] sm:$0xf]
      %v5719 = vld [vmem:[%s10 + $0x3c] sm:$0x1]
      %v5736 = vunpack.c.l.b16 %v5704
      %v5737 = vunpack.c.l.b16 %v5705
      %v5738 = vunpack.c.l.b16 %v5706
      %v5739 = vunpack.c.l.b16 %v5707
      %v5740 = vunpack.c.l.b16 %v5708
      %v5741 = vunpack.c.l.b16 %v5709
      %v5742 = vunpack.c.l.b16 %v5710
      %v5743 = vunpack.c.l.b16 %v5711
      %v5744 = vunpack.c.l.b16 %v5712
      %v5745 = vunpack.c.l.b16 %v5713
      %v5746 = vunpack.c.l.b16 %v5714
      %v5747 = vunpack.c.l.b16 %v5715
      %v5748 = vunpack.c.l.b16 %v5716
      %v5749 = vunpack.c.l.b16 %v5717
      %v5750 = vunpack.c.l.b16 %v5718
      %v5751 = vunpack.c.l.b16 %v5719
      %v5752 = vpack.c.b16 %v5737, %v5736
      %v5753 = vpack.c.b16 %v5739, %v5738
      %v5754 = vpack.c.b16 %v5741, %v5740
      %v5755 = vpack.c.b16 %v5743, %v5742
      %v5756 = vpack.c.b16 %v5745, %v5744
      %v5757 = vpack.c.b16 %v5747, %v5746
      %v5758 = vpack.c.b16 %v5749, %v5748
      %v5759 = vpack.c.b16 %v5751, %v5750
      %vm5767 = vcmask 990208
      %v5769 = vsel %vm5767, %v5702, 0
      %v5772 = vsel %vm5767, %v5703, 0
      %v5774 = vsel %vm1539, 4294967295, 65535
      %v5775 = vsel %vm3874, %v5774, 0
      %v5777 = vand.u32 %v5759, %v5775
      %5779 = vmatpush.bf16.msra.mxu0 %v5777
      %5780 = vmatpush.bf16.msra.mxu0 %v5758
      %5781 = vmatpush.bf16.msra.mxu0 %v5757
      %5782 = vmatpush.bf16.msra.mxu0 %v5756
      %5783 = vmatpush.bf16.msra.mxu0 %v5755
      %5784 = vmatpush.bf16.msra.mxu0 %v5754
      %5785 = vmatpush.bf16.msra.mxu0 %v5753
      %5786 = vmatpush.bf16.msra.mxu0 %v5752
      %5787 = vmatmul.bf16.gmra.mxu0 %v5769
      %v5788 = vpop.f32.mrf.mxu0
      %v5789 = vadd.f32 0.0, %v5788
      %v5790 = vpop.f32.mrf.mxu0
      %v5791 = vadd.f32 0.0, %v5790
      %5792 = vmatmul.bf16.gmra.mxu0 %v5772
      %v5793 = vpop.f32.mrf.mxu0
      %v5794 = vadd.f32 0.0, %v5793
      %v5795 = vpop.f32.mrf.mxu0
      %v5796 = vadd.f32 0.0, %v5795
      %5797 = vdwg.mxu0
      %vm5798 = vcmask 203776
      %5799 = vst.msk [vmem:[%s410] sm:$0xff] %vm5798, %v5789
      %5800 = vst.msk [vmem:[%s410 + $0x8] sm:$0xff] %vm5798, %v5791
      %5801 = vst.msk [vmem:[%s410 + $0x10] sm:$0xff] %vm5798, %v5794
      %5802 = vst.msk [vmem:[%s410 + $0x18] sm:$0xff] %vm5798, %v5796
      %p5803 = scmp.lt.s32.totalorder %s23, 1
      %s5804 = scalar_select %p5803, %s23, 1
      %s5805 = smul.addr %s5804, 4
      %s5806 = smul.addr %s5805, 8
      %s5807 = scalar_lea.vmem %s12, %s5806
      // Predicated region
      $region69: #{forward.2} parent=67 // pred_check
        %p5808 = pneg %p298
      $region70: #{forward.2} parent=67 // pred_check_branch
        %5810 = sbr.rel (%p5808) target = $region72
      $region71: #{forward.2} parent=67 // pred_region
        _
      $region72: #{forward.2} parent=67 // pred_fallthru
        _
    $region68: #{forward.2} parent=5 // pred_fallthru
      _
    %p5811 = scmp.le.s32.totalorder 2, %s18
    // Predicated region
    $region73: #{forward.2} parent=5 // pred_check
      %p5812 = pneg %p5811
    $region74: #{forward.2} parent=5 // pred_check_branch
      %5814 = sbr.rel (%p5812) target = $region76
    $region75: #{forward.2} parent=5 // pred_region
      %s5815 = ssub.s32 %s18, 2
      // Predicated region
      $region77: #{forward.2} parent=75 // pred_check
        %p5816 = pneg %p304
      $region78: #{forward.2} parent=75 // pred_check_branch
        %5818 = sbr.rel (%p5816) target = $region80
      $region79: #{forward.2} parent=75 // pred_region
        %p5819 = scmp.lt.s32.totalorder %s24, 1
        %s5820 = scalar_select %p5819, %s24, 1
        %s5821 = smul.addr %s5820, 4
        %s5822 = smul.addr %s5821, 8
        %s5823 = scalar_lea.vmem %s12, %s5822
      $region80: #{forward.2} parent=75 // pred_fallthru
        _
    $region76: #{forward.2} parent=5 // pred_fallthru
      _
  $region6: #{forward.2} parent=0 // loop_footer
    %s22 = sadd.s32 1, %s18
  $region7: #{forward.2} parent=0 // loop_footer_branch
    %17 = sbr.rel target = $region3
  $region8: #{forward.2} parent=0 // loop_exit
    _

</llo_original>
